<compile_context>
chip_gen: v7x
topology: tpu7x:2x2x1
jax: 0.10.0
libtpu: 0.0.40
codegen_flags: <defaults>
</compile_context>

<pallas_src>
import functools

import jax
import jax.numpy as jnp
from jax.experimental import pallas as pl
from jax.experimental.pallas import tpu as pltpu


# ----------------------------------------------------------------------------
# helpers
# ----------------------------------------------------------------------------
def _to3(v):
    if isinstance(v, (tuple, list)):
        assert len(v) == 3
        return tuple(int(i) for i in v)
    return (int(v),) * 3


def _gelu(x):
    # exact (erf-based) GELU, matching nn.GELU default
    return 0.5 * x * (1.0 + jax.lax.erf(x * (1.0 / jnp.sqrt(2.0))))


def _round_up(v, m):
    return -(-v // m) * m


# ----------------------------------------------------------------------------
# Fused kernel: conv1 matmul + GELU + LN1  -> VMEM scratch ->
#               conv2 (27 accumulated taps) + GELU + LN2 -> lane-dense store
# ----------------------------------------------------------------------------
def _project_fused_kernel(p1_ref, w1_ref, prm1_ref, w2_ref, prm2_ref, mask_ref,
                          o_ref, x1s_ref, *, dims, c1, c2, pad_rows, last, eps):
    d1, h1, w1d = dims
    rows = d1 * h1 * w1d
    c2p = o_ref.shape[-1]

    # -------- conv1 (im2col matmul) + bias + GELU + LayerNorm over C1 --------
    b1 = prm1_ref[0:1, :]
    g1 = prm1_ref[1:2, :]
    bt1 = prm1_ref[2:3, :]

    y = jnp.dot(p1_ref[0], w1_ref[...], preferred_element_type=jnp.float32)
    y = y + b1
    y = _gelu(y)
    mean1 = jnp.mean(y, axis=-1, keepdims=True)
    cen1 = y - mean1
    var1 = jnp.mean(cen1 * cen1, axis=-1, keepdims=True)
    x1 = cen1 * jax.lax.rsqrt(var1 + eps) * g1 + bt1          # (rows, C1)

    # Keep conv1 output resident in a row-padded VMEM scratch so every conv2
    # tap is a flat row shift (pad rows are zero; masks kill any wrong reads).
    x1s_ref[...] = jnp.zeros_like(x1s_ref)
    x1s_ref[pad_rows:pad_rows + rows, :] = x1.astype(x1s_ref.dtype)

    # -------- conv2: accumulate the 27 taps as (rows,C1) @ (C1,C2p) ---------
    b2 = prm2_ref[0:1, :]
    acc = jnp.zeros((rows, c2p), jnp.float32) + b2
    t = 0
    for dz in range(3):
        for dy in range(3):
            for dx in range(3):
                off = (dz - 1) * h1 * w1d + (dy - 1) * w1d + (dx - 1)
                start = pad_rows + off
                xt = x1s_ref[start:start + rows, :] * mask_ref[t]   # (rows, C1)
                acc = acc + jnp.dot(xt, w2_ref[t * c1:(t + 1) * c1, :],
                                    preferred_element_type=jnp.float32)
                t += 1

    # -------- optional GELU + LayerNorm over the real C2 channels -----------
    if not last:
        y2 = _gelu(acc)                                   # padded lanes stay 0
        lane = jax.lax.broadcasted_iota(jnp.int32, (rows, c2p), 1)
        valid = lane < c2
        g2 = prm2_ref[1:2, :]
        bt2 = prm2_ref[2:3, :]
        inv_n = 1.0 / float(c2)
        mean2 = jnp.sum(jnp.where(valid, y2, 0.0), axis=-1, keepdims=True) * inv_n
        cen2 = jnp.where(valid, y2 - mean2, 0.0)
        var2 = jnp.sum(cen2 * cen2, axis=-1, keepdims=True) * inv_n
        out = cen2 * jax.lax.rsqrt(var2 + eps) * g2 + bt2  # padded lanes -> 0
    else:
        out = acc

    o_ref[0] = out.astype(o_ref.dtype)                    # lane-dense (rows,128)


# ----------------------------------------------------------------------------
# JAX glue: im2col for the first (stride-k) conv, NCDHW input
# ----------------------------------------------------------------------------
def im2col_3d(x, ksize, stride, pad):
    """x: (N,C,D,H,W) -> (N, Do*Ho*Wo, C*kd*kh*kw), features ordered (C,kd,kh,kw)."""
    kd, kh, kw = ksize
    sd, sh, sw = stride
    pd, ph, pw = pad
    if pd or ph or pw:
        x = jnp.pad(x, ((0, 0), (0, 0), (pd, pd), (ph, ph), (pw, pw)))
    n, c, d, h, w = x.shape
    do = (d - kd) // sd + 1
    ho = (h - kh) // sh + 1
    wo = (w - kw) // sw + 1
    cols = []
    for dz in range(kd):
        for dy in range(kh):
            for dx in range(kw):
                cols.append(x[:, :,
                              dz: dz + (do - 1) * sd + 1: sd,
                              dy: dy + (ho - 1) * sh + 1: sh,
                              dx: dx + (wo - 1) * sw + 1: sw])
    p = jnp.stack(cols, axis=2)                       # (n, c, k3, do, ho, wo)
    p = p.reshape(n, c * kd * kh * kw, do, ho, wo)    # feature = (C, kd, kh, kw)
    p = p.transpose(0, 2, 3, 4, 1)                    # (n, do, ho, wo, K)
    return p.reshape(n, do * ho * wo, c * kd * kh * kw), (do, ho, wo)


# ----------------------------------------------------------------------------
# `project.forward` via the single fused Pallas kernel
# ----------------------------------------------------------------------------
def project_forward(x, params, *, kernel_size, stride, last=False, eps=1e-5):
    w1, b1, g1, bt1, w2, b2, g2, bt2 = params
    ks = _to3(kernel_size)
    st = _to3(stride)

    n = x.shape[0]
    c1 = w1.shape[0]                      # out_dim // 2
    c2 = w2.shape[0]                      # out_dim
    c2p = _round_up(max(c2, 128), 128)    # lane-dense (padded) output channels

    # conv1 patches (space-to-depth im2col; cheap XLA glue)
    p1, (d1, h1, wd1) = im2col_3d(x, ks, st, (0, 0, 0))
    rows = d1 * h1 * wd1
    k1 = p1.shape[-1]

    # conv1 weight as (K1, C1); bias / LN1 gamma / LN1 beta packed as (3, C1)
    w1m = w1.reshape(c1, -1).T
    prm1 = jnp.stack([b1, g1, bt1], axis=0)

    # conv2 weight as (27*C1, C2p): rows grouped per tap in (dz, dy, dx) order,
    # output channels zero-padded to 128 lanes.  bias / gamma / beta -> (3, C2p).
    w2m = w2.transpose(2, 3, 4, 1, 0).reshape(27 * c1, c2)
    w2m = jnp.pad(w2m, ((0, 0), (0, c2p - c2)))
    prm2 = jnp.pad(jnp.stack([b2, g2, bt2], axis=0), ((0, 0), (0, c2p - c2)))

    # per-tap validity masks (implement conv2's zero spatial padding)
    zz, yy, xx = jnp.meshgrid(jnp.arange(d1), jnp.arange(h1), jnp.arange(wd1),
                              indexing="ij")
    zz, yy, xx = zz.reshape(-1), yy.reshape(-1), xx.reshape(-1)
    masks = []
    for dz in range(3):
        for dy in range(3):
            for dx in range(3):
                ok = ((zz + dz - 1 >= 0) & (zz + dz - 1 < d1)
                      & (yy + dy - 1 >= 0) & (yy + dy - 1 < h1)
                      & (xx + dx - 1 >= 0) & (xx + dx - 1 < wd1))
                masks.append(ok)
    tap_mask = jnp.stack(masks, axis=0).astype(jnp.float32)[:, :, None]  # (27,R,1)

    # max |row shift| for a 3x3x3 tap, rounded up so the interior write is
    # sublane aligned
    pad_rows = _round_up(h1 * wd1 + wd1 + 1, 8)

    kernel = functools.partial(
        _project_fused_kernel, dims=(d1, h1, wd1), c1=c1, c2=c2,
        pad_rows=pad_rows, last=last, eps=eps)

    out_p = pl.pallas_call(
        kernel,
        out_shape=jax.ShapeDtypeStruct((n, rows, c2p), x.dtype),
        grid_spec=pltpu.PrefetchScalarGridSpec(
            num_scalar_prefetch=0,
            grid=(n,),
            in_specs=[
                pl.BlockSpec((1, rows, k1), lambda b: (b, 0, 0)),       # patches
                pl.BlockSpec((k1, c1), lambda b: (0, 0)),               # W1
                pl.BlockSpec((3, c1), lambda b: (0, 0)),                # b1,g1,bt1
                pl.BlockSpec((27 * c1, c2p), lambda b: (0, 0)),         # W2 (taps)
                pl.BlockSpec((3, c2p), lambda b: (0, 0)),               # b2,g2,bt2
                pl.BlockSpec((27, rows, 1), lambda b: (0, 0, 0)),       # tap masks
            ],
            out_specs=pl.BlockSpec((1, rows, c2p), lambda b: (b, 0, 0)),
            scratch_shapes=[pltpu.VMEM((rows + 2 * pad_rows, c1), jnp.float32)],
        ),
        compiler_params=pltpu.CompilerParams(
            dimension_semantics=("parallel",)),
    )(p1, w1m, prm1, w2m, prm2, tap_mask)

    out = out_p[:, :, :c2].reshape(n, d1, h1, wd1, c2).transpose(0, 4, 1, 2, 3)
    return out  # NCDHW


# ----------------------------------------------------------------------------
# Pure-JAX reference (same default precision) for a sanity check
# ----------------------------------------------------------------------------
def reference_forward(x, params, *, kernel_size, stride, last=False, eps=1e-5):
    w1, b1, g1, bt1, w2, b2, g2, bt2 = params
    ks = _to3(kernel_size)
    st = _to3(stride)
    dn = ("NCDHW", "OIDHW", "NCDHW")

    def conv(z, w, b, s, pad):
        y = jax.lax.conv_general_dilated(
            z, w, s, [(pad, pad)] * 3, dimension_numbers=dn)
        return y + b.reshape(1, -1, 1, 1, 1)

    def ln_ch(z, g, bt):   # LayerNorm over channel axis (axis=1 in NCDHW)
        m = jnp.mean(z, axis=1, keepdims=True)
        v = jnp.mean(jnp.square(z - m), axis=1, keepdims=True)
        zn = (z - m) * jax.lax.rsqrt(v + eps)
        return zn * g.reshape(1, -1, 1, 1, 1) + bt.reshape(1, -1, 1, 1, 1)

    y = conv(x, w1, b1, st, 0)
    y = ln_ch(_gelu(y), g1, bt1)
    y = conv(y, w2, b2, (1, 1, 1), 1)
    if not last:
        y = ln_ch(_gelu(y), g2, bt2)
    return y


if __name__ == "__main__":
    # project(in_dim=4, out_dim=32, kernel_size=2, stride=2,
    #         activate=nn.GELU, norm=nn.LayerNorm, last=False)
    in_dim, out_dim = 4, 32
    kernel_size, stride = 2, 2
    out_half = out_dim // 2

    key = jax.random.PRNGKey(0)
    kx, kw1, kb1, kw2, kb2 = jax.random.split(key, 5)

    x = jax.random.normal(kx, (2, in_dim, 8, 8, 8), dtype=jnp.float32)

    w1 = 0.1 * jax.random.normal(
        kw1, (out_half, in_dim, kernel_size, kernel_size, kernel_size),
        jnp.float32)
    b1 = 0.02 * jax.random.normal(kb1, (out_half,), jnp.float32)
    g1 = jnp.ones((out_half,), jnp.float32)     # LayerNorm default init
    bt1 = jnp.zeros((out_half,), jnp.float32)

    w2 = 0.1 * jax.random.normal(kw2, (out_dim, out_half, 3, 3, 3), jnp.float32)
    b2 = 0.02 * jax.random.normal(kb2, (out_dim,), jnp.float32)
    g2 = jnp.ones((out_dim,), jnp.float32)
    bt2 = jnp.zeros((out_dim,), jnp.float32)

    params = (w1, b1, g1, bt1, w2, b2, g2, bt2)

    out = project_forward(x, params, kernel_size=kernel_size, stride=stride,
                          last=False)
    out = jax.block_until_ready(out)
    assert out.shape == (2, out_dim, 4, 4, 4), out.shape

    ref = jax.block_until_ready(
        reference_forward(x, params, kernel_size=kernel_size, stride=stride,
                          last=False))
    err = float(jnp.max(jnp.abs(out - ref)))
    assert jnp.allclose(out, ref, rtol=3e-2, atol=3e-2), err

    print("KERNEL_OK")
</pallas_src>

<mosaic_0001>
module attributes {stable_mosaic.version = 11 : i64} {
  func.func @_project_fused_kernel(%arg0: i32, %arg1: memref<1x64x32xf32, #tpu.memory_space<vmem>>, %arg2: memref<32x16xf32, #tpu.memory_space<vmem>>, %arg3: memref<3x16xf32, #tpu.memory_space<vmem>>, %arg4: memref<432x128xf32, #tpu.memory_space<vmem>>, %arg5: memref<3x128xf32, #tpu.memory_space<vmem>>, %arg6: memref<27x64x1xf32, #tpu.memory_space<vmem>>, %arg7: memref<1x64x128xf32, #tpu.memory_space<vmem>>, %arg8: memref<112x16xf32, #tpu.memory_space<vmem>>) attributes {dimension_semantics = [#tpu.dimension_semantics<parallel>], iteration_bounds = array<i64: 2>, scalar_prefetch = 0 : i64, scratch_operands = 1 : i64, tpu.core_type = #tpu.core_type<tc>, window_params = [{transform_indices = @transform_0, window_bounds = array<i64: 1, 64, 32>}, {pipeline_mode = #tpu.pipeline_mode<synchronous>, transform_indices = @transform_1, window_bounds = array<i64: 32, 16>}, {pipeline_mode = #tpu.pipeline_mode<synchronous>, transform_indices = @transform_2, window_bounds = array<i64: 3, 16>}, {pipeline_mode = #tpu.pipeline_mode<synchronous>, transform_indices = @transform_3, window_bounds = array<i64: 432, 128>}, {pipeline_mode = #tpu.pipeline_mode<synchronous>, transform_indices = @transform_4, window_bounds = array<i64: 3, 128>}, {pipeline_mode = #tpu.pipeline_mode<synchronous>, transform_indices = @transform_5, window_bounds = array<i64: 27, 64, 1>}, {transform_indices = @transform_6, window_bounds = array<i64: 1, 64, 128>}]} {
    %c0 = arith.constant 0 : index
    %c0_0 = arith.constant 0 : index
    %0 = vector.load %arg3[%c0, %c0_0] : memref<3x16xf32, #tpu.memory_space<vmem>>, vector<1x16xf32>
    %c1 = arith.constant 1 : index
    %c0_1 = arith.constant 0 : index
    %1 = vector.load %arg3[%c1, %c0_1] : memref<3x16xf32, #tpu.memory_space<vmem>>, vector<1x16xf32>
    %c2 = arith.constant 2 : index
    %c0_2 = arith.constant 0 : index
    %2 = vector.load %arg3[%c2, %c0_2] : memref<3x16xf32, #tpu.memory_space<vmem>>, vector<1x16xf32>
    %c0_3 = arith.constant 0 : index
    %c0_4 = arith.constant 0 : index
    %c0_5 = arith.constant 0 : index
    %3 = vector.load %arg1[%c0_3, %c0_4, %c0_5] : memref<1x64x32xf32, #tpu.memory_space<vmem>>, vector<1x64x32xf32>
    %4 = vector.shape_cast %3 : vector<1x64x32xf32> to vector<64x32xf32>
    %c0_6 = arith.constant 0 : index
    %c0_7 = arith.constant 0 : index
    %5 = vector.load %arg2[%c0_6, %c0_7] : memref<32x16xf32, #tpu.memory_space<vmem>>, vector<32x16xf32>
    %cst = arith.constant dense<0.000000e+00> : vector<64x16xf32>
    %6 = tpu.matmul %4, %5, %cst {dimension_numbers = #tpu.dot_dimension_numbers<[1], [0], [0], [1], [0, 0, 1, 1], [], []>} : vector<64x32xf32>, vector<32x16xf32>, vector<64x16xf32> -> vector<64x16xf32>
    %7 = vector.broadcast %0 : vector<1x16xf32> to vector<64x16xf32>
    %8 = arith.addf %6, %7 : vector<64x16xf32>
    %cst_8 = arith.constant 5.000000e-01 : f32
    %9 = vector.broadcast %cst_8 : f32 to vector<64x16xf32>
    %10 = arith.mulf %9, %8 : vector<64x16xf32>
    %cst_9 = arith.constant 2.000000e+00 : f32
    %11 = math.sqrt %cst_9 : f32
    %cst_10 = arith.constant 1.000000e+00 : f32
    %12 = arith.divf %cst_10, %11 : f32
    %13 = vector.broadcast %12 : f32 to vector<64x16xf32>
    %14 = arith.mulf %8, %13 : vector<64x16xf32>
    %15 = math.erf %14 : vector<64x16xf32>
    %cst_11 = arith.constant 1.000000e+00 : f32
    %16 = vector.broadcast %cst_11 : f32 to vector<64x16xf32>
    %17 = arith.addf %16, %15 : vector<64x16xf32>
    %18 = arith.mulf %10, %17 : vector<64x16xf32>
    %cst_12 = arith.constant dense<0.000000e+00> : vector<64xf32>
    %19 = vector.multi_reduction <add>, %18, %cst_12 [1] : vector<64x16xf32> to vector<64xf32>
    %20 = vector.shape_cast %19 : vector<64xf32> to vector<64x1xf32>
    %cst_13 = arith.constant 1.600000e+01 : f32
    %21 = vector.broadcast %cst_13 : f32 to vector<64x1xf32>
    %22 = arith.divf %20, %21 : vector<64x1xf32>
    %23 = vector.broadcast %22 : vector<64x1xf32> to vector<64x16xf32>
    %24 = arith.subf %18, %23 : vector<64x16xf32>
    %25 = arith.mulf %24, %24 : vector<64x16xf32>
    %cst_14 = arith.constant dense<0.000000e+00> : vector<64xf32>
    %26 = vector.multi_reduction <add>, %25, %cst_14 [1] : vector<64x16xf32> to vector<64xf32>
    %27 = vector.shape_cast %26 : vector<64xf32> to vector<64x1xf32>
    %cst_15 = arith.constant 1.600000e+01 : f32
    %28 = vector.broadcast %cst_15 : f32 to vector<64x1xf32>
    %29 = arith.divf %27, %28 : vector<64x1xf32>
    %cst_16 = arith.constant 9.99999974E-6 : f32
    %30 = vector.broadcast %cst_16 : f32 to vector<64x1xf32>
    %31 = arith.addf %29, %30 : vector<64x1xf32>
    %32 = math.rsqrt %31 : vector<64x1xf32>
    %33 = vector.broadcast %32 : vector<64x1xf32> to vector<64x16xf32>
    %34 = arith.mulf %24, %33 : vector<64x16xf32>
    %35 = vector.broadcast %1 : vector<1x16xf32> to vector<64x16xf32>
    %36 = arith.mulf %34, %35 : vector<64x16xf32>
    %37 = vector.broadcast %2 : vector<1x16xf32> to vector<64x16xf32>
    %38 = arith.addf %36, %37 : vector<64x16xf32>
    %cst_17 = arith.constant 0.000000e+00 : f32
    %39 = vector.broadcast %cst_17 : f32 to vector<112x16xf32>
    %c0_18 = arith.constant 0 : index
    %c0_19 = arith.constant 0 : index
    %40 = vector.load %arg8[%c0_18, %c0_19] : memref<112x16xf32, #tpu.memory_space<vmem>>, vector<112x16xf32>
    tpu.vector_store %arg8[%c0_18, %c0_19], %39 {strides = array<i32>} : memref<112x16xf32, #tpu.memory_space<vmem>>, vector<112x16xf32>,
    %c24 = arith.constant 24 : index
    %c0_20 = arith.constant 0 : index
    %41 = vector.load %arg8[%c24, %c0_20] : memref<112x16xf32, #tpu.memory_space<vmem>>, vector<64x16xf32>
    tpu.vector_store %arg8[%c24, %c0_20], %38 {strides = array<i32>} : memref<112x16xf32, #tpu.memory_space<vmem>>, vector<64x16xf32>,
    %c0_21 = arith.constant 0 : index
    %c0_22 = arith.constant 0 : index
    %42 = vector.load %arg5[%c0_21, %c0_22] : memref<3x128xf32, #tpu.memory_space<vmem>>, vector<1x128xf32>
    %cst_23 = arith.constant 0.000000e+00 : f32
    %43 = vector.broadcast %cst_23 : f32 to vector<64x128xf32>
    %44 = vector.broadcast %42 : vector<1x128xf32> to vector<64x128xf32>
    %45 = arith.addf %43, %44 : vector<64x128xf32>
    %c3 = arith.constant 3 : index
    %c0_24 = arith.constant 0 : index
    %46 = vector.load %arg8[%c3, %c0_24] : memref<112x16xf32, #tpu.memory_space<vmem>>, vector<64x16xf32>
    %c0_25 = arith.constant 0 : index
    %c0_26 = arith.constant 0 : index
    %c0_27 = arith.constant 0 : index
    %47 = vector.load %arg6[%c0_25, %c0_26, %c0_27] : memref<27x64x1xf32, #tpu.memory_space<vmem>>, vector<1x64x1xf32>
    %48 = vector.shape_cast %47 : vector<1x64x1xf32> to vector<64x1xf32>
    %49 = vector.broadcast %48 : vector<64x1xf32> to vector<64x16xf32>
    %50 = arith.mulf %46, %49 : vector<64x16xf32>
    %c0_28 = arith.constant 0 : index
    %c0_29 = arith.constant 0 : index
    %51 = vector.load %arg4[%c0_28, %c0_29] : memref<432x128xf32, #tpu.memory_space<vmem>>, vector<16x128xf32>
    %cst_30 = arith.constant dense<0.000000e+00> : vector<64x128xf32>
    %52 = tpu.matmul %50, %51, %cst_30 {dimension_numbers = #tpu.dot_dimension_numbers<[1], [0], [0], [1], [0, 0, 1, 1], [], []>} : vector<64x16xf32>, vector<16x128xf32>, vector<64x128xf32> -> vector<64x128xf32>
    %53 = arith.addf %45, %52 : vector<64x128xf32>
    %c4 = arith.constant 4 : index
    %c0_31 = arith.constant 0 : index
    %54 = vector.load %arg8[%c4, %c0_31] : memref<112x16xf32, #tpu.memory_space<vmem>>, vector<64x16xf32>
    %c1_32 = arith.constant 1 : index
    %c0_33 = arith.constant 0 : index
    %c0_34 = arith.constant 0 : index
    %55 = vector.load %arg6[%c1_32, %c0_33, %c0_34] : memref<27x64x1xf32, #tpu.memory_space<vmem>>, vector<1x64x1xf32>
    %56 = vector.shape_cast %55 : vector<1x64x1xf32> to vector<64x1xf32>
    %57 = vector.broadcast %56 : vector<64x1xf32> to vector<64x16xf32>
    %58 = arith.mulf %54, %57 : vector<64x16xf32>
    %c16 = arith.constant 16 : index
    %c0_35 = arith.constant 0 : index
    %59 = vector.load %arg4[%c16, %c0_35] : memref<432x128xf32, #tpu.memory_space<vmem>>, vector<16x128xf32>
    %cst_36 = arith.constant dense<0.000000e+00> : vector<64x128xf32>
    %60 = tpu.matmul %58, %59, %cst_36 {dimension_numbers = #tpu.dot_dimension_numbers<[1], [0], [0], [1], [0, 0, 1, 1], [], []>} : vector<64x16xf32>, vector<16x128xf32>, vector<64x128xf32> -> vector<64x128xf32>
    %61 = arith.addf %53, %60 : vector<64x128xf32>
    %c5 = arith.constant 5 : index
    %c0_37 = arith.constant 0 : index
    %62 = vector.load %arg8[%c5, %c0_37] : memref<112x16xf32, #tpu.memory_space<vmem>>, vector<64x16xf32>
    %c2_38 = arith.constant 2 : index
    %c0_39 = arith.constant 0 : index
    %c0_40 = arith.constant 0 : index
    %63 = vector.load %arg6[%c2_38, %c0_39, %c0_40] : memref<27x64x1xf32, #tpu.memory_space<vmem>>, vector<1x64x1xf32>
    %64 = vector.shape_cast %63 : vector<1x64x1xf32> to vector<64x1xf32>
    %65 = vector.broadcast %64 : vector<64x1xf32> to vector<64x16xf32>
    %66 = arith.mulf %62, %65 : vector<64x16xf32>
    %c32 = arith.constant 32 : index
    %c0_41 = arith.constant 0 : index
    %67 = vector.load %arg4[%c32, %c0_41] : memref<432x128xf32, #tpu.memory_space<vmem>>, vector<16x128xf32>
    %cst_42 = arith.constant dense<0.000000e+00> : vector<64x128xf32>
    %68 = tpu.matmul %66, %67, %cst_42 {dimension_numbers = #tpu.dot_dimension_numbers<[1], [0], [0], [1], [0, 0, 1, 1], [], []>} : vector<64x16xf32>, vector<16x128xf32>, vector<64x128xf32> -> vector<64x128xf32>
    %69 = arith.addf %61, %68 : vector<64x128xf32>
    %c7 = arith.constant 7 : index
    %c0_43 = arith.constant 0 : index
    %70 = vector.load %arg8[%c7, %c0_43] : memref<112x16xf32, #tpu.memory_space<vmem>>, vector<64x16xf32>
    %c3_44 = arith.constant 3 : index
    %c0_45 = arith.constant 0 : index
    %c0_46 = arith.constant 0 : index
    %71 = vector.load %arg6[%c3_44, %c0_45, %c0_46] : memref<27x64x1xf32, #tpu.memory_space<vmem>>, vector<1x64x1xf32>
    %72 = vector.shape_cast %71 : vector<1x64x1xf32> to vector<64x1xf32>
    %73 = vector.broadcast %72 : vector<64x1xf32> to vector<64x16xf32>
    %74 = arith.mulf %70, %73 : vector<64x16xf32>
    %c48 = arith.constant 48 : index
    %c0_47 = arith.constant 0 : index
    %75 = vector.load %arg4[%c48, %c0_47] : memref<432x128xf32, #tpu.memory_space<vmem>>, vector<16x128xf32>
    %cst_48 = arith.constant dense<0.000000e+00> : vector<64x128xf32>
    %76 = tpu.matmul %74, %75, %cst_48 {dimension_numbers = #tpu.dot_dimension_numbers<[1], [0], [0], [1], [0, 0, 1, 1], [], []>} : vector<64x16xf32>, vector<16x128xf32>, vector<64x128xf32> -> vector<64x128xf32>
    %77 = arith.addf %69, %76 : vector<64x128xf32>
    %c8 = arith.constant 8 : index
    %c0_49 = arith.constant 0 : index
    %78 = vector.load %arg8[%c8, %c0_49] : memref<112x16xf32, #tpu.memory_space<vmem>>, vector<64x16xf32>
    %c4_50 = arith.constant 4 : index
    %c0_51 = arith.constant 0 : index
    %c0_52 = arith.constant 0 : index
    %79 = vector.load %arg6[%c4_50, %c0_51, %c0_52] : memref<27x64x1xf32, #tpu.memory_space<vmem>>, vector<1x64x1xf32>
    %80 = vector.shape_cast %79 : vector<1x64x1xf32> to vector<64x1xf32>
    %81 = vector.broadcast %80 : vector<64x1xf32> to vector<64x16xf32>
    %82 = arith.mulf %78, %81 : vector<64x16xf32>
    %c64 = arith.constant 64 : index
    %c0_53 = arith.constant 0 : index
    %83 = vector.load %arg4[%c64, %c0_53] : memref<432x128xf32, #tpu.memory_space<vmem>>, vector<16x128xf32>
    %cst_54 = arith.constant dense<0.000000e+00> : vector<64x128xf32>
    %84 = tpu.matmul %82, %83, %cst_54 {dimension_numbers = #tpu.dot_dimension_numbers<[1], [0], [0], [1], [0, 0, 1, 1], [], []>} : vector<64x16xf32>, vector<16x128xf32>, vector<64x128xf32> -> vector<64x128xf32>
    %85 = arith.addf %77, %84 : vector<64x128xf32>
    %c9 = arith.constant 9 : index
    %c0_55 = arith.constant 0 : index
    %86 = vector.load %arg8[%c9, %c0_55] : memref<112x16xf32, #tpu.memory_space<vmem>>, vector<64x16xf32>
    %c5_56 = arith.constant 5 : index
    %c0_57 = arith.constant 0 : index
    %c0_58 = arith.constant 0 : index
    %87 = vector.load %arg6[%c5_56, %c0_57, %c0_58] : memref<27x64x1xf32, #tpu.memory_space<vmem>>, vector<1x64x1xf32>
    %88 = vector.shape_cast %87 : vector<1x64x1xf32> to vector<64x1xf32>
    %89 = vector.broadcast %88 : vector<64x1xf32> to vector<64x16xf32>
    %90 = arith.mulf %86, %89 : vector<64x16xf32>
    %c80 = arith.constant 80 : index
    %c0_59 = arith.constant 0 : index
    %91 = vector.load %arg4[%c80, %c0_59] : memref<432x128xf32, #tpu.memory_space<vmem>>, vector<16x128xf32>
    %cst_60 = arith.constant dense<0.000000e+00> : vector<64x128xf32>
    %92 = tpu.matmul %90, %91, %cst_60 {dimension_numbers = #tpu.dot_dimension_numbers<[1], [0], [0], [1], [0, 0, 1, 1], [], []>} : vector<64x16xf32>, vector<16x128xf32>, vector<64x128xf32> -> vector<64x128xf32>
    %93 = arith.addf %85, %92 : vector<64x128xf32>
    %c11 = arith.constant 11 : index
    %c0_61 = arith.constant 0 : index
    %94 = vector.load %arg8[%c11, %c0_61] : memref<112x16xf32, #tpu.memory_space<vmem>>, vector<64x16xf32>
    %c6 = arith.constant 6 : index
    %c0_62 = arith.constant 0 : index
    %c0_63 = arith.constant 0 : index
    %95 = vector.load %arg6[%c6, %c0_62, %c0_63] : memref<27x64x1xf32, #tpu.memory_space<vmem>>, vector<1x64x1xf32>
    %96 = vector.shape_cast %95 : vector<1x64x1xf32> to vector<64x1xf32>
    %97 = vector.broadcast %96 : vector<64x1xf32> to vector<64x16xf32>
    %98 = arith.mulf %94, %97 : vector<64x16xf32>
    %c96 = arith.constant 96 : index
    %c0_64 = arith.constant 0 : index
    %99 = vector.load %arg4[%c96, %c0_64] : memref<432x128xf32, #tpu.memory_space<vmem>>, vector<16x128xf32>
    %cst_65 = arith.constant dense<0.000000e+00> : vector<64x128xf32>
    %100 = tpu.matmul %98, %99, %cst_65 {dimension_numbers = #tpu.dot_dimension_numbers<[1], [0], [0], [1], [0, 0, 1, 1], [], []>} : vector<64x16xf32>, vector<16x128xf32>, vector<64x128xf32> -> vector<64x128xf32>
    %101 = arith.addf %93, %100 : vector<64x128xf32>
    %c12 = arith.constant 12 : index
    %c0_66 = arith.constant 0 : index
    %102 = vector.load %arg8[%c12, %c0_66] : memref<112x16xf32, #tpu.memory_space<vmem>>, vector<64x16xf32>
    %c7_67 = arith.constant 7 : index
    %c0_68 = arith.constant 0 : index
    %c0_69 = arith.constant 0 : index
    %103 = vector.load %arg6[%c7_67, %c0_68, %c0_69] : memref<27x64x1xf32, #tpu.memory_space<vmem>>, vector<1x64x1xf32>
    %104 = vector.shape_cast %103 : vector<1x64x1xf32> to vector<64x1xf32>
    %105 = vector.broadcast %104 : vector<64x1xf32> to vector<64x16xf32>
    %106 = arith.mulf %102, %105 : vector<64x16xf32>
    %c112 = arith.constant 112 : index
    %c0_70 = arith.constant 0 : index
    %107 = vector.load %arg4[%c112, %c0_70] : memref<432x128xf32, #tpu.memory_space<vmem>>, vector<16x128xf32>
    %cst_71 = arith.constant dense<0.000000e+00> : vector<64x128xf32>
    %108 = tpu.matmul %106, %107, %cst_71 {dimension_numbers = #tpu.dot_dimension_numbers<[1], [0], [0], [1], [0, 0, 1, 1], [], []>} : vector<64x16xf32>, vector<16x128xf32>, vector<64x128xf32> -> vector<64x128xf32>
    %109 = arith.addf %101, %108 : vector<64x128xf32>
    %c13 = arith.constant 13 : index
    %c0_72 = arith.constant 0 : index
    %110 = vector.load %arg8[%c13, %c0_72] : memref<112x16xf32, #tpu.memory_space<vmem>>, vector<64x16xf32>
    %c8_73 = arith.constant 8 : index
    %c0_74 = arith.constant 0 : index
    %c0_75 = arith.constant 0 : index
    %111 = vector.load %arg6[%c8_73, %c0_74, %c0_75] : memref<27x64x1xf32, #tpu.memory_space<vmem>>, vector<1x64x1xf32>
    %112 = vector.shape_cast %111 : vector<1x64x1xf32> to vector<64x1xf32>
    %113 = vector.broadcast %112 : vector<64x1xf32> to vector<64x16xf32>
    %114 = arith.mulf %110, %113 : vector<64x16xf32>
    %c128 = arith.constant 128 : index
    %c0_76 = arith.constant 0 : index
    %115 = vector.load %arg4[%c128, %c0_76] : memref<432x128xf32, #tpu.memory_space<vmem>>, vector<16x128xf32>
    %cst_77 = arith.constant dense<0.000000e+00> : vector<64x128xf32>
    %116 = tpu.matmul %114, %115, %cst_77 {dimension_numbers = #tpu.dot_dimension_numbers<[1], [0], [0], [1], [0, 0, 1, 1], [], []>} : vector<64x16xf32>, vector<16x128xf32>, vector<64x128xf32> -> vector<64x128xf32>
    %117 = arith.addf %109, %116 : vector<64x128xf32>
    %c19 = arith.constant 19 : index
    %c0_78 = arith.constant 0 : index
    %118 = vector.load %arg8[%c19, %c0_78] : memref<112x16xf32, #tpu.memory_space<vmem>>, vector<64x16xf32>
    %c9_79 = arith.constant 9 : index
    %c0_80 = arith.constant 0 : index
    %c0_81 = arith.constant 0 : index
    %119 = vector.load %arg6[%c9_79, %c0_80, %c0_81] : memref<27x64x1xf32, #tpu.memory_space<vmem>>, vector<1x64x1xf32>
    %120 = vector.shape_cast %119 : vector<1x64x1xf32> to vector<64x1xf32>
    %121 = vector.broadcast %120 : vector<64x1xf32> to vector<64x16xf32>
    %122 = arith.mulf %118, %121 : vector<64x16xf32>
    %c144 = arith.constant 144 : index
    %c0_82 = arith.constant 0 : index
    %123 = vector.load %arg4[%c144, %c0_82] : memref<432x128xf32, #tpu.memory_space<vmem>>, vector<16x128xf32>
    %cst_83 = arith.constant dense<0.000000e+00> : vector<64x128xf32>
    %124 = tpu.matmul %122, %123, %cst_83 {dimension_numbers = #tpu.dot_dimension_numbers<[1], [0], [0], [1], [0, 0, 1, 1], [], []>} : vector<64x16xf32>, vector<16x128xf32>, vector<64x128xf32> -> vector<64x128xf32>
    %125 = arith.addf %117, %124 : vector<64x128xf32>
    %c20 = arith.constant 20 : index
    %c0_84 = arith.constant 0 : index
    %126 = vector.load %arg8[%c20, %c0_84] : memref<112x16xf32, #tpu.memory_space<vmem>>, vector<64x16xf32>
    %c10 = arith.constant 10 : index
    %c0_85 = arith.constant 0 : index
    %c0_86 = arith.constant 0 : index
    %127 = vector.load %arg6[%c10, %c0_85, %c0_86] : memref<27x64x1xf32, #tpu.memory_space<vmem>>, vector<1x64x1xf32>
    %128 = vector.shape_cast %127 : vector<1x64x1xf32> to vector<64x1xf32>
    %129 = vector.broadcast %128 : vector<64x1xf32> to vector<64x16xf32>
    %130 = arith.mulf %126, %129 : vector<64x16xf32>
    %c160 = arith.constant 160 : index
    %c0_87 = arith.constant 0 : index
    %131 = vector.load %arg4[%c160, %c0_87] : memref<432x128xf32, #tpu.memory_space<vmem>>, vector<16x128xf32>
    %cst_88 = arith.constant dense<0.000000e+00> : vector<64x128xf32>
    %132 = tpu.matmul %130, %131, %cst_88 {dimension_numbers = #tpu.dot_dimension_numbers<[1], [0], [0], [1], [0, 0, 1, 1], [], []>} : vector<64x16xf32>, vector<16x128xf32>, vector<64x128xf32> -> vector<64x128xf32>
    %133 = arith.addf %125, %132 : vector<64x128xf32>
    %c21 = arith.constant 21 : index
    %c0_89 = arith.constant 0 : index
    %134 = vector.load %arg8[%c21, %c0_89] : memref<112x16xf32, #tpu.memory_space<vmem>>, vector<64x16xf32>
    %c11_90 = arith.constant 11 : index
    %c0_91 = arith.constant 0 : index
    %c0_92 = arith.constant 0 : index
    %135 = vector.load %arg6[%c11_90, %c0_91, %c0_92] : memref<27x64x1xf32, #tpu.memory_space<vmem>>, vector<1x64x1xf32>
    %136 = vector.shape_cast %135 : vector<1x64x1xf32> to vector<64x1xf32>
    %137 = vector.broadcast %136 : vector<64x1xf32> to vector<64x16xf32>
    %138 = arith.mulf %134, %137 : vector<64x16xf32>
    %c176 = arith.constant 176 : index
    %c0_93 = arith.constant 0 : index
    %139 = vector.load %arg4[%c176, %c0_93] : memref<432x128xf32, #tpu.memory_space<vmem>>, vector<16x128xf32>
    %cst_94 = arith.constant dense<0.000000e+00> : vector<64x128xf32>
    %140 = tpu.matmul %138, %139, %cst_94 {dimension_numbers = #tpu.dot_dimension_numbers<[1], [0], [0], [1], [0, 0, 1, 1], [], []>} : vector<64x16xf32>, vector<16x128xf32>, vector<64x128xf32> -> vector<64x128xf32>
    %141 = arith.addf %133, %140 : vector<64x128xf32>
    %c23 = arith.constant 23 : index
    %c0_95 = arith.constant 0 : index
    %142 = vector.load %arg8[%c23, %c0_95] : memref<112x16xf32, #tpu.memory_space<vmem>>, vector<64x16xf32>
    %c12_96 = arith.constant 12 : index
    %c0_97 = arith.constant 0 : index
    %c0_98 = arith.constant 0 : index
    %143 = vector.load %arg6[%c12_96, %c0_97, %c0_98] : memref<27x64x1xf32, #tpu.memory_space<vmem>>, vector<1x64x1xf32>
    %144 = vector.shape_cast %143 : vector<1x64x1xf32> to vector<64x1xf32>
    %145 = vector.broadcast %144 : vector<64x1xf32> to vector<64x16xf32>
    %146 = arith.mulf %142, %145 : vector<64x16xf32>
    %c192 = arith.constant 192 : index
    %c0_99 = arith.constant 0 : index
    %147 = vector.load %arg4[%c192, %c0_99] : memref<432x128xf32, #tpu.memory_space<vmem>>, vector<16x128xf32>
    %cst_100 = arith.constant dense<0.000000e+00> : vector<64x128xf32>
    %148 = tpu.matmul %146, %147, %cst_100 {dimension_numbers = #tpu.dot_dimension_numbers<[1], [0], [0], [1], [0, 0, 1, 1], [], []>} : vector<64x16xf32>, vector<16x128xf32>, vector<64x128xf32> -> vector<64x128xf32>
    %149 = arith.addf %141, %148 : vector<64x128xf32>
    %c24_101 = arith.constant 24 : index
    %c0_102 = arith.constant 0 : index
    %150 = vector.load %arg8[%c24_101, %c0_102] : memref<112x16xf32, #tpu.memory_space<vmem>>, vector<64x16xf32>
    %c13_103 = arith.constant 13 : index
    %c0_104 = arith.constant 0 : index
    %c0_105 = arith.constant 0 : index
    %151 = vector.load %arg6[%c13_103, %c0_104, %c0_105] : memref<27x64x1xf32, #tpu.memory_space<vmem>>, vector<1x64x1xf32>
    %152 = vector.shape_cast %151 : vector<1x64x1xf32> to vector<64x1xf32>
    %153 = vector.broadcast %152 : vector<64x1xf32> to vector<64x16xf32>
    %154 = arith.mulf %150, %153 : vector<64x16xf32>
    %c208 = arith.constant 208 : index
    %c0_106 = arith.constant 0 : index
    %155 = vector.load %arg4[%c208, %c0_106] : memref<432x128xf32, #tpu.memory_space<vmem>>, vector<16x128xf32>
    %cst_107 = arith.constant dense<0.000000e+00> : vector<64x128xf32>
    %156 = tpu.matmul %154, %155, %cst_107 {dimension_numbers = #tpu.dot_dimension_numbers<[1], [0], [0], [1], [0, 0, 1, 1], [], []>} : vector<64x16xf32>, vector<16x128xf32>, vector<64x128xf32> -> vector<64x128xf32>
    %157 = arith.addf %149, %156 : vector<64x128xf32>
    %c25 = arith.constant 25 : index
    %c0_108 = arith.constant 0 : index
    %158 = vector.load %arg8[%c25, %c0_108] : memref<112x16xf32, #tpu.memory_space<vmem>>, vector<64x16xf32>
    %c14 = arith.constant 14 : index
    %c0_109 = arith.constant 0 : index
    %c0_110 = arith.constant 0 : index
    %159 = vector.load %arg6[%c14, %c0_109, %c0_110] : memref<27x64x1xf32, #tpu.memory_space<vmem>>, vector<1x64x1xf32>
    %160 = vector.shape_cast %159 : vector<1x64x1xf32> to vector<64x1xf32>
    %161 = vector.broadcast %160 : vector<64x1xf32> to vector<64x16xf32>
    %162 = arith.mulf %158, %161 : vector<64x16xf32>
    %c224 = arith.constant 224 : index
    %c0_111 = arith.constant 0 : index
    %163 = vector.load %arg4[%c224, %c0_111] : memref<432x128xf32, #tpu.memory_space<vmem>>, vector<16x128xf32>
    %cst_112 = arith.constant dense<0.000000e+00> : vector<64x128xf32>
    %164 = tpu.matmul %162, %163, %cst_112 {dimension_numbers = #tpu.dot_dimension_numbers<[1], [0], [0], [1], [0, 0, 1, 1], [], []>} : vector<64x16xf32>, vector<16x128xf32>, vector<64x128xf32> -> vector<64x128xf32>
    %165 = arith.addf %157, %164 : vector<64x128xf32>
    %c27 = arith.constant 27 : index
    %c0_113 = arith.constant 0 : index
    %166 = vector.load %arg8[%c27, %c0_113] : memref<112x16xf32, #tpu.memory_space<vmem>>, vector<64x16xf32>
    %c15 = arith.constant 15 : index
    %c0_114 = arith.constant 0 : index
    %c0_115 = arith.constant 0 : index
    %167 = vector.load %arg6[%c15, %c0_114, %c0_115] : memref<27x64x1xf32, #tpu.memory_space<vmem>>, vector<1x64x1xf32>
    %168 = vector.shape_cast %167 : vector<1x64x1xf32> to vector<64x1xf32>
    %169 = vector.broadcast %168 : vector<64x1xf32> to vector<64x16xf32>
    %170 = arith.mulf %166, %169 : vector<64x16xf32>
    %c240 = arith.constant 240 : index
    %c0_116 = arith.constant 0 : index
    %171 = vector.load %arg4[%c240, %c0_116] : memref<432x128xf32, #tpu.memory_space<vmem>>, vector<16x128xf32>
    %cst_117 = arith.constant dense<0.000000e+00> : vector<64x128xf32>
    %172 = tpu.matmul %170, %171, %cst_117 {dimension_numbers = #tpu.dot_dimension_numbers<[1], [0], [0], [1], [0, 0, 1, 1], [], []>} : vector<64x16xf32>, vector<16x128xf32>, vector<64x128xf32> -> vector<64x128xf32>
    %173 = arith.addf %165, %172 : vector<64x128xf32>
    %c28 = arith.constant 28 : index
    %c0_118 = arith.constant 0 : index
    %174 = vector.load %arg8[%c28, %c0_118] : memref<112x16xf32, #tpu.memory_space<vmem>>, vector<64x16xf32>
    %c16_119 = arith.constant 16 : index
    %c0_120 = arith.constant 0 : index
    %c0_121 = arith.constant 0 : index
    %175 = vector.load %arg6[%c16_119, %c0_120, %c0_121] : memref<27x64x1xf32, #tpu.memory_space<vmem>>, vector<1x64x1xf32>
    %176 = vector.shape_cast %175 : vector<1x64x1xf32> to vector<64x1xf32>
    %177 = vector.broadcast %176 : vector<64x1xf32> to vector<64x16xf32>
    %178 = arith.mulf %174, %177 : vector<64x16xf32>
    %c256 = arith.constant 256 : index
    %c0_122 = arith.constant 0 : index
    %179 = vector.load %arg4[%c256, %c0_122] : memref<432x128xf32, #tpu.memory_space<vmem>>, vector<16x128xf32>
    %cst_123 = arith.constant dense<0.000000e+00> : vector<64x128xf32>
    %180 = tpu.matmul %178, %179, %cst_123 {dimension_numbers = #tpu.dot_dimension_numbers<[1], [0], [0], [1], [0, 0, 1, 1], [], []>} : vector<64x16xf32>, vector<16x128xf32>, vector<64x128xf32> -> vector<64x128xf32>
    %181 = arith.addf %173, %180 : vector<64x128xf32>
    %c29 = arith.constant 29 : index
    %c0_124 = arith.constant 0 : index
    %182 = vector.load %arg8[%c29, %c0_124] : memref<112x16xf32, #tpu.memory_space<vmem>>, vector<64x16xf32>
    %c17 = arith.constant 17 : index
    %c0_125 = arith.constant 0 : index
    %c0_126 = arith.constant 0 : index
    %183 = vector.load %arg6[%c17, %c0_125, %c0_126] : memref<27x64x1xf32, #tpu.memory_space<vmem>>, vector<1x64x1xf32>
    %184 = vector.shape_cast %183 : vector<1x64x1xf32> to vector<64x1xf32>
    %185 = vector.broadcast %184 : vector<64x1xf32> to vector<64x16xf32>
    %186 = arith.mulf %182, %185 : vector<64x16xf32>
    %c272 = arith.constant 272 : index
    %c0_127 = arith.constant 0 : index
    %187 = vector.load %arg4[%c272, %c0_127] : memref<432x128xf32, #tpu.memory_space<vmem>>, vector<16x128xf32>
    %cst_128 = arith.constant dense<0.000000e+00> : vector<64x128xf32>
    %188 = tpu.matmul %186, %187, %cst_128 {dimension_numbers = #tpu.dot_dimension_numbers<[1], [0], [0], [1], [0, 0, 1, 1], [], []>} : vector<64x16xf32>, vector<16x128xf32>, vector<64x128xf32> -> vector<64x128xf32>
    %189 = arith.addf %181, %188 : vector<64x128xf32>
    %c35 = arith.constant 35 : index
    %c0_129 = arith.constant 0 : index
    %190 = vector.load %arg8[%c35, %c0_129] : memref<112x16xf32, #tpu.memory_space<vmem>>, vector<64x16xf32>
    %c18 = arith.constant 18 : index
    %c0_130 = arith.constant 0 : index
    %c0_131 = arith.constant 0 : index
    %191 = vector.load %arg6[%c18, %c0_130, %c0_131] : memref<27x64x1xf32, #tpu.memory_space<vmem>>, vector<1x64x1xf32>
    %192 = vector.shape_cast %191 : vector<1x64x1xf32> to vector<64x1xf32>
    %193 = vector.broadcast %192 : vector<64x1xf32> to vector<64x16xf32>
    %194 = arith.mulf %190, %193 : vector<64x16xf32>
    %c288 = arith.constant 288 : index
    %c0_132 = arith.constant 0 : index
    %195 = vector.load %arg4[%c288, %c0_132] : memref<432x128xf32, #tpu.memory_space<vmem>>, vector<16x128xf32>
    %cst_133 = arith.constant dense<0.000000e+00> : vector<64x128xf32>
    %196 = tpu.matmul %194, %195, %cst_133 {dimension_numbers = #tpu.dot_dimension_numbers<[1], [0], [0], [1], [0, 0, 1, 1], [], []>} : vector<64x16xf32>, vector<16x128xf32>, vector<64x128xf32> -> vector<64x128xf32>
    %197 = arith.addf %189, %196 : vector<64x128xf32>
    %c36 = arith.constant 36 : index
    %c0_134 = arith.constant 0 : index
    %198 = vector.load %arg8[%c36, %c0_134] : memref<112x16xf32, #tpu.memory_space<vmem>>, vector<64x16xf32>
    %c19_135 = arith.constant 19 : index
    %c0_136 = arith.constant 0 : index
    %c0_137 = arith.constant 0 : index
    %199 = vector.load %arg6[%c19_135, %c0_136, %c0_137] : memref<27x64x1xf32, #tpu.memory_space<vmem>>, vector<1x64x1xf32>
    %200 = vector.shape_cast %199 : vector<1x64x1xf32> to vector<64x1xf32>
    %201 = vector.broadcast %200 : vector<64x1xf32> to vector<64x16xf32>
    %202 = arith.mulf %198, %201 : vector<64x16xf32>
    %c304 = arith.constant 304 : index
    %c0_138 = arith.constant 0 : index
    %203 = vector.load %arg4[%c304, %c0_138] : memref<432x128xf32, #tpu.memory_space<vmem>>, vector<16x128xf32>
    %cst_139 = arith.constant dense<0.000000e+00> : vector<64x128xf32>
    %204 = tpu.matmul %202, %203, %cst_139 {dimension_numbers = #tpu.dot_dimension_numbers<[1], [0], [0], [1], [0, 0, 1, 1], [], []>} : vector<64x16xf32>, vector<16x128xf32>, vector<64x128xf32> -> vector<64x128xf32>
    %205 = arith.addf %197, %204 : vector<64x128xf32>
    %c37 = arith.constant 37 : index
    %c0_140 = arith.constant 0 : index
    %206 = vector.load %arg8[%c37, %c0_140] : memref<112x16xf32, #tpu.memory_space<vmem>>, vector<64x16xf32>
    %c20_141 = arith.constant 20 : index
    %c0_142 = arith.constant 0 : index
    %c0_143 = arith.constant 0 : index
    %207 = vector.load %arg6[%c20_141, %c0_142, %c0_143] : memref<27x64x1xf32, #tpu.memory_space<vmem>>, vector<1x64x1xf32>
    %208 = vector.shape_cast %207 : vector<1x64x1xf32> to vector<64x1xf32>
    %209 = vector.broadcast %208 : vector<64x1xf32> to vector<64x16xf32>
    %210 = arith.mulf %206, %209 : vector<64x16xf32>
    %c320 = arith.constant 320 : index
    %c0_144 = arith.constant 0 : index
    %211 = vector.load %arg4[%c320, %c0_144] : memref<432x128xf32, #tpu.memory_space<vmem>>, vector<16x128xf32>
    %cst_145 = arith.constant dense<0.000000e+00> : vector<64x128xf32>
    %212 = tpu.matmul %210, %211, %cst_145 {dimension_numbers = #tpu.dot_dimension_numbers<[1], [0], [0], [1], [0, 0, 1, 1], [], []>} : vector<64x16xf32>, vector<16x128xf32>, vector<64x128xf32> -> vector<64x128xf32>
    %213 = arith.addf %205, %212 : vector<64x128xf32>
    %c39 = arith.constant 39 : index
    %c0_146 = arith.constant 0 : index
    %214 = vector.load %arg8[%c39, %c0_146] : memref<112x16xf32, #tpu.memory_space<vmem>>, vector<64x16xf32>
    %c21_147 = arith.constant 21 : index
    %c0_148 = arith.constant 0 : index
    %c0_149 = arith.constant 0 : index
    %215 = vector.load %arg6[%c21_147, %c0_148, %c0_149] : memref<27x64x1xf32, #tpu.memory_space<vmem>>, vector<1x64x1xf32>
    %216 = vector.shape_cast %215 : vector<1x64x1xf32> to vector<64x1xf32>
    %217 = vector.broadcast %216 : vector<64x1xf32> to vector<64x16xf32>
    %218 = arith.mulf %214, %217 : vector<64x16xf32>
    %c336 = arith.constant 336 : index
    %c0_150 = arith.constant 0 : index
    %219 = vector.load %arg4[%c336, %c0_150] : memref<432x128xf32, #tpu.memory_space<vmem>>, vector<16x128xf32>
    %cst_151 = arith.constant dense<0.000000e+00> : vector<64x128xf32>
    %220 = tpu.matmul %218, %219, %cst_151 {dimension_numbers = #tpu.dot_dimension_numbers<[1], [0], [0], [1], [0, 0, 1, 1], [], []>} : vector<64x16xf32>, vector<16x128xf32>, vector<64x128xf32> -> vector<64x128xf32>
    %221 = arith.addf %213, %220 : vector<64x128xf32>
    %c40 = arith.constant 40 : index
    %c0_152 = arith.constant 0 : index
    %222 = vector.load %arg8[%c40, %c0_152] : memref<112x16xf32, #tpu.memory_space<vmem>>, vector<64x16xf32>
    %c22 = arith.constant 22 : index
    %c0_153 = arith.constant 0 : index
    %c0_154 = arith.constant 0 : index
    %223 = vector.load %arg6[%c22, %c0_153, %c0_154] : memref<27x64x1xf32, #tpu.memory_space<vmem>>, vector<1x64x1xf32>
    %224 = vector.shape_cast %223 : vector<1x64x1xf32> to vector<64x1xf32>
    %225 = vector.broadcast %224 : vector<64x1xf32> to vector<64x16xf32>
    %226 = arith.mulf %222, %225 : vector<64x16xf32>
    %c352 = arith.constant 352 : index
    %c0_155 = arith.constant 0 : index
    %227 = vector.load %arg4[%c352, %c0_155] : memref<432x128xf32, #tpu.memory_space<vmem>>, vector<16x128xf32>
    %cst_156 = arith.constant dense<0.000000e+00> : vector<64x128xf32>
    %228 = tpu.matmul %226, %227, %cst_156 {dimension_numbers = #tpu.dot_dimension_numbers<[1], [0], [0], [1], [0, 0, 1, 1], [], []>} : vector<64x16xf32>, vector<16x128xf32>, vector<64x128xf32> -> vector<64x128xf32>
    %229 = arith.addf %221, %228 : vector<64x128xf32>
    %c41 = arith.constant 41 : index
    %c0_157 = arith.constant 0 : index
    %230 = vector.load %arg8[%c41, %c0_157] : memref<112x16xf32, #tpu.memory_space<vmem>>, vector<64x16xf32>
    %c23_158 = arith.constant 23 : index
    %c0_159 = arith.constant 0 : index
    %c0_160 = arith.constant 0 : index
    %231 = vector.load %arg6[%c23_158, %c0_159, %c0_160] : memref<27x64x1xf32, #tpu.memory_space<vmem>>, vector<1x64x1xf32>
    %232 = vector.shape_cast %231 : vector<1x64x1xf32> to vector<64x1xf32>
    %233 = vector.broadcast %232 : vector<64x1xf32> to vector<64x16xf32>
    %234 = arith.mulf %230, %233 : vector<64x16xf32>
    %c368 = arith.constant 368 : index
    %c0_161 = arith.constant 0 : index
    %235 = vector.load %arg4[%c368, %c0_161] : memref<432x128xf32, #tpu.memory_space<vmem>>, vector<16x128xf32>
    %cst_162 = arith.constant dense<0.000000e+00> : vector<64x128xf32>
    %236 = tpu.matmul %234, %235, %cst_162 {dimension_numbers = #tpu.dot_dimension_numbers<[1], [0], [0], [1], [0, 0, 1, 1], [], []>} : vector<64x16xf32>, vector<16x128xf32>, vector<64x128xf32> -> vector<64x128xf32>
    %237 = arith.addf %229, %236 : vector<64x128xf32>
    %c43 = arith.constant 43 : index
    %c0_163 = arith.constant 0 : index
    %238 = vector.load %arg8[%c43, %c0_163] : memref<112x16xf32, #tpu.memory_space<vmem>>, vector<64x16xf32>
    %c24_164 = arith.constant 24 : index
    %c0_165 = arith.constant 0 : index
    %c0_166 = arith.constant 0 : index
    %239 = vector.load %arg6[%c24_164, %c0_165, %c0_166] : memref<27x64x1xf32, #tpu.memory_space<vmem>>, vector<1x64x1xf32>
    %240 = vector.shape_cast %239 : vector<1x64x1xf32> to vector<64x1xf32>
    %241 = vector.broadcast %240 : vector<64x1xf32> to vector<64x16xf32>
    %242 = arith.mulf %238, %241 : vector<64x16xf32>
    %c384 = arith.constant 384 : index
    %c0_167 = arith.constant 0 : index
    %243 = vector.load %arg4[%c384, %c0_167] : memref<432x128xf32, #tpu.memory_space<vmem>>, vector<16x128xf32>
    %cst_168 = arith.constant dense<0.000000e+00> : vector<64x128xf32>
    %244 = tpu.matmul %242, %243, %cst_168 {dimension_numbers = #tpu.dot_dimension_numbers<[1], [0], [0], [1], [0, 0, 1, 1], [], []>} : vector<64x16xf32>, vector<16x128xf32>, vector<64x128xf32> -> vector<64x128xf32>
    %245 = arith.addf %237, %244 : vector<64x128xf32>
    %c44 = arith.constant 44 : index
    %c0_169 = arith.constant 0 : index
    %246 = vector.load %arg8[%c44, %c0_169] : memref<112x16xf32, #tpu.memory_space<vmem>>, vector<64x16xf32>
    %c25_170 = arith.constant 25 : index
    %c0_171 = arith.constant 0 : index
    %c0_172 = arith.constant 0 : index
    %247 = vector.load %arg6[%c25_170, %c0_171, %c0_172] : memref<27x64x1xf32, #tpu.memory_space<vmem>>, vector<1x64x1xf32>
    %248 = vector.shape_cast %247 : vector<1x64x1xf32> to vector<64x1xf32>
    %249 = vector.broadcast %248 : vector<64x1xf32> to vector<64x16xf32>
    %250 = arith.mulf %246, %249 : vector<64x16xf32>
    %c400 = arith.constant 400 : index
    %c0_173 = arith.constant 0 : index
    %251 = vector.load %arg4[%c400, %c0_173] : memref<432x128xf32, #tpu.memory_space<vmem>>, vector<16x128xf32>
    %cst_174 = arith.constant dense<0.000000e+00> : vector<64x128xf32>
    %252 = tpu.matmul %250, %251, %cst_174 {dimension_numbers = #tpu.dot_dimension_numbers<[1], [0], [0], [1], [0, 0, 1, 1], [], []>} : vector<64x16xf32>, vector<16x128xf32>, vector<64x128xf32> -> vector<64x128xf32>
    %253 = arith.addf %245, %252 : vector<64x128xf32>
    %c45 = arith.constant 45 : index
    %c0_175 = arith.constant 0 : index
    %254 = vector.load %arg8[%c45, %c0_175] : memref<112x16xf32, #tpu.memory_space<vmem>>, vector<64x16xf32>
    %c26 = arith.constant 26 : index
    %c0_176 = arith.constant 0 : index
    %c0_177 = arith.constant 0 : index
    %255 = vector.load %arg6[%c26, %c0_176, %c0_177] : memref<27x64x1xf32, #tpu.memory_space<vmem>>, vector<1x64x1xf32>
    %256 = vector.shape_cast %255 : vector<1x64x1xf32> to vector<64x1xf32>
    %257 = vector.broadcast %256 : vector<64x1xf32> to vector<64x16xf32>
    %258 = arith.mulf %254, %257 : vector<64x16xf32>
    %c416 = arith.constant 416 : index
    %c0_178 = arith.constant 0 : index
    %259 = vector.load %arg4[%c416, %c0_178] : memref<432x128xf32, #tpu.memory_space<vmem>>, vector<16x128xf32>
    %cst_179 = arith.constant dense<0.000000e+00> : vector<64x128xf32>
    %260 = tpu.matmul %258, %259, %cst_179 {dimension_numbers = #tpu.dot_dimension_numbers<[1], [0], [0], [1], [0, 0, 1, 1], [], []>} : vector<64x16xf32>, vector<16x128xf32>, vector<64x128xf32> -> vector<64x128xf32>
    %261 = arith.addf %253, %260 : vector<64x128xf32>
    %cst_180 = arith.constant 5.000000e-01 : f32
    %262 = vector.broadcast %cst_180 : f32 to vector<64x128xf32>
    %263 = arith.mulf %262, %261 : vector<64x128xf32>
    %cst_181 = arith.constant 2.000000e+00 : f32
    %264 = math.sqrt %cst_181 : f32
    %cst_182 = arith.constant 1.000000e+00 : f32
    %265 = arith.divf %cst_182, %264 : f32
    %266 = vector.broadcast %265 : f32 to vector<64x128xf32>
    %267 = arith.mulf %261, %266 : vector<64x128xf32>
    %268 = math.erf %267 : vector<64x128xf32>
    %cst_183 = arith.constant 1.000000e+00 : f32
    %269 = vector.broadcast %cst_183 : f32 to vector<64x128xf32>
    %270 = arith.addf %269, %268 : vector<64x128xf32>
    %271 = arith.mulf %263, %270 : vector<64x128xf32>
    %272 = tpu.iota {dimensions = array<i32: 1>} : vector<64x128xi32>
    %c32_i32 = arith.constant 32 : i32
    %273 = vector.broadcast %c32_i32 : i32 to vector<64x128xi32>
    %274 = arith.cmpi slt, %272, %273 : vector<64x128xi32>
    %c1_184 = arith.constant 1 : index
    %c0_185 = arith.constant 0 : index
    %275 = vector.load %arg5[%c1_184, %c0_185] : memref<3x128xf32, #tpu.memory_space<vmem>>, vector<1x128xf32>
    %c2_186 = arith.constant 2 : index
    %c0_187 = arith.constant 0 : index
    %276 = vector.load %arg5[%c2_186, %c0_187] : memref<3x128xf32, #tpu.memory_space<vmem>>, vector<1x128xf32>
    %cst_188 = arith.constant 0.000000e+00 : f32
    %277 = vector.broadcast %cst_188 : f32 to vector<64x128xf32>
    %278 = arith.select %274, %271, %277 : vector<64x128xi1>, vector<64x128xf32>
    %cst_189 = arith.constant dense<0.000000e+00> : vector<64xf32>
    %279 = vector.multi_reduction <add>, %278, %cst_189 [1] : vector<64x128xf32> to vector<64xf32>
    %280 = vector.shape_cast %279 : vector<64xf32> to vector<64x1xf32>
    %cst_190 = arith.constant 3.125000e-02 : f32
    %281 = vector.broadcast %cst_190 : f32 to vector<64x1xf32>
    %282 = arith.mulf %280, %281 : vector<64x1xf32>
    %283 = vector.broadcast %282 : vector<64x1xf32> to vector<64x128xf32>
    %284 = arith.subf %271, %283 : vector<64x128xf32>
    %cst_191 = arith.constant 0.000000e+00 : f32
    %285 = vector.broadcast %cst_191 : f32 to vector<64x128xf32>
    %286 = arith.select %274, %284, %285 : vector<64x128xi1>, vector<64x128xf32>
    %287 = arith.mulf %286, %286 : vector<64x128xf32>
    %cst_192 = arith.constant dense<0.000000e+00> : vector<64xf32>
    %288 = vector.multi_reduction <add>, %287, %cst_192 [1] : vector<64x128xf32> to vector<64xf32>
    %289 = vector.shape_cast %288 : vector<64xf32> to vector<64x1xf32>
    %cst_193 = arith.constant 3.125000e-02 : f32
    %290 = vector.broadcast %cst_193 : f32 to vector<64x1xf32>
    %291 = arith.mulf %289, %290 : vector<64x1xf32>
    %cst_194 = arith.constant 9.99999974E-6 : f32
    %292 = vector.broadcast %cst_194 : f32 to vector<64x1xf32>
    %293 = arith.addf %291, %292 : vector<64x1xf32>
    %294 = math.rsqrt %293 : vector<64x1xf32>
    %295 = vector.broadcast %294 : vector<64x1xf32> to vector<64x128xf32>
    %296 = arith.mulf %286, %295 : vector<64x128xf32>
    %297 = vector.broadcast %275 : vector<1x128xf32> to vector<64x128xf32>
    %298 = arith.mulf %296, %297 : vector<64x128xf32>
    %299 = vector.broadcast %276 : vector<1x128xf32> to vector<64x128xf32>
    %300 = arith.addf %298, %299 : vector<64x128xf32>
    %c0_195 = arith.constant 0 : index
    %c0_196 = arith.constant 0 : index
    %c0_197 = arith.constant 0 : index
    %301 = vector.load %arg7[%c0_195, %c0_196, %c0_197] : memref<1x64x128xf32, #tpu.memory_space<vmem>>, vector<1x64x128xf32>
    %302 = vector.shape_cast %301 : vector<1x64x128xf32> to vector<64x128xf32>
    %303 = vector.shape_cast %300 : vector<64x128xf32> to vector<1x64x128xf32>
    tpu.vector_store %arg7[%c0_195, %c0_196, %c0_197], %303 {strides = array<i32>} : memref<1x64x128xf32, #tpu.memory_space<vmem>>, vector<1x64x128xf32>,
    return
  }
  func.func @transform_0(%arg0: i32) -> (i32, i32, i32) {
    %c0_i32 = arith.constant 0 : i32
    %c0_i32_0 = arith.constant 0 : i32
    %c0_i32_1 = arith.constant 0 : i32
    return %arg0, %c0_i32, %c0_i32_0 : i32, i32, i32
  }
  func.func @transform_1(%arg0: i32) -> (i32, i32) {
    %c0_i32 = arith.constant 0 : i32
    %c0_i32_0 = arith.constant 0 : i32
    %c0_i32_1 = arith.constant 0 : i32
    return %c0_i32, %c0_i32_0 : i32, i32
  }
  func.func @transform_2(%arg0: i32) -> (i32, i32) {
    %c0_i32 = arith.constant 0 : i32
    %c0_i32_0 = arith.constant 0 : i32
    %c0_i32_1 = arith.constant 0 : i32
    return %c0_i32, %c0_i32_0 : i32, i32
  }
  func.func @transform_3(%arg0: i32) -> (i32, i32) {
    %c0_i32 = arith.constant 0 : i32
    %c0_i32_0 = arith.constant 0 : i32
    %c0_i32_1 = arith.constant 0 : i32
    return %c0_i32, %c0_i32_0 : i32, i32
  }
  func.func @transform_4(%arg0: i32) -> (i32, i32) {
    %c0_i32 = arith.constant 0 : i32
    %c0_i32_0 = arith.constant 0 : i32
    %c0_i32_1 = arith.constant 0 : i32
    return %c0_i32, %c0_i32_0 : i32, i32
  }
  func.func @transform_5(%arg0: i32) -> (i32, i32, i32) {
    %c0_i32 = arith.constant 0 : i32
    %c0_i32_0 = arith.constant 0 : i32
    %c0_i32_1 = arith.constant 0 : i32
    %c0_i32_2 = arith.constant 0 : i32
    return %c0_i32, %c0_i32_0, %c0_i32_1 : i32, i32, i32
  }
  func.func @transform_6(%arg0: i32) -> (i32, i32, i32) {
    %c0_i32 = arith.constant 0 : i32
    %c0_i32_0 = arith.constant 0 : i32
    %c0_i32_1 = arith.constant 0 : i32
    return %arg0, %c0_i32, %c0_i32_0 : i32, i32, i32
  }
}

</mosaic_0001>

<llo_original>
// kernel: tpu_custom_call.1
$region0: #{tpu_custom_call.1}
  #allocation0 [shape = 'u32[]', space=smem, size = 0x4, offset = 0x4, fixed_abs, tag = 'smem constant byte address 0x4 - core index']
  #allocation1 [shape = 'u32[144,128]{1,0:T(1,128)}', space=vmem, size = 0x12000, scoped, tag = 'internal scratch']
  #allocation2 [shape = 'f32[112,16]{1,0:T(8,128)}', space=vmem, size = 0xe000, scoped, tag = 'scratch operand']
  %s0 = inlined_call_operand.vmem [shape: f32[2,64,32], index: 0, kind: input, shape index: {}]
  %s1 = inlined_call_operand.vmem [shape: f32[32,16], index: 1, kind: input, shape index: {}]
  %s2 = inlined_call_operand.vmem [shape: f32[3,16], index: 2, kind: input, shape index: {}]
  %s3 = inlined_call_operand.vmem [shape: f32[432,128], index: 3, kind: input, shape index: {}]
  %s4 = inlined_call_operand.vmem [shape: f32[3,128], index: 4, kind: input, shape index: {}]
  %s5 = inlined_call_operand.vmem [shape: f32[27,64,1], index: 5, kind: input, shape index: {}]
  %s6 = inlined_call_operand.hbm [shape: f32[2,64,128], index: 6, kind: output, shape index: {}]
  %s7 = sld [smem:[#allocation0]]
  $region57: #{tpu_custom_call.1} parent=0
    _
  %s9 = ssub.s32 1, %s7
  %s10 = scalar_select 0, %s9, %s7
  $region1: #{tpu_custom_call.1} parent=0
    #allocation3 [shape = 'u8[65536]{0}', space=vmem, size = 0x10000, scoped, tag = 'output window, operand 0']
    #allocation4 [shape = 's32[2]{0}', space=sflag, size = 0x8, scoped, tag = 'scoped memory for tpu_custom_call.1']
    %11 = vsyncpa [#allocation4], 0
    %s12 = scalar_lea.sflag [#allocation4], 1
    %13 = vsyncpa %s12, 0
    loop: start=0, step=1, limit=4
    $region2: #{tpu_custom_call.1} parent=1 // loop_pre_header
      _
    $region3: #{tpu_custom_call.1} parent=1 // loop_header
      %s15 = sphi 0, %s19
      %p16 = scmp.ge.s32.totalorder %s15, 4
      %s25 = sphi 0, %s27
      %s28 = sphi 0, %s25
      %s29 = sphi 0, %s28
      %s45 = sphi 0, %s29
      %s49 = sphi 0, %s49
      %s51 = sphi 0, %s49
      %s52 = sphi 0, %s51
      %s66 = sphi 0, %s52
      %s70 = sphi 0, %s70
      %s72 = sphi 0, %s70
      %s73 = sphi 0, %s72
      %s87 = sphi 0, %s73
      %s91 = sphi 0, %s91
      %s93 = sphi 0, %s91
      %s94 = sphi 0, %s93
      %s108 = sphi 0, %s94
      %s112 = sphi 0, %s112
      %s114 = sphi 0, %s112
      %s115 = sphi 0, %s114
      %s129 = sphi 0, %s115
      %s133 = sphi 0, %s133
      %s135 = sphi 0, %s133
      %s136 = sphi 0, %s135
      %s150 = sphi 0, %s136
      %s156 = sphi 0, %s158
      %s159 = sphi 0, %s156
      %s160 = sphi 0, %s159
      %s176 = sphi 0, %s160
    $region4: #{tpu_custom_call.1} parent=1 // loop_header_branch
      %18 = sbr.rel (%p16) target = $region8
    $region5: #{tpu_custom_call.1} parent=1 // loop_body
      %s20 = ssub.s32 %s15, 1
      %s21 = ssub.s32 %s15, 2
      %s22 = sadd.s32 %s15, 1
      %s23 = ssub.s32 %s15, %s22
      %p24 = scmp.eq.s32.totalorder %s23, 0
      %s26 = sadd.s32 %s25, 1
      %s27 = scalar_select %p24, %s25, %s26
      %p30 = pneg %p24
      %p31 = scmp.eq.s32.totalorder %s15, 1
      %p32 = por %p30, %p31
      %p33 = scmp.ne.s32.totalorder %s25, %s28
      %p34 = scmp.eq.s32.totalorder %s15, 0
      %p35 = por %p33, %p34
      %p36 = scmp.ne.s32.totalorder %s25, %s28
      %p37 = scmp.eq.s32.totalorder %s20, 1
      %p38 = por %p36, %p37
      %p39 = scmp.ne.s32.totalorder %s28, %s29
      %p40 = scmp.eq.s32.totalorder %s20, 0
      %p41 = por %p39, %p40
      %p42 = scmp.ne.s32.totalorder %s28, %s29
      %p43 = scmp.eq.s32.totalorder %s21, 1
      %p44 = por %p42, %p43
      %p46 = scmp.ne.s32.totalorder %s29, %s45
      %p47 = scmp.eq.s32.totalorder %s21, 0
      %p48 = por %p46, %p47
      %s50 = sadd.s32 %s49, 1
      %p53 = scmp.eq.s32.totalorder %s15, 1
      %p54 = scmp.ne.s32.totalorder %s49, %s51
      %p55 = scmp.eq.s32.totalorder %s15, 0
      %p56 = por %p54, %p55
      %p57 = scmp.ne.s32.totalorder %s49, %s51
      %p58 = scmp.eq.s32.totalorder %s20, 1
      %p59 = por %p57, %p58
      %p60 = scmp.ne.s32.totalorder %s51, %s52
      %p61 = scmp.eq.s32.totalorder %s20, 0
      %p62 = por %p60, %p61
      %p63 = scmp.ne.s32.totalorder %s51, %s52
      %p64 = scmp.eq.s32.totalorder %s21, 1
      %p65 = por %p63, %p64
      %p67 = scmp.ne.s32.totalorder %s52, %s66
      %p68 = scmp.eq.s32.totalorder %s21, 0
      %p69 = por %p67, %p68
      %s71 = sadd.s32 %s70, 1
      %p74 = scmp.eq.s32.totalorder %s15, 1
      %p75 = scmp.ne.s32.totalorder %s70, %s72
      %p76 = scmp.eq.s32.totalorder %s15, 0
      %p77 = por %p75, %p76
      %p78 = scmp.ne.s32.totalorder %s70, %s72
      %p79 = scmp.eq.s32.totalorder %s20, 1
      %p80 = por %p78, %p79
      %p81 = scmp.ne.s32.totalorder %s72, %s73
      %p82 = scmp.eq.s32.totalorder %s20, 0
      %p83 = por %p81, %p82
      %p84 = scmp.ne.s32.totalorder %s72, %s73
      %p85 = scmp.eq.s32.totalorder %s21, 1
      %p86 = por %p84, %p85
      %p88 = scmp.ne.s32.totalorder %s73, %s87
      %p89 = scmp.eq.s32.totalorder %s21, 0
      %p90 = por %p88, %p89
      %s92 = sadd.s32 %s91, 1
      %p95 = scmp.eq.s32.totalorder %s15, 1
      %p96 = scmp.ne.s32.totalorder %s91, %s93
      %p97 = scmp.eq.s32.totalorder %s15, 0
      %p98 = por %p96, %p97
      %p99 = scmp.ne.s32.totalorder %s91, %s93
      %p100 = scmp.eq.s32.totalorder %s20, 1
      %p101 = por %p99, %p100
      %p102 = scmp.ne.s32.totalorder %s93, %s94
      %p103 = scmp.eq.s32.totalorder %s20, 0
      %p104 = por %p102, %p103
      %p105 = scmp.ne.s32.totalorder %s93, %s94
      %p106 = scmp.eq.s32.totalorder %s21, 1
      %p107 = por %p105, %p106
      %p109 = scmp.ne.s32.totalorder %s94, %s108
      %p110 = scmp.eq.s32.totalorder %s21, 0
      %p111 = por %p109, %p110
      %s113 = sadd.s32 %s112, 1
      %p116 = scmp.eq.s32.totalorder %s15, 1
      %p117 = scmp.ne.s32.totalorder %s112, %s114
      %p118 = scmp.eq.s32.totalorder %s15, 0
      %p119 = por %p117, %p118
      %p120 = scmp.ne.s32.totalorder %s112, %s114
      %p121 = scmp.eq.s32.totalorder %s20, 1
      %p122 = por %p120, %p121
      %p123 = scmp.ne.s32.totalorder %s114, %s115
      %p124 = scmp.eq.s32.totalorder %s20, 0
      %p125 = por %p123, %p124
      %p126 = scmp.ne.s32.totalorder %s114, %s115
      %p127 = scmp.eq.s32.totalorder %s21, 1
      %p128 = por %p126, %p127
      %p130 = scmp.ne.s32.totalorder %s115, %s129
      %p131 = scmp.eq.s32.totalorder %s21, 0
      %p132 = por %p130, %p131
      %s134 = sadd.s32 %s133, 1
      %p137 = scmp.eq.s32.totalorder %s15, 1
      %p138 = scmp.ne.s32.totalorder %s133, %s135
      %p139 = scmp.eq.s32.totalorder %s15, 0
      %p140 = por %p138, %p139
      %p141 = scmp.ne.s32.totalorder %s133, %s135
      %p142 = scmp.eq.s32.totalorder %s20, 1
      %p143 = por %p141, %p142
      %p144 = scmp.ne.s32.totalorder %s135, %s136
      %p145 = scmp.eq.s32.totalorder %s20, 0
      %p146 = por %p144, %p145
      %p147 = scmp.ne.s32.totalorder %s135, %s136
      %p148 = scmp.eq.s32.totalorder %s21, 1
      %p149 = por %p147, %p148
      %p151 = scmp.ne.s32.totalorder %s136, %s150
      %p152 = scmp.eq.s32.totalorder %s21, 0
      %p153 = por %p151, %p152
      %s154 = ssub.s32 %s15, %s22
      %p155 = scmp.eq.s32.totalorder %s154, 0
      %s157 = sadd.s32 %s156, 1
      %s158 = scalar_select %p155, %s156, %s157
      %p161 = pneg %p155
      %p162 = scmp.eq.s32.totalorder %s15, 1
      %p163 = por %p161, %p162
      %p164 = scmp.ne.s32.totalorder %s156, %s159
      %p165 = scmp.eq.s32.totalorder %s15, 0
      %p166 = por %p164, %p165
      %p167 = scmp.ne.s32.totalorder %s156, %s159
      %p168 = scmp.eq.s32.totalorder %s20, 1
      %p169 = por %p167, %p168
      %p170 = scmp.ne.s32.totalorder %s159, %s160
      %p171 = scmp.eq.s32.totalorder %s20, 0
      %p172 = por %p170, %p171
      %p173 = scmp.ne.s32.totalorder %s159, %s160
      %p174 = scmp.eq.s32.totalorder %s21, 1
      %p175 = por %p173, %p174
      %p177 = scmp.ne.s32.totalorder %s160, %s176
      %p178 = scmp.eq.s32.totalorder %s21, 0
      %p179 = por %p177, %p178
      %p180 = scmp.le.s32.totalorder 1, %s15
      %p181 = scmp.lt.s32.totalorder %s15, 3
      %p182 = pnand %p180, %p181
      %p183 = pneg %p182
      // Predicated region
      $region9: #{tpu_custom_call.1} parent=5 // pred_check
        _
      $region10: #{tpu_custom_call.1} parent=5 // pred_check_branch
        %185 = sbr.rel (%p182) target = $region12
      $region11: #{tpu_custom_call.1} parent=5 // pred_region
        %s186 = ssub.s32 %s15, 1
        // Predicated region
        $region13: #{tpu_custom_call.1} parent=11 // pred_check
          %p187 = pneg %p62
        $region14: #{tpu_custom_call.1} parent=11 // pred_check_branch
          %189 = sbr.rel (%p187) target = $region16
        $region15: #{tpu_custom_call.1} parent=11 // pred_region
          _
        $region16: #{tpu_custom_call.1} parent=11 // pred_fallthru
          _
        // Predicated region
        $region17: #{tpu_custom_call.1} parent=11 // pred_check
          %p190 = pneg %p83
        $region18: #{tpu_custom_call.1} parent=11 // pred_check_branch
          %192 = sbr.rel (%p190) target = $region20
        $region19: #{tpu_custom_call.1} parent=11 // pred_region
          _
        $region20: #{tpu_custom_call.1} parent=11 // pred_fallthru
          _
        // Predicated region
        $region21: #{tpu_custom_call.1} parent=11 // pred_check
          %p193 = pneg %p104
        $region22: #{tpu_custom_call.1} parent=11 // pred_check_branch
          %195 = sbr.rel (%p193) target = $region24
        $region23: #{tpu_custom_call.1} parent=11 // pred_region
          _
        $region24: #{tpu_custom_call.1} parent=11 // pred_fallthru
          _
        // Predicated region
        $region25: #{tpu_custom_call.1} parent=11 // pred_check
          %p196 = pneg %p125
        $region26: #{tpu_custom_call.1} parent=11 // pred_check_branch
          %198 = sbr.rel (%p196) target = $region28
        $region27: #{tpu_custom_call.1} parent=11 // pred_region
          _
        $region28: #{tpu_custom_call.1} parent=11 // pred_fallthru
          _
        // Predicated region
        $region29: #{tpu_custom_call.1} parent=11 // pred_check
          %p199 = pneg %p146
        $region30: #{tpu_custom_call.1} parent=11 // pred_check_branch
          %201 = sbr.rel (%p199) target = $region32
        $region31: #{tpu_custom_call.1} parent=11 // pred_region
          _
        $region32: #{tpu_custom_call.1} parent=11 // pred_fallthru
          _
      $region12: #{tpu_custom_call.1} parent=5 // pred_fallthru
        _
      %p202 = scmp.lt.s32.totalorder %s15, 2
      // Predicated region
      $region33: #{tpu_custom_call.1} parent=5 // pred_check
        %p203 = pneg %p202
      $region34: #{tpu_custom_call.1} parent=5 // pred_check_branch
        %205 = sbr.rel (%p203) target = $region36
      $region35: #{tpu_custom_call.1} parent=5 // pred_region
        // Predicated region
        $region37: #{tpu_custom_call.1} parent=35 // pred_check
          %p206 = pneg %p35
        $region38: #{tpu_custom_call.1} parent=35 // pred_check_branch
          %208 = sbr.rel (%p206) target = $region40
        $region39: #{tpu_custom_call.1} parent=35 // pred_region
          %p209 = scmp.lt.s32.totalorder %s15, 1
          %s210 = scalar_select %p209, %s15, 1
          %s211 = smul.addr %s210, 8
          %s212 = smul.addr %s211, 8
          %s213 = scalar_lea.vmem %s0, %s212
        $region40: #{tpu_custom_call.1} parent=35 // pred_fallthru
          _
      $region36: #{tpu_custom_call.1} parent=5 // pred_fallthru
        _
      %p214 = scmp.le.s32.totalorder 1, %s15
      %p215 = scmp.lt.s32.totalorder %s15, 3
      %p216 = pnand %p214, %p215
      %p217 = pneg %p216
      // Predicated region
      $region41: #{tpu_custom_call.1} parent=5 // pred_check
        _
      $region42: #{tpu_custom_call.1} parent=5 // pred_check_branch
        %219 = sbr.rel (%p216) target = $region44
      $region43: #{tpu_custom_call.1} parent=5 // pred_region
        %s220 = ssub.s32 %s15, 1
        %p221 = scmp.lt.s32.totalorder %s20, 1
        %s222 = scalar_select %p221, %s20, 1
        %s223 = smul.addr %s222, 8
        %s224 = smul.addr %s223, 8
        %s225 = scalar_lea.vmem %s0, %s224
        %p226 = pneg %p41
        %p227 = pneg %p38
        %p228 = pneg %p62
        %p229 = pneg %p59
        %p230 = pneg %p83
        %p231 = pneg %p80
        %p232 = pneg %p104
        %p233 = pneg %p101
        %p234 = pneg %p125
        %p235 = pneg %p122
        %p236 = pneg %p146
        %p237 = pneg %p143
        %p238 = pneg %p172
        %p239 = pneg %p169
        %s240 = sand.u32 %s159, 1
        %s241 = scalar_lea.sflag [#allocation4], %s240
        %s242 = sand.u32 %s159, 1
        %s243 = smul.addr %s242, 64
        %s244 = scalar_lea.vmem [#allocation3], %s243
        %p245 = scmp.lt.s32.totalorder %s20, 1
        %s246 = scalar_select %p245, %s20, 1
        %s247 = smul.addr %s246, 8
        %s248 = smul.addr %s247, 8
        %s249 = scalar_lea.vmem %s0, %s248
        %v250 = vld [vmem:[%s2] sm:$0x1]
        %v251 = vld [vmem:[%s2 + $0x1] sm:$0x1]
        %v252 = vld [vmem:[%s2 + $0x2] sm:$0x1]
        %v253 = vld [vmem:[%s249] sm:$0xff]
        %v254 = vld [vmem:[%s249 + $0x8] sm:$0xff]
        %v255 = vld [vmem:[%s249 + $0x10] sm:$0xff]
        %v256 = vld [vmem:[%s249 + $0x18] sm:$0xff]
        %v257 = vld [vmem:[%s249 + $0x20] sm:$0xff]
        %v258 = vld [vmem:[%s249 + $0x28] sm:$0xff]
        %v259 = vld [vmem:[%s249 + $0x30] sm:$0xff]
        %v260 = vld [vmem:[%s249 + $0x38] sm:$0xff]
        %v261 = vld [vmem:[%s1] sm:$0xff]
        %v262 = vld [vmem:[%s1 + $0x8] sm:$0xff]
        %v263 = vld [vmem:[%s1 + $0x10] sm:$0xff]
        %v264 = vld [vmem:[%s1 + $0x18] sm:$0xff]
        %v265 = vlaneseq
        %v266 = vshrl.u32 %v265, 7
        %v267 = vsub.s32 0, %v266
        %v268 = vrot.slane %v250, %v267
        %vm269 = vcmask 261120
        %v271 = vsel %vm269, %v253, 0
        %v274 = vsel %vm269, %v254, 0
        %v277 = vsel %vm269, %v255, 0
        %v280 = vsel %vm269, %v256, 0
        %v283 = vsel %vm269, %v257, 0
        %v286 = vsel %vm269, %v258, 0
        %v289 = vsel %vm269, %v259, 0
        %v292 = vsel %vm269, %v260, 0
        %294 = vmatprep.subr.mxu0 0.0
        %295 = vmatpush1.msra.mxu0 %v261
        %296 = vmatprep.subr.mxu0 0.0
        %297 = vmatpush1.msra.mxu0 %v262
        %298 = vmatprep.subr.mxu0 0.0
        %299 = vmatpush1.msra.mxu0 %v263
        %300 = vmatprep.subr.mxu0 0.0
        %301 = vmatpush1.msra.mxu0 %v264
        %302 = vmatprep.subr.mxu0 0.0
        %303 = vmatpush1.msra.mxu0 0.0
        %304 = vmatprep.subr.mxu0 0.0
        %305 = vmatpush1.msra.mxu0 0.0
        %306 = vmatprep.subr.mxu0 0.0
        %307 = vmatpush1.msra.mxu0 0.0
        %308 = vmatprep.subr.mxu0 0.0
        %309 = vmatpush1.msra.mxu0 0.0
        %310 = vmatprep.subr.mxu0 0.0
        %311 = vmatpush1.msra.mxu0 0.0
        %312 = vmatprep.subr.mxu0 0.0
        %313 = vmatpush1.msra.mxu0 0.0
        %314 = vmatprep.subr.mxu0 0.0
        %315 = vmatpush1.msra.mxu0 0.0
        %316 = vmatprep.subr.mxu0 0.0
        %317 = vmatpush1.msra.mxu0 0.0
        %318 = vmatprep.subr.mxu0 0.0
        %319 = vmatpush1.msra.mxu0 0.0
        %320 = vmatprep.subr.mxu0 0.0
        %321 = vmatpush1.msra.mxu0 0.0
        %322 = vmatprep.subr.mxu0 0.0
        %323 = vmatpush1.msra.mxu0 0.0
        %324 = vmatprep.subr.mxu0 0.0
        %325 = vmatpush1.msra.mxu0 0.0
        %326 = vmatprep.subr.mxu0 0.0
        %327 = vmatpush1.msra.mxu0 0.0
        %328 = vmatprep.subr.mxu0 0.0
        %329 = vmatpush1.msra.mxu0 0.0
        %330 = vmatprep.subr.mxu0 0.0
        %331 = vmatpush1.msra.mxu0 0.0
        %332 = vmatprep.subr.mxu0 0.0
        %333 = vmatpush1.msra.mxu0 0.0
        %334 = vmatprep.subr.mxu0 0.0
        %335 = vmatpush1.msra.mxu0 0.0
        %336 = vmatprep.subr.mxu0 0.0
        %337 = vmatpush1.msra.mxu0 0.0
        %338 = vmatprep.subr.mxu0 0.0
        %339 = vmatpush1.msra.mxu0 0.0
        %340 = vmatprep.subr.mxu0 0.0
        %341 = vmatpush1.msra.mxu0 0.0
        %342 = vmatprep.subr.mxu0 0.0
        %343 = vmatpush1.msra.mxu0 0.0
        %344 = vmatprep.subr.mxu0 0.0
        %345 = vmatpush1.msra.mxu0 0.0
        %346 = vmatprep.subr.mxu0 0.0
        %347 = vmatpush1.msra.mxu0 0.0
        %348 = vmatprep.subr.mxu0 0.0
        %349 = vmatpush1.msra.mxu0 0.0
        %350 = vmatprep.subr.mxu0 0.0
        %351 = vmatpush1.msra.mxu0 0.0
        %352 = vmatprep.subr.mxu0 0.0
        %353 = vmatpush1.msra.mxu0 0.0
        %354 = vmatprep.subr.mxu0 0.0
        %355 = vmatpush1.msra.mxu0 0.0
        %356 = vmatprep.subr.mxu0 0.0
        %357 = vmatpush1.msra.mxu0 0.0
        %358 = vmatprep.mubr.f32.mxu0 0.0
        %359 = vmatmul.mubr.f32.gmra.mrb[0].mxu0 %v271
        %v360 = vpop.f32.mrb[0].mxu0
        %v361 = vadd.f32 %v268, %v360
        %v362 = vpop.f32.mrb[0].mxu0
        %363 = vmatprep.mubr.f32.mxu0 0.0
        %364 = vmatmul.mubr.f32.gmra.mrb[0].mxu0 %v274
        %v365 = vpop.f32.mrb[0].mxu0
        %v366 = vadd.f32 %v268, %v365
        %v367 = vpop.f32.mrb[0].mxu0
        %368 = vmatprep.mubr.f32.mxu0 0.0
        %369 = vmatmul.mubr.f32.gmra.mrb[0].mxu0 %v277
        %v370 = vpop.f32.mrb[0].mxu0
        %v371 = vadd.f32 %v268, %v370
        %v372 = vpop.f32.mrb[0].mxu0
        %373 = vmatprep.mubr.f32.mxu0 0.0
        %374 = vmatmul.mubr.f32.gmra.mrb[0].mxu0 %v280
        %v375 = vpop.f32.mrb[0].mxu0
        %v376 = vadd.f32 %v268, %v375
        %v377 = vpop.f32.mrb[0].mxu0
        %378 = vmatprep.mubr.f32.mxu0 0.0
        %379 = vmatmul.mubr.f32.gmra.mrb[0].mxu0 %v283
        %v380 = vpop.f32.mrb[0].mxu0
        %v381 = vadd.f32 %v268, %v380
        %v382 = vpop.f32.mrb[0].mxu0
        %383 = vmatprep.mubr.f32.mxu0 0.0
        %384 = vmatmul.mubr.f32.gmra.mrb[0].mxu0 %v286
        %v385 = vpop.f32.mrb[0].mxu0
        %v386 = vadd.f32 %v268, %v385
        %v387 = vpop.f32.mrb[0].mxu0
        %388 = vmatprep.mubr.f32.mxu0 0.0
        %389 = vmatmul.mubr.f32.gmra.mrb[0].mxu0 %v289
        %v390 = vpop.f32.mrb[0].mxu0
        %v391 = vadd.f32 %v268, %v390
        %v392 = vpop.f32.mrb[0].mxu0
        %393 = vmatprep.mubr.f32.mxu0 0.0
        %394 = vmatmul.mubr.f32.gmra.mrb[0].mxu0 %v292
        %v395 = vpop.f32.mrb[0].mxu0
        %v396 = vadd.f32 %v268, %v395
        %v397 = vpop.f32.mrb[0].mxu0
        %398 = vdwg.mxu0
        %v399 = vmul.f32 %v361, 0.5
        %v400 = vmul.f32 %v366, 0.5
        %v401 = vmul.f32 %v371, 0.5
        %v402 = vmul.f32 %v376, 0.5
        %v403 = vmul.f32 %v381, 0.5
        %v404 = vmul.f32 %v386, 0.5
        %v405 = vmul.f32 %v391, 0.5
        %v406 = vmul.f32 %v396, 0.5
        %v407 = vmul.f32 %v361, 0.70710677
        %v408 = vmul.f32 %v366, 0.70710677
        %v409 = vmul.f32 %v371, 0.70710677
        %v410 = vmul.f32 %v376, 0.70710677
        %v411 = vmul.f32 %v381, 0.70710677
        %v412 = vmul.f32 %v386, 0.70710677
        %v413 = vmul.f32 %v391, 0.70710677
        %v414 = vmul.f32 %v396, 0.70710677
        %v415 = verf.f32.pop %v407
        %v416 = verf.f32.pop %v408
        %v417 = verf.f32.pop %v409
        %v418 = verf.f32.pop %v410
        %v419 = verf.f32.pop %v411
        %v420 = verf.f32.pop %v412
        %v421 = verf.f32.pop %v413
        %v422 = verf.f32.pop %v414
        %v423 = vadd.f32 %v415, 1.0
        %v424 = vadd.f32 %v416, 1.0
        %v425 = vadd.f32 %v417, 1.0
        %v426 = vadd.f32 %v418, 1.0
        %v427 = vadd.f32 %v419, 1.0
        %v428 = vadd.f32 %v420, 1.0
        %v429 = vadd.f32 %v421, 1.0
        %v430 = vadd.f32 %v422, 1.0
        %v431 = vmul.f32 %v399, %v423
        %v432 = vmul.f32 %v400, %v424
        %v433 = vmul.f32 %v401, %v425
        %v434 = vmul.f32 %v402, %v426
        %v435 = vmul.f32 %v403, %v427
        %v436 = vmul.f32 %v404, %v428
        %v437 = vmul.f32 %v405, %v429
        %v438 = vmul.f32 %v406, %v430
        %vm439 = vcmask 130048
        %v440 = vsel %vm439, %v431, 0.0
        %441 = vadd.xlane.f32.xlu0 %v440
        %v442 = vpop.xlane.xlu0 %441
        %v443 = vsel %vm439, %v432, 0.0
        %444 = vadd.xlane.f32.xlu0 %v443
        %v445 = vpop.xlane.xlu0 %444
        %v446 = vsel %vm439, %v433, 0.0
        %447 = vadd.xlane.f32.xlu0 %v446
        %v448 = vpop.xlane.xlu0 %447
        %v449 = vsel %vm439, %v434, 0.0
        %450 = vadd.xlane.f32.xlu0 %v449
        %v451 = vpop.xlane.xlu0 %450
        %v452 = vsel %vm439, %v435, 0.0
        %453 = vadd.xlane.f32.xlu0 %v452
        %v454 = vpop.xlane.xlu0 %453
        %v455 = vsel %vm439, %v436, 0.0
        %456 = vadd.xlane.f32.xlu0 %v455
        %v457 = vpop.xlane.xlu0 %456
        %v458 = vsel %vm439, %v437, 0.0
        %459 = vadd.xlane.f32.xlu0 %v458
        %v460 = vpop.xlane.xlu0 %459
        %v461 = vsel %vm439, %v438, 0.0
        %462 = vadd.xlane.f32.xlu0 %v461
        %v463 = vpop.xlane.xlu0 %462
        %v464 = vrcp.pop 16.0
        %v465 = vmul.f32 %v442, %v464
        %v466 = vmul.f32 %v445, %v464
        %v467 = vmul.f32 %v448, %v464
        %v468 = vmul.f32 %v451, %v464
        %v469 = vmul.f32 %v454, %v464
        %v470 = vmul.f32 %v457, %v464
        %v471 = vmul.f32 %v460, %v464
        %v472 = vmul.f32 %v463, %v464
        %v473 = vsub.f32 %v431, %v465
        %v474 = vsub.f32 %v432, %v466
        %v475 = vsub.f32 %v433, %v467
        %v476 = vsub.f32 %v434, %v468
        %v477 = vsub.f32 %v435, %v469
        %v478 = vsub.f32 %v436, %v470
        %v479 = vsub.f32 %v437, %v471
        %v480 = vsub.f32 %v438, %v472
        %v481 = vmul.f32 %v473, %v473
        %v482 = vmul.f32 %v474, %v474
        %v483 = vmul.f32 %v475, %v475
        %v484 = vmul.f32 %v476, %v476
        %v485 = vmul.f32 %v477, %v477
        %v486 = vmul.f32 %v478, %v478
        %v487 = vmul.f32 %v479, %v479
        %v488 = vmul.f32 %v480, %v480
        %v489 = vsel %vm439, %v481, 0.0
        %490 = vadd.xlane.f32.xlu0 %v489
        %v491 = vpop.xlane.xlu0 %490
        %v492 = vsel %vm439, %v482, 0.0
        %493 = vadd.xlane.f32.xlu0 %v492
        %v494 = vpop.xlane.xlu0 %493
        %v495 = vsel %vm439, %v483, 0.0
        %496 = vadd.xlane.f32.xlu0 %v495
        %v497 = vpop.xlane.xlu0 %496
        %v498 = vsel %vm439, %v484, 0.0
        %499 = vadd.xlane.f32.xlu0 %v498
        %v500 = vpop.xlane.xlu0 %499
        %v501 = vsel %vm439, %v485, 0.0
        %502 = vadd.xlane.f32.xlu0 %v501
        %v503 = vpop.xlane.xlu0 %502
        %v504 = vsel %vm439, %v486, 0.0
        %505 = vadd.xlane.f32.xlu0 %v504
        %v506 = vpop.xlane.xlu0 %505
        %v507 = vsel %vm439, %v487, 0.0
        %508 = vadd.xlane.f32.xlu0 %v507
        %v509 = vpop.xlane.xlu0 %508
        %v510 = vsel %vm439, %v488, 0.0
        %511 = vadd.xlane.f32.xlu0 %v510
        %v512 = vpop.xlane.xlu0 %511
        %v513 = vmul.f32 %v491, %v464
        %v514 = vmul.f32 %v494, %v464
        %v515 = vmul.f32 %v497, %v464
        %v516 = vmul.f32 %v500, %v464
        %v517 = vmul.f32 %v503, %v464
        %v518 = vmul.f32 %v506, %v464
        %v519 = vmul.f32 %v509, %v464
        %v520 = vmul.f32 %v512, %v464
        %v521 = vadd.f32 %v513, 1e-05
        %v522 = vadd.f32 %v514, 1e-05
        %v523 = vadd.f32 %v515, 1e-05
        %v524 = vadd.f32 %v516, 1e-05
        %v525 = vadd.f32 %v517, 1e-05
        %v526 = vadd.f32 %v518, 1e-05
        %v527 = vadd.f32 %v519, 1e-05
        %v528 = vadd.f32 %v520, 1e-05
        %v529 = vrsqrt.pop %v521
        %v530 = vrsqrt.pop %v522
        %v531 = vrsqrt.pop %v523
        %v532 = vrsqrt.pop %v524
        %v533 = vrsqrt.pop %v525
        %v534 = vrsqrt.pop %v526
        %v535 = vrsqrt.pop %v527
        %v536 = vrsqrt.pop %v528
        %v537 = vmul.f32 %v473, %v529
        %v538 = vmul.f32 %v474, %v530
        %v539 = vmul.f32 %v475, %v531
        %v540 = vmul.f32 %v476, %v532
        %v541 = vmul.f32 %v477, %v533
        %v542 = vmul.f32 %v478, %v534
        %v543 = vmul.f32 %v479, %v535
        %v544 = vmul.f32 %v480, %v536
        %v545 = vlaneseq
        %v546 = vshrl.u32 %v545, 7
        %v547 = vsub.s32 0, %v546
        %v548 = vrot.slane %v251, %v547
        %v549 = vmul.f32 %v537, %v548
        %v550 = vmul.f32 %v538, %v548
        %v551 = vmul.f32 %v539, %v548
        %v552 = vmul.f32 %v540, %v548
        %v553 = vmul.f32 %v541, %v548
        %v554 = vmul.f32 %v542, %v548
        %v555 = vmul.f32 %v543, %v548
        %v556 = vmul.f32 %v544, %v548
        %v557 = vlaneseq
        %v558 = vshrl.u32 %v557, 7
        %v559 = vsub.s32 0, %v558
        %v560 = vrot.slane %v252, %v559
        %v561 = vadd.f32 %v549, %v560
        %v562 = vadd.f32 %v550, %v560
        %v563 = vadd.f32 %v551, %v560
        %v564 = vadd.f32 %v552, %v560
        %v565 = vadd.f32 %v553, %v560
        %v566 = vadd.f32 %v554, %v560
        %v567 = vadd.f32 %v555, %v560
        %v568 = vadd.f32 %v556, %v560
        %569 = vst.msk [vmem:[#allocation2] sm:$0xff] %vm439, 0.0
        %570 = vst.msk [vmem:[#allocation2 + $0x8] sm:$0xff] %vm439, 0.0
        %571 = vst.msk [vmem:[#allocation2 + $0x10] sm:$0xff] %vm439, 0.0
        %572 = vst.msk [vmem:[#allocation2 + $0x18] sm:$0xff] %vm439, 0.0
        %573 = vst.msk [vmem:[#allocation2 + $0x20] sm:$0xff] %vm439, 0.0
        %574 = vst.msk [vmem:[#allocation2 + $0x28] sm:$0xff] %vm439, 0.0
        %575 = vst.msk [vmem:[#allocation2 + $0x30] sm:$0xff] %vm439, 0.0
        %576 = vst.msk [vmem:[#allocation2 + $0x38] sm:$0xff] %vm439, 0.0
        %577 = vst.msk [vmem:[#allocation2 + $0x40] sm:$0xff] %vm439, 0.0
        %578 = vst.msk [vmem:[#allocation2 + $0x48] sm:$0xff] %vm439, 0.0
        %579 = vst.msk [vmem:[#allocation2 + $0x50] sm:$0xff] %vm439, 0.0
        %580 = vst.msk [vmem:[#allocation2 + $0x58] sm:$0xff] %vm439, 0.0
        %581 = vst.msk [vmem:[#allocation2 + $0x60] sm:$0xff] %vm439, 0.0
        %582 = vst.msk [vmem:[#allocation2 + $0x68] sm:$0xff] %vm439, 0.0
        %583 = vst.msk [vmem:[#allocation2 + $0x18] sm:$0xff] %vm439, %v561
        %584 = vst.msk [vmem:[#allocation2 + $0x20] sm:$0xff] %vm439, %v562
        %585 = vst.msk [vmem:[#allocation2 + $0x28] sm:$0xff] %vm439, %v563
        %586 = vst.msk [vmem:[#allocation2 + $0x30] sm:$0xff] %vm439, %v564
        %587 = vst.msk [vmem:[#allocation2 + $0x38] sm:$0xff] %vm439, %v565
        %588 = vst.msk [vmem:[#allocation2 + $0x40] sm:$0xff] %vm439, %v566
        %589 = vst.msk [vmem:[#allocation2 + $0x48] sm:$0xff] %vm439, %v567
        %590 = vst.msk [vmem:[#allocation2 + $0x50] sm:$0xff] %vm439, %v568
        %v591 = vld [vmem:[%s4] sm:$0x1]
        %v592 = vlaneseq
        %v593 = vshrl.u32 %v592, 7
        %v594 = vsub.s32 0, %v593
        %v595 = vrot.slane %v591, %v594
        %v596 = vadd.f32 %v595, 0.0
        %v597 = vld [vmem:[#allocation2 + $0x3] sm:$0xff]
        %v598 = vld [vmem:[#allocation2 + $0xb] sm:$0xff]
        %v599 = vld [vmem:[#allocation2 + $0x13] sm:$0xff]
        %v600 = vld [vmem:[#allocation2 + $0x1b] sm:$0xff]
        %v601 = vld [vmem:[#allocation2 + $0x23] sm:$0xff]
        %v602 = vld [vmem:[#allocation2 + $0x2b] sm:$0xff]
        %v603 = vld [vmem:[#allocation2 + $0x33] sm:$0xff]
        %v604 = vld [vmem:[#allocation2 + $0x3b] sm:$0xff]
        %v605 = vld [vmem:[%s5] sm:$0xff]
        %v606 = vld [vmem:[%s5 + $0x8] sm:$0xff]
        %v607 = vld [vmem:[%s5 + $0x10] sm:$0xff]
        %v608 = vld [vmem:[%s5 + $0x18] sm:$0xff]
        %v609 = vld [vmem:[%s5 + $0x20] sm:$0xff]
        %v610 = vld [vmem:[%s5 + $0x28] sm:$0xff]
        %v611 = vld [vmem:[%s5 + $0x30] sm:$0xff]
        %v612 = vld [vmem:[%s5 + $0x38] sm:$0xff]
        %614 = vset.pattern.permute.xlu0 0
        %615 = vperm.xlu0 %614, %v605
        %v616 = vpop.permute.xlu0 %615
        %619 = vset.pattern.permute.xlu0 0
        %620 = vperm.xlu0 %619, %v606
        %v621 = vpop.permute.xlu0 %620
        %624 = vset.pattern.permute.xlu0 0
        %625 = vperm.xlu0 %624, %v607
        %v626 = vpop.permute.xlu0 %625
        %629 = vset.pattern.permute.xlu0 0
        %630 = vperm.xlu0 %629, %v608
        %v631 = vpop.permute.xlu0 %630
        %634 = vset.pattern.permute.xlu0 0
        %635 = vperm.xlu0 %634, %v609
        %v636 = vpop.permute.xlu0 %635
        %639 = vset.pattern.permute.xlu0 0
        %640 = vperm.xlu0 %639, %v610
        %v641 = vpop.permute.xlu0 %640
        %644 = vset.pattern.permute.xlu0 0
        %645 = vperm.xlu0 %644, %v611
        %v646 = vpop.permute.xlu0 %645
        %649 = vset.pattern.permute.xlu0 0
        %650 = vperm.xlu0 %649, %v612
        %v651 = vpop.permute.xlu0 %650
        %v653 = vmul.f32 %v597, %v616
        %v654 = vmul.f32 %v598, %v621
        %v655 = vmul.f32 %v599, %v626
        %v656 = vmul.f32 %v600, %v631
        %v657 = vmul.f32 %v601, %v636
        %v658 = vmul.f32 %v602, %v641
        %v659 = vmul.f32 %v603, %v646
        %v660 = vmul.f32 %v604, %v651
        %v661 = vld [vmem:[%s3] sm:$0xff]
        %v662 = vld [vmem:[%s3 + $0x8] sm:$0xff]
        %v664 = vsel %vm439, %v653, 0
        %v667 = vsel %vm439, %v654, 0
        %v670 = vsel %vm439, %v655, 0
        %v673 = vsel %vm439, %v656, 0
        %v676 = vsel %vm439, %v657, 0
        %v679 = vsel %vm439, %v658, 0
        %v682 = vsel %vm439, %v659, 0
        %v685 = vsel %vm439, %v660, 0
        %687 = vmatprep.subr.mxu0 0.0
        %688 = vmatpush1.msra.mxu0 %v661
        %689 = vmatprep.subr.mxu0 0.0
        %690 = vmatpush1.msra.mxu0 %v662
        %691 = vmatprep.subr.mxu0 0.0
        %692 = vmatpush1.msra.mxu0 0.0
        %693 = vmatprep.subr.mxu0 0.0
        %694 = vmatpush1.msra.mxu0 0.0
        %695 = vmatprep.subr.mxu0 0.0
        %696 = vmatpush1.msra.mxu0 0.0
        %697 = vmatprep.subr.mxu0 0.0
        %698 = vmatpush1.msra.mxu0 0.0
        %699 = vmatprep.subr.mxu0 0.0
        %700 = vmatpush1.msra.mxu0 0.0
        %701 = vmatprep.subr.mxu0 0.0
        %702 = vmatpush1.msra.mxu0 0.0
        %703 = vmatprep.subr.mxu0 0.0
        %704 = vmatpush1.msra.mxu0 0.0
        %705 = vmatprep.subr.mxu0 0.0
        %706 = vmatpush1.msra.mxu0 0.0
        %707 = vmatprep.subr.mxu0 0.0
        %708 = vmatpush1.msra.mxu0 0.0
        %709 = vmatprep.subr.mxu0 0.0
        %710 = vmatpush1.msra.mxu0 0.0
        %711 = vmatprep.subr.mxu0 0.0
        %712 = vmatpush1.msra.mxu0 0.0
        %713 = vmatprep.subr.mxu0 0.0
        %714 = vmatpush1.msra.mxu0 0.0
        %715 = vmatprep.subr.mxu0 0.0
        %716 = vmatpush1.msra.mxu0 0.0
        %717 = vmatprep.subr.mxu0 0.0
        %718 = vmatpush1.msra.mxu0 0.0
        %719 = vmatprep.subr.mxu0 0.0
        %720 = vmatpush1.msra.mxu0 0.0
        %721 = vmatprep.subr.mxu0 0.0
        %722 = vmatpush1.msra.mxu0 0.0
        %723 = vmatprep.subr.mxu0 0.0
        %724 = vmatpush1.msra.mxu0 0.0
        %725 = vmatprep.subr.mxu0 0.0
        %726 = vmatpush1.msra.mxu0 0.0
        %727 = vmatprep.subr.mxu0 0.0
        %728 = vmatpush1.msra.mxu0 0.0
        %729 = vmatprep.subr.mxu0 0.0
        %730 = vmatpush1.msra.mxu0 0.0
        %731 = vmatprep.subr.mxu0 0.0
        %732 = vmatpush1.msra.mxu0 0.0
        %733 = vmatprep.subr.mxu0 0.0
        %734 = vmatpush1.msra.mxu0 0.0
        %735 = vmatprep.subr.mxu0 0.0
        %736 = vmatpush1.msra.mxu0 0.0
        %737 = vmatprep.subr.mxu0 0.0
        %738 = vmatpush1.msra.mxu0 0.0
        %739 = vmatprep.subr.mxu0 0.0
        %740 = vmatpush1.msra.mxu0 0.0
        %741 = vmatprep.subr.mxu0 0.0
        %742 = vmatpush1.msra.mxu0 0.0
        %743 = vmatprep.subr.mxu0 0.0
        %744 = vmatpush1.msra.mxu0 0.0
        %745 = vmatprep.subr.mxu0 0.0
        %746 = vmatpush1.msra.mxu0 0.0
        %747 = vmatprep.subr.mxu0 0.0
        %748 = vmatpush1.msra.mxu0 0.0
        %749 = vmatprep.subr.mxu0 0.0
        %750 = vmatpush1.msra.mxu0 0.0
        %751 = vmatprep.mubr.f32.mxu0 0.0
        %752 = vmatmul.mubr.f32.gmra.mrb[0].mxu0 %v664
        %v753 = vpop.f32.mrb[0].mxu0
        %v754 = vadd.f32 0.0, %v753
        %v755 = vpop.f32.mrb[0].mxu0
        %756 = vmatprep.mubr.f32.mxu0 0.0
        %757 = vmatmul.mubr.f32.gmra.mrb[0].mxu0 %v667
        %v758 = vpop.f32.mrb[0].mxu0
        %v759 = vadd.f32 0.0, %v758
        %v760 = vpop.f32.mrb[0].mxu0
        %761 = vmatprep.mubr.f32.mxu0 0.0
        %762 = vmatmul.mubr.f32.gmra.mrb[0].mxu0 %v670
        %v763 = vpop.f32.mrb[0].mxu0
        %v764 = vadd.f32 0.0, %v763
        %v765 = vpop.f32.mrb[0].mxu0
        %766 = vmatprep.mubr.f32.mxu0 0.0
        %767 = vmatmul.mubr.f32.gmra.mrb[0].mxu0 %v673
        %v768 = vpop.f32.mrb[0].mxu0
        %v769 = vadd.f32 0.0, %v768
        %v770 = vpop.f32.mrb[0].mxu0
        %771 = vmatprep.mubr.f32.mxu0 0.0
        %772 = vmatmul.mubr.f32.gmra.mrb[0].mxu0 %v676
        %v773 = vpop.f32.mrb[0].mxu0
        %v774 = vadd.f32 0.0, %v773
        %v775 = vpop.f32.mrb[0].mxu0
        %776 = vmatprep.mubr.f32.mxu0 0.0
        %777 = vmatmul.mubr.f32.gmra.mrb[0].mxu0 %v679
        %v778 = vpop.f32.mrb[0].mxu0
        %v779 = vadd.f32 0.0, %v778
        %v780 = vpop.f32.mrb[0].mxu0
        %781 = vmatprep.mubr.f32.mxu0 0.0
        %782 = vmatmul.mubr.f32.gmra.mrb[0].mxu0 %v682
        %v783 = vpop.f32.mrb[0].mxu0
        %v784 = vadd.f32 0.0, %v783
        %v785 = vpop.f32.mrb[0].mxu0
        %786 = vmatprep.mubr.f32.mxu0 0.0
        %787 = vmatmul.mubr.f32.gmra.mrb[0].mxu0 %v685
        %v788 = vpop.f32.mrb[0].mxu0
        %v789 = vadd.f32 0.0, %v788
        %v790 = vpop.f32.mrb[0].mxu0
        %791 = vdwg.mxu0
        %v792 = vadd.f32 %v596, %v754
        %v793 = vadd.f32 %v596, %v759
        %v794 = vadd.f32 %v596, %v764
        %v795 = vadd.f32 %v596, %v769
        %v796 = vadd.f32 %v596, %v774
        %v797 = vadd.f32 %v596, %v779
        %v798 = vadd.f32 %v596, %v784
        %v799 = vadd.f32 %v596, %v789
        %v800 = vld [vmem:[#allocation2 + $0x4] sm:$0xff]
        %v801 = vld [vmem:[#allocation2 + $0xc] sm:$0xff]
        %v802 = vld [vmem:[#allocation2 + $0x14] sm:$0xff]
        %v803 = vld [vmem:[#allocation2 + $0x1c] sm:$0xff]
        %v804 = vld [vmem:[#allocation2 + $0x24] sm:$0xff]
        %v805 = vld [vmem:[#allocation2 + $0x2c] sm:$0xff]
        %v806 = vld [vmem:[#allocation2 + $0x34] sm:$0xff]
        %v807 = vld [vmem:[#allocation2 + $0x3c] sm:$0xff]
        %s808 = scalar_lea.vmem %s5, 64
        %v809 = vld [vmem:[%s808] sm:$0xff]
        %v810 = vld [vmem:[%s808 + $0x8] sm:$0xff]
        %v811 = vld [vmem:[%s808 + $0x10] sm:$0xff]
        %v812 = vld [vmem:[%s808 + $0x18] sm:$0xff]
        %v813 = vld [vmem:[%s808 + $0x20] sm:$0xff]
        %v814 = vld [vmem:[%s808 + $0x28] sm:$0xff]
        %v815 = vld [vmem:[%s808 + $0x30] sm:$0xff]
        %v816 = vld [vmem:[%s808 + $0x38] sm:$0xff]
        %818 = vset.pattern.permute.xlu0 0
        %819 = vperm.xlu0 %818, %v809
        %v820 = vpop.permute.xlu0 %819
        %823 = vset.pattern.permute.xlu0 0
        %824 = vperm.xlu0 %823, %v810
        %v825 = vpop.permute.xlu0 %824
        %828 = vset.pattern.permute.xlu0 0
        %829 = vperm.xlu0 %828, %v811
        %v830 = vpop.permute.xlu0 %829
        %833 = vset.pattern.permute.xlu0 0
        %834 = vperm.xlu0 %833, %v812
        %v835 = vpop.permute.xlu0 %834
        %838 = vset.pattern.permute.xlu0 0
        %839 = vperm.xlu0 %838, %v813
        %v840 = vpop.permute.xlu0 %839
        %843 = vset.pattern.permute.xlu0 0
        %844 = vperm.xlu0 %843, %v814
        %v845 = vpop.permute.xlu0 %844
        %848 = vset.pattern.permute.xlu0 0
        %849 = vperm.xlu0 %848, %v815
        %v850 = vpop.permute.xlu0 %849
        %853 = vset.pattern.permute.xlu0 0
        %854 = vperm.xlu0 %853, %v816
        %v855 = vpop.permute.xlu0 %854
        %v857 = vmul.f32 %v800, %v820
        %v858 = vmul.f32 %v801, %v825
        %v859 = vmul.f32 %v802, %v830
        %v860 = vmul.f32 %v803, %v835
        %v861 = vmul.f32 %v804, %v840
        %v862 = vmul.f32 %v805, %v845
        %v863 = vmul.f32 %v806, %v850
        %v864 = vmul.f32 %v807, %v855
        %v865 = vld [vmem:[%s3 + $0x10] sm:$0xff]
        %v866 = vld [vmem:[%s3 + $0x18] sm:$0xff]
        %v868 = vsel %vm439, %v857, 0
        %v871 = vsel %vm439, %v858, 0
        %v874 = vsel %vm439, %v859, 0
        %v877 = vsel %vm439, %v860, 0
        %v880 = vsel %vm439, %v861, 0
        %v883 = vsel %vm439, %v862, 0
        %v886 = vsel %vm439, %v863, 0
        %v889 = vsel %vm439, %v864, 0
        %891 = vmatprep.subr.mxu0 0.0
        %892 = vmatpush1.msra.mxu0 %v865
        %893 = vmatprep.subr.mxu0 0.0
        %894 = vmatpush1.msra.mxu0 %v866
        %895 = vmatprep.subr.mxu0 0.0
        %896 = vmatpush1.msra.mxu0 0.0
        %897 = vmatprep.subr.mxu0 0.0
        %898 = vmatpush1.msra.mxu0 0.0
        %899 = vmatprep.subr.mxu0 0.0
        %900 = vmatpush1.msra.mxu0 0.0
        %901 = vmatprep.subr.mxu0 0.0
        %902 = vmatpush1.msra.mxu0 0.0
        %903 = vmatprep.subr.mxu0 0.0
        %904 = vmatpush1.msra.mxu0 0.0
        %905 = vmatprep.subr.mxu0 0.0
        %906 = vmatpush1.msra.mxu0 0.0
        %907 = vmatprep.subr.mxu0 0.0
        %908 = vmatpush1.msra.mxu0 0.0
        %909 = vmatprep.subr.mxu0 0.0
        %910 = vmatpush1.msra.mxu0 0.0
        %911 = vmatprep.subr.mxu0 0.0
        %912 = vmatpush1.msra.mxu0 0.0
        %913 = vmatprep.subr.mxu0 0.0
        %914 = vmatpush1.msra.mxu0 0.0
        %915 = vmatprep.subr.mxu0 0.0
        %916 = vmatpush1.msra.mxu0 0.0
        %917 = vmatprep.subr.mxu0 0.0
        %918 = vmatpush1.msra.mxu0 0.0
        %919 = vmatprep.subr.mxu0 0.0
        %920 = vmatpush1.msra.mxu0 0.0
        %921 = vmatprep.subr.mxu0 0.0
        %922 = vmatpush1.msra.mxu0 0.0
        %923 = vmatprep.subr.mxu0 0.0
        %924 = vmatpush1.msra.mxu0 0.0
        %925 = vmatprep.subr.mxu0 0.0
        %926 = vmatpush1.msra.mxu0 0.0
        %927 = vmatprep.subr.mxu0 0.0
        %928 = vmatpush1.msra.mxu0 0.0
        %929 = vmatprep.subr.mxu0 0.0
        %930 = vmatpush1.msra.mxu0 0.0
        %931 = vmatprep.subr.mxu0 0.0
        %932 = vmatpush1.msra.mxu0 0.0
        %933 = vmatprep.subr.mxu0 0.0
        %934 = vmatpush1.msra.mxu0 0.0
        %935 = vmatprep.subr.mxu0 0.0
        %936 = vmatpush1.msra.mxu0 0.0
        %937 = vmatprep.subr.mxu0 0.0
        %938 = vmatpush1.msra.mxu0 0.0
        %939 = vmatprep.subr.mxu0 0.0
        %940 = vmatpush1.msra.mxu0 0.0
        %941 = vmatprep.subr.mxu0 0.0
        %942 = vmatpush1.msra.mxu0 0.0
        %943 = vmatprep.subr.mxu0 0.0
        %944 = vmatpush1.msra.mxu0 0.0
        %945 = vmatprep.subr.mxu0 0.0
        %946 = vmatpush1.msra.mxu0 0.0
        %947 = vmatprep.subr.mxu0 0.0
        %948 = vmatpush1.msra.mxu0 0.0
        %949 = vmatprep.subr.mxu0 0.0
        %950 = vmatpush1.msra.mxu0 0.0
        %951 = vmatprep.subr.mxu0 0.0
        %952 = vmatpush1.msra.mxu0 0.0
        %953 = vmatprep.subr.mxu0 0.0
        %954 = vmatpush1.msra.mxu0 0.0
        %955 = vmatprep.mubr.f32.mxu0 0.0
        %956 = vmatmul.mubr.f32.gmra.mrb[0].mxu0 %v868
        %v957 = vpop.f32.mrb[0].mxu0
        %v958 = vadd.f32 0.0, %v957
        %v959 = vpop.f32.mrb[0].mxu0
        %960 = vmatprep.mubr.f32.mxu0 0.0
        %961 = vmatmul.mubr.f32.gmra.mrb[0].mxu0 %v871
        %v962 = vpop.f32.mrb[0].mxu0
        %v963 = vadd.f32 0.0, %v962
        %v964 = vpop.f32.mrb[0].mxu0
        %965 = vmatprep.mubr.f32.mxu0 0.0
        %966 = vmatmul.mubr.f32.gmra.mrb[0].mxu0 %v874
        %v967 = vpop.f32.mrb[0].mxu0
        %v968 = vadd.f32 0.0, %v967
        %v969 = vpop.f32.mrb[0].mxu0
        %970 = vmatprep.mubr.f32.mxu0 0.0
        %971 = vmatmul.mubr.f32.gmra.mrb[0].mxu0 %v877
        %v972 = vpop.f32.mrb[0].mxu0
        %v973 = vadd.f32 0.0, %v972
        %v974 = vpop.f32.mrb[0].mxu0
        %975 = vmatprep.mubr.f32.mxu0 0.0
        %976 = vmatmul.mubr.f32.gmra.mrb[0].mxu0 %v880
        %v977 = vpop.f32.mrb[0].mxu0
        %v978 = vadd.f32 0.0, %v977
        %v979 = vpop.f32.mrb[0].mxu0
        %980 = vmatprep.mubr.f32.mxu0 0.0
        %981 = vmatmul.mubr.f32.gmra.mrb[0].mxu0 %v883
        %v982 = vpop.f32.mrb[0].mxu0
        %v983 = vadd.f32 0.0, %v982
        %v984 = vpop.f32.mrb[0].mxu0
        %985 = vmatprep.mubr.f32.mxu0 0.0
        %986 = vmatmul.mubr.f32.gmra.mrb[0].mxu0 %v886
        %v987 = vpop.f32.mrb[0].mxu0
        %v988 = vadd.f32 0.0, %v987
        %v989 = vpop.f32.mrb[0].mxu0
        %990 = vmatprep.mubr.f32.mxu0 0.0
        %991 = vmatmul.mubr.f32.gmra.mrb[0].mxu0 %v889
        %v992 = vpop.f32.mrb[0].mxu0
        %v993 = vadd.f32 0.0, %v992
        %v994 = vpop.f32.mrb[0].mxu0
        %995 = vdwg.mxu0
        %v996 = vadd.f32 %v792, %v958
        %v997 = vadd.f32 %v793, %v963
        %v998 = vadd.f32 %v794, %v968
        %v999 = vadd.f32 %v795, %v973
        %v1000 = vadd.f32 %v796, %v978
        %v1001 = vadd.f32 %v797, %v983
        %v1002 = vadd.f32 %v798, %v988
        %v1003 = vadd.f32 %v799, %v993
        %v1004 = vld [vmem:[#allocation2 + $0x5] sm:$0xff]
        %v1005 = vld [vmem:[#allocation2 + $0xd] sm:$0xff]
        %v1006 = vld [vmem:[#allocation2 + $0x15] sm:$0xff]
        %v1007 = vld [vmem:[#allocation2 + $0x1d] sm:$0xff]
        %v1008 = vld [vmem:[#allocation2 + $0x25] sm:$0xff]
        %v1009 = vld [vmem:[#allocation2 + $0x2d] sm:$0xff]
        %v1010 = vld [vmem:[#allocation2 + $0x35] sm:$0xff]
        %v1011 = vld [vmem:[#allocation2 + $0x3d] sm:$0xff]
        %s1012 = scalar_lea.vmem %s5, 128
        %v1013 = vld [vmem:[%s1012] sm:$0xff]
        %v1014 = vld [vmem:[%s1012 + $0x8] sm:$0xff]
        %v1015 = vld [vmem:[%s1012 + $0x10] sm:$0xff]
        %v1016 = vld [vmem:[%s1012 + $0x18] sm:$0xff]
        %v1017 = vld [vmem:[%s1012 + $0x20] sm:$0xff]
        %v1018 = vld [vmem:[%s1012 + $0x28] sm:$0xff]
        %v1019 = vld [vmem:[%s1012 + $0x30] sm:$0xff]
        %v1020 = vld [vmem:[%s1012 + $0x38] sm:$0xff]
        %1022 = vset.pattern.permute.xlu0 0
        %1023 = vperm.xlu0 %1022, %v1013
        %v1024 = vpop.permute.xlu0 %1023
        %1027 = vset.pattern.permute.xlu0 0
        %1028 = vperm.xlu0 %1027, %v1014
        %v1029 = vpop.permute.xlu0 %1028
        %1032 = vset.pattern.permute.xlu0 0
        %1033 = vperm.xlu0 %1032, %v1015
        %v1034 = vpop.permute.xlu0 %1033
        %1037 = vset.pattern.permute.xlu0 0
        %1038 = vperm.xlu0 %1037, %v1016
        %v1039 = vpop.permute.xlu0 %1038
        %1042 = vset.pattern.permute.xlu0 0
        %1043 = vperm.xlu0 %1042, %v1017
        %v1044 = vpop.permute.xlu0 %1043
        %1047 = vset.pattern.permute.xlu0 0
        %1048 = vperm.xlu0 %1047, %v1018
        %v1049 = vpop.permute.xlu0 %1048
        %1052 = vset.pattern.permute.xlu0 0
        %1053 = vperm.xlu0 %1052, %v1019
        %v1054 = vpop.permute.xlu0 %1053
        %1057 = vset.pattern.permute.xlu0 0
        %1058 = vperm.xlu0 %1057, %v1020
        %v1059 = vpop.permute.xlu0 %1058
        %v1061 = vmul.f32 %v1004, %v1024
        %v1062 = vmul.f32 %v1005, %v1029
        %v1063 = vmul.f32 %v1006, %v1034
        %v1064 = vmul.f32 %v1007, %v1039
        %v1065 = vmul.f32 %v1008, %v1044
        %v1066 = vmul.f32 %v1009, %v1049
        %v1067 = vmul.f32 %v1010, %v1054
        %v1068 = vmul.f32 %v1011, %v1059
        %v1069 = vld [vmem:[%s3 + $0x20] sm:$0xff]
        %v1070 = vld [vmem:[%s3 + $0x28] sm:$0xff]
        %v1072 = vsel %vm439, %v1061, 0
        %v1075 = vsel %vm439, %v1062, 0
        %v1078 = vsel %vm439, %v1063, 0
        %v1081 = vsel %vm439, %v1064, 0
        %v1084 = vsel %vm439, %v1065, 0
        %v1087 = vsel %vm439, %v1066, 0
        %v1090 = vsel %vm439, %v1067, 0
        %v1093 = vsel %vm439, %v1068, 0
        %1095 = vmatprep.subr.mxu0 0.0
        %1096 = vmatpush1.msra.mxu0 %v1069
        %1097 = vmatprep.subr.mxu0 0.0
        %1098 = vmatpush1.msra.mxu0 %v1070
        %1099 = vmatprep.subr.mxu0 0.0
        %1100 = vmatpush1.msra.mxu0 0.0
        %1101 = vmatprep.subr.mxu0 0.0
        %1102 = vmatpush1.msra.mxu0 0.0
        %1103 = vmatprep.subr.mxu0 0.0
        %1104 = vmatpush1.msra.mxu0 0.0
        %1105 = vmatprep.subr.mxu0 0.0
        %1106 = vmatpush1.msra.mxu0 0.0
        %1107 = vmatprep.subr.mxu0 0.0
        %1108 = vmatpush1.msra.mxu0 0.0
        %1109 = vmatprep.subr.mxu0 0.0
        %1110 = vmatpush1.msra.mxu0 0.0
        %1111 = vmatprep.subr.mxu0 0.0
        %1112 = vmatpush1.msra.mxu0 0.0
        %1113 = vmatprep.subr.mxu0 0.0
        %1114 = vmatpush1.msra.mxu0 0.0
        %1115 = vmatprep.subr.mxu0 0.0
        %1116 = vmatpush1.msra.mxu0 0.0
        %1117 = vmatprep.subr.mxu0 0.0
        %1118 = vmatpush1.msra.mxu0 0.0
        %1119 = vmatprep.subr.mxu0 0.0
        %1120 = vmatpush1.msra.mxu0 0.0
        %1121 = vmatprep.subr.mxu0 0.0
        %1122 = vmatpush1.msra.mxu0 0.0
        %1123 = vmatprep.subr.mxu0 0.0
        %1124 = vmatpush1.msra.mxu0 0.0
        %1125 = vmatprep.subr.mxu0 0.0
        %1126 = vmatpush1.msra.mxu0 0.0
        %1127 = vmatprep.subr.mxu0 0.0
        %1128 = vmatpush1.msra.mxu0 0.0
        %1129 = vmatprep.subr.mxu0 0.0
        %1130 = vmatpush1.msra.mxu0 0.0
        %1131 = vmatprep.subr.mxu0 0.0
        %1132 = vmatpush1.msra.mxu0 0.0
        %1133 = vmatprep.subr.mxu0 0.0
        %1134 = vmatpush1.msra.mxu0 0.0
        %1135 = vmatprep.subr.mxu0 0.0
        %1136 = vmatpush1.msra.mxu0 0.0
        %1137 = vmatprep.subr.mxu0 0.0
        %1138 = vmatpush1.msra.mxu0 0.0
        %1139 = vmatprep.subr.mxu0 0.0
        %1140 = vmatpush1.msra.mxu0 0.0
        %1141 = vmatprep.subr.mxu0 0.0
        %1142 = vmatpush1.msra.mxu0 0.0
        %1143 = vmatprep.subr.mxu0 0.0
        %1144 = vmatpush1.msra.mxu0 0.0
        %1145 = vmatprep.subr.mxu0 0.0
        %1146 = vmatpush1.msra.mxu0 0.0
        %1147 = vmatprep.subr.mxu0 0.0
        %1148 = vmatpush1.msra.mxu0 0.0
        %1149 = vmatprep.subr.mxu0 0.0
        %1150 = vmatpush1.msra.mxu0 0.0
        %1151 = vmatprep.subr.mxu0 0.0
        %1152 = vmatpush1.msra.mxu0 0.0
        %1153 = vmatprep.subr.mxu0 0.0
        %1154 = vmatpush1.msra.mxu0 0.0
        %1155 = vmatprep.subr.mxu0 0.0
        %1156 = vmatpush1.msra.mxu0 0.0
        %1157 = vmatprep.subr.mxu0 0.0
        %1158 = vmatpush1.msra.mxu0 0.0
        %1159 = vmatprep.mubr.f32.mxu0 0.0
        %1160 = vmatmul.mubr.f32.gmra.mrb[0].mxu0 %v1072
        %v1161 = vpop.f32.mrb[0].mxu0
        %v1162 = vadd.f32 0.0, %v1161
        %v1163 = vpop.f32.mrb[0].mxu0
        %1164 = vmatprep.mubr.f32.mxu0 0.0
        %1165 = vmatmul.mubr.f32.gmra.mrb[0].mxu0 %v1075
        %v1166 = vpop.f32.mrb[0].mxu0
        %v1167 = vadd.f32 0.0, %v1166
        %v1168 = vpop.f32.mrb[0].mxu0
        %1169 = vmatprep.mubr.f32.mxu0 0.0
        %1170 = vmatmul.mubr.f32.gmra.mrb[0].mxu0 %v1078
        %v1171 = vpop.f32.mrb[0].mxu0
        %v1172 = vadd.f32 0.0, %v1171
        %v1173 = vpop.f32.mrb[0].mxu0
        %1174 = vmatprep.mubr.f32.mxu0 0.0
        %1175 = vmatmul.mubr.f32.gmra.mrb[0].mxu0 %v1081
        %v1176 = vpop.f32.mrb[0].mxu0
        %v1177 = vadd.f32 0.0, %v1176
        %v1178 = vpop.f32.mrb[0].mxu0
        %1179 = vmatprep.mubr.f32.mxu0 0.0
        %1180 = vmatmul.mubr.f32.gmra.mrb[0].mxu0 %v1084
        %v1181 = vpop.f32.mrb[0].mxu0
        %v1182 = vadd.f32 0.0, %v1181
        %v1183 = vpop.f32.mrb[0].mxu0
        %1184 = vmatprep.mubr.f32.mxu0 0.0
        %1185 = vmatmul.mubr.f32.gmra.mrb[0].mxu0 %v1087
        %v1186 = vpop.f32.mrb[0].mxu0
        %v1187 = vadd.f32 0.0, %v1186
        %v1188 = vpop.f32.mrb[0].mxu0
        %1189 = vmatprep.mubr.f32.mxu0 0.0
        %1190 = vmatmul.mubr.f32.gmra.mrb[0].mxu0 %v1090
        %v1191 = vpop.f32.mrb[0].mxu0
        %v1192 = vadd.f32 0.0, %v1191
        %v1193 = vpop.f32.mrb[0].mxu0
        %1194 = vmatprep.mubr.f32.mxu0 0.0
        %1195 = vmatmul.mubr.f32.gmra.mrb[0].mxu0 %v1093
        %v1196 = vpop.f32.mrb[0].mxu0
        %v1197 = vadd.f32 0.0, %v1196
        %v1198 = vpop.f32.mrb[0].mxu0
        %1199 = vdwg.mxu0
        %v1200 = vadd.f32 %v996, %v1162
        %v1201 = vadd.f32 %v997, %v1167
        %v1202 = vadd.f32 %v998, %v1172
        %v1203 = vadd.f32 %v999, %v1177
        %v1204 = vadd.f32 %v1000, %v1182
        %v1205 = vadd.f32 %v1001, %v1187
        %v1206 = vadd.f32 %v1002, %v1192
        %v1207 = vadd.f32 %v1003, %v1197
        %v1208 = vld [vmem:[#allocation2 + $0x7] sm:$0xff]
        %v1209 = vld [vmem:[#allocation2 + $0xf] sm:$0xff]
        %v1210 = vld [vmem:[#allocation2 + $0x17] sm:$0xff]
        %v1211 = vld [vmem:[#allocation2 + $0x1f] sm:$0xff]
        %v1212 = vld [vmem:[#allocation2 + $0x27] sm:$0xff]
        %v1213 = vld [vmem:[#allocation2 + $0x2f] sm:$0xff]
        %v1214 = vld [vmem:[#allocation2 + $0x37] sm:$0xff]
        %v1215 = vld [vmem:[#allocation2 + $0x3f] sm:$0xff]
        %s1216 = scalar_lea.vmem %s5, 192
        %v1217 = vld [vmem:[%s1216] sm:$0xff]
        %v1218 = vld [vmem:[%s1216 + $0x8] sm:$0xff]
        %v1219 = vld [vmem:[%s1216 + $0x10] sm:$0xff]
        %v1220 = vld [vmem:[%s1216 + $0x18] sm:$0xff]
        %v1221 = vld [vmem:[%s1216 + $0x20] sm:$0xff]
        %v1222 = vld [vmem:[%s1216 + $0x28] sm:$0xff]
        %v1223 = vld [vmem:[%s1216 + $0x30] sm:$0xff]
        %v1224 = vld [vmem:[%s1216 + $0x38] sm:$0xff]
        %1226 = vset.pattern.permute.xlu0 0
        %1227 = vperm.xlu0 %1226, %v1217
        %v1228 = vpop.permute.xlu0 %1227
        %1231 = vset.pattern.permute.xlu0 0
        %1232 = vperm.xlu0 %1231, %v1218
        %v1233 = vpop.permute.xlu0 %1232
        %1236 = vset.pattern.permute.xlu0 0
        %1237 = vperm.xlu0 %1236, %v1219
        %v1238 = vpop.permute.xlu0 %1237
        %1241 = vset.pattern.permute.xlu0 0
        %1242 = vperm.xlu0 %1241, %v1220
        %v1243 = vpop.permute.xlu0 %1242
        %1246 = vset.pattern.permute.xlu0 0
        %1247 = vperm.xlu0 %1246, %v1221
        %v1248 = vpop.permute.xlu0 %1247
        %1251 = vset.pattern.permute.xlu0 0
        %1252 = vperm.xlu0 %1251, %v1222
        %v1253 = vpop.permute.xlu0 %1252
        %1256 = vset.pattern.permute.xlu0 0
        %1257 = vperm.xlu0 %1256, %v1223
        %v1258 = vpop.permute.xlu0 %1257
        %1261 = vset.pattern.permute.xlu0 0
        %1262 = vperm.xlu0 %1261, %v1224
        %v1263 = vpop.permute.xlu0 %1262
        %v1265 = vmul.f32 %v1208, %v1228
        %v1266 = vmul.f32 %v1209, %v1233
        %v1267 = vmul.f32 %v1210, %v1238
        %v1268 = vmul.f32 %v1211, %v1243
        %v1269 = vmul.f32 %v1212, %v1248
        %v1270 = vmul.f32 %v1213, %v1253
        %v1271 = vmul.f32 %v1214, %v1258
        %v1272 = vmul.f32 %v1215, %v1263
        %v1273 = vld [vmem:[%s3 + $0x30] sm:$0xff]
        %v1274 = vld [vmem:[%s3 + $0x38] sm:$0xff]
        %v1276 = vsel %vm439, %v1265, 0
        %v1279 = vsel %vm439, %v1266, 0
        %v1282 = vsel %vm439, %v1267, 0
        %v1285 = vsel %vm439, %v1268, 0
        %v1288 = vsel %vm439, %v1269, 0
        %v1291 = vsel %vm439, %v1270, 0
        %v1294 = vsel %vm439, %v1271, 0
        %v1297 = vsel %vm439, %v1272, 0
        %1299 = vmatprep.subr.mxu0 0.0
        %1300 = vmatpush1.msra.mxu0 %v1273
        %1301 = vmatprep.subr.mxu0 0.0
        %1302 = vmatpush1.msra.mxu0 %v1274
        %1303 = vmatprep.subr.mxu0 0.0
        %1304 = vmatpush1.msra.mxu0 0.0
        %1305 = vmatprep.subr.mxu0 0.0
        %1306 = vmatpush1.msra.mxu0 0.0
        %1307 = vmatprep.subr.mxu0 0.0
        %1308 = vmatpush1.msra.mxu0 0.0
        %1309 = vmatprep.subr.mxu0 0.0
        %1310 = vmatpush1.msra.mxu0 0.0
        %1311 = vmatprep.subr.mxu0 0.0
        %1312 = vmatpush1.msra.mxu0 0.0
        %1313 = vmatprep.subr.mxu0 0.0
        %1314 = vmatpush1.msra.mxu0 0.0
        %1315 = vmatprep.subr.mxu0 0.0
        %1316 = vmatpush1.msra.mxu0 0.0
        %1317 = vmatprep.subr.mxu0 0.0
        %1318 = vmatpush1.msra.mxu0 0.0
        %1319 = vmatprep.subr.mxu0 0.0
        %1320 = vmatpush1.msra.mxu0 0.0
        %1321 = vmatprep.subr.mxu0 0.0
        %1322 = vmatpush1.msra.mxu0 0.0
        %1323 = vmatprep.subr.mxu0 0.0
        %1324 = vmatpush1.msra.mxu0 0.0
        %1325 = vmatprep.subr.mxu0 0.0
        %1326 = vmatpush1.msra.mxu0 0.0
        %1327 = vmatprep.subr.mxu0 0.0
        %1328 = vmatpush1.msra.mxu0 0.0
        %1329 = vmatprep.subr.mxu0 0.0
        %1330 = vmatpush1.msra.mxu0 0.0
        %1331 = vmatprep.subr.mxu0 0.0
        %1332 = vmatpush1.msra.mxu0 0.0
        %1333 = vmatprep.subr.mxu0 0.0
        %1334 = vmatpush1.msra.mxu0 0.0
        %1335 = vmatprep.subr.mxu0 0.0
        %1336 = vmatpush1.msra.mxu0 0.0
        %1337 = vmatprep.subr.mxu0 0.0
        %1338 = vmatpush1.msra.mxu0 0.0
        %1339 = vmatprep.subr.mxu0 0.0
        %1340 = vmatpush1.msra.mxu0 0.0
        %1341 = vmatprep.subr.mxu0 0.0
        %1342 = vmatpush1.msra.mxu0 0.0
        %1343 = vmatprep.subr.mxu0 0.0
        %1344 = vmatpush1.msra.mxu0 0.0
        %1345 = vmatprep.subr.mxu0 0.0
        %1346 = vmatpush1.msra.mxu0 0.0
        %1347 = vmatprep.subr.mxu0 0.0
        %1348 = vmatpush1.msra.mxu0 0.0
        %1349 = vmatprep.subr.mxu0 0.0
        %1350 = vmatpush1.msra.mxu0 0.0
        %1351 = vmatprep.subr.mxu0 0.0
        %1352 = vmatpush1.msra.mxu0 0.0
        %1353 = vmatprep.subr.mxu0 0.0
        %1354 = vmatpush1.msra.mxu0 0.0
        %1355 = vmatprep.subr.mxu0 0.0
        %1356 = vmatpush1.msra.mxu0 0.0
        %1357 = vmatprep.subr.mxu0 0.0
        %1358 = vmatpush1.msra.mxu0 0.0
        %1359 = vmatprep.subr.mxu0 0.0
        %1360 = vmatpush1.msra.mxu0 0.0
        %1361 = vmatprep.subr.mxu0 0.0
        %1362 = vmatpush1.msra.mxu0 0.0
        %1363 = vmatprep.mubr.f32.mxu0 0.0
        %1364 = vmatmul.mubr.f32.gmra.mrb[0].mxu0 %v1276
        %v1365 = vpop.f32.mrb[0].mxu0
        %v1366 = vadd.f32 0.0, %v1365
        %v1367 = vpop.f32.mrb[0].mxu0
        %1368 = vmatprep.mubr.f32.mxu0 0.0
        %1369 = vmatmul.mubr.f32.gmra.mrb[0].mxu0 %v1279
        %v1370 = vpop.f32.mrb[0].mxu0
        %v1371 = vadd.f32 0.0, %v1370
        %v1372 = vpop.f32.mrb[0].mxu0
        %1373 = vmatprep.mubr.f32.mxu0 0.0
        %1374 = vmatmul.mubr.f32.gmra.mrb[0].mxu0 %v1282
        %v1375 = vpop.f32.mrb[0].mxu0
        %v1376 = vadd.f32 0.0, %v1375
        %v1377 = vpop.f32.mrb[0].mxu0
        %1378 = vmatprep.mubr.f32.mxu0 0.0
        %1379 = vmatmul.mubr.f32.gmra.mrb[0].mxu0 %v1285
        %v1380 = vpop.f32.mrb[0].mxu0
        %v1381 = vadd.f32 0.0, %v1380
        %v1382 = vpop.f32.mrb[0].mxu0
        %1383 = vmatprep.mubr.f32.mxu0 0.0
        %1384 = vmatmul.mubr.f32.gmra.mrb[0].mxu0 %v1288
        %v1385 = vpop.f32.mrb[0].mxu0
        %v1386 = vadd.f32 0.0, %v1385
        %v1387 = vpop.f32.mrb[0].mxu0
        %1388 = vmatprep.mubr.f32.mxu0 0.0
        %1389 = vmatmul.mubr.f32.gmra.mrb[0].mxu0 %v1291
        %v1390 = vpop.f32.mrb[0].mxu0
        %v1391 = vadd.f32 0.0, %v1390
        %v1392 = vpop.f32.mrb[0].mxu0
        %1393 = vmatprep.mubr.f32.mxu0 0.0
        %1394 = vmatmul.mubr.f32.gmra.mrb[0].mxu0 %v1294
        %v1395 = vpop.f32.mrb[0].mxu0
        %v1396 = vadd.f32 0.0, %v1395
        %v1397 = vpop.f32.mrb[0].mxu0
        %1398 = vmatprep.mubr.f32.mxu0 0.0
        %1399 = vmatmul.mubr.f32.gmra.mrb[0].mxu0 %v1297
        %v1400 = vpop.f32.mrb[0].mxu0
        %v1401 = vadd.f32 0.0, %v1400
        %v1402 = vpop.f32.mrb[0].mxu0
        %1403 = vdwg.mxu0
        %v1404 = vadd.f32 %v1200, %v1366
        %v1405 = vadd.f32 %v1201, %v1371
        %v1406 = vadd.f32 %v1202, %v1376
        %v1407 = vadd.f32 %v1203, %v1381
        %v1408 = vadd.f32 %v1204, %v1386
        %v1409 = vadd.f32 %v1205, %v1391
        %v1410 = vadd.f32 %v1206, %v1396
        %v1411 = vadd.f32 %v1207, %v1401
        %v1412 = vld [vmem:[#allocation2 + $0x8] sm:$0xff]
        %v1413 = vld [vmem:[#allocation2 + $0x10] sm:$0xff]
        %v1414 = vld [vmem:[#allocation2 + $0x18] sm:$0xff]
        %v1415 = vld [vmem:[#allocation2 + $0x20] sm:$0xff]
        %v1416 = vld [vmem:[#allocation2 + $0x28] sm:$0xff]
        %v1417 = vld [vmem:[#allocation2 + $0x30] sm:$0xff]
        %v1418 = vld [vmem:[#allocation2 + $0x38] sm:$0xff]
        %v1419 = vld [vmem:[#allocation2 + $0x40] sm:$0xff]
        %s1420 = scalar_lea.vmem %s5, 256
        %v1421 = vld [vmem:[%s1420] sm:$0xff]
        %v1422 = vld [vmem:[%s1420 + $0x8] sm:$0xff]
        %v1423 = vld [vmem:[%s1420 + $0x10] sm:$0xff]
        %v1424 = vld [vmem:[%s1420 + $0x18] sm:$0xff]
        %v1425 = vld [vmem:[%s1420 + $0x20] sm:$0xff]
        %v1426 = vld [vmem:[%s1420 + $0x28] sm:$0xff]
        %v1427 = vld [vmem:[%s1420 + $0x30] sm:$0xff]
        %v1428 = vld [vmem:[%s1420 + $0x38] sm:$0xff]
        %1430 = vset.pattern.permute.xlu0 0
        %1431 = vperm.xlu0 %1430, %v1421
        %v1432 = vpop.permute.xlu0 %1431
        %1435 = vset.pattern.permute.xlu0 0
        %1436 = vperm.xlu0 %1435, %v1422
        %v1437 = vpop.permute.xlu0 %1436
        %1440 = vset.pattern.permute.xlu0 0
        %1441 = vperm.xlu0 %1440, %v1423
        %v1442 = vpop.permute.xlu0 %1441
        %1445 = vset.pattern.permute.xlu0 0
        %1446 = vperm.xlu0 %1445, %v1424
        %v1447 = vpop.permute.xlu0 %1446
        %1450 = vset.pattern.permute.xlu0 0
        %1451 = vperm.xlu0 %1450, %v1425
        %v1452 = vpop.permute.xlu0 %1451
        %1455 = vset.pattern.permute.xlu0 0
        %1456 = vperm.xlu0 %1455, %v1426
        %v1457 = vpop.permute.xlu0 %1456
        %1460 = vset.pattern.permute.xlu0 0
        %1461 = vperm.xlu0 %1460, %v1427
        %v1462 = vpop.permute.xlu0 %1461
        %1465 = vset.pattern.permute.xlu0 0
        %1466 = vperm.xlu0 %1465, %v1428
        %v1467 = vpop.permute.xlu0 %1466
        %v1469 = vmul.f32 %v1412, %v1432
        %v1470 = vmul.f32 %v1413, %v1437
        %v1471 = vmul.f32 %v1414, %v1442
        %v1472 = vmul.f32 %v1415, %v1447
        %v1473 = vmul.f32 %v1416, %v1452
        %v1474 = vmul.f32 %v1417, %v1457
        %v1475 = vmul.f32 %v1418, %v1462
        %v1476 = vmul.f32 %v1419, %v1467
        %v1477 = vld [vmem:[%s3 + $0x40] sm:$0xff]
        %v1478 = vld [vmem:[%s3 + $0x48] sm:$0xff]
        %v1480 = vsel %vm439, %v1469, 0
        %v1483 = vsel %vm439, %v1470, 0
        %v1486 = vsel %vm439, %v1471, 0
        %v1489 = vsel %vm439, %v1472, 0
        %v1492 = vsel %vm439, %v1473, 0
        %v1495 = vsel %vm439, %v1474, 0
        %v1498 = vsel %vm439, %v1475, 0
        %v1501 = vsel %vm439, %v1476, 0
        %1503 = vmatprep.subr.mxu0 0.0
        %1504 = vmatpush1.msra.mxu0 %v1477
        %1505 = vmatprep.subr.mxu0 0.0
        %1506 = vmatpush1.msra.mxu0 %v1478
        %1507 = vmatprep.subr.mxu0 0.0
        %1508 = vmatpush1.msra.mxu0 0.0
        %1509 = vmatprep.subr.mxu0 0.0
        %1510 = vmatpush1.msra.mxu0 0.0
        %1511 = vmatprep.subr.mxu0 0.0
        %1512 = vmatpush1.msra.mxu0 0.0
        %1513 = vmatprep.subr.mxu0 0.0
        %1514 = vmatpush1.msra.mxu0 0.0
        %1515 = vmatprep.subr.mxu0 0.0
        %1516 = vmatpush1.msra.mxu0 0.0
        %1517 = vmatprep.subr.mxu0 0.0
        %1518 = vmatpush1.msra.mxu0 0.0
        %1519 = vmatprep.subr.mxu0 0.0
        %1520 = vmatpush1.msra.mxu0 0.0
        %1521 = vmatprep.subr.mxu0 0.0
        %1522 = vmatpush1.msra.mxu0 0.0
        %1523 = vmatprep.subr.mxu0 0.0
        %1524 = vmatpush1.msra.mxu0 0.0
        %1525 = vmatprep.subr.mxu0 0.0
        %1526 = vmatpush1.msra.mxu0 0.0
        %1527 = vmatprep.subr.mxu0 0.0
        %1528 = vmatpush1.msra.mxu0 0.0
        %1529 = vmatprep.subr.mxu0 0.0
        %1530 = vmatpush1.msra.mxu0 0.0
        %1531 = vmatprep.subr.mxu0 0.0
        %1532 = vmatpush1.msra.mxu0 0.0
        %1533 = vmatprep.subr.mxu0 0.0
        %1534 = vmatpush1.msra.mxu0 0.0
        %1535 = vmatprep.subr.mxu0 0.0
        %1536 = vmatpush1.msra.mxu0 0.0
        %1537 = vmatprep.subr.mxu0 0.0
        %1538 = vmatpush1.msra.mxu0 0.0
        %1539 = vmatprep.subr.mxu0 0.0
        %1540 = vmatpush1.msra.mxu0 0.0
        %1541 = vmatprep.subr.mxu0 0.0
        %1542 = vmatpush1.msra.mxu0 0.0
        %1543 = vmatprep.subr.mxu0 0.0
        %1544 = vmatpush1.msra.mxu0 0.0
        %1545 = vmatprep.subr.mxu0 0.0
        %1546 = vmatpush1.msra.mxu0 0.0
        %1547 = vmatprep.subr.mxu0 0.0
        %1548 = vmatpush1.msra.mxu0 0.0
        %1549 = vmatprep.subr.mxu0 0.0
        %1550 = vmatpush1.msra.mxu0 0.0
        %1551 = vmatprep.subr.mxu0 0.0
        %1552 = vmatpush1.msra.mxu0 0.0
        %1553 = vmatprep.subr.mxu0 0.0
        %1554 = vmatpush1.msra.mxu0 0.0
        %1555 = vmatprep.subr.mxu0 0.0
        %1556 = vmatpush1.msra.mxu0 0.0
        %1557 = vmatprep.subr.mxu0 0.0
        %1558 = vmatpush1.msra.mxu0 0.0
        %1559 = vmatprep.subr.mxu0 0.0
        %1560 = vmatpush1.msra.mxu0 0.0
        %1561 = vmatprep.subr.mxu0 0.0
        %1562 = vmatpush1.msra.mxu0 0.0
        %1563 = vmatprep.subr.mxu0 0.0
        %1564 = vmatpush1.msra.mxu0 0.0
        %1565 = vmatprep.subr.mxu0 0.0
        %1566 = vmatpush1.msra.mxu0 0.0
        %1567 = vmatprep.mubr.f32.mxu0 0.0
        %1568 = vmatmul.mubr.f32.gmra.mrb[0].mxu0 %v1480
        %v1569 = vpop.f32.mrb[0].mxu0
        %v1570 = vadd.f32 0.0, %v1569
        %v1571 = vpop.f32.mrb[0].mxu0
        %1572 = vmatprep.mubr.f32.mxu0 0.0
        %1573 = vmatmul.mubr.f32.gmra.mrb[0].mxu0 %v1483
        %v1574 = vpop.f32.mrb[0].mxu0
        %v1575 = vadd.f32 0.0, %v1574
        %v1576 = vpop.f32.mrb[0].mxu0
        %1577 = vmatprep.mubr.f32.mxu0 0.0
        %1578 = vmatmul.mubr.f32.gmra.mrb[0].mxu0 %v1486
        %v1579 = vpop.f32.mrb[0].mxu0
        %v1580 = vadd.f32 0.0, %v1579
        %v1581 = vpop.f32.mrb[0].mxu0
        %1582 = vmatprep.mubr.f32.mxu0 0.0
        %1583 = vmatmul.mubr.f32.gmra.mrb[0].mxu0 %v1489
        %v1584 = vpop.f32.mrb[0].mxu0
        %v1585 = vadd.f32 0.0, %v1584
        %v1586 = vpop.f32.mrb[0].mxu0
        %1587 = vmatprep.mubr.f32.mxu0 0.0
        %1588 = vmatmul.mubr.f32.gmra.mrb[0].mxu0 %v1492
        %v1589 = vpop.f32.mrb[0].mxu0
        %v1590 = vadd.f32 0.0, %v1589
        %v1591 = vpop.f32.mrb[0].mxu0
        %1592 = vmatprep.mubr.f32.mxu0 0.0
        %1593 = vmatmul.mubr.f32.gmra.mrb[0].mxu0 %v1495
        %v1594 = vpop.f32.mrb[0].mxu0
        %v1595 = vadd.f32 0.0, %v1594
        %v1596 = vpop.f32.mrb[0].mxu0
        %1597 = vmatprep.mubr.f32.mxu0 0.0
        %1598 = vmatmul.mubr.f32.gmra.mrb[0].mxu0 %v1498
        %v1599 = vpop.f32.mrb[0].mxu0
        %v1600 = vadd.f32 0.0, %v1599
        %v1601 = vpop.f32.mrb[0].mxu0
        %1602 = vmatprep.mubr.f32.mxu0 0.0
        %1603 = vmatmul.mubr.f32.gmra.mrb[0].mxu0 %v1501
        %v1604 = vpop.f32.mrb[0].mxu0
        %v1605 = vadd.f32 0.0, %v1604
        %v1606 = vpop.f32.mrb[0].mxu0
        %1607 = vdwg.mxu0
        %v1608 = vadd.f32 %v1404, %v1570
        %v1609 = vadd.f32 %v1405, %v1575
        %v1610 = vadd.f32 %v1406, %v1580
        %v1611 = vadd.f32 %v1407, %v1585
        %v1612 = vadd.f32 %v1408, %v1590
        %v1613 = vadd.f32 %v1409, %v1595
        %v1614 = vadd.f32 %v1410, %v1600
        %v1615 = vadd.f32 %v1411, %v1605
        %v1616 = vld [vmem:[#allocation2 + $0x9] sm:$0xff]
        %v1617 = vld [vmem:[#allocation2 + $0x11] sm:$0xff]
        %v1618 = vld [vmem:[#allocation2 + $0x19] sm:$0xff]
        %v1619 = vld [vmem:[#allocation2 + $0x21] sm:$0xff]
        %v1620 = vld [vmem:[#allocation2 + $0x29] sm:$0xff]
        %v1621 = vld [vmem:[#allocation2 + $0x31] sm:$0xff]
        %v1622 = vld [vmem:[#allocation2 + $0x39] sm:$0xff]
        %v1623 = vld [vmem:[#allocation2 + $0x41] sm:$0xff]
        %s1624 = scalar_lea.vmem %s5, 320
        %v1625 = vld [vmem:[%s1624] sm:$0xff]
        %v1626 = vld [vmem:[%s1624 + $0x8] sm:$0xff]
        %v1627 = vld [vmem:[%s1624 + $0x10] sm:$0xff]
        %v1628 = vld [vmem:[%s1624 + $0x18] sm:$0xff]
        %v1629 = vld [vmem:[%s1624 + $0x20] sm:$0xff]
        %v1630 = vld [vmem:[%s1624 + $0x28] sm:$0xff]
        %v1631 = vld [vmem:[%s1624 + $0x30] sm:$0xff]
        %v1632 = vld [vmem:[%s1624 + $0x38] sm:$0xff]
        %1634 = vset.pattern.permute.xlu0 0
        %1635 = vperm.xlu0 %1634, %v1625
        %v1636 = vpop.permute.xlu0 %1635
        %1639 = vset.pattern.permute.xlu0 0
        %1640 = vperm.xlu0 %1639, %v1626
        %v1641 = vpop.permute.xlu0 %1640
        %1644 = vset.pattern.permute.xlu0 0
        %1645 = vperm.xlu0 %1644, %v1627
        %v1646 = vpop.permute.xlu0 %1645
        %1649 = vset.pattern.permute.xlu0 0
        %1650 = vperm.xlu0 %1649, %v1628
        %v1651 = vpop.permute.xlu0 %1650
        %1654 = vset.pattern.permute.xlu0 0
        %1655 = vperm.xlu0 %1654, %v1629
        %v1656 = vpop.permute.xlu0 %1655
        %1659 = vset.pattern.permute.xlu0 0
        %1660 = vperm.xlu0 %1659, %v1630
        %v1661 = vpop.permute.xlu0 %1660
        %1664 = vset.pattern.permute.xlu0 0
        %1665 = vperm.xlu0 %1664, %v1631
        %v1666 = vpop.permute.xlu0 %1665
        %1669 = vset.pattern.permute.xlu0 0
        %1670 = vperm.xlu0 %1669, %v1632
        %v1671 = vpop.permute.xlu0 %1670
        %v1673 = vmul.f32 %v1616, %v1636
        %v1674 = vmul.f32 %v1617, %v1641
        %v1675 = vmul.f32 %v1618, %v1646
        %v1676 = vmul.f32 %v1619, %v1651
        %v1677 = vmul.f32 %v1620, %v1656
        %v1678 = vmul.f32 %v1621, %v1661
        %v1679 = vmul.f32 %v1622, %v1666
        %v1680 = vmul.f32 %v1623, %v1671
        %v1681 = vld [vmem:[%s3 + $0x50] sm:$0xff]
        %v1682 = vld [vmem:[%s3 + $0x58] sm:$0xff]
        %v1684 = vsel %vm439, %v1673, 0
        %v1687 = vsel %vm439, %v1674, 0
        %v1690 = vsel %vm439, %v1675, 0
        %v1693 = vsel %vm439, %v1676, 0
        %v1696 = vsel %vm439, %v1677, 0
        %v1699 = vsel %vm439, %v1678, 0
        %v1702 = vsel %vm439, %v1679, 0
        %v1705 = vsel %vm439, %v1680, 0
        %1707 = vmatprep.subr.mxu0 0.0
        %1708 = vmatpush1.msra.mxu0 %v1681
        %1709 = vmatprep.subr.mxu0 0.0
        %1710 = vmatpush1.msra.mxu0 %v1682
        %1711 = vmatprep.subr.mxu0 0.0
        %1712 = vmatpush1.msra.mxu0 0.0
        %1713 = vmatprep.subr.mxu0 0.0
        %1714 = vmatpush1.msra.mxu0 0.0
        %1715 = vmatprep.subr.mxu0 0.0
        %1716 = vmatpush1.msra.mxu0 0.0
        %1717 = vmatprep.subr.mxu0 0.0
        %1718 = vmatpush1.msra.mxu0 0.0
        %1719 = vmatprep.subr.mxu0 0.0
        %1720 = vmatpush1.msra.mxu0 0.0
        %1721 = vmatprep.subr.mxu0 0.0
        %1722 = vmatpush1.msra.mxu0 0.0
        %1723 = vmatprep.subr.mxu0 0.0
        %1724 = vmatpush1.msra.mxu0 0.0
        %1725 = vmatprep.subr.mxu0 0.0
        %1726 = vmatpush1.msra.mxu0 0.0
        %1727 = vmatprep.subr.mxu0 0.0
        %1728 = vmatpush1.msra.mxu0 0.0
        %1729 = vmatprep.subr.mxu0 0.0
        %1730 = vmatpush1.msra.mxu0 0.0
        %1731 = vmatprep.subr.mxu0 0.0
        %1732 = vmatpush1.msra.mxu0 0.0
        %1733 = vmatprep.subr.mxu0 0.0
        %1734 = vmatpush1.msra.mxu0 0.0
        %1735 = vmatprep.subr.mxu0 0.0
        %1736 = vmatpush1.msra.mxu0 0.0
        %1737 = vmatprep.subr.mxu0 0.0
        %1738 = vmatpush1.msra.mxu0 0.0
        %1739 = vmatprep.subr.mxu0 0.0
        %1740 = vmatpush1.msra.mxu0 0.0
        %1741 = vmatprep.subr.mxu0 0.0
        %1742 = vmatpush1.msra.mxu0 0.0
        %1743 = vmatprep.subr.mxu0 0.0
        %1744 = vmatpush1.msra.mxu0 0.0
        %1745 = vmatprep.subr.mxu0 0.0
        %1746 = vmatpush1.msra.mxu0 0.0
        %1747 = vmatprep.subr.mxu0 0.0
        %1748 = vmatpush1.msra.mxu0 0.0
        %1749 = vmatprep.subr.mxu0 0.0
        %1750 = vmatpush1.msra.mxu0 0.0
        %1751 = vmatprep.subr.mxu0 0.0
        %1752 = vmatpush1.msra.mxu0 0.0
        %1753 = vmatprep.subr.mxu0 0.0
        %1754 = vmatpush1.msra.mxu0 0.0
        %1755 = vmatprep.subr.mxu0 0.0
        %1756 = vmatpush1.msra.mxu0 0.0
        %1757 = vmatprep.subr.mxu0 0.0
        %1758 = vmatpush1.msra.mxu0 0.0
        %1759 = vmatprep.subr.mxu0 0.0
        %1760 = vmatpush1.msra.mxu0 0.0
        %1761 = vmatprep.subr.mxu0 0.0
        %1762 = vmatpush1.msra.mxu0 0.0
        %1763 = vmatprep.subr.mxu0 0.0
        %1764 = vmatpush1.msra.mxu0 0.0
        %1765 = vmatprep.subr.mxu0 0.0
        %1766 = vmatpush1.msra.mxu0 0.0
        %1767 = vmatprep.subr.mxu0 0.0
        %1768 = vmatpush1.msra.mxu0 0.0
        %1769 = vmatprep.subr.mxu0 0.0
        %1770 = vmatpush1.msra.mxu0 0.0
        %1771 = vmatprep.mubr.f32.mxu0 0.0
        %1772 = vmatmul.mubr.f32.gmra.mrb[0].mxu0 %v1684
        %v1773 = vpop.f32.mrb[0].mxu0
        %v1774 = vadd.f32 0.0, %v1773
        %v1775 = vpop.f32.mrb[0].mxu0
        %1776 = vmatprep.mubr.f32.mxu0 0.0
        %1777 = vmatmul.mubr.f32.gmra.mrb[0].mxu0 %v1687
        %v1778 = vpop.f32.mrb[0].mxu0
        %v1779 = vadd.f32 0.0, %v1778
        %v1780 = vpop.f32.mrb[0].mxu0
        %1781 = vmatprep.mubr.f32.mxu0 0.0
        %1782 = vmatmul.mubr.f32.gmra.mrb[0].mxu0 %v1690
        %v1783 = vpop.f32.mrb[0].mxu0
        %v1784 = vadd.f32 0.0, %v1783
        %v1785 = vpop.f32.mrb[0].mxu0
        %1786 = vmatprep.mubr.f32.mxu0 0.0
        %1787 = vmatmul.mubr.f32.gmra.mrb[0].mxu0 %v1693
        %v1788 = vpop.f32.mrb[0].mxu0
        %v1789 = vadd.f32 0.0, %v1788
        %v1790 = vpop.f32.mrb[0].mxu0
        %1791 = vmatprep.mubr.f32.mxu0 0.0
        %1792 = vmatmul.mubr.f32.gmra.mrb[0].mxu0 %v1696
        %v1793 = vpop.f32.mrb[0].mxu0
        %v1794 = vadd.f32 0.0, %v1793
        %v1795 = vpop.f32.mrb[0].mxu0
        %1796 = vmatprep.mubr.f32.mxu0 0.0
        %1797 = vmatmul.mubr.f32.gmra.mrb[0].mxu0 %v1699
        %v1798 = vpop.f32.mrb[0].mxu0
        %v1799 = vadd.f32 0.0, %v1798
        %v1800 = vpop.f32.mrb[0].mxu0
        %1801 = vmatprep.mubr.f32.mxu0 0.0
        %1802 = vmatmul.mubr.f32.gmra.mrb[0].mxu0 %v1702
        %v1803 = vpop.f32.mrb[0].mxu0
        %v1804 = vadd.f32 0.0, %v1803
        %v1805 = vpop.f32.mrb[0].mxu0
        %1806 = vmatprep.mubr.f32.mxu0 0.0
        %1807 = vmatmul.mubr.f32.gmra.mrb[0].mxu0 %v1705
        %v1808 = vpop.f32.mrb[0].mxu0
        %v1809 = vadd.f32 0.0, %v1808
        %v1810 = vpop.f32.mrb[0].mxu0
        %1811 = vdwg.mxu0
        %v1812 = vadd.f32 %v1608, %v1774
        %v1813 = vadd.f32 %v1609, %v1779
        %v1814 = vadd.f32 %v1610, %v1784
        %v1815 = vadd.f32 %v1611, %v1789
        %v1816 = vadd.f32 %v1612, %v1794
        %v1817 = vadd.f32 %v1613, %v1799
        %v1818 = vadd.f32 %v1614, %v1804
        %v1819 = vadd.f32 %v1615, %v1809
        %v1820 = vld [vmem:[#allocation2 + $0xb] sm:$0xff]
        %v1821 = vld [vmem:[#allocation2 + $0x13] sm:$0xff]
        %v1822 = vld [vmem:[#allocation2 + $0x1b] sm:$0xff]
        %v1823 = vld [vmem:[#allocation2 + $0x23] sm:$0xff]
        %v1824 = vld [vmem:[#allocation2 + $0x2b] sm:$0xff]
        %v1825 = vld [vmem:[#allocation2 + $0x33] sm:$0xff]
        %v1826 = vld [vmem:[#allocation2 + $0x3b] sm:$0xff]
        %v1827 = vld [vmem:[#allocation2 + $0x43] sm:$0xff]
        %s1828 = scalar_lea.vmem %s5, 384
        %v1829 = vld [vmem:[%s1828] sm:$0xff]
        %v1830 = vld [vmem:[%s1828 + $0x8] sm:$0xff]
        %v1831 = vld [vmem:[%s1828 + $0x10] sm:$0xff]
        %v1832 = vld [vmem:[%s1828 + $0x18] sm:$0xff]
        %v1833 = vld [vmem:[%s1828 + $0x20] sm:$0xff]
        %v1834 = vld [vmem:[%s1828 + $0x28] sm:$0xff]
        %v1835 = vld [vmem:[%s1828 + $0x30] sm:$0xff]
        %v1836 = vld [vmem:[%s1828 + $0x38] sm:$0xff]
        %1838 = vset.pattern.permute.xlu0 0
        %1839 = vperm.xlu0 %1838, %v1829
        %v1840 = vpop.permute.xlu0 %1839
        %1843 = vset.pattern.permute.xlu0 0
        %1844 = vperm.xlu0 %1843, %v1830
        %v1845 = vpop.permute.xlu0 %1844
        %1848 = vset.pattern.permute.xlu0 0
        %1849 = vperm.xlu0 %1848, %v1831
        %v1850 = vpop.permute.xlu0 %1849
        %1853 = vset.pattern.permute.xlu0 0
        %1854 = vperm.xlu0 %1853, %v1832
        %v1855 = vpop.permute.xlu0 %1854
        %1858 = vset.pattern.permute.xlu0 0
        %1859 = vperm.xlu0 %1858, %v1833
        %v1860 = vpop.permute.xlu0 %1859
        %1863 = vset.pattern.permute.xlu0 0
        %1864 = vperm.xlu0 %1863, %v1834
        %v1865 = vpop.permute.xlu0 %1864
        %1868 = vset.pattern.permute.xlu0 0
        %1869 = vperm.xlu0 %1868, %v1835
        %v1870 = vpop.permute.xlu0 %1869
        %1873 = vset.pattern.permute.xlu0 0
        %1874 = vperm.xlu0 %1873, %v1836
        %v1875 = vpop.permute.xlu0 %1874
        %v1877 = vmul.f32 %v1820, %v1840
        %v1878 = vmul.f32 %v1821, %v1845
        %v1879 = vmul.f32 %v1822, %v1850
        %v1880 = vmul.f32 %v1823, %v1855
        %v1881 = vmul.f32 %v1824, %v1860
        %v1882 = vmul.f32 %v1825, %v1865
        %v1883 = vmul.f32 %v1826, %v1870
        %v1884 = vmul.f32 %v1827, %v1875
        %v1885 = vld [vmem:[%s3 + $0x60] sm:$0xff]
        %v1886 = vld [vmem:[%s3 + $0x68] sm:$0xff]
        %v1888 = vsel %vm439, %v1877, 0
        %v1891 = vsel %vm439, %v1878, 0
        %v1894 = vsel %vm439, %v1879, 0
        %v1897 = vsel %vm439, %v1880, 0
        %v1900 = vsel %vm439, %v1881, 0
        %v1903 = vsel %vm439, %v1882, 0
        %v1906 = vsel %vm439, %v1883, 0
        %v1909 = vsel %vm439, %v1884, 0
        %1911 = vmatprep.subr.mxu0 0.0
        %1912 = vmatpush1.msra.mxu0 %v1885
        %1913 = vmatprep.subr.mxu0 0.0
        %1914 = vmatpush1.msra.mxu0 %v1886
        %1915 = vmatprep.subr.mxu0 0.0
        %1916 = vmatpush1.msra.mxu0 0.0
        %1917 = vmatprep.subr.mxu0 0.0
        %1918 = vmatpush1.msra.mxu0 0.0
        %1919 = vmatprep.subr.mxu0 0.0
        %1920 = vmatpush1.msra.mxu0 0.0
        %1921 = vmatprep.subr.mxu0 0.0
        %1922 = vmatpush1.msra.mxu0 0.0
        %1923 = vmatprep.subr.mxu0 0.0
        %1924 = vmatpush1.msra.mxu0 0.0
        %1925 = vmatprep.subr.mxu0 0.0
        %1926 = vmatpush1.msra.mxu0 0.0
        %1927 = vmatprep.subr.mxu0 0.0
        %1928 = vmatpush1.msra.mxu0 0.0
        %1929 = vmatprep.subr.mxu0 0.0
        %1930 = vmatpush1.msra.mxu0 0.0
        %1931 = vmatprep.subr.mxu0 0.0
        %1932 = vmatpush1.msra.mxu0 0.0
        %1933 = vmatprep.subr.mxu0 0.0
        %1934 = vmatpush1.msra.mxu0 0.0
        %1935 = vmatprep.subr.mxu0 0.0
        %1936 = vmatpush1.msra.mxu0 0.0
        %1937 = vmatprep.subr.mxu0 0.0
        %1938 = vmatpush1.msra.mxu0 0.0
        %1939 = vmatprep.subr.mxu0 0.0
        %1940 = vmatpush1.msra.mxu0 0.0
        %1941 = vmatprep.subr.mxu0 0.0
        %1942 = vmatpush1.msra.mxu0 0.0
        %1943 = vmatprep.subr.mxu0 0.0
        %1944 = vmatpush1.msra.mxu0 0.0
        %1945 = vmatprep.subr.mxu0 0.0
        %1946 = vmatpush1.msra.mxu0 0.0
        %1947 = vmatprep.subr.mxu0 0.0
        %1948 = vmatpush1.msra.mxu0 0.0
        %1949 = vmatprep.subr.mxu0 0.0
        %1950 = vmatpush1.msra.mxu0 0.0
        %1951 = vmatprep.subr.mxu0 0.0
        %1952 = vmatpush1.msra.mxu0 0.0
        %1953 = vmatprep.subr.mxu0 0.0
        %1954 = vmatpush1.msra.mxu0 0.0
        %1955 = vmatprep.subr.mxu0 0.0
        %1956 = vmatpush1.msra.mxu0 0.0
        %1957 = vmatprep.subr.mxu0 0.0
        %1958 = vmatpush1.msra.mxu0 0.0
        %1959 = vmatprep.subr.mxu0 0.0
        %1960 = vmatpush1.msra.mxu0 0.0
        %1961 = vmatprep.subr.mxu0 0.0
        %1962 = vmatpush1.msra.mxu0 0.0
        %1963 = vmatprep.subr.mxu0 0.0
        %1964 = vmatpush1.msra.mxu0 0.0
        %1965 = vmatprep.subr.mxu0 0.0
        %1966 = vmatpush1.msra.mxu0 0.0
        %1967 = vmatprep.subr.mxu0 0.0
        %1968 = vmatpush1.msra.mxu0 0.0
        %1969 = vmatprep.subr.mxu0 0.0
        %1970 = vmatpush1.msra.mxu0 0.0
        %1971 = vmatprep.subr.mxu0 0.0
        %1972 = vmatpush1.msra.mxu0 0.0
        %1973 = vmatprep.subr.mxu0 0.0
        %1974 = vmatpush1.msra.mxu0 0.0
        %1975 = vmatprep.mubr.f32.mxu0 0.0
        %1976 = vmatmul.mubr.f32.gmra.mrb[0].mxu0 %v1888
        %v1977 = vpop.f32.mrb[0].mxu0
        %v1978 = vadd.f32 0.0, %v1977
        %v1979 = vpop.f32.mrb[0].mxu0
        %1980 = vmatprep.mubr.f32.mxu0 0.0
        %1981 = vmatmul.mubr.f32.gmra.mrb[0].mxu0 %v1891
        %v1982 = vpop.f32.mrb[0].mxu0
        %v1983 = vadd.f32 0.0, %v1982
        %v1984 = vpop.f32.mrb[0].mxu0
        %1985 = vmatprep.mubr.f32.mxu0 0.0
        %1986 = vmatmul.mubr.f32.gmra.mrb[0].mxu0 %v1894
        %v1987 = vpop.f32.mrb[0].mxu0
        %v1988 = vadd.f32 0.0, %v1987
        %v1989 = vpop.f32.mrb[0].mxu0
        %1990 = vmatprep.mubr.f32.mxu0 0.0
        %1991 = vmatmul.mubr.f32.gmra.mrb[0].mxu0 %v1897
        %v1992 = vpop.f32.mrb[0].mxu0
        %v1993 = vadd.f32 0.0, %v1992
        %v1994 = vpop.f32.mrb[0].mxu0
        %1995 = vmatprep.mubr.f32.mxu0 0.0
        %1996 = vmatmul.mubr.f32.gmra.mrb[0].mxu0 %v1900
        %v1997 = vpop.f32.mrb[0].mxu0
        %v1998 = vadd.f32 0.0, %v1997
        %v1999 = vpop.f32.mrb[0].mxu0
        %2000 = vmatprep.mubr.f32.mxu0 0.0
        %2001 = vmatmul.mubr.f32.gmra.mrb[0].mxu0 %v1903
        %v2002 = vpop.f32.mrb[0].mxu0
        %v2003 = vadd.f32 0.0, %v2002
        %v2004 = vpop.f32.mrb[0].mxu0
        %2005 = vmatprep.mubr.f32.mxu0 0.0
        %2006 = vmatmul.mubr.f32.gmra.mrb[0].mxu0 %v1906
        %v2007 = vpop.f32.mrb[0].mxu0
        %v2008 = vadd.f32 0.0, %v2007
        %v2009 = vpop.f32.mrb[0].mxu0
        %2010 = vmatprep.mubr.f32.mxu0 0.0
        %2011 = vmatmul.mubr.f32.gmra.mrb[0].mxu0 %v1909
        %v2012 = vpop.f32.mrb[0].mxu0
        %v2013 = vadd.f32 0.0, %v2012
        %v2014 = vpop.f32.mrb[0].mxu0
        %2015 = vdwg.mxu0
        %v2016 = vadd.f32 %v1812, %v1978
        %v2017 = vadd.f32 %v1813, %v1983
        %v2018 = vadd.f32 %v1814, %v1988
        %v2019 = vadd.f32 %v1815, %v1993
        %v2020 = vadd.f32 %v1816, %v1998
        %v2021 = vadd.f32 %v1817, %v2003
        %v2022 = vadd.f32 %v1818, %v2008
        %v2023 = vadd.f32 %v1819, %v2013
        %v2024 = vld [vmem:[#allocation2 + $0xc] sm:$0xff]
        %v2025 = vld [vmem:[#allocation2 + $0x14] sm:$0xff]
        %v2026 = vld [vmem:[#allocation2 + $0x1c] sm:$0xff]
        %v2027 = vld [vmem:[#allocation2 + $0x24] sm:$0xff]
        %v2028 = vld [vmem:[#allocation2 + $0x2c] sm:$0xff]
        %v2029 = vld [vmem:[#allocation2 + $0x34] sm:$0xff]
        %v2030 = vld [vmem:[#allocation2 + $0x3c] sm:$0xff]
        %v2031 = vld [vmem:[#allocation2 + $0x44] sm:$0xff]
        %s2032 = scalar_lea.vmem %s5, 448
        %v2033 = vld [vmem:[%s2032] sm:$0xff]
        %v2034 = vld [vmem:[%s2032 + $0x8] sm:$0xff]
        %v2035 = vld [vmem:[%s2032 + $0x10] sm:$0xff]
        %v2036 = vld [vmem:[%s2032 + $0x18] sm:$0xff]
        %v2037 = vld [vmem:[%s2032 + $0x20] sm:$0xff]
        %v2038 = vld [vmem:[%s2032 + $0x28] sm:$0xff]
        %v2039 = vld [vmem:[%s2032 + $0x30] sm:$0xff]
        %v2040 = vld [vmem:[%s2032 + $0x38] sm:$0xff]
        %2042 = vset.pattern.permute.xlu0 0
        %2043 = vperm.xlu0 %2042, %v2033
        %v2044 = vpop.permute.xlu0 %2043
        %2047 = vset.pattern.permute.xlu0 0
        %2048 = vperm.xlu0 %2047, %v2034
        %v2049 = vpop.permute.xlu0 %2048
        %2052 = vset.pattern.permute.xlu0 0
        %2053 = vperm.xlu0 %2052, %v2035
        %v2054 = vpop.permute.xlu0 %2053
        %2057 = vset.pattern.permute.xlu0 0
        %2058 = vperm.xlu0 %2057, %v2036
        %v2059 = vpop.permute.xlu0 %2058
        %2062 = vset.pattern.permute.xlu0 0
        %2063 = vperm.xlu0 %2062, %v2037
        %v2064 = vpop.permute.xlu0 %2063
        %2067 = vset.pattern.permute.xlu0 0
        %2068 = vperm.xlu0 %2067, %v2038
        %v2069 = vpop.permute.xlu0 %2068
        %2072 = vset.pattern.permute.xlu0 0
        %2073 = vperm.xlu0 %2072, %v2039
        %v2074 = vpop.permute.xlu0 %2073
        %2077 = vset.pattern.permute.xlu0 0
        %2078 = vperm.xlu0 %2077, %v2040
        %v2079 = vpop.permute.xlu0 %2078
        %v2081 = vmul.f32 %v2024, %v2044
        %v2082 = vmul.f32 %v2025, %v2049
        %v2083 = vmul.f32 %v2026, %v2054
        %v2084 = vmul.f32 %v2027, %v2059
        %v2085 = vmul.f32 %v2028, %v2064
        %v2086 = vmul.f32 %v2029, %v2069
        %v2087 = vmul.f32 %v2030, %v2074
        %v2088 = vmul.f32 %v2031, %v2079
        %v2089 = vld [vmem:[%s3 + $0x70] sm:$0xff]
        %v2090 = vld [vmem:[%s3 + $0x78] sm:$0xff]
        %v2092 = vsel %vm439, %v2081, 0
        %v2095 = vsel %vm439, %v2082, 0
        %v2098 = vsel %vm439, %v2083, 0
        %v2101 = vsel %vm439, %v2084, 0
        %v2104 = vsel %vm439, %v2085, 0
        %v2107 = vsel %vm439, %v2086, 0
        %v2110 = vsel %vm439, %v2087, 0
        %v2113 = vsel %vm439, %v2088, 0
        %2115 = vmatprep.subr.mxu0 0.0
        %2116 = vmatpush1.msra.mxu0 %v2089
        %2117 = vmatprep.subr.mxu0 0.0
        %2118 = vmatpush1.msra.mxu0 %v2090
        %2119 = vmatprep.subr.mxu0 0.0
        %2120 = vmatpush1.msra.mxu0 0.0
        %2121 = vmatprep.subr.mxu0 0.0
        %2122 = vmatpush1.msra.mxu0 0.0
        %2123 = vmatprep.subr.mxu0 0.0
        %2124 = vmatpush1.msra.mxu0 0.0
        %2125 = vmatprep.subr.mxu0 0.0
        %2126 = vmatpush1.msra.mxu0 0.0
        %2127 = vmatprep.subr.mxu0 0.0
        %2128 = vmatpush1.msra.mxu0 0.0
        %2129 = vmatprep.subr.mxu0 0.0
        %2130 = vmatpush1.msra.mxu0 0.0
        %2131 = vmatprep.subr.mxu0 0.0
        %2132 = vmatpush1.msra.mxu0 0.0
        %2133 = vmatprep.subr.mxu0 0.0
        %2134 = vmatpush1.msra.mxu0 0.0
        %2135 = vmatprep.subr.mxu0 0.0
        %2136 = vmatpush1.msra.mxu0 0.0
        %2137 = vmatprep.subr.mxu0 0.0
        %2138 = vmatpush1.msra.mxu0 0.0
        %2139 = vmatprep.subr.mxu0 0.0
        %2140 = vmatpush1.msra.mxu0 0.0
        %2141 = vmatprep.subr.mxu0 0.0
        %2142 = vmatpush1.msra.mxu0 0.0
        %2143 = vmatprep.subr.mxu0 0.0
        %2144 = vmatpush1.msra.mxu0 0.0
        %2145 = vmatprep.subr.mxu0 0.0
        %2146 = vmatpush1.msra.mxu0 0.0
        %2147 = vmatprep.subr.mxu0 0.0
        %2148 = vmatpush1.msra.mxu0 0.0
        %2149 = vmatprep.subr.mxu0 0.0
        %2150 = vmatpush1.msra.mxu0 0.0
        %2151 = vmatprep.subr.mxu0 0.0
        %2152 = vmatpush1.msra.mxu0 0.0
        %2153 = vmatprep.subr.mxu0 0.0
        %2154 = vmatpush1.msra.mxu0 0.0
        %2155 = vmatprep.subr.mxu0 0.0
        %2156 = vmatpush1.msra.mxu0 0.0
        %2157 = vmatprep.subr.mxu0 0.0
        %2158 = vmatpush1.msra.mxu0 0.0
        %2159 = vmatprep.subr.mxu0 0.0
        %2160 = vmatpush1.msra.mxu0 0.0
        %2161 = vmatprep.subr.mxu0 0.0
        %2162 = vmatpush1.msra.mxu0 0.0
        %2163 = vmatprep.subr.mxu0 0.0
        %2164 = vmatpush1.msra.mxu0 0.0
        %2165 = vmatprep.subr.mxu0 0.0
        %2166 = vmatpush1.msra.mxu0 0.0
        %2167 = vmatprep.subr.mxu0 0.0
        %2168 = vmatpush1.msra.mxu0 0.0
        %2169 = vmatprep.subr.mxu0 0.0
        %2170 = vmatpush1.msra.mxu0 0.0
        %2171 = vmatprep.subr.mxu0 0.0
        %2172 = vmatpush1.msra.mxu0 0.0
        %2173 = vmatprep.subr.mxu0 0.0
        %2174 = vmatpush1.msra.mxu0 0.0
        %2175 = vmatprep.subr.mxu0 0.0
        %2176 = vmatpush1.msra.mxu0 0.0
        %2177 = vmatprep.subr.mxu0 0.0
        %2178 = vmatpush1.msra.mxu0 0.0
        %2179 = vmatprep.mubr.f32.mxu0 0.0
        %2180 = vmatmul.mubr.f32.gmra.mrb[0].mxu0 %v2092
        %v2181 = vpop.f32.mrb[0].mxu0
        %v2182 = vadd.f32 0.0, %v2181
        %v2183 = vpop.f32.mrb[0].mxu0
        %2184 = vmatprep.mubr.f32.mxu0 0.0
        %2185 = vmatmul.mubr.f32.gmra.mrb[0].mxu0 %v2095
        %v2186 = vpop.f32.mrb[0].mxu0
        %v2187 = vadd.f32 0.0, %v2186
        %v2188 = vpop.f32.mrb[0].mxu0
        %2189 = vmatprep.mubr.f32.mxu0 0.0
        %2190 = vmatmul.mubr.f32.gmra.mrb[0].mxu0 %v2098
        %v2191 = vpop.f32.mrb[0].mxu0
        %v2192 = vadd.f32 0.0, %v2191
        %v2193 = vpop.f32.mrb[0].mxu0
        %2194 = vmatprep.mubr.f32.mxu0 0.0
        %2195 = vmatmul.mubr.f32.gmra.mrb[0].mxu0 %v2101
        %v2196 = vpop.f32.mrb[0].mxu0
        %v2197 = vadd.f32 0.0, %v2196
        %v2198 = vpop.f32.mrb[0].mxu0
        %2199 = vmatprep.mubr.f32.mxu0 0.0
        %2200 = vmatmul.mubr.f32.gmra.mrb[0].mxu0 %v2104
        %v2201 = vpop.f32.mrb[0].mxu0
        %v2202 = vadd.f32 0.0, %v2201
        %v2203 = vpop.f32.mrb[0].mxu0
        %2204 = vmatprep.mubr.f32.mxu0 0.0
        %2205 = vmatmul.mubr.f32.gmra.mrb[0].mxu0 %v2107
        %v2206 = vpop.f32.mrb[0].mxu0
        %v2207 = vadd.f32 0.0, %v2206
        %v2208 = vpop.f32.mrb[0].mxu0
        %2209 = vmatprep.mubr.f32.mxu0 0.0
        %2210 = vmatmul.mubr.f32.gmra.mrb[0].mxu0 %v2110
        %v2211 = vpop.f32.mrb[0].mxu0
        %v2212 = vadd.f32 0.0, %v2211
        %v2213 = vpop.f32.mrb[0].mxu0
        %2214 = vmatprep.mubr.f32.mxu0 0.0
        %2215 = vmatmul.mubr.f32.gmra.mrb[0].mxu0 %v2113
        %v2216 = vpop.f32.mrb[0].mxu0
        %v2217 = vadd.f32 0.0, %v2216
        %v2218 = vpop.f32.mrb[0].mxu0
        %2219 = vdwg.mxu0
        %v2220 = vadd.f32 %v2016, %v2182
        %v2221 = vadd.f32 %v2017, %v2187
        %v2222 = vadd.f32 %v2018, %v2192
        %v2223 = vadd.f32 %v2019, %v2197
        %v2224 = vadd.f32 %v2020, %v2202
        %v2225 = vadd.f32 %v2021, %v2207
        %v2226 = vadd.f32 %v2022, %v2212
        %v2227 = vadd.f32 %v2023, %v2217
        %v2228 = vld [vmem:[#allocation2 + $0xd] sm:$0xff]
        %v2229 = vld [vmem:[#allocation2 + $0x15] sm:$0xff]
        %v2230 = vld [vmem:[#allocation2 + $0x1d] sm:$0xff]
        %v2231 = vld [vmem:[#allocation2 + $0x25] sm:$0xff]
        %v2232 = vld [vmem:[#allocation2 + $0x2d] sm:$0xff]
        %v2233 = vld [vmem:[#allocation2 + $0x35] sm:$0xff]
        %v2234 = vld [vmem:[#allocation2 + $0x3d] sm:$0xff]
        %v2235 = vld [vmem:[#allocation2 + $0x45] sm:$0xff]
        %s2236 = scalar_lea.vmem %s5, 512
        %v2237 = vld [vmem:[%s2236] sm:$0xff]
        %v2238 = vld [vmem:[%s2236 + $0x8] sm:$0xff]
        %v2239 = vld [vmem:[%s2236 + $0x10] sm:$0xff]
        %v2240 = vld [vmem:[%s2236 + $0x18] sm:$0xff]
        %v2241 = vld [vmem:[%s2236 + $0x20] sm:$0xff]
        %v2242 = vld [vmem:[%s2236 + $0x28] sm:$0xff]
        %v2243 = vld [vmem:[%s2236 + $0x30] sm:$0xff]
        %v2244 = vld [vmem:[%s2236 + $0x38] sm:$0xff]
        %2246 = vset.pattern.permute.xlu0 0
        %2247 = vperm.xlu0 %2246, %v2237
        %v2248 = vpop.permute.xlu0 %2247
        %2251 = vset.pattern.permute.xlu0 0
        %2252 = vperm.xlu0 %2251, %v2238
        %v2253 = vpop.permute.xlu0 %2252
        %2256 = vset.pattern.permute.xlu0 0
        %2257 = vperm.xlu0 %2256, %v2239
        %v2258 = vpop.permute.xlu0 %2257
        %2261 = vset.pattern.permute.xlu0 0
        %2262 = vperm.xlu0 %2261, %v2240
        %v2263 = vpop.permute.xlu0 %2262
        %2266 = vset.pattern.permute.xlu0 0
        %2267 = vperm.xlu0 %2266, %v2241
        %v2268 = vpop.permute.xlu0 %2267
        %2271 = vset.pattern.permute.xlu0 0
        %2272 = vperm.xlu0 %2271, %v2242
        %v2273 = vpop.permute.xlu0 %2272
        %2276 = vset.pattern.permute.xlu0 0
        %2277 = vperm.xlu0 %2276, %v2243
        %v2278 = vpop.permute.xlu0 %2277
        %2281 = vset.pattern.permute.xlu0 0
        %2282 = vperm.xlu0 %2281, %v2244
        %v2283 = vpop.permute.xlu0 %2282
        %v2285 = vmul.f32 %v2228, %v2248
        %v2286 = vmul.f32 %v2229, %v2253
        %v2287 = vmul.f32 %v2230, %v2258
        %v2288 = vmul.f32 %v2231, %v2263
        %v2289 = vmul.f32 %v2232, %v2268
        %v2290 = vmul.f32 %v2233, %v2273
        %v2291 = vmul.f32 %v2234, %v2278
        %v2292 = vmul.f32 %v2235, %v2283
        %v2293 = vld [vmem:[%s3 + $0x80] sm:$0xff]
        %v2294 = vld [vmem:[%s3 + $0x88] sm:$0xff]
        %v2296 = vsel %vm439, %v2285, 0
        %v2299 = vsel %vm439, %v2286, 0
        %v2302 = vsel %vm439, %v2287, 0
        %v2305 = vsel %vm439, %v2288, 0
        %v2308 = vsel %vm439, %v2289, 0
        %v2311 = vsel %vm439, %v2290, 0
        %v2314 = vsel %vm439, %v2291, 0
        %v2317 = vsel %vm439, %v2292, 0
        %2319 = vmatprep.subr.mxu0 0.0
        %2320 = vmatpush1.msra.mxu0 %v2293
        %2321 = vmatprep.subr.mxu0 0.0
        %2322 = vmatpush1.msra.mxu0 %v2294
        %2323 = vmatprep.subr.mxu0 0.0
        %2324 = vmatpush1.msra.mxu0 0.0
        %2325 = vmatprep.subr.mxu0 0.0
        %2326 = vmatpush1.msra.mxu0 0.0
        %2327 = vmatprep.subr.mxu0 0.0
        %2328 = vmatpush1.msra.mxu0 0.0
        %2329 = vmatprep.subr.mxu0 0.0
        %2330 = vmatpush1.msra.mxu0 0.0
        %2331 = vmatprep.subr.mxu0 0.0
        %2332 = vmatpush1.msra.mxu0 0.0
        %2333 = vmatprep.subr.mxu0 0.0
        %2334 = vmatpush1.msra.mxu0 0.0
        %2335 = vmatprep.subr.mxu0 0.0
        %2336 = vmatpush1.msra.mxu0 0.0
        %2337 = vmatprep.subr.mxu0 0.0
        %2338 = vmatpush1.msra.mxu0 0.0
        %2339 = vmatprep.subr.mxu0 0.0
        %2340 = vmatpush1.msra.mxu0 0.0
        %2341 = vmatprep.subr.mxu0 0.0
        %2342 = vmatpush1.msra.mxu0 0.0
        %2343 = vmatprep.subr.mxu0 0.0
        %2344 = vmatpush1.msra.mxu0 0.0
        %2345 = vmatprep.subr.mxu0 0.0
        %2346 = vmatpush1.msra.mxu0 0.0
        %2347 = vmatprep.subr.mxu0 0.0
        %2348 = vmatpush1.msra.mxu0 0.0
        %2349 = vmatprep.subr.mxu0 0.0
        %2350 = vmatpush1.msra.mxu0 0.0
        %2351 = vmatprep.subr.mxu0 0.0
        %2352 = vmatpush1.msra.mxu0 0.0
        %2353 = vmatprep.subr.mxu0 0.0
        %2354 = vmatpush1.msra.mxu0 0.0
        %2355 = vmatprep.subr.mxu0 0.0
        %2356 = vmatpush1.msra.mxu0 0.0
        %2357 = vmatprep.subr.mxu0 0.0
        %2358 = vmatpush1.msra.mxu0 0.0
        %2359 = vmatprep.subr.mxu0 0.0
        %2360 = vmatpush1.msra.mxu0 0.0
        %2361 = vmatprep.subr.mxu0 0.0
        %2362 = vmatpush1.msra.mxu0 0.0
        %2363 = vmatprep.subr.mxu0 0.0
        %2364 = vmatpush1.msra.mxu0 0.0
        %2365 = vmatprep.subr.mxu0 0.0
        %2366 = vmatpush1.msra.mxu0 0.0
        %2367 = vmatprep.subr.mxu0 0.0
        %2368 = vmatpush1.msra.mxu0 0.0
        %2369 = vmatprep.subr.mxu0 0.0
        %2370 = vmatpush1.msra.mxu0 0.0
        %2371 = vmatprep.subr.mxu0 0.0
        %2372 = vmatpush1.msra.mxu0 0.0
        %2373 = vmatprep.subr.mxu0 0.0
        %2374 = vmatpush1.msra.mxu0 0.0
        %2375 = vmatprep.subr.mxu0 0.0
        %2376 = vmatpush1.msra.mxu0 0.0
        %2377 = vmatprep.subr.mxu0 0.0
        %2378 = vmatpush1.msra.mxu0 0.0
        %2379 = vmatprep.subr.mxu0 0.0
        %2380 = vmatpush1.msra.mxu0 0.0
        %2381 = vmatprep.subr.mxu0 0.0
        %2382 = vmatpush1.msra.mxu0 0.0
        %2383 = vmatprep.mubr.f32.mxu0 0.0
        %2384 = vmatmul.mubr.f32.gmra.mrb[0].mxu0 %v2296
        %v2385 = vpop.f32.mrb[0].mxu0
        %v2386 = vadd.f32 0.0, %v2385
        %v2387 = vpop.f32.mrb[0].mxu0
        %2388 = vmatprep.mubr.f32.mxu0 0.0
        %2389 = vmatmul.mubr.f32.gmra.mrb[0].mxu0 %v2299
        %v2390 = vpop.f32.mrb[0].mxu0
        %v2391 = vadd.f32 0.0, %v2390
        %v2392 = vpop.f32.mrb[0].mxu0
        %2393 = vmatprep.mubr.f32.mxu0 0.0
        %2394 = vmatmul.mubr.f32.gmra.mrb[0].mxu0 %v2302
        %v2395 = vpop.f32.mrb[0].mxu0
        %v2396 = vadd.f32 0.0, %v2395
        %v2397 = vpop.f32.mrb[0].mxu0
        %2398 = vmatprep.mubr.f32.mxu0 0.0
        %2399 = vmatmul.mubr.f32.gmra.mrb[0].mxu0 %v2305
        %v2400 = vpop.f32.mrb[0].mxu0
        %v2401 = vadd.f32 0.0, %v2400
        %v2402 = vpop.f32.mrb[0].mxu0
        %2403 = vmatprep.mubr.f32.mxu0 0.0
        %2404 = vmatmul.mubr.f32.gmra.mrb[0].mxu0 %v2308
        %v2405 = vpop.f32.mrb[0].mxu0
        %v2406 = vadd.f32 0.0, %v2405
        %v2407 = vpop.f32.mrb[0].mxu0
        %2408 = vmatprep.mubr.f32.mxu0 0.0
        %2409 = vmatmul.mubr.f32.gmra.mrb[0].mxu0 %v2311
        %v2410 = vpop.f32.mrb[0].mxu0
        %v2411 = vadd.f32 0.0, %v2410
        %v2412 = vpop.f32.mrb[0].mxu0
        %2413 = vmatprep.mubr.f32.mxu0 0.0
        %2414 = vmatmul.mubr.f32.gmra.mrb[0].mxu0 %v2314
        %v2415 = vpop.f32.mrb[0].mxu0
        %v2416 = vadd.f32 0.0, %v2415
        %v2417 = vpop.f32.mrb[0].mxu0
        %2418 = vmatprep.mubr.f32.mxu0 0.0
        %2419 = vmatmul.mubr.f32.gmra.mrb[0].mxu0 %v2317
        %v2420 = vpop.f32.mrb[0].mxu0
        %v2421 = vadd.f32 0.0, %v2420
        %v2422 = vpop.f32.mrb[0].mxu0
        %2423 = vdwg.mxu0
        %v2424 = vadd.f32 %v2220, %v2386
        %v2425 = vadd.f32 %v2221, %v2391
        %v2426 = vadd.f32 %v2222, %v2396
        %v2427 = vadd.f32 %v2223, %v2401
        %v2428 = vadd.f32 %v2224, %v2406
        %v2429 = vadd.f32 %v2225, %v2411
        %v2430 = vadd.f32 %v2226, %v2416
        %v2431 = vadd.f32 %v2227, %v2421
        %v2432 = vld [vmem:[#allocation2 + $0x13] sm:$0xff]
        %v2433 = vld [vmem:[#allocation2 + $0x1b] sm:$0xff]
        %v2434 = vld [vmem:[#allocation2 + $0x23] sm:$0xff]
        %v2435 = vld [vmem:[#allocation2 + $0x2b] sm:$0xff]
        %v2436 = vld [vmem:[#allocation2 + $0x33] sm:$0xff]
        %v2437 = vld [vmem:[#allocation2 + $0x3b] sm:$0xff]
        %v2438 = vld [vmem:[#allocation2 + $0x43] sm:$0xff]
        %v2439 = vld [vmem:[#allocation2 + $0x4b] sm:$0xff]
        %s2440 = scalar_lea.vmem %s5, 576
        %v2441 = vld [vmem:[%s2440] sm:$0xff]
        %v2442 = vld [vmem:[%s2440 + $0x8] sm:$0xff]
        %v2443 = vld [vmem:[%s2440 + $0x10] sm:$0xff]
        %v2444 = vld [vmem:[%s2440 + $0x18] sm:$0xff]
        %v2445 = vld [vmem:[%s2440 + $0x20] sm:$0xff]
        %v2446 = vld [vmem:[%s2440 + $0x28] sm:$0xff]
        %v2447 = vld [vmem:[%s2440 + $0x30] sm:$0xff]
        %v2448 = vld [vmem:[%s2440 + $0x38] sm:$0xff]
        %2450 = vset.pattern.permute.xlu0 0
        %2451 = vperm.xlu0 %2450, %v2441
        %v2452 = vpop.permute.xlu0 %2451
        %2455 = vset.pattern.permute.xlu0 0
        %2456 = vperm.xlu0 %2455, %v2442
        %v2457 = vpop.permute.xlu0 %2456
        %2460 = vset.pattern.permute.xlu0 0
        %2461 = vperm.xlu0 %2460, %v2443
        %v2462 = vpop.permute.xlu0 %2461
        %2465 = vset.pattern.permute.xlu0 0
        %2466 = vperm.xlu0 %2465, %v2444
        %v2467 = vpop.permute.xlu0 %2466
        %2470 = vset.pattern.permute.xlu0 0
        %2471 = vperm.xlu0 %2470, %v2445
        %v2472 = vpop.permute.xlu0 %2471
        %2475 = vset.pattern.permute.xlu0 0
        %2476 = vperm.xlu0 %2475, %v2446
        %v2477 = vpop.permute.xlu0 %2476
        %2480 = vset.pattern.permute.xlu0 0
        %2481 = vperm.xlu0 %2480, %v2447
        %v2482 = vpop.permute.xlu0 %2481
        %2485 = vset.pattern.permute.xlu0 0
        %2486 = vperm.xlu0 %2485, %v2448
        %v2487 = vpop.permute.xlu0 %2486
        %v2489 = vmul.f32 %v2432, %v2452
        %v2490 = vmul.f32 %v2433, %v2457
        %v2491 = vmul.f32 %v2434, %v2462
        %v2492 = vmul.f32 %v2435, %v2467
        %v2493 = vmul.f32 %v2436, %v2472
        %v2494 = vmul.f32 %v2437, %v2477
        %v2495 = vmul.f32 %v2438, %v2482
        %v2496 = vmul.f32 %v2439, %v2487
        %v2497 = vld [vmem:[%s3 + $0x90] sm:$0xff]
        %v2498 = vld [vmem:[%s3 + $0x98] sm:$0xff]
        %v2500 = vsel %vm439, %v2489, 0
        %v2503 = vsel %vm439, %v2490, 0
        %v2506 = vsel %vm439, %v2491, 0
        %v2509 = vsel %vm439, %v2492, 0
        %v2512 = vsel %vm439, %v2493, 0
        %v2515 = vsel %vm439, %v2494, 0
        %v2518 = vsel %vm439, %v2495, 0
        %v2521 = vsel %vm439, %v2496, 0
        %2523 = vmatprep.subr.mxu0 0.0
        %2524 = vmatpush1.msra.mxu0 %v2497
        %2525 = vmatprep.subr.mxu0 0.0
        %2526 = vmatpush1.msra.mxu0 %v2498
        %2527 = vmatprep.subr.mxu0 0.0
        %2528 = vmatpush1.msra.mxu0 0.0
        %2529 = vmatprep.subr.mxu0 0.0
        %2530 = vmatpush1.msra.mxu0 0.0
        %2531 = vmatprep.subr.mxu0 0.0
        %2532 = vmatpush1.msra.mxu0 0.0
        %2533 = vmatprep.subr.mxu0 0.0
        %2534 = vmatpush1.msra.mxu0 0.0
        %2535 = vmatprep.subr.mxu0 0.0
        %2536 = vmatpush1.msra.mxu0 0.0
        %2537 = vmatprep.subr.mxu0 0.0
        %2538 = vmatpush1.msra.mxu0 0.0
        %2539 = vmatprep.subr.mxu0 0.0
        %2540 = vmatpush1.msra.mxu0 0.0
        %2541 = vmatprep.subr.mxu0 0.0
        %2542 = vmatpush1.msra.mxu0 0.0
        %2543 = vmatprep.subr.mxu0 0.0
        %2544 = vmatpush1.msra.mxu0 0.0
        %2545 = vmatprep.subr.mxu0 0.0
        %2546 = vmatpush1.msra.mxu0 0.0
        %2547 = vmatprep.subr.mxu0 0.0
        %2548 = vmatpush1.msra.mxu0 0.0
        %2549 = vmatprep.subr.mxu0 0.0
        %2550 = vmatpush1.msra.mxu0 0.0
        %2551 = vmatprep.subr.mxu0 0.0
        %2552 = vmatpush1.msra.mxu0 0.0
        %2553 = vmatprep.subr.mxu0 0.0
        %2554 = vmatpush1.msra.mxu0 0.0
        %2555 = vmatprep.subr.mxu0 0.0
        %2556 = vmatpush1.msra.mxu0 0.0
        %2557 = vmatprep.subr.mxu0 0.0
        %2558 = vmatpush1.msra.mxu0 0.0
        %2559 = vmatprep.subr.mxu0 0.0
        %2560 = vmatpush1.msra.mxu0 0.0
        %2561 = vmatprep.subr.mxu0 0.0
        %2562 = vmatpush1.msra.mxu0 0.0
        %2563 = vmatprep.subr.mxu0 0.0
        %2564 = vmatpush1.msra.mxu0 0.0
        %2565 = vmatprep.subr.mxu0 0.0
        %2566 = vmatpush1.msra.mxu0 0.0
        %2567 = vmatprep.subr.mxu0 0.0
        %2568 = vmatpush1.msra.mxu0 0.0
        %2569 = vmatprep.subr.mxu0 0.0
        %2570 = vmatpush1.msra.mxu0 0.0
        %2571 = vmatprep.subr.mxu0 0.0
        %2572 = vmatpush1.msra.mxu0 0.0
        %2573 = vmatprep.subr.mxu0 0.0
        %2574 = vmatpush1.msra.mxu0 0.0
        %2575 = vmatprep.subr.mxu0 0.0
        %2576 = vmatpush1.msra.mxu0 0.0
        %2577 = vmatprep.subr.mxu0 0.0
        %2578 = vmatpush1.msra.mxu0 0.0
        %2579 = vmatprep.subr.mxu0 0.0
        %2580 = vmatpush1.msra.mxu0 0.0
        %2581 = vmatprep.subr.mxu0 0.0
        %2582 = vmatpush1.msra.mxu0 0.0
        %2583 = vmatprep.subr.mxu0 0.0
        %2584 = vmatpush1.msra.mxu0 0.0
        %2585 = vmatprep.subr.mxu0 0.0
        %2586 = vmatpush1.msra.mxu0 0.0
        %2587 = vmatprep.mubr.f32.mxu0 0.0
        %2588 = vmatmul.mubr.f32.gmra.mrb[0].mxu0 %v2500
        %v2589 = vpop.f32.mrb[0].mxu0
        %v2590 = vadd.f32 0.0, %v2589
        %v2591 = vpop.f32.mrb[0].mxu0
        %2592 = vmatprep.mubr.f32.mxu0 0.0
        %2593 = vmatmul.mubr.f32.gmra.mrb[0].mxu0 %v2503
        %v2594 = vpop.f32.mrb[0].mxu0
        %v2595 = vadd.f32 0.0, %v2594
        %v2596 = vpop.f32.mrb[0].mxu0
        %2597 = vmatprep.mubr.f32.mxu0 0.0
        %2598 = vmatmul.mubr.f32.gmra.mrb[0].mxu0 %v2506
        %v2599 = vpop.f32.mrb[0].mxu0
        %v2600 = vadd.f32 0.0, %v2599
        %v2601 = vpop.f32.mrb[0].mxu0
        %2602 = vmatprep.mubr.f32.mxu0 0.0
        %2603 = vmatmul.mubr.f32.gmra.mrb[0].mxu0 %v2509
        %v2604 = vpop.f32.mrb[0].mxu0
        %v2605 = vadd.f32 0.0, %v2604
        %v2606 = vpop.f32.mrb[0].mxu0
        %2607 = vmatprep.mubr.f32.mxu0 0.0
        %2608 = vmatmul.mubr.f32.gmra.mrb[0].mxu0 %v2512
        %v2609 = vpop.f32.mrb[0].mxu0
        %v2610 = vadd.f32 0.0, %v2609
        %v2611 = vpop.f32.mrb[0].mxu0
        %2612 = vmatprep.mubr.f32.mxu0 0.0
        %2613 = vmatmul.mubr.f32.gmra.mrb[0].mxu0 %v2515
        %v2614 = vpop.f32.mrb[0].mxu0
        %v2615 = vadd.f32 0.0, %v2614
        %v2616 = vpop.f32.mrb[0].mxu0
        %2617 = vmatprep.mubr.f32.mxu0 0.0
        %2618 = vmatmul.mubr.f32.gmra.mrb[0].mxu0 %v2518
        %v2619 = vpop.f32.mrb[0].mxu0
        %v2620 = vadd.f32 0.0, %v2619
        %v2621 = vpop.f32.mrb[0].mxu0
        %2622 = vmatprep.mubr.f32.mxu0 0.0
        %2623 = vmatmul.mubr.f32.gmra.mrb[0].mxu0 %v2521
        %v2624 = vpop.f32.mrb[0].mxu0
        %v2625 = vadd.f32 0.0, %v2624
        %v2626 = vpop.f32.mrb[0].mxu0
        %2627 = vdwg.mxu0
        %v2628 = vadd.f32 %v2424, %v2590
        %v2629 = vadd.f32 %v2425, %v2595
        %v2630 = vadd.f32 %v2426, %v2600
        %v2631 = vadd.f32 %v2427, %v2605
        %v2632 = vadd.f32 %v2428, %v2610
        %v2633 = vadd.f32 %v2429, %v2615
        %v2634 = vadd.f32 %v2430, %v2620
        %v2635 = vadd.f32 %v2431, %v2625
        %v2636 = vld [vmem:[#allocation2 + $0x14] sm:$0xff]
        %v2637 = vld [vmem:[#allocation2 + $0x1c] sm:$0xff]
        %v2638 = vld [vmem:[#allocation2 + $0x24] sm:$0xff]
        %v2639 = vld [vmem:[#allocation2 + $0x2c] sm:$0xff]
        %v2640 = vld [vmem:[#allocation2 + $0x34] sm:$0xff]
        %v2641 = vld [vmem:[#allocation2 + $0x3c] sm:$0xff]
        %v2642 = vld [vmem:[#allocation2 + $0x44] sm:$0xff]
        %v2643 = vld [vmem:[#allocation2 + $0x4c] sm:$0xff]
        %s2644 = scalar_lea.vmem %s5, 640
        %v2645 = vld [vmem:[%s2644] sm:$0xff]
        %v2646 = vld [vmem:[%s2644 + $0x8] sm:$0xff]
        %v2647 = vld [vmem:[%s2644 + $0x10] sm:$0xff]
        %v2648 = vld [vmem:[%s2644 + $0x18] sm:$0xff]
        %v2649 = vld [vmem:[%s2644 + $0x20] sm:$0xff]
        %v2650 = vld [vmem:[%s2644 + $0x28] sm:$0xff]
        %v2651 = vld [vmem:[%s2644 + $0x30] sm:$0xff]
        %v2652 = vld [vmem:[%s2644 + $0x38] sm:$0xff]
        %2654 = vset.pattern.permute.xlu0 0
        %2655 = vperm.xlu0 %2654, %v2645
        %v2656 = vpop.permute.xlu0 %2655
        %2659 = vset.pattern.permute.xlu0 0
        %2660 = vperm.xlu0 %2659, %v2646
        %v2661 = vpop.permute.xlu0 %2660
        %2664 = vset.pattern.permute.xlu0 0
        %2665 = vperm.xlu0 %2664, %v2647
        %v2666 = vpop.permute.xlu0 %2665
        %2669 = vset.pattern.permute.xlu0 0
        %2670 = vperm.xlu0 %2669, %v2648
        %v2671 = vpop.permute.xlu0 %2670
        %2674 = vset.pattern.permute.xlu0 0
        %2675 = vperm.xlu0 %2674, %v2649
        %v2676 = vpop.permute.xlu0 %2675
        %2679 = vset.pattern.permute.xlu0 0
        %2680 = vperm.xlu0 %2679, %v2650
        %v2681 = vpop.permute.xlu0 %2680
        %2684 = vset.pattern.permute.xlu0 0
        %2685 = vperm.xlu0 %2684, %v2651
        %v2686 = vpop.permute.xlu0 %2685
        %2689 = vset.pattern.permute.xlu0 0
        %2690 = vperm.xlu0 %2689, %v2652
        %v2691 = vpop.permute.xlu0 %2690
        %v2693 = vmul.f32 %v2636, %v2656
        %v2694 = vmul.f32 %v2637, %v2661
        %v2695 = vmul.f32 %v2638, %v2666
        %v2696 = vmul.f32 %v2639, %v2671
        %v2697 = vmul.f32 %v2640, %v2676
        %v2698 = vmul.f32 %v2641, %v2681
        %v2699 = vmul.f32 %v2642, %v2686
        %v2700 = vmul.f32 %v2643, %v2691
        %v2701 = vld [vmem:[%s3 + $0xa0] sm:$0xff]
        %v2702 = vld [vmem:[%s3 + $0xa8] sm:$0xff]
        %v2704 = vsel %vm439, %v2693, 0
        %v2707 = vsel %vm439, %v2694, 0
        %v2710 = vsel %vm439, %v2695, 0
        %v2713 = vsel %vm439, %v2696, 0
        %v2716 = vsel %vm439, %v2697, 0
        %v2719 = vsel %vm439, %v2698, 0
        %v2722 = vsel %vm439, %v2699, 0
        %v2725 = vsel %vm439, %v2700, 0
        %2727 = vmatprep.subr.mxu0 0.0
        %2728 = vmatpush1.msra.mxu0 %v2701
        %2729 = vmatprep.subr.mxu0 0.0
        %2730 = vmatpush1.msra.mxu0 %v2702
        %2731 = vmatprep.subr.mxu0 0.0
        %2732 = vmatpush1.msra.mxu0 0.0
        %2733 = vmatprep.subr.mxu0 0.0
        %2734 = vmatpush1.msra.mxu0 0.0
        %2735 = vmatprep.subr.mxu0 0.0
        %2736 = vmatpush1.msra.mxu0 0.0
        %2737 = vmatprep.subr.mxu0 0.0
        %2738 = vmatpush1.msra.mxu0 0.0
        %2739 = vmatprep.subr.mxu0 0.0
        %2740 = vmatpush1.msra.mxu0 0.0
        %2741 = vmatprep.subr.mxu0 0.0
        %2742 = vmatpush1.msra.mxu0 0.0
        %2743 = vmatprep.subr.mxu0 0.0
        %2744 = vmatpush1.msra.mxu0 0.0
        %2745 = vmatprep.subr.mxu0 0.0
        %2746 = vmatpush1.msra.mxu0 0.0
        %2747 = vmatprep.subr.mxu0 0.0
        %2748 = vmatpush1.msra.mxu0 0.0
        %2749 = vmatprep.subr.mxu0 0.0
        %2750 = vmatpush1.msra.mxu0 0.0
        %2751 = vmatprep.subr.mxu0 0.0
        %2752 = vmatpush1.msra.mxu0 0.0
        %2753 = vmatprep.subr.mxu0 0.0
        %2754 = vmatpush1.msra.mxu0 0.0
        %2755 = vmatprep.subr.mxu0 0.0
        %2756 = vmatpush1.msra.mxu0 0.0
        %2757 = vmatprep.subr.mxu0 0.0
        %2758 = vmatpush1.msra.mxu0 0.0
        %2759 = vmatprep.subr.mxu0 0.0
        %2760 = vmatpush1.msra.mxu0 0.0
        %2761 = vmatprep.subr.mxu0 0.0
        %2762 = vmatpush1.msra.mxu0 0.0
        %2763 = vmatprep.subr.mxu0 0.0
        %2764 = vmatpush1.msra.mxu0 0.0
        %2765 = vmatprep.subr.mxu0 0.0
        %2766 = vmatpush1.msra.mxu0 0.0
        %2767 = vmatprep.subr.mxu0 0.0
        %2768 = vmatpush1.msra.mxu0 0.0
        %2769 = vmatprep.subr.mxu0 0.0
        %2770 = vmatpush1.msra.mxu0 0.0
        %2771 = vmatprep.subr.mxu0 0.0
        %2772 = vmatpush1.msra.mxu0 0.0
        %2773 = vmatprep.subr.mxu0 0.0
        %2774 = vmatpush1.msra.mxu0 0.0
        %2775 = vmatprep.subr.mxu0 0.0
        %2776 = vmatpush1.msra.mxu0 0.0
        %2777 = vmatprep.subr.mxu0 0.0
        %2778 = vmatpush1.msra.mxu0 0.0
        %2779 = vmatprep.subr.mxu0 0.0
        %2780 = vmatpush1.msra.mxu0 0.0
        %2781 = vmatprep.subr.mxu0 0.0
        %2782 = vmatpush1.msra.mxu0 0.0
        %2783 = vmatprep.subr.mxu0 0.0
        %2784 = vmatpush1.msra.mxu0 0.0
        %2785 = vmatprep.subr.mxu0 0.0
        %2786 = vmatpush1.msra.mxu0 0.0
        %2787 = vmatprep.subr.mxu0 0.0
        %2788 = vmatpush1.msra.mxu0 0.0
        %2789 = vmatprep.subr.mxu0 0.0
        %2790 = vmatpush1.msra.mxu0 0.0
        %2791 = vmatprep.mubr.f32.mxu0 0.0
        %2792 = vmatmul.mubr.f32.gmra.mrb[0].mxu0 %v2704
        %v2793 = vpop.f32.mrb[0].mxu0
        %v2794 = vadd.f32 0.0, %v2793
        %v2795 = vpop.f32.mrb[0].mxu0
        %2796 = vmatprep.mubr.f32.mxu0 0.0
        %2797 = vmatmul.mubr.f32.gmra.mrb[0].mxu0 %v2707
        %v2798 = vpop.f32.mrb[0].mxu0
        %v2799 = vadd.f32 0.0, %v2798
        %v2800 = vpop.f32.mrb[0].mxu0
        %2801 = vmatprep.mubr.f32.mxu0 0.0
        %2802 = vmatmul.mubr.f32.gmra.mrb[0].mxu0 %v2710
        %v2803 = vpop.f32.mrb[0].mxu0
        %v2804 = vadd.f32 0.0, %v2803
        %v2805 = vpop.f32.mrb[0].mxu0
        %2806 = vmatprep.mubr.f32.mxu0 0.0
        %2807 = vmatmul.mubr.f32.gmra.mrb[0].mxu0 %v2713
        %v2808 = vpop.f32.mrb[0].mxu0
        %v2809 = vadd.f32 0.0, %v2808
        %v2810 = vpop.f32.mrb[0].mxu0
        %2811 = vmatprep.mubr.f32.mxu0 0.0
        %2812 = vmatmul.mubr.f32.gmra.mrb[0].mxu0 %v2716
        %v2813 = vpop.f32.mrb[0].mxu0
        %v2814 = vadd.f32 0.0, %v2813
        %v2815 = vpop.f32.mrb[0].mxu0
        %2816 = vmatprep.mubr.f32.mxu0 0.0
        %2817 = vmatmul.mubr.f32.gmra.mrb[0].mxu0 %v2719
        %v2818 = vpop.f32.mrb[0].mxu0
        %v2819 = vadd.f32 0.0, %v2818
        %v2820 = vpop.f32.mrb[0].mxu0
        %2821 = vmatprep.mubr.f32.mxu0 0.0
        %2822 = vmatmul.mubr.f32.gmra.mrb[0].mxu0 %v2722
        %v2823 = vpop.f32.mrb[0].mxu0
        %v2824 = vadd.f32 0.0, %v2823
        %v2825 = vpop.f32.mrb[0].mxu0
        %2826 = vmatprep.mubr.f32.mxu0 0.0
        %2827 = vmatmul.mubr.f32.gmra.mrb[0].mxu0 %v2725
        %v2828 = vpop.f32.mrb[0].mxu0
        %v2829 = vadd.f32 0.0, %v2828
        %v2830 = vpop.f32.mrb[0].mxu0
        %2831 = vdwg.mxu0
        %v2832 = vadd.f32 %v2628, %v2794
        %v2833 = vadd.f32 %v2629, %v2799
        %v2834 = vadd.f32 %v2630, %v2804
        %v2835 = vadd.f32 %v2631, %v2809
        %v2836 = vadd.f32 %v2632, %v2814
        %v2837 = vadd.f32 %v2633, %v2819
        %v2838 = vadd.f32 %v2634, %v2824
        %v2839 = vadd.f32 %v2635, %v2829
        %v2840 = vld [vmem:[#allocation2 + $0x15] sm:$0xff]
        %v2841 = vld [vmem:[#allocation2 + $0x1d] sm:$0xff]
        %v2842 = vld [vmem:[#allocation2 + $0x25] sm:$0xff]
        %v2843 = vld [vmem:[#allocation2 + $0x2d] sm:$0xff]
        %v2844 = vld [vmem:[#allocation2 + $0x35] sm:$0xff]
        %v2845 = vld [vmem:[#allocation2 + $0x3d] sm:$0xff]
        %v2846 = vld [vmem:[#allocation2 + $0x45] sm:$0xff]
        %v2847 = vld [vmem:[#allocation2 + $0x4d] sm:$0xff]
        %s2848 = scalar_lea.vmem %s5, 704
        %v2849 = vld [vmem:[%s2848] sm:$0xff]
        %v2850 = vld [vmem:[%s2848 + $0x8] sm:$0xff]
        %v2851 = vld [vmem:[%s2848 + $0x10] sm:$0xff]
        %v2852 = vld [vmem:[%s2848 + $0x18] sm:$0xff]
        %v2853 = vld [vmem:[%s2848 + $0x20] sm:$0xff]
        %v2854 = vld [vmem:[%s2848 + $0x28] sm:$0xff]
        %v2855 = vld [vmem:[%s2848 + $0x30] sm:$0xff]
        %v2856 = vld [vmem:[%s2848 + $0x38] sm:$0xff]
        %2858 = vset.pattern.permute.xlu0 0
        %2859 = vperm.xlu0 %2858, %v2849
        %v2860 = vpop.permute.xlu0 %2859
        %2863 = vset.pattern.permute.xlu0 0
        %2864 = vperm.xlu0 %2863, %v2850
        %v2865 = vpop.permute.xlu0 %2864
        %2868 = vset.pattern.permute.xlu0 0
        %2869 = vperm.xlu0 %2868, %v2851
        %v2870 = vpop.permute.xlu0 %2869
        %2873 = vset.pattern.permute.xlu0 0
        %2874 = vperm.xlu0 %2873, %v2852
        %v2875 = vpop.permute.xlu0 %2874
        %2878 = vset.pattern.permute.xlu0 0
        %2879 = vperm.xlu0 %2878, %v2853
        %v2880 = vpop.permute.xlu0 %2879
        %2883 = vset.pattern.permute.xlu0 0
        %2884 = vperm.xlu0 %2883, %v2854
        %v2885 = vpop.permute.xlu0 %2884
        %2888 = vset.pattern.permute.xlu0 0
        %2889 = vperm.xlu0 %2888, %v2855
        %v2890 = vpop.permute.xlu0 %2889
        %2893 = vset.pattern.permute.xlu0 0
        %2894 = vperm.xlu0 %2893, %v2856
        %v2895 = vpop.permute.xlu0 %2894
        %v2897 = vmul.f32 %v2840, %v2860
        %v2898 = vmul.f32 %v2841, %v2865
        %v2899 = vmul.f32 %v2842, %v2870
        %v2900 = vmul.f32 %v2843, %v2875
        %v2901 = vmul.f32 %v2844, %v2880
        %v2902 = vmul.f32 %v2845, %v2885
        %v2903 = vmul.f32 %v2846, %v2890
        %v2904 = vmul.f32 %v2847, %v2895
        %v2905 = vld [vmem:[%s3 + $0xb0] sm:$0xff]
        %v2906 = vld [vmem:[%s3 + $0xb8] sm:$0xff]
        %v2908 = vsel %vm439, %v2897, 0
        %v2911 = vsel %vm439, %v2898, 0
        %v2914 = vsel %vm439, %v2899, 0
        %v2917 = vsel %vm439, %v2900, 0
        %v2920 = vsel %vm439, %v2901, 0
        %v2923 = vsel %vm439, %v2902, 0
        %v2926 = vsel %vm439, %v2903, 0
        %v2929 = vsel %vm439, %v2904, 0
        %2931 = vmatprep.subr.mxu0 0.0
        %2932 = vmatpush1.msra.mxu0 %v2905
        %2933 = vmatprep.subr.mxu0 0.0
        %2934 = vmatpush1.msra.mxu0 %v2906
        %2935 = vmatprep.subr.mxu0 0.0
        %2936 = vmatpush1.msra.mxu0 0.0
        %2937 = vmatprep.subr.mxu0 0.0
        %2938 = vmatpush1.msra.mxu0 0.0
        %2939 = vmatprep.subr.mxu0 0.0
        %2940 = vmatpush1.msra.mxu0 0.0
        %2941 = vmatprep.subr.mxu0 0.0
        %2942 = vmatpush1.msra.mxu0 0.0
        %2943 = vmatprep.subr.mxu0 0.0
        %2944 = vmatpush1.msra.mxu0 0.0
        %2945 = vmatprep.subr.mxu0 0.0
        %2946 = vmatpush1.msra.mxu0 0.0
        %2947 = vmatprep.subr.mxu0 0.0
        %2948 = vmatpush1.msra.mxu0 0.0
        %2949 = vmatprep.subr.mxu0 0.0
        %2950 = vmatpush1.msra.mxu0 0.0
        %2951 = vmatprep.subr.mxu0 0.0
        %2952 = vmatpush1.msra.mxu0 0.0
        %2953 = vmatprep.subr.mxu0 0.0
        %2954 = vmatpush1.msra.mxu0 0.0
        %2955 = vmatprep.subr.mxu0 0.0
        %2956 = vmatpush1.msra.mxu0 0.0
        %2957 = vmatprep.subr.mxu0 0.0
        %2958 = vmatpush1.msra.mxu0 0.0
        %2959 = vmatprep.subr.mxu0 0.0
        %2960 = vmatpush1.msra.mxu0 0.0
        %2961 = vmatprep.subr.mxu0 0.0
        %2962 = vmatpush1.msra.mxu0 0.0
        %2963 = vmatprep.subr.mxu0 0.0
        %2964 = vmatpush1.msra.mxu0 0.0
        %2965 = vmatprep.subr.mxu0 0.0
        %2966 = vmatpush1.msra.mxu0 0.0
        %2967 = vmatprep.subr.mxu0 0.0
        %2968 = vmatpush1.msra.mxu0 0.0
        %2969 = vmatprep.subr.mxu0 0.0
        %2970 = vmatpush1.msra.mxu0 0.0
        %2971 = vmatprep.subr.mxu0 0.0
        %2972 = vmatpush1.msra.mxu0 0.0
        %2973 = vmatprep.subr.mxu0 0.0
        %2974 = vmatpush1.msra.mxu0 0.0
        %2975 = vmatprep.subr.mxu0 0.0
        %2976 = vmatpush1.msra.mxu0 0.0
        %2977 = vmatprep.subr.mxu0 0.0
        %2978 = vmatpush1.msra.mxu0 0.0
        %2979 = vmatprep.subr.mxu0 0.0
        %2980 = vmatpush1.msra.mxu0 0.0
        %2981 = vmatprep.subr.mxu0 0.0
        %2982 = vmatpush1.msra.mxu0 0.0
        %2983 = vmatprep.subr.mxu0 0.0
        %2984 = vmatpush1.msra.mxu0 0.0
        %2985 = vmatprep.subr.mxu0 0.0
        %2986 = vmatpush1.msra.mxu0 0.0
        %2987 = vmatprep.subr.mxu0 0.0
        %2988 = vmatpush1.msra.mxu0 0.0
        %2989 = vmatprep.subr.mxu0 0.0
        %2990 = vmatpush1.msra.mxu0 0.0
        %2991 = vmatprep.subr.mxu0 0.0
        %2992 = vmatpush1.msra.mxu0 0.0
        %2993 = vmatprep.subr.mxu0 0.0
        %2994 = vmatpush1.msra.mxu0 0.0
        %2995 = vmatprep.mubr.f32.mxu0 0.0
        %2996 = vmatmul.mubr.f32.gmra.mrb[0].mxu0 %v2908
        %v2997 = vpop.f32.mrb[0].mxu0
        %v2998 = vadd.f32 0.0, %v2997
        %v2999 = vpop.f32.mrb[0].mxu0
        %3000 = vmatprep.mubr.f32.mxu0 0.0
        %3001 = vmatmul.mubr.f32.gmra.mrb[0].mxu0 %v2911
        %v3002 = vpop.f32.mrb[0].mxu0
        %v3003 = vadd.f32 0.0, %v3002
        %v3004 = vpop.f32.mrb[0].mxu0
        %3005 = vmatprep.mubr.f32.mxu0 0.0
        %3006 = vmatmul.mubr.f32.gmra.mrb[0].mxu0 %v2914
        %v3007 = vpop.f32.mrb[0].mxu0
        %v3008 = vadd.f32 0.0, %v3007
        %v3009 = vpop.f32.mrb[0].mxu0
        %3010 = vmatprep.mubr.f32.mxu0 0.0
        %3011 = vmatmul.mubr.f32.gmra.mrb[0].mxu0 %v2917
        %v3012 = vpop.f32.mrb[0].mxu0
        %v3013 = vadd.f32 0.0, %v3012
        %v3014 = vpop.f32.mrb[0].mxu0
        %3015 = vmatprep.mubr.f32.mxu0 0.0
        %3016 = vmatmul.mubr.f32.gmra.mrb[0].mxu0 %v2920
        %v3017 = vpop.f32.mrb[0].mxu0
        %v3018 = vadd.f32 0.0, %v3017
        %v3019 = vpop.f32.mrb[0].mxu0
        %3020 = vmatprep.mubr.f32.mxu0 0.0
        %3021 = vmatmul.mubr.f32.gmra.mrb[0].mxu0 %v2923
        %v3022 = vpop.f32.mrb[0].mxu0
        %v3023 = vadd.f32 0.0, %v3022
        %v3024 = vpop.f32.mrb[0].mxu0
        %3025 = vmatprep.mubr.f32.mxu0 0.0
        %3026 = vmatmul.mubr.f32.gmra.mrb[0].mxu0 %v2926
        %v3027 = vpop.f32.mrb[0].mxu0
        %v3028 = vadd.f32 0.0, %v3027
        %v3029 = vpop.f32.mrb[0].mxu0
        %3030 = vmatprep.mubr.f32.mxu0 0.0
        %3031 = vmatmul.mubr.f32.gmra.mrb[0].mxu0 %v2929
        %v3032 = vpop.f32.mrb[0].mxu0
        %v3033 = vadd.f32 0.0, %v3032
        %v3034 = vpop.f32.mrb[0].mxu0
        %3035 = vdwg.mxu0
        %v3036 = vadd.f32 %v2832, %v2998
        %v3037 = vadd.f32 %v2833, %v3003
        %v3038 = vadd.f32 %v2834, %v3008
        %v3039 = vadd.f32 %v2835, %v3013
        %v3040 = vadd.f32 %v2836, %v3018
        %v3041 = vadd.f32 %v2837, %v3023
        %v3042 = vadd.f32 %v2838, %v3028
        %v3043 = vadd.f32 %v2839, %v3033
        %v3044 = vld [vmem:[#allocation2 + $0x17] sm:$0xff]
        %v3045 = vld [vmem:[#allocation2 + $0x1f] sm:$0xff]
        %v3046 = vld [vmem:[#allocation2 + $0x27] sm:$0xff]
        %v3047 = vld [vmem:[#allocation2 + $0x2f] sm:$0xff]
        %v3048 = vld [vmem:[#allocation2 + $0x37] sm:$0xff]
        %v3049 = vld [vmem:[#allocation2 + $0x3f] sm:$0xff]
        %v3050 = vld [vmem:[#allocation2 + $0x47] sm:$0xff]
        %v3051 = vld [vmem:[#allocation2 + $0x4f] sm:$0xff]
        %s3052 = scalar_lea.vmem %s5, 768
        %v3053 = vld [vmem:[%s3052] sm:$0xff]
        %v3054 = vld [vmem:[%s3052 + $0x8] sm:$0xff]
        %v3055 = vld [vmem:[%s3052 + $0x10] sm:$0xff]
        %v3056 = vld [vmem:[%s3052 + $0x18] sm:$0xff]
        %v3057 = vld [vmem:[%s3052 + $0x20] sm:$0xff]
        %v3058 = vld [vmem:[%s3052 + $0x28] sm:$0xff]
        %v3059 = vld [vmem:[%s3052 + $0x30] sm:$0xff]
        %v3060 = vld [vmem:[%s3052 + $0x38] sm:$0xff]
        %3062 = vset.pattern.permute.xlu0 0
        %3063 = vperm.xlu0 %3062, %v3053
        %v3064 = vpop.permute.xlu0 %3063
        %3067 = vset.pattern.permute.xlu0 0
        %3068 = vperm.xlu0 %3067, %v3054
        %v3069 = vpop.permute.xlu0 %3068
        %3072 = vset.pattern.permute.xlu0 0
        %3073 = vperm.xlu0 %3072, %v3055
        %v3074 = vpop.permute.xlu0 %3073
        %3077 = vset.pattern.permute.xlu0 0
        %3078 = vperm.xlu0 %3077, %v3056
        %v3079 = vpop.permute.xlu0 %3078
        %3082 = vset.pattern.permute.xlu0 0
        %3083 = vperm.xlu0 %3082, %v3057
        %v3084 = vpop.permute.xlu0 %3083
        %3087 = vset.pattern.permute.xlu0 0
        %3088 = vperm.xlu0 %3087, %v3058
        %v3089 = vpop.permute.xlu0 %3088
        %3092 = vset.pattern.permute.xlu0 0
        %3093 = vperm.xlu0 %3092, %v3059
        %v3094 = vpop.permute.xlu0 %3093
        %3097 = vset.pattern.permute.xlu0 0
        %3098 = vperm.xlu0 %3097, %v3060
        %v3099 = vpop.permute.xlu0 %3098
        %v3101 = vmul.f32 %v3044, %v3064
        %v3102 = vmul.f32 %v3045, %v3069
        %v3103 = vmul.f32 %v3046, %v3074
        %v3104 = vmul.f32 %v3047, %v3079
        %v3105 = vmul.f32 %v3048, %v3084
        %v3106 = vmul.f32 %v3049, %v3089
        %v3107 = vmul.f32 %v3050, %v3094
        %v3108 = vmul.f32 %v3051, %v3099
        %v3109 = vld [vmem:[%s3 + $0xc0] sm:$0xff]
        %v3110 = vld [vmem:[%s3 + $0xc8] sm:$0xff]
        %v3112 = vsel %vm439, %v3101, 0
        %v3115 = vsel %vm439, %v3102, 0
        %v3118 = vsel %vm439, %v3103, 0
        %v3121 = vsel %vm439, %v3104, 0
        %v3124 = vsel %vm439, %v3105, 0
        %v3127 = vsel %vm439, %v3106, 0
        %v3130 = vsel %vm439, %v3107, 0
        %v3133 = vsel %vm439, %v3108, 0
        %3135 = vmatprep.subr.mxu0 0.0
        %3136 = vmatpush1.msra.mxu0 %v3109
        %3137 = vmatprep.subr.mxu0 0.0
        %3138 = vmatpush1.msra.mxu0 %v3110
        %3139 = vmatprep.subr.mxu0 0.0
        %3140 = vmatpush1.msra.mxu0 0.0
        %3141 = vmatprep.subr.mxu0 0.0
        %3142 = vmatpush1.msra.mxu0 0.0
        %3143 = vmatprep.subr.mxu0 0.0
        %3144 = vmatpush1.msra.mxu0 0.0
        %3145 = vmatprep.subr.mxu0 0.0
        %3146 = vmatpush1.msra.mxu0 0.0
        %3147 = vmatprep.subr.mxu0 0.0
        %3148 = vmatpush1.msra.mxu0 0.0
        %3149 = vmatprep.subr.mxu0 0.0
        %3150 = vmatpush1.msra.mxu0 0.0
        %3151 = vmatprep.subr.mxu0 0.0
        %3152 = vmatpush1.msra.mxu0 0.0
        %3153 = vmatprep.subr.mxu0 0.0
        %3154 = vmatpush1.msra.mxu0 0.0
        %3155 = vmatprep.subr.mxu0 0.0
        %3156 = vmatpush1.msra.mxu0 0.0
        %3157 = vmatprep.subr.mxu0 0.0
        %3158 = vmatpush1.msra.mxu0 0.0
        %3159 = vmatprep.subr.mxu0 0.0
        %3160 = vmatpush1.msra.mxu0 0.0
        %3161 = vmatprep.subr.mxu0 0.0
        %3162 = vmatpush1.msra.mxu0 0.0
        %3163 = vmatprep.subr.mxu0 0.0
        %3164 = vmatpush1.msra.mxu0 0.0
        %3165 = vmatprep.subr.mxu0 0.0
        %3166 = vmatpush1.msra.mxu0 0.0
        %3167 = vmatprep.subr.mxu0 0.0
        %3168 = vmatpush1.msra.mxu0 0.0
        %3169 = vmatprep.subr.mxu0 0.0
        %3170 = vmatpush1.msra.mxu0 0.0
        %3171 = vmatprep.subr.mxu0 0.0
        %3172 = vmatpush1.msra.mxu0 0.0
        %3173 = vmatprep.subr.mxu0 0.0
        %3174 = vmatpush1.msra.mxu0 0.0
        %3175 = vmatprep.subr.mxu0 0.0
        %3176 = vmatpush1.msra.mxu0 0.0
        %3177 = vmatprep.subr.mxu0 0.0
        %3178 = vmatpush1.msra.mxu0 0.0
        %3179 = vmatprep.subr.mxu0 0.0
        %3180 = vmatpush1.msra.mxu0 0.0
        %3181 = vmatprep.subr.mxu0 0.0
        %3182 = vmatpush1.msra.mxu0 0.0
        %3183 = vmatprep.subr.mxu0 0.0
        %3184 = vmatpush1.msra.mxu0 0.0
        %3185 = vmatprep.subr.mxu0 0.0
        %3186 = vmatpush1.msra.mxu0 0.0
        %3187 = vmatprep.subr.mxu0 0.0
        %3188 = vmatpush1.msra.mxu0 0.0
        %3189 = vmatprep.subr.mxu0 0.0
        %3190 = vmatpush1.msra.mxu0 0.0
        %3191 = vmatprep.subr.mxu0 0.0
        %3192 = vmatpush1.msra.mxu0 0.0
        %3193 = vmatprep.subr.mxu0 0.0
        %3194 = vmatpush1.msra.mxu0 0.0
        %3195 = vmatprep.subr.mxu0 0.0
        %3196 = vmatpush1.msra.mxu0 0.0
        %3197 = vmatprep.subr.mxu0 0.0
        %3198 = vmatpush1.msra.mxu0 0.0
        %3199 = vmatprep.mubr.f32.mxu0 0.0
        %3200 = vmatmul.mubr.f32.gmra.mrb[0].mxu0 %v3112
        %v3201 = vpop.f32.mrb[0].mxu0
        %v3202 = vadd.f32 0.0, %v3201
        %v3203 = vpop.f32.mrb[0].mxu0
        %3204 = vmatprep.mubr.f32.mxu0 0.0
        %3205 = vmatmul.mubr.f32.gmra.mrb[0].mxu0 %v3115
        %v3206 = vpop.f32.mrb[0].mxu0
        %v3207 = vadd.f32 0.0, %v3206
        %v3208 = vpop.f32.mrb[0].mxu0
        %3209 = vmatprep.mubr.f32.mxu0 0.0
        %3210 = vmatmul.mubr.f32.gmra.mrb[0].mxu0 %v3118
        %v3211 = vpop.f32.mrb[0].mxu0
        %v3212 = vadd.f32 0.0, %v3211
        %v3213 = vpop.f32.mrb[0].mxu0
        %3214 = vmatprep.mubr.f32.mxu0 0.0
        %3215 = vmatmul.mubr.f32.gmra.mrb[0].mxu0 %v3121
        %v3216 = vpop.f32.mrb[0].mxu0
        %v3217 = vadd.f32 0.0, %v3216
        %v3218 = vpop.f32.mrb[0].mxu0
        %3219 = vmatprep.mubr.f32.mxu0 0.0
        %3220 = vmatmul.mubr.f32.gmra.mrb[0].mxu0 %v3124
        %v3221 = vpop.f32.mrb[0].mxu0
        %v3222 = vadd.f32 0.0, %v3221
        %v3223 = vpop.f32.mrb[0].mxu0
        %3224 = vmatprep.mubr.f32.mxu0 0.0
        %3225 = vmatmul.mubr.f32.gmra.mrb[0].mxu0 %v3127
        %v3226 = vpop.f32.mrb[0].mxu0
        %v3227 = vadd.f32 0.0, %v3226
        %v3228 = vpop.f32.mrb[0].mxu0
        %3229 = vmatprep.mubr.f32.mxu0 0.0
        %3230 = vmatmul.mubr.f32.gmra.mrb[0].mxu0 %v3130
        %v3231 = vpop.f32.mrb[0].mxu0
        %v3232 = vadd.f32 0.0, %v3231
        %v3233 = vpop.f32.mrb[0].mxu0
        %3234 = vmatprep.mubr.f32.mxu0 0.0
        %3235 = vmatmul.mubr.f32.gmra.mrb[0].mxu0 %v3133
        %v3236 = vpop.f32.mrb[0].mxu0
        %v3237 = vadd.f32 0.0, %v3236
        %v3238 = vpop.f32.mrb[0].mxu0
        %3239 = vdwg.mxu0
        %v3240 = vadd.f32 %v3036, %v3202
        %v3241 = vadd.f32 %v3037, %v3207
        %v3242 = vadd.f32 %v3038, %v3212
        %v3243 = vadd.f32 %v3039, %v3217
        %v3244 = vadd.f32 %v3040, %v3222
        %v3245 = vadd.f32 %v3041, %v3227
        %v3246 = vadd.f32 %v3042, %v3232
        %v3247 = vadd.f32 %v3043, %v3237
        %v3248 = vld [vmem:[#allocation2 + $0x18] sm:$0xff]
        %v3249 = vld [vmem:[#allocation2 + $0x20] sm:$0xff]
        %v3250 = vld [vmem:[#allocation2 + $0x28] sm:$0xff]
        %v3251 = vld [vmem:[#allocation2 + $0x30] sm:$0xff]
        %v3252 = vld [vmem:[#allocation2 + $0x38] sm:$0xff]
        %v3253 = vld [vmem:[#allocation2 + $0x40] sm:$0xff]
        %v3254 = vld [vmem:[#allocation2 + $0x48] sm:$0xff]
        %v3255 = vld [vmem:[#allocation2 + $0x50] sm:$0xff]
        %s3256 = scalar_lea.vmem %s5, 832
        %v3257 = vld [vmem:[%s3256] sm:$0xff]
        %v3258 = vld [vmem:[%s3256 + $0x8] sm:$0xff]
        %v3259 = vld [vmem:[%s3256 + $0x10] sm:$0xff]
        %v3260 = vld [vmem:[%s3256 + $0x18] sm:$0xff]
        %v3261 = vld [vmem:[%s3256 + $0x20] sm:$0xff]
        %v3262 = vld [vmem:[%s3256 + $0x28] sm:$0xff]
        %v3263 = vld [vmem:[%s3256 + $0x30] sm:$0xff]
        %v3264 = vld [vmem:[%s3256 + $0x38] sm:$0xff]
        %3266 = vset.pattern.permute.xlu0 0
        %3267 = vperm.xlu0 %3266, %v3257
        %v3268 = vpop.permute.xlu0 %3267
        %3271 = vset.pattern.permute.xlu0 0
        %3272 = vperm.xlu0 %3271, %v3258
        %v3273 = vpop.permute.xlu0 %3272
        %3276 = vset.pattern.permute.xlu0 0
        %3277 = vperm.xlu0 %3276, %v3259
        %v3278 = vpop.permute.xlu0 %3277
        %3281 = vset.pattern.permute.xlu0 0
        %3282 = vperm.xlu0 %3281, %v3260
        %v3283 = vpop.permute.xlu0 %3282
        %3286 = vset.pattern.permute.xlu0 0
        %3287 = vperm.xlu0 %3286, %v3261
        %v3288 = vpop.permute.xlu0 %3287
        %3291 = vset.pattern.permute.xlu0 0
        %3292 = vperm.xlu0 %3291, %v3262
        %v3293 = vpop.permute.xlu0 %3292
        %3296 = vset.pattern.permute.xlu0 0
        %3297 = vperm.xlu0 %3296, %v3263
        %v3298 = vpop.permute.xlu0 %3297
        %3301 = vset.pattern.permute.xlu0 0
        %3302 = vperm.xlu0 %3301, %v3264
        %v3303 = vpop.permute.xlu0 %3302
        %v3305 = vmul.f32 %v3248, %v3268
        %v3306 = vmul.f32 %v3249, %v3273
        %v3307 = vmul.f32 %v3250, %v3278
        %v3308 = vmul.f32 %v3251, %v3283
        %v3309 = vmul.f32 %v3252, %v3288
        %v3310 = vmul.f32 %v3253, %v3293
        %v3311 = vmul.f32 %v3254, %v3298
        %v3312 = vmul.f32 %v3255, %v3303
        %v3313 = vld [vmem:[%s3 + $0xd0] sm:$0xff]
        %v3314 = vld [vmem:[%s3 + $0xd8] sm:$0xff]
        %v3316 = vsel %vm439, %v3305, 0
        %v3319 = vsel %vm439, %v3306, 0
        %v3322 = vsel %vm439, %v3307, 0
        %v3325 = vsel %vm439, %v3308, 0
        %v3328 = vsel %vm439, %v3309, 0
        %v3331 = vsel %vm439, %v3310, 0
        %v3334 = vsel %vm439, %v3311, 0
        %v3337 = vsel %vm439, %v3312, 0
        %3339 = vmatprep.subr.mxu0 0.0
        %3340 = vmatpush1.msra.mxu0 %v3313
        %3341 = vmatprep.subr.mxu0 0.0
        %3342 = vmatpush1.msra.mxu0 %v3314
        %3343 = vmatprep.subr.mxu0 0.0
        %3344 = vmatpush1.msra.mxu0 0.0
        %3345 = vmatprep.subr.mxu0 0.0
        %3346 = vmatpush1.msra.mxu0 0.0
        %3347 = vmatprep.subr.mxu0 0.0
        %3348 = vmatpush1.msra.mxu0 0.0
        %3349 = vmatprep.subr.mxu0 0.0
        %3350 = vmatpush1.msra.mxu0 0.0
        %3351 = vmatprep.subr.mxu0 0.0
        %3352 = vmatpush1.msra.mxu0 0.0
        %3353 = vmatprep.subr.mxu0 0.0
        %3354 = vmatpush1.msra.mxu0 0.0
        %3355 = vmatprep.subr.mxu0 0.0
        %3356 = vmatpush1.msra.mxu0 0.0
        %3357 = vmatprep.subr.mxu0 0.0
        %3358 = vmatpush1.msra.mxu0 0.0
        %3359 = vmatprep.subr.mxu0 0.0
        %3360 = vmatpush1.msra.mxu0 0.0
        %3361 = vmatprep.subr.mxu0 0.0
        %3362 = vmatpush1.msra.mxu0 0.0
        %3363 = vmatprep.subr.mxu0 0.0
        %3364 = vmatpush1.msra.mxu0 0.0
        %3365 = vmatprep.subr.mxu0 0.0
        %3366 = vmatpush1.msra.mxu0 0.0
        %3367 = vmatprep.subr.mxu0 0.0
        %3368 = vmatpush1.msra.mxu0 0.0
        %3369 = vmatprep.subr.mxu0 0.0
        %3370 = vmatpush1.msra.mxu0 0.0
        %3371 = vmatprep.subr.mxu0 0.0
        %3372 = vmatpush1.msra.mxu0 0.0
        %3373 = vmatprep.subr.mxu0 0.0
        %3374 = vmatpush1.msra.mxu0 0.0
        %3375 = vmatprep.subr.mxu0 0.0
        %3376 = vmatpush1.msra.mxu0 0.0
        %3377 = vmatprep.subr.mxu0 0.0
        %3378 = vmatpush1.msra.mxu0 0.0
        %3379 = vmatprep.subr.mxu0 0.0
        %3380 = vmatpush1.msra.mxu0 0.0
        %3381 = vmatprep.subr.mxu0 0.0
        %3382 = vmatpush1.msra.mxu0 0.0
        %3383 = vmatprep.subr.mxu0 0.0
        %3384 = vmatpush1.msra.mxu0 0.0
        %3385 = vmatprep.subr.mxu0 0.0
        %3386 = vmatpush1.msra.mxu0 0.0
        %3387 = vmatprep.subr.mxu0 0.0
        %3388 = vmatpush1.msra.mxu0 0.0
        %3389 = vmatprep.subr.mxu0 0.0
        %3390 = vmatpush1.msra.mxu0 0.0
        %3391 = vmatprep.subr.mxu0 0.0
        %3392 = vmatpush1.msra.mxu0 0.0
        %3393 = vmatprep.subr.mxu0 0.0
        %3394 = vmatpush1.msra.mxu0 0.0
        %3395 = vmatprep.subr.mxu0 0.0
        %3396 = vmatpush1.msra.mxu0 0.0
        %3397 = vmatprep.subr.mxu0 0.0
        %3398 = vmatpush1.msra.mxu0 0.0
        %3399 = vmatprep.subr.mxu0 0.0
        %3400 = vmatpush1.msra.mxu0 0.0
        %3401 = vmatprep.subr.mxu0 0.0
        %3402 = vmatpush1.msra.mxu0 0.0
        %3403 = vmatprep.mubr.f32.mxu0 0.0
        %3404 = vmatmul.mubr.f32.gmra.mrb[0].mxu0 %v3316
        %v3405 = vpop.f32.mrb[0].mxu0
        %v3406 = vadd.f32 0.0, %v3405
        %v3407 = vpop.f32.mrb[0].mxu0
        %3408 = vmatprep.mubr.f32.mxu0 0.0
        %3409 = vmatmul.mubr.f32.gmra.mrb[0].mxu0 %v3319
        %v3410 = vpop.f32.mrb[0].mxu0
        %v3411 = vadd.f32 0.0, %v3410
        %v3412 = vpop.f32.mrb[0].mxu0
        %3413 = vmatprep.mubr.f32.mxu0 0.0
        %3414 = vmatmul.mubr.f32.gmra.mrb[0].mxu0 %v3322
        %v3415 = vpop.f32.mrb[0].mxu0
        %v3416 = vadd.f32 0.0, %v3415
        %v3417 = vpop.f32.mrb[0].mxu0
        %3418 = vmatprep.mubr.f32.mxu0 0.0
        %3419 = vmatmul.mubr.f32.gmra.mrb[0].mxu0 %v3325
        %v3420 = vpop.f32.mrb[0].mxu0
        %v3421 = vadd.f32 0.0, %v3420
        %v3422 = vpop.f32.mrb[0].mxu0
        %3423 = vmatprep.mubr.f32.mxu0 0.0
        %3424 = vmatmul.mubr.f32.gmra.mrb[0].mxu0 %v3328
        %v3425 = vpop.f32.mrb[0].mxu0
        %v3426 = vadd.f32 0.0, %v3425
        %v3427 = vpop.f32.mrb[0].mxu0
        %3428 = vmatprep.mubr.f32.mxu0 0.0
        %3429 = vmatmul.mubr.f32.gmra.mrb[0].mxu0 %v3331
        %v3430 = vpop.f32.mrb[0].mxu0
        %v3431 = vadd.f32 0.0, %v3430
        %v3432 = vpop.f32.mrb[0].mxu0
        %3433 = vmatprep.mubr.f32.mxu0 0.0
        %3434 = vmatmul.mubr.f32.gmra.mrb[0].mxu0 %v3334
        %v3435 = vpop.f32.mrb[0].mxu0
        %v3436 = vadd.f32 0.0, %v3435
        %v3437 = vpop.f32.mrb[0].mxu0
        %3438 = vmatprep.mubr.f32.mxu0 0.0
        %3439 = vmatmul.mubr.f32.gmra.mrb[0].mxu0 %v3337
        %v3440 = vpop.f32.mrb[0].mxu0
        %v3441 = vadd.f32 0.0, %v3440
        %v3442 = vpop.f32.mrb[0].mxu0
        %3443 = vdwg.mxu0
        %v3444 = vadd.f32 %v3240, %v3406
        %v3445 = vadd.f32 %v3241, %v3411
        %v3446 = vadd.f32 %v3242, %v3416
        %v3447 = vadd.f32 %v3243, %v3421
        %v3448 = vadd.f32 %v3244, %v3426
        %v3449 = vadd.f32 %v3245, %v3431
        %v3450 = vadd.f32 %v3246, %v3436
        %v3451 = vadd.f32 %v3247, %v3441
        %v3452 = vld [vmem:[#allocation2 + $0x19] sm:$0xff]
        %v3453 = vld [vmem:[#allocation2 + $0x21] sm:$0xff]
        %v3454 = vld [vmem:[#allocation2 + $0x29] sm:$0xff]
        %v3455 = vld [vmem:[#allocation2 + $0x31] sm:$0xff]
        %v3456 = vld [vmem:[#allocation2 + $0x39] sm:$0xff]
        %v3457 = vld [vmem:[#allocation2 + $0x41] sm:$0xff]
        %v3458 = vld [vmem:[#allocation2 + $0x49] sm:$0xff]
        %v3459 = vld [vmem:[#allocation2 + $0x51] sm:$0xff]
        %s3460 = scalar_lea.vmem %s5, 896
        %v3461 = vld [vmem:[%s3460] sm:$0xff]
        %v3462 = vld [vmem:[%s3460 + $0x8] sm:$0xff]
        %v3463 = vld [vmem:[%s3460 + $0x10] sm:$0xff]
        %v3464 = vld [vmem:[%s3460 + $0x18] sm:$0xff]
        %v3465 = vld [vmem:[%s3460 + $0x20] sm:$0xff]
        %v3466 = vld [vmem:[%s3460 + $0x28] sm:$0xff]
        %v3467 = vld [vmem:[%s3460 + $0x30] sm:$0xff]
        %v3468 = vld [vmem:[%s3460 + $0x38] sm:$0xff]
        %3470 = vset.pattern.permute.xlu0 0
        %3471 = vperm.xlu0 %3470, %v3461
        %v3472 = vpop.permute.xlu0 %3471
        %3475 = vset.pattern.permute.xlu0 0
        %3476 = vperm.xlu0 %3475, %v3462
        %v3477 = vpop.permute.xlu0 %3476
        %3480 = vset.pattern.permute.xlu0 0
        %3481 = vperm.xlu0 %3480, %v3463
        %v3482 = vpop.permute.xlu0 %3481
        %3485 = vset.pattern.permute.xlu0 0
        %3486 = vperm.xlu0 %3485, %v3464
        %v3487 = vpop.permute.xlu0 %3486
        %3490 = vset.pattern.permute.xlu0 0
        %3491 = vperm.xlu0 %3490, %v3465
        %v3492 = vpop.permute.xlu0 %3491
        %3495 = vset.pattern.permute.xlu0 0
        %3496 = vperm.xlu0 %3495, %v3466
        %v3497 = vpop.permute.xlu0 %3496
        %3500 = vset.pattern.permute.xlu0 0
        %3501 = vperm.xlu0 %3500, %v3467
        %v3502 = vpop.permute.xlu0 %3501
        %3505 = vset.pattern.permute.xlu0 0
        %3506 = vperm.xlu0 %3505, %v3468
        %v3507 = vpop.permute.xlu0 %3506
        %v3509 = vmul.f32 %v3452, %v3472
        %v3510 = vmul.f32 %v3453, %v3477
        %v3511 = vmul.f32 %v3454, %v3482
        %v3512 = vmul.f32 %v3455, %v3487
        %v3513 = vmul.f32 %v3456, %v3492
        %v3514 = vmul.f32 %v3457, %v3497
        %v3515 = vmul.f32 %v3458, %v3502
        %v3516 = vmul.f32 %v3459, %v3507
        %v3517 = vld [vmem:[%s3 + $0xe0] sm:$0xff]
        %v3518 = vld [vmem:[%s3 + $0xe8] sm:$0xff]
        %v3520 = vsel %vm439, %v3509, 0
        %v3523 = vsel %vm439, %v3510, 0
        %v3526 = vsel %vm439, %v3511, 0
        %v3529 = vsel %vm439, %v3512, 0
        %v3532 = vsel %vm439, %v3513, 0
        %v3535 = vsel %vm439, %v3514, 0
        %v3538 = vsel %vm439, %v3515, 0
        %v3541 = vsel %vm439, %v3516, 0
        %3543 = vmatprep.subr.mxu0 0.0
        %3544 = vmatpush1.msra.mxu0 %v3517
        %3545 = vmatprep.subr.mxu0 0.0
        %3546 = vmatpush1.msra.mxu0 %v3518
        %3547 = vmatprep.subr.mxu0 0.0
        %3548 = vmatpush1.msra.mxu0 0.0
        %3549 = vmatprep.subr.mxu0 0.0
        %3550 = vmatpush1.msra.mxu0 0.0
        %3551 = vmatprep.subr.mxu0 0.0
        %3552 = vmatpush1.msra.mxu0 0.0
        %3553 = vmatprep.subr.mxu0 0.0
        %3554 = vmatpush1.msra.mxu0 0.0
        %3555 = vmatprep.subr.mxu0 0.0
        %3556 = vmatpush1.msra.mxu0 0.0
        %3557 = vmatprep.subr.mxu0 0.0
        %3558 = vmatpush1.msra.mxu0 0.0
        %3559 = vmatprep.subr.mxu0 0.0
        %3560 = vmatpush1.msra.mxu0 0.0
        %3561 = vmatprep.subr.mxu0 0.0
        %3562 = vmatpush1.msra.mxu0 0.0
        %3563 = vmatprep.subr.mxu0 0.0
        %3564 = vmatpush1.msra.mxu0 0.0
        %3565 = vmatprep.subr.mxu0 0.0
        %3566 = vmatpush1.msra.mxu0 0.0
        %3567 = vmatprep.subr.mxu0 0.0
        %3568 = vmatpush1.msra.mxu0 0.0
        %3569 = vmatprep.subr.mxu0 0.0
        %3570 = vmatpush1.msra.mxu0 0.0
        %3571 = vmatprep.subr.mxu0 0.0
        %3572 = vmatpush1.msra.mxu0 0.0
        %3573 = vmatprep.subr.mxu0 0.0
        %3574 = vmatpush1.msra.mxu0 0.0
        %3575 = vmatprep.subr.mxu0 0.0
        %3576 = vmatpush1.msra.mxu0 0.0
        %3577 = vmatprep.subr.mxu0 0.0
        %3578 = vmatpush1.msra.mxu0 0.0
        %3579 = vmatprep.subr.mxu0 0.0
        %3580 = vmatpush1.msra.mxu0 0.0
        %3581 = vmatprep.subr.mxu0 0.0
        %3582 = vmatpush1.msra.mxu0 0.0
        %3583 = vmatprep.subr.mxu0 0.0
        %3584 = vmatpush1.msra.mxu0 0.0
        %3585 = vmatprep.subr.mxu0 0.0
        %3586 = vmatpush1.msra.mxu0 0.0
        %3587 = vmatprep.subr.mxu0 0.0
        %3588 = vmatpush1.msra.mxu0 0.0
        %3589 = vmatprep.subr.mxu0 0.0
        %3590 = vmatpush1.msra.mxu0 0.0
        %3591 = vmatprep.subr.mxu0 0.0
        %3592 = vmatpush1.msra.mxu0 0.0
        %3593 = vmatprep.subr.mxu0 0.0
        %3594 = vmatpush1.msra.mxu0 0.0
        %3595 = vmatprep.subr.mxu0 0.0
        %3596 = vmatpush1.msra.mxu0 0.0
        %3597 = vmatprep.subr.mxu0 0.0
        %3598 = vmatpush1.msra.mxu0 0.0
        %3599 = vmatprep.subr.mxu0 0.0
        %3600 = vmatpush1.msra.mxu0 0.0
        %3601 = vmatprep.subr.mxu0 0.0
        %3602 = vmatpush1.msra.mxu0 0.0
        %3603 = vmatprep.subr.mxu0 0.0
        %3604 = vmatpush1.msra.mxu0 0.0
        %3605 = vmatprep.subr.mxu0 0.0
        %3606 = vmatpush1.msra.mxu0 0.0
        %3607 = vmatprep.mubr.f32.mxu0 0.0
        %3608 = vmatmul.mubr.f32.gmra.mrb[0].mxu0 %v3520
        %v3609 = vpop.f32.mrb[0].mxu0
        %v3610 = vadd.f32 0.0, %v3609
        %v3611 = vpop.f32.mrb[0].mxu0
        %3612 = vmatprep.mubr.f32.mxu0 0.0
        %3613 = vmatmul.mubr.f32.gmra.mrb[0].mxu0 %v3523
        %v3614 = vpop.f32.mrb[0].mxu0
        %v3615 = vadd.f32 0.0, %v3614
        %v3616 = vpop.f32.mrb[0].mxu0
        %3617 = vmatprep.mubr.f32.mxu0 0.0
        %3618 = vmatmul.mubr.f32.gmra.mrb[0].mxu0 %v3526
        %v3619 = vpop.f32.mrb[0].mxu0
        %v3620 = vadd.f32 0.0, %v3619
        %v3621 = vpop.f32.mrb[0].mxu0
        %3622 = vmatprep.mubr.f32.mxu0 0.0
        %3623 = vmatmul.mubr.f32.gmra.mrb[0].mxu0 %v3529
        %v3624 = vpop.f32.mrb[0].mxu0
        %v3625 = vadd.f32 0.0, %v3624
        %v3626 = vpop.f32.mrb[0].mxu0
        %3627 = vmatprep.mubr.f32.mxu0 0.0
        %3628 = vmatmul.mubr.f32.gmra.mrb[0].mxu0 %v3532
        %v3629 = vpop.f32.mrb[0].mxu0
        %v3630 = vadd.f32 0.0, %v3629
        %v3631 = vpop.f32.mrb[0].mxu0
        %3632 = vmatprep.mubr.f32.mxu0 0.0
        %3633 = vmatmul.mubr.f32.gmra.mrb[0].mxu0 %v3535
        %v3634 = vpop.f32.mrb[0].mxu0
        %v3635 = vadd.f32 0.0, %v3634
        %v3636 = vpop.f32.mrb[0].mxu0
        %3637 = vmatprep.mubr.f32.mxu0 0.0
        %3638 = vmatmul.mubr.f32.gmra.mrb[0].mxu0 %v3538
        %v3639 = vpop.f32.mrb[0].mxu0
        %v3640 = vadd.f32 0.0, %v3639
        %v3641 = vpop.f32.mrb[0].mxu0
        %3642 = vmatprep.mubr.f32.mxu0 0.0
        %3643 = vmatmul.mubr.f32.gmra.mrb[0].mxu0 %v3541
        %v3644 = vpop.f32.mrb[0].mxu0
        %v3645 = vadd.f32 0.0, %v3644
        %v3646 = vpop.f32.mrb[0].mxu0
        %3647 = vdwg.mxu0
        %v3648 = vadd.f32 %v3444, %v3610
        %v3649 = vadd.f32 %v3445, %v3615
        %v3650 = vadd.f32 %v3446, %v3620
        %v3651 = vadd.f32 %v3447, %v3625
        %v3652 = vadd.f32 %v3448, %v3630
        %v3653 = vadd.f32 %v3449, %v3635
        %v3654 = vadd.f32 %v3450, %v3640
        %v3655 = vadd.f32 %v3451, %v3645
        %v3656 = vld [vmem:[#allocation2 + $0x1b] sm:$0xff]
        %v3657 = vld [vmem:[#allocation2 + $0x23] sm:$0xff]
        %v3658 = vld [vmem:[#allocation2 + $0x2b] sm:$0xff]
        %v3659 = vld [vmem:[#allocation2 + $0x33] sm:$0xff]
        %v3660 = vld [vmem:[#allocation2 + $0x3b] sm:$0xff]
        %v3661 = vld [vmem:[#allocation2 + $0x43] sm:$0xff]
        %v3662 = vld [vmem:[#allocation2 + $0x4b] sm:$0xff]
        %v3663 = vld [vmem:[#allocation2 + $0x53] sm:$0xff]
        %s3664 = scalar_lea.vmem %s5, 960
        %v3665 = vld [vmem:[%s3664] sm:$0xff]
        %v3666 = vld [vmem:[%s3664 + $0x8] sm:$0xff]
        %v3667 = vld [vmem:[%s3664 + $0x10] sm:$0xff]
        %v3668 = vld [vmem:[%s3664 + $0x18] sm:$0xff]
        %v3669 = vld [vmem:[%s3664 + $0x20] sm:$0xff]
        %v3670 = vld [vmem:[%s3664 + $0x28] sm:$0xff]
        %v3671 = vld [vmem:[%s3664 + $0x30] sm:$0xff]
        %v3672 = vld [vmem:[%s3664 + $0x38] sm:$0xff]
        %3674 = vset.pattern.permute.xlu0 0
        %3675 = vperm.xlu0 %3674, %v3665
        %v3676 = vpop.permute.xlu0 %3675
        %3679 = vset.pattern.permute.xlu0 0
        %3680 = vperm.xlu0 %3679, %v3666
        %v3681 = vpop.permute.xlu0 %3680
        %3684 = vset.pattern.permute.xlu0 0
        %3685 = vperm.xlu0 %3684, %v3667
        %v3686 = vpop.permute.xlu0 %3685
        %3689 = vset.pattern.permute.xlu0 0
        %3690 = vperm.xlu0 %3689, %v3668
        %v3691 = vpop.permute.xlu0 %3690
        %3694 = vset.pattern.permute.xlu0 0
        %3695 = vperm.xlu0 %3694, %v3669
        %v3696 = vpop.permute.xlu0 %3695
        %3699 = vset.pattern.permute.xlu0 0
        %3700 = vperm.xlu0 %3699, %v3670
        %v3701 = vpop.permute.xlu0 %3700
        %3704 = vset.pattern.permute.xlu0 0
        %3705 = vperm.xlu0 %3704, %v3671
        %v3706 = vpop.permute.xlu0 %3705
        %3709 = vset.pattern.permute.xlu0 0
        %3710 = vperm.xlu0 %3709, %v3672
        %v3711 = vpop.permute.xlu0 %3710
        %v3713 = vmul.f32 %v3656, %v3676
        %v3714 = vmul.f32 %v3657, %v3681
        %v3715 = vmul.f32 %v3658, %v3686
        %v3716 = vmul.f32 %v3659, %v3691
        %v3717 = vmul.f32 %v3660, %v3696
        %v3718 = vmul.f32 %v3661, %v3701
        %v3719 = vmul.f32 %v3662, %v3706
        %v3720 = vmul.f32 %v3663, %v3711
        %v3721 = vld [vmem:[%s3 + $0xf0] sm:$0xff]
        %v3722 = vld [vmem:[%s3 + $0xf8] sm:$0xff]
        %v3724 = vsel %vm439, %v3713, 0
        %v3727 = vsel %vm439, %v3714, 0
        %v3730 = vsel %vm439, %v3715, 0
        %v3733 = vsel %vm439, %v3716, 0
        %v3736 = vsel %vm439, %v3717, 0
        %v3739 = vsel %vm439, %v3718, 0
        %v3742 = vsel %vm439, %v3719, 0
        %v3745 = vsel %vm439, %v3720, 0
        %3747 = vmatprep.subr.mxu0 0.0
        %3748 = vmatpush1.msra.mxu0 %v3721
        %3749 = vmatprep.subr.mxu0 0.0
        %3750 = vmatpush1.msra.mxu0 %v3722
        %3751 = vmatprep.subr.mxu0 0.0
        %3752 = vmatpush1.msra.mxu0 0.0
        %3753 = vmatprep.subr.mxu0 0.0
        %3754 = vmatpush1.msra.mxu0 0.0
        %3755 = vmatprep.subr.mxu0 0.0
        %3756 = vmatpush1.msra.mxu0 0.0
        %3757 = vmatprep.subr.mxu0 0.0
        %3758 = vmatpush1.msra.mxu0 0.0
        %3759 = vmatprep.subr.mxu0 0.0
        %3760 = vmatpush1.msra.mxu0 0.0
        %3761 = vmatprep.subr.mxu0 0.0
        %3762 = vmatpush1.msra.mxu0 0.0
        %3763 = vmatprep.subr.mxu0 0.0
        %3764 = vmatpush1.msra.mxu0 0.0
        %3765 = vmatprep.subr.mxu0 0.0
        %3766 = vmatpush1.msra.mxu0 0.0
        %3767 = vmatprep.subr.mxu0 0.0
        %3768 = vmatpush1.msra.mxu0 0.0
        %3769 = vmatprep.subr.mxu0 0.0
        %3770 = vmatpush1.msra.mxu0 0.0
        %3771 = vmatprep.subr.mxu0 0.0
        %3772 = vmatpush1.msra.mxu0 0.0
        %3773 = vmatprep.subr.mxu0 0.0
        %3774 = vmatpush1.msra.mxu0 0.0
        %3775 = vmatprep.subr.mxu0 0.0
        %3776 = vmatpush1.msra.mxu0 0.0
        %3777 = vmatprep.subr.mxu0 0.0
        %3778 = vmatpush1.msra.mxu0 0.0
        %3779 = vmatprep.subr.mxu0 0.0
        %3780 = vmatpush1.msra.mxu0 0.0
        %3781 = vmatprep.subr.mxu0 0.0
        %3782 = vmatpush1.msra.mxu0 0.0
        %3783 = vmatprep.subr.mxu0 0.0
        %3784 = vmatpush1.msra.mxu0 0.0
        %3785 = vmatprep.subr.mxu0 0.0
        %3786 = vmatpush1.msra.mxu0 0.0
        %3787 = vmatprep.subr.mxu0 0.0
        %3788 = vmatpush1.msra.mxu0 0.0
        %3789 = vmatprep.subr.mxu0 0.0
        %3790 = vmatpush1.msra.mxu0 0.0
        %3791 = vmatprep.subr.mxu0 0.0
        %3792 = vmatpush1.msra.mxu0 0.0
        %3793 = vmatprep.subr.mxu0 0.0
        %3794 = vmatpush1.msra.mxu0 0.0
        %3795 = vmatprep.subr.mxu0 0.0
        %3796 = vmatpush1.msra.mxu0 0.0
        %3797 = vmatprep.subr.mxu0 0.0
        %3798 = vmatpush1.msra.mxu0 0.0
        %3799 = vmatprep.subr.mxu0 0.0
        %3800 = vmatpush1.msra.mxu0 0.0
        %3801 = vmatprep.subr.mxu0 0.0
        %3802 = vmatpush1.msra.mxu0 0.0
        %3803 = vmatprep.subr.mxu0 0.0
        %3804 = vmatpush1.msra.mxu0 0.0
        %3805 = vmatprep.subr.mxu0 0.0
        %3806 = vmatpush1.msra.mxu0 0.0
        %3807 = vmatprep.subr.mxu0 0.0
        %3808 = vmatpush1.msra.mxu0 0.0
        %3809 = vmatprep.subr.mxu0 0.0
        %3810 = vmatpush1.msra.mxu0 0.0
        %3811 = vmatprep.mubr.f32.mxu0 0.0
        %3812 = vmatmul.mubr.f32.gmra.mrb[0].mxu0 %v3724
        %v3813 = vpop.f32.mrb[0].mxu0
        %v3814 = vadd.f32 0.0, %v3813
        %v3815 = vpop.f32.mrb[0].mxu0
        %3816 = vmatprep.mubr.f32.mxu0 0.0
        %3817 = vmatmul.mubr.f32.gmra.mrb[0].mxu0 %v3727
        %v3818 = vpop.f32.mrb[0].mxu0
        %v3819 = vadd.f32 0.0, %v3818
        %v3820 = vpop.f32.mrb[0].mxu0
        %3821 = vmatprep.mubr.f32.mxu0 0.0
        %3822 = vmatmul.mubr.f32.gmra.mrb[0].mxu0 %v3730
        %v3823 = vpop.f32.mrb[0].mxu0
        %v3824 = vadd.f32 0.0, %v3823
        %v3825 = vpop.f32.mrb[0].mxu0
        %3826 = vmatprep.mubr.f32.mxu0 0.0
        %3827 = vmatmul.mubr.f32.gmra.mrb[0].mxu0 %v3733
        %v3828 = vpop.f32.mrb[0].mxu0
        %v3829 = vadd.f32 0.0, %v3828
        %v3830 = vpop.f32.mrb[0].mxu0
        %3831 = vmatprep.mubr.f32.mxu0 0.0
        %3832 = vmatmul.mubr.f32.gmra.mrb[0].mxu0 %v3736
        %v3833 = vpop.f32.mrb[0].mxu0
        %v3834 = vadd.f32 0.0, %v3833
        %v3835 = vpop.f32.mrb[0].mxu0
        %3836 = vmatprep.mubr.f32.mxu0 0.0
        %3837 = vmatmul.mubr.f32.gmra.mrb[0].mxu0 %v3739
        %v3838 = vpop.f32.mrb[0].mxu0
        %v3839 = vadd.f32 0.0, %v3838
        %v3840 = vpop.f32.mrb[0].mxu0
        %3841 = vmatprep.mubr.f32.mxu0 0.0
        %3842 = vmatmul.mubr.f32.gmra.mrb[0].mxu0 %v3742
        %v3843 = vpop.f32.mrb[0].mxu0
        %v3844 = vadd.f32 0.0, %v3843
        %v3845 = vpop.f32.mrb[0].mxu0
        %3846 = vmatprep.mubr.f32.mxu0 0.0
        %3847 = vmatmul.mubr.f32.gmra.mrb[0].mxu0 %v3745
        %v3848 = vpop.f32.mrb[0].mxu0
        %v3849 = vadd.f32 0.0, %v3848
        %v3850 = vpop.f32.mrb[0].mxu0
        %3851 = vdwg.mxu0
        %v3852 = vadd.f32 %v3648, %v3814
        %v3853 = vadd.f32 %v3649, %v3819
        %v3854 = vadd.f32 %v3650, %v3824
        %v3855 = vadd.f32 %v3651, %v3829
        %v3856 = vadd.f32 %v3652, %v3834
        %v3857 = vadd.f32 %v3653, %v3839
        %v3858 = vadd.f32 %v3654, %v3844
        %v3859 = vadd.f32 %v3655, %v3849
        %v3860 = vld [vmem:[#allocation2 + $0x1c] sm:$0xff]
        %v3861 = vld [vmem:[#allocation2 + $0x24] sm:$0xff]
        %v3862 = vld [vmem:[#allocation2 + $0x2c] sm:$0xff]
        %v3863 = vld [vmem:[#allocation2 + $0x34] sm:$0xff]
        %v3864 = vld [vmem:[#allocation2 + $0x3c] sm:$0xff]
        %v3865 = vld [vmem:[#allocation2 + $0x44] sm:$0xff]
        %v3866 = vld [vmem:[#allocation2 + $0x4c] sm:$0xff]
        %v3867 = vld [vmem:[#allocation2 + $0x54] sm:$0xff]
        %s3868 = scalar_lea.vmem %s5, 1024
        %v3869 = vld [vmem:[%s3868] sm:$0xff]
        %v3870 = vld [vmem:[%s3868 + $0x8] sm:$0xff]
        %v3871 = vld [vmem:[%s3868 + $0x10] sm:$0xff]
        %v3872 = vld [vmem:[%s3868 + $0x18] sm:$0xff]
        %v3873 = vld [vmem:[%s3868 + $0x20] sm:$0xff]
        %v3874 = vld [vmem:[%s3868 + $0x28] sm:$0xff]
        %v3875 = vld [vmem:[%s3868 + $0x30] sm:$0xff]
        %v3876 = vld [vmem:[%s3868 + $0x38] sm:$0xff]
        %3878 = vset.pattern.permute.xlu0 0
        %3879 = vperm.xlu0 %3878, %v3869
        %v3880 = vpop.permute.xlu0 %3879
        %3883 = vset.pattern.permute.xlu0 0
        %3884 = vperm.xlu0 %3883, %v3870
        %v3885 = vpop.permute.xlu0 %3884
        %3888 = vset.pattern.permute.xlu0 0
        %3889 = vperm.xlu0 %3888, %v3871
        %v3890 = vpop.permute.xlu0 %3889
        %3893 = vset.pattern.permute.xlu0 0
        %3894 = vperm.xlu0 %3893, %v3872
        %v3895 = vpop.permute.xlu0 %3894
        %3898 = vset.pattern.permute.xlu0 0
        %3899 = vperm.xlu0 %3898, %v3873
        %v3900 = vpop.permute.xlu0 %3899
        %3903 = vset.pattern.permute.xlu0 0
        %3904 = vperm.xlu0 %3903, %v3874
        %v3905 = vpop.permute.xlu0 %3904
        %3908 = vset.pattern.permute.xlu0 0
        %3909 = vperm.xlu0 %3908, %v3875
        %v3910 = vpop.permute.xlu0 %3909
        %3913 = vset.pattern.permute.xlu0 0
        %3914 = vperm.xlu0 %3913, %v3876
        %v3915 = vpop.permute.xlu0 %3914
        %v3917 = vmul.f32 %v3860, %v3880
        %v3918 = vmul.f32 %v3861, %v3885
        %v3919 = vmul.f32 %v3862, %v3890
        %v3920 = vmul.f32 %v3863, %v3895
        %v3921 = vmul.f32 %v3864, %v3900
        %v3922 = vmul.f32 %v3865, %v3905
        %v3923 = vmul.f32 %v3866, %v3910
        %v3924 = vmul.f32 %v3867, %v3915
        %v3925 = vld [vmem:[%s3 + $0x100] sm:$0xff]
        %v3926 = vld [vmem:[%s3 + $0x108] sm:$0xff]
        %v3928 = vsel %vm439, %v3917, 0
        %v3931 = vsel %vm439, %v3918, 0
        %v3934 = vsel %vm439, %v3919, 0
        %v3937 = vsel %vm439, %v3920, 0
        %v3940 = vsel %vm439, %v3921, 0
        %v3943 = vsel %vm439, %v3922, 0
        %v3946 = vsel %vm439, %v3923, 0
        %v3949 = vsel %vm439, %v3924, 0
        %3951 = vmatprep.subr.mxu0 0.0
        %3952 = vmatpush1.msra.mxu0 %v3925
        %3953 = vmatprep.subr.mxu0 0.0
        %3954 = vmatpush1.msra.mxu0 %v3926
        %3955 = vmatprep.subr.mxu0 0.0
        %3956 = vmatpush1.msra.mxu0 0.0
        %3957 = vmatprep.subr.mxu0 0.0
        %3958 = vmatpush1.msra.mxu0 0.0
        %3959 = vmatprep.subr.mxu0 0.0
        %3960 = vmatpush1.msra.mxu0 0.0
        %3961 = vmatprep.subr.mxu0 0.0
        %3962 = vmatpush1.msra.mxu0 0.0
        %3963 = vmatprep.subr.mxu0 0.0
        %3964 = vmatpush1.msra.mxu0 0.0
        %3965 = vmatprep.subr.mxu0 0.0
        %3966 = vmatpush1.msra.mxu0 0.0
        %3967 = vmatprep.subr.mxu0 0.0
        %3968 = vmatpush1.msra.mxu0 0.0
        %3969 = vmatprep.subr.mxu0 0.0
        %3970 = vmatpush1.msra.mxu0 0.0
        %3971 = vmatprep.subr.mxu0 0.0
        %3972 = vmatpush1.msra.mxu0 0.0
        %3973 = vmatprep.subr.mxu0 0.0
        %3974 = vmatpush1.msra.mxu0 0.0
        %3975 = vmatprep.subr.mxu0 0.0
        %3976 = vmatpush1.msra.mxu0 0.0
        %3977 = vmatprep.subr.mxu0 0.0
        %3978 = vmatpush1.msra.mxu0 0.0
        %3979 = vmatprep.subr.mxu0 0.0
        %3980 = vmatpush1.msra.mxu0 0.0
        %3981 = vmatprep.subr.mxu0 0.0
        %3982 = vmatpush1.msra.mxu0 0.0
        %3983 = vmatprep.subr.mxu0 0.0
        %3984 = vmatpush1.msra.mxu0 0.0
        %3985 = vmatprep.subr.mxu0 0.0
        %3986 = vmatpush1.msra.mxu0 0.0
        %3987 = vmatprep.subr.mxu0 0.0
        %3988 = vmatpush1.msra.mxu0 0.0
        %3989 = vmatprep.subr.mxu0 0.0
        %3990 = vmatpush1.msra.mxu0 0.0
        %3991 = vmatprep.subr.mxu0 0.0
        %3992 = vmatpush1.msra.mxu0 0.0
        %3993 = vmatprep.subr.mxu0 0.0
        %3994 = vmatpush1.msra.mxu0 0.0
        %3995 = vmatprep.subr.mxu0 0.0
        %3996 = vmatpush1.msra.mxu0 0.0
        %3997 = vmatprep.subr.mxu0 0.0
        %3998 = vmatpush1.msra.mxu0 0.0
        %3999 = vmatprep.subr.mxu0 0.0
        %4000 = vmatpush1.msra.mxu0 0.0
        %4001 = vmatprep.subr.mxu0 0.0
        %4002 = vmatpush1.msra.mxu0 0.0
        %4003 = vmatprep.subr.mxu0 0.0
        %4004 = vmatpush1.msra.mxu0 0.0
        %4005 = vmatprep.subr.mxu0 0.0
        %4006 = vmatpush1.msra.mxu0 0.0
        %4007 = vmatprep.subr.mxu0 0.0
        %4008 = vmatpush1.msra.mxu0 0.0
        %4009 = vmatprep.subr.mxu0 0.0
        %4010 = vmatpush1.msra.mxu0 0.0
        %4011 = vmatprep.subr.mxu0 0.0
        %4012 = vmatpush1.msra.mxu0 0.0
        %4013 = vmatprep.subr.mxu0 0.0
        %4014 = vmatpush1.msra.mxu0 0.0
        %4015 = vmatprep.mubr.f32.mxu0 0.0
        %4016 = vmatmul.mubr.f32.gmra.mrb[0].mxu0 %v3928
        %v4017 = vpop.f32.mrb[0].mxu0
        %v4018 = vadd.f32 0.0, %v4017
        %v4019 = vpop.f32.mrb[0].mxu0
        %4020 = vmatprep.mubr.f32.mxu0 0.0
        %4021 = vmatmul.mubr.f32.gmra.mrb[0].mxu0 %v3931
        %v4022 = vpop.f32.mrb[0].mxu0
        %v4023 = vadd.f32 0.0, %v4022
        %v4024 = vpop.f32.mrb[0].mxu0
        %4025 = vmatprep.mubr.f32.mxu0 0.0
        %4026 = vmatmul.mubr.f32.gmra.mrb[0].mxu0 %v3934
        %v4027 = vpop.f32.mrb[0].mxu0
        %v4028 = vadd.f32 0.0, %v4027
        %v4029 = vpop.f32.mrb[0].mxu0
        %4030 = vmatprep.mubr.f32.mxu0 0.0
        %4031 = vmatmul.mubr.f32.gmra.mrb[0].mxu0 %v3937
        %v4032 = vpop.f32.mrb[0].mxu0
        %v4033 = vadd.f32 0.0, %v4032
        %v4034 = vpop.f32.mrb[0].mxu0
        %4035 = vmatprep.mubr.f32.mxu0 0.0
        %4036 = vmatmul.mubr.f32.gmra.mrb[0].mxu0 %v3940
        %v4037 = vpop.f32.mrb[0].mxu0
        %v4038 = vadd.f32 0.0, %v4037
        %v4039 = vpop.f32.mrb[0].mxu0
        %4040 = vmatprep.mubr.f32.mxu0 0.0
        %4041 = vmatmul.mubr.f32.gmra.mrb[0].mxu0 %v3943
        %v4042 = vpop.f32.mrb[0].mxu0
        %v4043 = vadd.f32 0.0, %v4042
        %v4044 = vpop.f32.mrb[0].mxu0
        %4045 = vmatprep.mubr.f32.mxu0 0.0
        %4046 = vmatmul.mubr.f32.gmra.mrb[0].mxu0 %v3946
        %v4047 = vpop.f32.mrb[0].mxu0
        %v4048 = vadd.f32 0.0, %v4047
        %v4049 = vpop.f32.mrb[0].mxu0
        %4050 = vmatprep.mubr.f32.mxu0 0.0
        %4051 = vmatmul.mubr.f32.gmra.mrb[0].mxu0 %v3949
        %v4052 = vpop.f32.mrb[0].mxu0
        %v4053 = vadd.f32 0.0, %v4052
        %v4054 = vpop.f32.mrb[0].mxu0
        %4055 = vdwg.mxu0
        %v4056 = vadd.f32 %v3852, %v4018
        %v4057 = vadd.f32 %v3853, %v4023
        %v4058 = vadd.f32 %v3854, %v4028
        %v4059 = vadd.f32 %v3855, %v4033
        %v4060 = vadd.f32 %v3856, %v4038
        %v4061 = vadd.f32 %v3857, %v4043
        %v4062 = vadd.f32 %v3858, %v4048
        %v4063 = vadd.f32 %v3859, %v4053
        %v4064 = vld [vmem:[#allocation2 + $0x1d] sm:$0xff]
        %v4065 = vld [vmem:[#allocation2 + $0x25] sm:$0xff]
        %v4066 = vld [vmem:[#allocation2 + $0x2d] sm:$0xff]
        %v4067 = vld [vmem:[#allocation2 + $0x35] sm:$0xff]
        %v4068 = vld [vmem:[#allocation2 + $0x3d] sm:$0xff]
        %v4069 = vld [vmem:[#allocation2 + $0x45] sm:$0xff]
        %v4070 = vld [vmem:[#allocation2 + $0x4d] sm:$0xff]
        %v4071 = vld [vmem:[#allocation2 + $0x55] sm:$0xff]
        %s4072 = scalar_lea.vmem %s5, 1088
        %v4073 = vld [vmem:[%s4072] sm:$0xff]
        %v4074 = vld [vmem:[%s4072 + $0x8] sm:$0xff]
        %v4075 = vld [vmem:[%s4072 + $0x10] sm:$0xff]
        %v4076 = vld [vmem:[%s4072 + $0x18] sm:$0xff]
        %v4077 = vld [vmem:[%s4072 + $0x20] sm:$0xff]
        %v4078 = vld [vmem:[%s4072 + $0x28] sm:$0xff]
        %v4079 = vld [vmem:[%s4072 + $0x30] sm:$0xff]
        %v4080 = vld [vmem:[%s4072 + $0x38] sm:$0xff]
        %4082 = vset.pattern.permute.xlu0 0
        %4083 = vperm.xlu0 %4082, %v4073
        %v4084 = vpop.permute.xlu0 %4083
        %4087 = vset.pattern.permute.xlu0 0
        %4088 = vperm.xlu0 %4087, %v4074
        %v4089 = vpop.permute.xlu0 %4088
        %4092 = vset.pattern.permute.xlu0 0
        %4093 = vperm.xlu0 %4092, %v4075
        %v4094 = vpop.permute.xlu0 %4093
        %4097 = vset.pattern.permute.xlu0 0
        %4098 = vperm.xlu0 %4097, %v4076
        %v4099 = vpop.permute.xlu0 %4098
        %4102 = vset.pattern.permute.xlu0 0
        %4103 = vperm.xlu0 %4102, %v4077
        %v4104 = vpop.permute.xlu0 %4103
        %4107 = vset.pattern.permute.xlu0 0
        %4108 = vperm.xlu0 %4107, %v4078
        %v4109 = vpop.permute.xlu0 %4108
        %4112 = vset.pattern.permute.xlu0 0
        %4113 = vperm.xlu0 %4112, %v4079
        %v4114 = vpop.permute.xlu0 %4113
        %4117 = vset.pattern.permute.xlu0 0
        %4118 = vperm.xlu0 %4117, %v4080
        %v4119 = vpop.permute.xlu0 %4118
        %v4121 = vmul.f32 %v4064, %v4084
        %v4122 = vmul.f32 %v4065, %v4089
        %v4123 = vmul.f32 %v4066, %v4094
        %v4124 = vmul.f32 %v4067, %v4099
        %v4125 = vmul.f32 %v4068, %v4104
        %v4126 = vmul.f32 %v4069, %v4109
        %v4127 = vmul.f32 %v4070, %v4114
        %v4128 = vmul.f32 %v4071, %v4119
        %v4129 = vld [vmem:[%s3 + $0x110] sm:$0xff]
        %v4130 = vld [vmem:[%s3 + $0x118] sm:$0xff]
        %v4132 = vsel %vm439, %v4121, 0
        %v4135 = vsel %vm439, %v4122, 0
        %v4138 = vsel %vm439, %v4123, 0
        %v4141 = vsel %vm439, %v4124, 0
        %v4144 = vsel %vm439, %v4125, 0
        %v4147 = vsel %vm439, %v4126, 0
        %v4150 = vsel %vm439, %v4127, 0
        %v4153 = vsel %vm439, %v4128, 0
        %4155 = vmatprep.subr.mxu0 0.0
        %4156 = vmatpush1.msra.mxu0 %v4129
        %4157 = vmatprep.subr.mxu0 0.0
        %4158 = vmatpush1.msra.mxu0 %v4130
        %4159 = vmatprep.subr.mxu0 0.0
        %4160 = vmatpush1.msra.mxu0 0.0
        %4161 = vmatprep.subr.mxu0 0.0
        %4162 = vmatpush1.msra.mxu0 0.0
        %4163 = vmatprep.subr.mxu0 0.0
        %4164 = vmatpush1.msra.mxu0 0.0
        %4165 = vmatprep.subr.mxu0 0.0
        %4166 = vmatpush1.msra.mxu0 0.0
        %4167 = vmatprep.subr.mxu0 0.0
        %4168 = vmatpush1.msra.mxu0 0.0
        %4169 = vmatprep.subr.mxu0 0.0
        %4170 = vmatpush1.msra.mxu0 0.0
        %4171 = vmatprep.subr.mxu0 0.0
        %4172 = vmatpush1.msra.mxu0 0.0
        %4173 = vmatprep.subr.mxu0 0.0
        %4174 = vmatpush1.msra.mxu0 0.0
        %4175 = vmatprep.subr.mxu0 0.0
        %4176 = vmatpush1.msra.mxu0 0.0
        %4177 = vmatprep.subr.mxu0 0.0
        %4178 = vmatpush1.msra.mxu0 0.0
        %4179 = vmatprep.subr.mxu0 0.0
        %4180 = vmatpush1.msra.mxu0 0.0
        %4181 = vmatprep.subr.mxu0 0.0
        %4182 = vmatpush1.msra.mxu0 0.0
        %4183 = vmatprep.subr.mxu0 0.0
        %4184 = vmatpush1.msra.mxu0 0.0
        %4185 = vmatprep.subr.mxu0 0.0
        %4186 = vmatpush1.msra.mxu0 0.0
        %4187 = vmatprep.subr.mxu0 0.0
        %4188 = vmatpush1.msra.mxu0 0.0
        %4189 = vmatprep.subr.mxu0 0.0
        %4190 = vmatpush1.msra.mxu0 0.0
        %4191 = vmatprep.subr.mxu0 0.0
        %4192 = vmatpush1.msra.mxu0 0.0
        %4193 = vmatprep.subr.mxu0 0.0
        %4194 = vmatpush1.msra.mxu0 0.0
        %4195 = vmatprep.subr.mxu0 0.0
        %4196 = vmatpush1.msra.mxu0 0.0
        %4197 = vmatprep.subr.mxu0 0.0
        %4198 = vmatpush1.msra.mxu0 0.0
        %4199 = vmatprep.subr.mxu0 0.0
        %4200 = vmatpush1.msra.mxu0 0.0
        %4201 = vmatprep.subr.mxu0 0.0
        %4202 = vmatpush1.msra.mxu0 0.0
        %4203 = vmatprep.subr.mxu0 0.0
        %4204 = vmatpush1.msra.mxu0 0.0
        %4205 = vmatprep.subr.mxu0 0.0
        %4206 = vmatpush1.msra.mxu0 0.0
        %4207 = vmatprep.subr.mxu0 0.0
        %4208 = vmatpush1.msra.mxu0 0.0
        %4209 = vmatprep.subr.mxu0 0.0
        %4210 = vmatpush1.msra.mxu0 0.0
        %4211 = vmatprep.subr.mxu0 0.0
        %4212 = vmatpush1.msra.mxu0 0.0
        %4213 = vmatprep.subr.mxu0 0.0
        %4214 = vmatpush1.msra.mxu0 0.0
        %4215 = vmatprep.subr.mxu0 0.0
        %4216 = vmatpush1.msra.mxu0 0.0
        %4217 = vmatprep.subr.mxu0 0.0
        %4218 = vmatpush1.msra.mxu0 0.0
        %4219 = vmatprep.mubr.f32.mxu0 0.0
        %4220 = vmatmul.mubr.f32.gmra.mrb[0].mxu0 %v4132
        %v4221 = vpop.f32.mrb[0].mxu0
        %v4222 = vadd.f32 0.0, %v4221
        %v4223 = vpop.f32.mrb[0].mxu0
        %4224 = vmatprep.mubr.f32.mxu0 0.0
        %4225 = vmatmul.mubr.f32.gmra.mrb[0].mxu0 %v4135
        %v4226 = vpop.f32.mrb[0].mxu0
        %v4227 = vadd.f32 0.0, %v4226
        %v4228 = vpop.f32.mrb[0].mxu0
        %4229 = vmatprep.mubr.f32.mxu0 0.0
        %4230 = vmatmul.mubr.f32.gmra.mrb[0].mxu0 %v4138
        %v4231 = vpop.f32.mrb[0].mxu0
        %v4232 = vadd.f32 0.0, %v4231
        %v4233 = vpop.f32.mrb[0].mxu0
        %4234 = vmatprep.mubr.f32.mxu0 0.0
        %4235 = vmatmul.mubr.f32.gmra.mrb[0].mxu0 %v4141
        %v4236 = vpop.f32.mrb[0].mxu0
        %v4237 = vadd.f32 0.0, %v4236
        %v4238 = vpop.f32.mrb[0].mxu0
        %4239 = vmatprep.mubr.f32.mxu0 0.0
        %4240 = vmatmul.mubr.f32.gmra.mrb[0].mxu0 %v4144
        %v4241 = vpop.f32.mrb[0].mxu0
        %v4242 = vadd.f32 0.0, %v4241
        %v4243 = vpop.f32.mrb[0].mxu0
        %4244 = vmatprep.mubr.f32.mxu0 0.0
        %4245 = vmatmul.mubr.f32.gmra.mrb[0].mxu0 %v4147
        %v4246 = vpop.f32.mrb[0].mxu0
        %v4247 = vadd.f32 0.0, %v4246
        %v4248 = vpop.f32.mrb[0].mxu0
        %4249 = vmatprep.mubr.f32.mxu0 0.0
        %4250 = vmatmul.mubr.f32.gmra.mrb[0].mxu0 %v4150
        %v4251 = vpop.f32.mrb[0].mxu0
        %v4252 = vadd.f32 0.0, %v4251
        %v4253 = vpop.f32.mrb[0].mxu0
        %4254 = vmatprep.mubr.f32.mxu0 0.0
        %4255 = vmatmul.mubr.f32.gmra.mrb[0].mxu0 %v4153
        %v4256 = vpop.f32.mrb[0].mxu0
        %v4257 = vadd.f32 0.0, %v4256
        %v4258 = vpop.f32.mrb[0].mxu0
        %4259 = vdwg.mxu0
        %v4260 = vadd.f32 %v4056, %v4222
        %v4261 = vadd.f32 %v4057, %v4227
        %v4262 = vadd.f32 %v4058, %v4232
        %v4263 = vadd.f32 %v4059, %v4237
        %v4264 = vadd.f32 %v4060, %v4242
        %v4265 = vadd.f32 %v4061, %v4247
        %v4266 = vadd.f32 %v4062, %v4252
        %v4267 = vadd.f32 %v4063, %v4257
        %v4268 = vld [vmem:[#allocation2 + $0x23] sm:$0xff]
        %v4269 = vld [vmem:[#allocation2 + $0x2b] sm:$0xff]
        %v4270 = vld [vmem:[#allocation2 + $0x33] sm:$0xff]
        %v4271 = vld [vmem:[#allocation2 + $0x3b] sm:$0xff]
        %v4272 = vld [vmem:[#allocation2 + $0x43] sm:$0xff]
        %v4273 = vld [vmem:[#allocation2 + $0x4b] sm:$0xff]
        %v4274 = vld [vmem:[#allocation2 + $0x53] sm:$0xff]
        %v4275 = vld [vmem:[#allocation2 + $0x5b] sm:$0xff]
        %s4276 = scalar_lea.vmem %s5, 1152
        %v4277 = vld [vmem:[%s4276] sm:$0xff]
        %v4278 = vld [vmem:[%s4276 + $0x8] sm:$0xff]
        %v4279 = vld [vmem:[%s4276 + $0x10] sm:$0xff]
        %v4280 = vld [vmem:[%s4276 + $0x18] sm:$0xff]
        %v4281 = vld [vmem:[%s4276 + $0x20] sm:$0xff]
        %v4282 = vld [vmem:[%s4276 + $0x28] sm:$0xff]
        %v4283 = vld [vmem:[%s4276 + $0x30] sm:$0xff]
        %v4284 = vld [vmem:[%s4276 + $0x38] sm:$0xff]
        %4286 = vset.pattern.permute.xlu0 0
        %4287 = vperm.xlu0 %4286, %v4277
        %v4288 = vpop.permute.xlu0 %4287
        %4291 = vset.pattern.permute.xlu0 0
        %4292 = vperm.xlu0 %4291, %v4278
        %v4293 = vpop.permute.xlu0 %4292
        %4296 = vset.pattern.permute.xlu0 0
        %4297 = vperm.xlu0 %4296, %v4279
        %v4298 = vpop.permute.xlu0 %4297
        %4301 = vset.pattern.permute.xlu0 0
        %4302 = vperm.xlu0 %4301, %v4280
        %v4303 = vpop.permute.xlu0 %4302
        %4306 = vset.pattern.permute.xlu0 0
        %4307 = vperm.xlu0 %4306, %v4281
        %v4308 = vpop.permute.xlu0 %4307
        %4311 = vset.pattern.permute.xlu0 0
        %4312 = vperm.xlu0 %4311, %v4282
        %v4313 = vpop.permute.xlu0 %4312
        %4316 = vset.pattern.permute.xlu0 0
        %4317 = vperm.xlu0 %4316, %v4283
        %v4318 = vpop.permute.xlu0 %4317
        %4321 = vset.pattern.permute.xlu0 0
        %4322 = vperm.xlu0 %4321, %v4284
        %v4323 = vpop.permute.xlu0 %4322
        %v4325 = vmul.f32 %v4268, %v4288
        %v4326 = vmul.f32 %v4269, %v4293
        %v4327 = vmul.f32 %v4270, %v4298
        %v4328 = vmul.f32 %v4271, %v4303
        %v4329 = vmul.f32 %v4272, %v4308
        %v4330 = vmul.f32 %v4273, %v4313
        %v4331 = vmul.f32 %v4274, %v4318
        %v4332 = vmul.f32 %v4275, %v4323
        %v4333 = vld [vmem:[%s3 + $0x120] sm:$0xff]
        %v4334 = vld [vmem:[%s3 + $0x128] sm:$0xff]
        %v4336 = vsel %vm439, %v4325, 0
        %v4339 = vsel %vm439, %v4326, 0
        %v4342 = vsel %vm439, %v4327, 0
        %v4345 = vsel %vm439, %v4328, 0
        %v4348 = vsel %vm439, %v4329, 0
        %v4351 = vsel %vm439, %v4330, 0
        %v4354 = vsel %vm439, %v4331, 0
        %v4357 = vsel %vm439, %v4332, 0
        %4359 = vmatprep.subr.mxu0 0.0
        %4360 = vmatpush1.msra.mxu0 %v4333
        %4361 = vmatprep.subr.mxu0 0.0
        %4362 = vmatpush1.msra.mxu0 %v4334
        %4363 = vmatprep.subr.mxu0 0.0
        %4364 = vmatpush1.msra.mxu0 0.0
        %4365 = vmatprep.subr.mxu0 0.0
        %4366 = vmatpush1.msra.mxu0 0.0
        %4367 = vmatprep.subr.mxu0 0.0
        %4368 = vmatpush1.msra.mxu0 0.0
        %4369 = vmatprep.subr.mxu0 0.0
        %4370 = vmatpush1.msra.mxu0 0.0
        %4371 = vmatprep.subr.mxu0 0.0
        %4372 = vmatpush1.msra.mxu0 0.0
        %4373 = vmatprep.subr.mxu0 0.0
        %4374 = vmatpush1.msra.mxu0 0.0
        %4375 = vmatprep.subr.mxu0 0.0
        %4376 = vmatpush1.msra.mxu0 0.0
        %4377 = vmatprep.subr.mxu0 0.0
        %4378 = vmatpush1.msra.mxu0 0.0
        %4379 = vmatprep.subr.mxu0 0.0
        %4380 = vmatpush1.msra.mxu0 0.0
        %4381 = vmatprep.subr.mxu0 0.0
        %4382 = vmatpush1.msra.mxu0 0.0
        %4383 = vmatprep.subr.mxu0 0.0
        %4384 = vmatpush1.msra.mxu0 0.0
        %4385 = vmatprep.subr.mxu0 0.0
        %4386 = vmatpush1.msra.mxu0 0.0
        %4387 = vmatprep.subr.mxu0 0.0
        %4388 = vmatpush1.msra.mxu0 0.0
        %4389 = vmatprep.subr.mxu0 0.0
        %4390 = vmatpush1.msra.mxu0 0.0
        %4391 = vmatprep.subr.mxu0 0.0
        %4392 = vmatpush1.msra.mxu0 0.0
        %4393 = vmatprep.subr.mxu0 0.0
        %4394 = vmatpush1.msra.mxu0 0.0
        %4395 = vmatprep.subr.mxu0 0.0
        %4396 = vmatpush1.msra.mxu0 0.0
        %4397 = vmatprep.subr.mxu0 0.0
        %4398 = vmatpush1.msra.mxu0 0.0
        %4399 = vmatprep.subr.mxu0 0.0
        %4400 = vmatpush1.msra.mxu0 0.0
        %4401 = vmatprep.subr.mxu0 0.0
        %4402 = vmatpush1.msra.mxu0 0.0
        %4403 = vmatprep.subr.mxu0 0.0
        %4404 = vmatpush1.msra.mxu0 0.0
        %4405 = vmatprep.subr.mxu0 0.0
        %4406 = vmatpush1.msra.mxu0 0.0
        %4407 = vmatprep.subr.mxu0 0.0
        %4408 = vmatpush1.msra.mxu0 0.0
        %4409 = vmatprep.subr.mxu0 0.0
        %4410 = vmatpush1.msra.mxu0 0.0
        %4411 = vmatprep.subr.mxu0 0.0
        %4412 = vmatpush1.msra.mxu0 0.0
        %4413 = vmatprep.subr.mxu0 0.0
        %4414 = vmatpush1.msra.mxu0 0.0
        %4415 = vmatprep.subr.mxu0 0.0
        %4416 = vmatpush1.msra.mxu0 0.0
        %4417 = vmatprep.subr.mxu0 0.0
        %4418 = vmatpush1.msra.mxu0 0.0
        %4419 = vmatprep.subr.mxu0 0.0
        %4420 = vmatpush1.msra.mxu0 0.0
        %4421 = vmatprep.subr.mxu0 0.0
        %4422 = vmatpush1.msra.mxu0 0.0
        %4423 = vmatprep.mubr.f32.mxu0 0.0
        %4424 = vmatmul.mubr.f32.gmra.mrb[0].mxu0 %v4336
        %v4425 = vpop.f32.mrb[0].mxu0
        %v4426 = vadd.f32 0.0, %v4425
        %v4427 = vpop.f32.mrb[0].mxu0
        %4428 = vmatprep.mubr.f32.mxu0 0.0
        %4429 = vmatmul.mubr.f32.gmra.mrb[0].mxu0 %v4339
        %v4430 = vpop.f32.mrb[0].mxu0
        %v4431 = vadd.f32 0.0, %v4430
        %v4432 = vpop.f32.mrb[0].mxu0
        %4433 = vmatprep.mubr.f32.mxu0 0.0
        %4434 = vmatmul.mubr.f32.gmra.mrb[0].mxu0 %v4342
        %v4435 = vpop.f32.mrb[0].mxu0
        %v4436 = vadd.f32 0.0, %v4435
        %v4437 = vpop.f32.mrb[0].mxu0
        %4438 = vmatprep.mubr.f32.mxu0 0.0
        %4439 = vmatmul.mubr.f32.gmra.mrb[0].mxu0 %v4345
        %v4440 = vpop.f32.mrb[0].mxu0
        %v4441 = vadd.f32 0.0, %v4440
        %v4442 = vpop.f32.mrb[0].mxu0
        %4443 = vmatprep.mubr.f32.mxu0 0.0
        %4444 = vmatmul.mubr.f32.gmra.mrb[0].mxu0 %v4348
        %v4445 = vpop.f32.mrb[0].mxu0
        %v4446 = vadd.f32 0.0, %v4445
        %v4447 = vpop.f32.mrb[0].mxu0
        %4448 = vmatprep.mubr.f32.mxu0 0.0
        %4449 = vmatmul.mubr.f32.gmra.mrb[0].mxu0 %v4351
        %v4450 = vpop.f32.mrb[0].mxu0
        %v4451 = vadd.f32 0.0, %v4450
        %v4452 = vpop.f32.mrb[0].mxu0
        %4453 = vmatprep.mubr.f32.mxu0 0.0
        %4454 = vmatmul.mubr.f32.gmra.mrb[0].mxu0 %v4354
        %v4455 = vpop.f32.mrb[0].mxu0
        %v4456 = vadd.f32 0.0, %v4455
        %v4457 = vpop.f32.mrb[0].mxu0
        %4458 = vmatprep.mubr.f32.mxu0 0.0
        %4459 = vmatmul.mubr.f32.gmra.mrb[0].mxu0 %v4357
        %v4460 = vpop.f32.mrb[0].mxu0
        %v4461 = vadd.f32 0.0, %v4460
        %v4462 = vpop.f32.mrb[0].mxu0
        %4463 = vdwg.mxu0
        %v4464 = vadd.f32 %v4260, %v4426
        %v4465 = vadd.f32 %v4261, %v4431
        %v4466 = vadd.f32 %v4262, %v4436
        %v4467 = vadd.f32 %v4263, %v4441
        %v4468 = vadd.f32 %v4264, %v4446
        %v4469 = vadd.f32 %v4265, %v4451
        %v4470 = vadd.f32 %v4266, %v4456
        %v4471 = vadd.f32 %v4267, %v4461
        %v4472 = vld [vmem:[#allocation2 + $0x24] sm:$0xff]
        %v4473 = vld [vmem:[#allocation2 + $0x2c] sm:$0xff]
        %v4474 = vld [vmem:[#allocation2 + $0x34] sm:$0xff]
        %v4475 = vld [vmem:[#allocation2 + $0x3c] sm:$0xff]
        %v4476 = vld [vmem:[#allocation2 + $0x44] sm:$0xff]
        %v4477 = vld [vmem:[#allocation2 + $0x4c] sm:$0xff]
        %v4478 = vld [vmem:[#allocation2 + $0x54] sm:$0xff]
        %v4479 = vld [vmem:[#allocation2 + $0x5c] sm:$0xff]
        %s4480 = scalar_lea.vmem %s5, 1216
        %v4481 = vld [vmem:[%s4480] sm:$0xff]
        %v4482 = vld [vmem:[%s4480 + $0x8] sm:$0xff]
        %v4483 = vld [vmem:[%s4480 + $0x10] sm:$0xff]
        %v4484 = vld [vmem:[%s4480 + $0x18] sm:$0xff]
        %v4485 = vld [vmem:[%s4480 + $0x20] sm:$0xff]
        %v4486 = vld [vmem:[%s4480 + $0x28] sm:$0xff]
        %v4487 = vld [vmem:[%s4480 + $0x30] sm:$0xff]
        %v4488 = vld [vmem:[%s4480 + $0x38] sm:$0xff]
        %4490 = vset.pattern.permute.xlu0 0
        %4491 = vperm.xlu0 %4490, %v4481
        %v4492 = vpop.permute.xlu0 %4491
        %4495 = vset.pattern.permute.xlu0 0
        %4496 = vperm.xlu0 %4495, %v4482
        %v4497 = vpop.permute.xlu0 %4496
        %4500 = vset.pattern.permute.xlu0 0
        %4501 = vperm.xlu0 %4500, %v4483
        %v4502 = vpop.permute.xlu0 %4501
        %4505 = vset.pattern.permute.xlu0 0
        %4506 = vperm.xlu0 %4505, %v4484
        %v4507 = vpop.permute.xlu0 %4506
        %4510 = vset.pattern.permute.xlu0 0
        %4511 = vperm.xlu0 %4510, %v4485
        %v4512 = vpop.permute.xlu0 %4511
        %4515 = vset.pattern.permute.xlu0 0
        %4516 = vperm.xlu0 %4515, %v4486
        %v4517 = vpop.permute.xlu0 %4516
        %4520 = vset.pattern.permute.xlu0 0
        %4521 = vperm.xlu0 %4520, %v4487
        %v4522 = vpop.permute.xlu0 %4521
        %4525 = vset.pattern.permute.xlu0 0
        %4526 = vperm.xlu0 %4525, %v4488
        %v4527 = vpop.permute.xlu0 %4526
        %v4529 = vmul.f32 %v4472, %v4492
        %v4530 = vmul.f32 %v4473, %v4497
        %v4531 = vmul.f32 %v4474, %v4502
        %v4532 = vmul.f32 %v4475, %v4507
        %v4533 = vmul.f32 %v4476, %v4512
        %v4534 = vmul.f32 %v4477, %v4517
        %v4535 = vmul.f32 %v4478, %v4522
        %v4536 = vmul.f32 %v4479, %v4527
        %v4537 = vld [vmem:[%s3 + $0x130] sm:$0xff]
        %v4538 = vld [vmem:[%s3 + $0x138] sm:$0xff]
        %v4540 = vsel %vm439, %v4529, 0
        %v4543 = vsel %vm439, %v4530, 0
        %v4546 = vsel %vm439, %v4531, 0
        %v4549 = vsel %vm439, %v4532, 0
        %v4552 = vsel %vm439, %v4533, 0
        %v4555 = vsel %vm439, %v4534, 0
        %v4558 = vsel %vm439, %v4535, 0
        %v4561 = vsel %vm439, %v4536, 0
        %4563 = vmatprep.subr.mxu0 0.0
        %4564 = vmatpush1.msra.mxu0 %v4537
        %4565 = vmatprep.subr.mxu0 0.0
        %4566 = vmatpush1.msra.mxu0 %v4538
        %4567 = vmatprep.subr.mxu0 0.0
        %4568 = vmatpush1.msra.mxu0 0.0
        %4569 = vmatprep.subr.mxu0 0.0
        %4570 = vmatpush1.msra.mxu0 0.0
        %4571 = vmatprep.subr.mxu0 0.0
        %4572 = vmatpush1.msra.mxu0 0.0
        %4573 = vmatprep.subr.mxu0 0.0
        %4574 = vmatpush1.msra.mxu0 0.0
        %4575 = vmatprep.subr.mxu0 0.0
        %4576 = vmatpush1.msra.mxu0 0.0
        %4577 = vmatprep.subr.mxu0 0.0
        %4578 = vmatpush1.msra.mxu0 0.0
        %4579 = vmatprep.subr.mxu0 0.0
        %4580 = vmatpush1.msra.mxu0 0.0
        %4581 = vmatprep.subr.mxu0 0.0
        %4582 = vmatpush1.msra.mxu0 0.0
        %4583 = vmatprep.subr.mxu0 0.0
        %4584 = vmatpush1.msra.mxu0 0.0
        %4585 = vmatprep.subr.mxu0 0.0
        %4586 = vmatpush1.msra.mxu0 0.0
        %4587 = vmatprep.subr.mxu0 0.0
        %4588 = vmatpush1.msra.mxu0 0.0
        %4589 = vmatprep.subr.mxu0 0.0
        %4590 = vmatpush1.msra.mxu0 0.0
        %4591 = vmatprep.subr.mxu0 0.0
        %4592 = vmatpush1.msra.mxu0 0.0
        %4593 = vmatprep.subr.mxu0 0.0
        %4594 = vmatpush1.msra.mxu0 0.0
        %4595 = vmatprep.subr.mxu0 0.0
        %4596 = vmatpush1.msra.mxu0 0.0
        %4597 = vmatprep.subr.mxu0 0.0
        %4598 = vmatpush1.msra.mxu0 0.0
        %4599 = vmatprep.subr.mxu0 0.0
        %4600 = vmatpush1.msra.mxu0 0.0
        %4601 = vmatprep.subr.mxu0 0.0
        %4602 = vmatpush1.msra.mxu0 0.0
        %4603 = vmatprep.subr.mxu0 0.0
        %4604 = vmatpush1.msra.mxu0 0.0
        %4605 = vmatprep.subr.mxu0 0.0
        %4606 = vmatpush1.msra.mxu0 0.0
        %4607 = vmatprep.subr.mxu0 0.0
        %4608 = vmatpush1.msra.mxu0 0.0
        %4609 = vmatprep.subr.mxu0 0.0
        %4610 = vmatpush1.msra.mxu0 0.0
        %4611 = vmatprep.subr.mxu0 0.0
        %4612 = vmatpush1.msra.mxu0 0.0
        %4613 = vmatprep.subr.mxu0 0.0
        %4614 = vmatpush1.msra.mxu0 0.0
        %4615 = vmatprep.subr.mxu0 0.0
        %4616 = vmatpush1.msra.mxu0 0.0
        %4617 = vmatprep.subr.mxu0 0.0
        %4618 = vmatpush1.msra.mxu0 0.0
        %4619 = vmatprep.subr.mxu0 0.0
        %4620 = vmatpush1.msra.mxu0 0.0
        %4621 = vmatprep.subr.mxu0 0.0
        %4622 = vmatpush1.msra.mxu0 0.0
        %4623 = vmatprep.subr.mxu0 0.0
        %4624 = vmatpush1.msra.mxu0 0.0
        %4625 = vmatprep.subr.mxu0 0.0
        %4626 = vmatpush1.msra.mxu0 0.0
        %4627 = vmatprep.mubr.f32.mxu0 0.0
        %4628 = vmatmul.mubr.f32.gmra.mrb[0].mxu0 %v4540
        %v4629 = vpop.f32.mrb[0].mxu0
        %v4630 = vadd.f32 0.0, %v4629
        %v4631 = vpop.f32.mrb[0].mxu0
        %4632 = vmatprep.mubr.f32.mxu0 0.0
        %4633 = vmatmul.mubr.f32.gmra.mrb[0].mxu0 %v4543
        %v4634 = vpop.f32.mrb[0].mxu0
        %v4635 = vadd.f32 0.0, %v4634
        %v4636 = vpop.f32.mrb[0].mxu0
        %4637 = vmatprep.mubr.f32.mxu0 0.0
        %4638 = vmatmul.mubr.f32.gmra.mrb[0].mxu0 %v4546
        %v4639 = vpop.f32.mrb[0].mxu0
        %v4640 = vadd.f32 0.0, %v4639
        %v4641 = vpop.f32.mrb[0].mxu0
        %4642 = vmatprep.mubr.f32.mxu0 0.0
        %4643 = vmatmul.mubr.f32.gmra.mrb[0].mxu0 %v4549
        %v4644 = vpop.f32.mrb[0].mxu0
        %v4645 = vadd.f32 0.0, %v4644
        %v4646 = vpop.f32.mrb[0].mxu0
        %4647 = vmatprep.mubr.f32.mxu0 0.0
        %4648 = vmatmul.mubr.f32.gmra.mrb[0].mxu0 %v4552
        %v4649 = vpop.f32.mrb[0].mxu0
        %v4650 = vadd.f32 0.0, %v4649
        %v4651 = vpop.f32.mrb[0].mxu0
        %4652 = vmatprep.mubr.f32.mxu0 0.0
        %4653 = vmatmul.mubr.f32.gmra.mrb[0].mxu0 %v4555
        %v4654 = vpop.f32.mrb[0].mxu0
        %v4655 = vadd.f32 0.0, %v4654
        %v4656 = vpop.f32.mrb[0].mxu0
        %4657 = vmatprep.mubr.f32.mxu0 0.0
        %4658 = vmatmul.mubr.f32.gmra.mrb[0].mxu0 %v4558
        %v4659 = vpop.f32.mrb[0].mxu0
        %v4660 = vadd.f32 0.0, %v4659
        %v4661 = vpop.f32.mrb[0].mxu0
        %4662 = vmatprep.mubr.f32.mxu0 0.0
        %4663 = vmatmul.mubr.f32.gmra.mrb[0].mxu0 %v4561
        %v4664 = vpop.f32.mrb[0].mxu0
        %v4665 = vadd.f32 0.0, %v4664
        %v4666 = vpop.f32.mrb[0].mxu0
        %4667 = vdwg.mxu0
        %v4668 = vadd.f32 %v4464, %v4630
        %v4669 = vadd.f32 %v4465, %v4635
        %v4670 = vadd.f32 %v4466, %v4640
        %v4671 = vadd.f32 %v4467, %v4645
        %v4672 = vadd.f32 %v4468, %v4650
        %v4673 = vadd.f32 %v4469, %v4655
        %v4674 = vadd.f32 %v4470, %v4660
        %v4675 = vadd.f32 %v4471, %v4665
        %v4676 = vld [vmem:[#allocation2 + $0x25] sm:$0xff]
        %v4677 = vld [vmem:[#allocation2 + $0x2d] sm:$0xff]
        %v4678 = vld [vmem:[#allocation2 + $0x35] sm:$0xff]
        %v4679 = vld [vmem:[#allocation2 + $0x3d] sm:$0xff]
        %v4680 = vld [vmem:[#allocation2 + $0x45] sm:$0xff]
        %v4681 = vld [vmem:[#allocation2 + $0x4d] sm:$0xff]
        %v4682 = vld [vmem:[#allocation2 + $0x55] sm:$0xff]
        %v4683 = vld [vmem:[#allocation2 + $0x5d] sm:$0xff]
        %s4684 = scalar_lea.vmem %s5, 1280
        %v4685 = vld [vmem:[%s4684] sm:$0xff]
        %v4686 = vld [vmem:[%s4684 + $0x8] sm:$0xff]
        %v4687 = vld [vmem:[%s4684 + $0x10] sm:$0xff]
        %v4688 = vld [vmem:[%s4684 + $0x18] sm:$0xff]
        %v4689 = vld [vmem:[%s4684 + $0x20] sm:$0xff]
        %v4690 = vld [vmem:[%s4684 + $0x28] sm:$0xff]
        %v4691 = vld [vmem:[%s4684 + $0x30] sm:$0xff]
        %v4692 = vld [vmem:[%s4684 + $0x38] sm:$0xff]
        %4694 = vset.pattern.permute.xlu0 0
        %4695 = vperm.xlu0 %4694, %v4685
        %v4696 = vpop.permute.xlu0 %4695
        %4699 = vset.pattern.permute.xlu0 0
        %4700 = vperm.xlu0 %4699, %v4686
        %v4701 = vpop.permute.xlu0 %4700
        %4704 = vset.pattern.permute.xlu0 0
        %4705 = vperm.xlu0 %4704, %v4687
        %v4706 = vpop.permute.xlu0 %4705
        %4709 = vset.pattern.permute.xlu0 0
        %4710 = vperm.xlu0 %4709, %v4688
        %v4711 = vpop.permute.xlu0 %4710
        %4714 = vset.pattern.permute.xlu0 0
        %4715 = vperm.xlu0 %4714, %v4689
        %v4716 = vpop.permute.xlu0 %4715
        %4719 = vset.pattern.permute.xlu0 0
        %4720 = vperm.xlu0 %4719, %v4690
        %v4721 = vpop.permute.xlu0 %4720
        %4724 = vset.pattern.permute.xlu0 0
        %4725 = vperm.xlu0 %4724, %v4691
        %v4726 = vpop.permute.xlu0 %4725
        %4729 = vset.pattern.permute.xlu0 0
        %4730 = vperm.xlu0 %4729, %v4692
        %v4731 = vpop.permute.xlu0 %4730
        %v4733 = vmul.f32 %v4676, %v4696
        %v4734 = vmul.f32 %v4677, %v4701
        %v4735 = vmul.f32 %v4678, %v4706
        %v4736 = vmul.f32 %v4679, %v4711
        %v4737 = vmul.f32 %v4680, %v4716
        %v4738 = vmul.f32 %v4681, %v4721
        %v4739 = vmul.f32 %v4682, %v4726
        %v4740 = vmul.f32 %v4683, %v4731
        %v4741 = vld [vmem:[%s3 + $0x140] sm:$0xff]
        %v4742 = vld [vmem:[%s3 + $0x148] sm:$0xff]
        %v4744 = vsel %vm439, %v4733, 0
        %v4747 = vsel %vm439, %v4734, 0
        %v4750 = vsel %vm439, %v4735, 0
        %v4753 = vsel %vm439, %v4736, 0
        %v4756 = vsel %vm439, %v4737, 0
        %v4759 = vsel %vm439, %v4738, 0
        %v4762 = vsel %vm439, %v4739, 0
        %v4765 = vsel %vm439, %v4740, 0
        %4767 = vmatprep.subr.mxu0 0.0
        %4768 = vmatpush1.msra.mxu0 %v4741
        %4769 = vmatprep.subr.mxu0 0.0
        %4770 = vmatpush1.msra.mxu0 %v4742
        %4771 = vmatprep.subr.mxu0 0.0
        %4772 = vmatpush1.msra.mxu0 0.0
        %4773 = vmatprep.subr.mxu0 0.0
        %4774 = vmatpush1.msra.mxu0 0.0
        %4775 = vmatprep.subr.mxu0 0.0
        %4776 = vmatpush1.msra.mxu0 0.0
        %4777 = vmatprep.subr.mxu0 0.0
        %4778 = vmatpush1.msra.mxu0 0.0
        %4779 = vmatprep.subr.mxu0 0.0
        %4780 = vmatpush1.msra.mxu0 0.0
        %4781 = vmatprep.subr.mxu0 0.0
        %4782 = vmatpush1.msra.mxu0 0.0
        %4783 = vmatprep.subr.mxu0 0.0
        %4784 = vmatpush1.msra.mxu0 0.0
        %4785 = vmatprep.subr.mxu0 0.0
        %4786 = vmatpush1.msra.mxu0 0.0
        %4787 = vmatprep.subr.mxu0 0.0
        %4788 = vmatpush1.msra.mxu0 0.0
        %4789 = vmatprep.subr.mxu0 0.0
        %4790 = vmatpush1.msra.mxu0 0.0
        %4791 = vmatprep.subr.mxu0 0.0
        %4792 = vmatpush1.msra.mxu0 0.0
        %4793 = vmatprep.subr.mxu0 0.0
        %4794 = vmatpush1.msra.mxu0 0.0
        %4795 = vmatprep.subr.mxu0 0.0
        %4796 = vmatpush1.msra.mxu0 0.0
        %4797 = vmatprep.subr.mxu0 0.0
        %4798 = vmatpush1.msra.mxu0 0.0
        %4799 = vmatprep.subr.mxu0 0.0
        %4800 = vmatpush1.msra.mxu0 0.0
        %4801 = vmatprep.subr.mxu0 0.0
        %4802 = vmatpush1.msra.mxu0 0.0
        %4803 = vmatprep.subr.mxu0 0.0
        %4804 = vmatpush1.msra.mxu0 0.0
        %4805 = vmatprep.subr.mxu0 0.0
        %4806 = vmatpush1.msra.mxu0 0.0
        %4807 = vmatprep.subr.mxu0 0.0
        %4808 = vmatpush1.msra.mxu0 0.0
        %4809 = vmatprep.subr.mxu0 0.0
        %4810 = vmatpush1.msra.mxu0 0.0
        %4811 = vmatprep.subr.mxu0 0.0
        %4812 = vmatpush1.msra.mxu0 0.0
        %4813 = vmatprep.subr.mxu0 0.0
        %4814 = vmatpush1.msra.mxu0 0.0
        %4815 = vmatprep.subr.mxu0 0.0
        %4816 = vmatpush1.msra.mxu0 0.0
        %4817 = vmatprep.subr.mxu0 0.0
        %4818 = vmatpush1.msra.mxu0 0.0
        %4819 = vmatprep.subr.mxu0 0.0
        %4820 = vmatpush1.msra.mxu0 0.0
        %4821 = vmatprep.subr.mxu0 0.0
        %4822 = vmatpush1.msra.mxu0 0.0
        %4823 = vmatprep.subr.mxu0 0.0
        %4824 = vmatpush1.msra.mxu0 0.0
        %4825 = vmatprep.subr.mxu0 0.0
        %4826 = vmatpush1.msra.mxu0 0.0
        %4827 = vmatprep.subr.mxu0 0.0
        %4828 = vmatpush1.msra.mxu0 0.0
        %4829 = vmatprep.subr.mxu0 0.0
        %4830 = vmatpush1.msra.mxu0 0.0
        %4831 = vmatprep.mubr.f32.mxu0 0.0
        %4832 = vmatmul.mubr.f32.gmra.mrb[0].mxu0 %v4744
        %v4833 = vpop.f32.mrb[0].mxu0
        %v4834 = vadd.f32 0.0, %v4833
        %v4835 = vpop.f32.mrb[0].mxu0
        %4836 = vmatprep.mubr.f32.mxu0 0.0
        %4837 = vmatmul.mubr.f32.gmra.mrb[0].mxu0 %v4747
        %v4838 = vpop.f32.mrb[0].mxu0
        %v4839 = vadd.f32 0.0, %v4838
        %v4840 = vpop.f32.mrb[0].mxu0
        %4841 = vmatprep.mubr.f32.mxu0 0.0
        %4842 = vmatmul.mubr.f32.gmra.mrb[0].mxu0 %v4750
        %v4843 = vpop.f32.mrb[0].mxu0
        %v4844 = vadd.f32 0.0, %v4843
        %v4845 = vpop.f32.mrb[0].mxu0
        %4846 = vmatprep.mubr.f32.mxu0 0.0
        %4847 = vmatmul.mubr.f32.gmra.mrb[0].mxu0 %v4753
        %v4848 = vpop.f32.mrb[0].mxu0
        %v4849 = vadd.f32 0.0, %v4848
        %v4850 = vpop.f32.mrb[0].mxu0
        %4851 = vmatprep.mubr.f32.mxu0 0.0
        %4852 = vmatmul.mubr.f32.gmra.mrb[0].mxu0 %v4756
        %v4853 = vpop.f32.mrb[0].mxu0
        %v4854 = vadd.f32 0.0, %v4853
        %v4855 = vpop.f32.mrb[0].mxu0
        %4856 = vmatprep.mubr.f32.mxu0 0.0
        %4857 = vmatmul.mubr.f32.gmra.mrb[0].mxu0 %v4759
        %v4858 = vpop.f32.mrb[0].mxu0
        %v4859 = vadd.f32 0.0, %v4858
        %v4860 = vpop.f32.mrb[0].mxu0
        %4861 = vmatprep.mubr.f32.mxu0 0.0
        %4862 = vmatmul.mubr.f32.gmra.mrb[0].mxu0 %v4762
        %v4863 = vpop.f32.mrb[0].mxu0
        %v4864 = vadd.f32 0.0, %v4863
        %v4865 = vpop.f32.mrb[0].mxu0
        %4866 = vmatprep.mubr.f32.mxu0 0.0
        %4867 = vmatmul.mubr.f32.gmra.mrb[0].mxu0 %v4765
        %v4868 = vpop.f32.mrb[0].mxu0
        %v4869 = vadd.f32 0.0, %v4868
        %v4870 = vpop.f32.mrb[0].mxu0
        %4871 = vdwg.mxu0
        %v4872 = vadd.f32 %v4668, %v4834
        %v4873 = vadd.f32 %v4669, %v4839
        %v4874 = vadd.f32 %v4670, %v4844
        %v4875 = vadd.f32 %v4671, %v4849
        %v4876 = vadd.f32 %v4672, %v4854
        %v4877 = vadd.f32 %v4673, %v4859
        %v4878 = vadd.f32 %v4674, %v4864
        %v4879 = vadd.f32 %v4675, %v4869
        %v4880 = vld [vmem:[#allocation2 + $0x27] sm:$0xff]
        %v4881 = vld [vmem:[#allocation2 + $0x2f] sm:$0xff]
        %v4882 = vld [vmem:[#allocation2 + $0x37] sm:$0xff]
        %v4883 = vld [vmem:[#allocation2 + $0x3f] sm:$0xff]
        %v4884 = vld [vmem:[#allocation2 + $0x47] sm:$0xff]
        %v4885 = vld [vmem:[#allocation2 + $0x4f] sm:$0xff]
        %v4886 = vld [vmem:[#allocation2 + $0x57] sm:$0xff]
        %v4887 = vld [vmem:[#allocation2 + $0x5f] sm:$0xff]
        %s4888 = scalar_lea.vmem %s5, 1344
        %v4889 = vld [vmem:[%s4888] sm:$0xff]
        %v4890 = vld [vmem:[%s4888 + $0x8] sm:$0xff]
        %v4891 = vld [vmem:[%s4888 + $0x10] sm:$0xff]
        %v4892 = vld [vmem:[%s4888 + $0x18] sm:$0xff]
        %v4893 = vld [vmem:[%s4888 + $0x20] sm:$0xff]
        %v4894 = vld [vmem:[%s4888 + $0x28] sm:$0xff]
        %v4895 = vld [vmem:[%s4888 + $0x30] sm:$0xff]
        %v4896 = vld [vmem:[%s4888 + $0x38] sm:$0xff]
        %4898 = vset.pattern.permute.xlu0 0
        %4899 = vperm.xlu0 %4898, %v4889
        %v4900 = vpop.permute.xlu0 %4899
        %4903 = vset.pattern.permute.xlu0 0
        %4904 = vperm.xlu0 %4903, %v4890
        %v4905 = vpop.permute.xlu0 %4904
        %4908 = vset.pattern.permute.xlu0 0
        %4909 = vperm.xlu0 %4908, %v4891
        %v4910 = vpop.permute.xlu0 %4909
        %4913 = vset.pattern.permute.xlu0 0
        %4914 = vperm.xlu0 %4913, %v4892
        %v4915 = vpop.permute.xlu0 %4914
        %4918 = vset.pattern.permute.xlu0 0
        %4919 = vperm.xlu0 %4918, %v4893
        %v4920 = vpop.permute.xlu0 %4919
        %4923 = vset.pattern.permute.xlu0 0
        %4924 = vperm.xlu0 %4923, %v4894
        %v4925 = vpop.permute.xlu0 %4924
        %4928 = vset.pattern.permute.xlu0 0
        %4929 = vperm.xlu0 %4928, %v4895
        %v4930 = vpop.permute.xlu0 %4929
        %4933 = vset.pattern.permute.xlu0 0
        %4934 = vperm.xlu0 %4933, %v4896
        %v4935 = vpop.permute.xlu0 %4934
        %v4937 = vmul.f32 %v4880, %v4900
        %v4938 = vmul.f32 %v4881, %v4905
        %v4939 = vmul.f32 %v4882, %v4910
        %v4940 = vmul.f32 %v4883, %v4915
        %v4941 = vmul.f32 %v4884, %v4920
        %v4942 = vmul.f32 %v4885, %v4925
        %v4943 = vmul.f32 %v4886, %v4930
        %v4944 = vmul.f32 %v4887, %v4935
        %v4945 = vld [vmem:[%s3 + $0x150] sm:$0xff]
        %v4946 = vld [vmem:[%s3 + $0x158] sm:$0xff]
        %v4948 = vsel %vm439, %v4937, 0
        %v4951 = vsel %vm439, %v4938, 0
        %v4954 = vsel %vm439, %v4939, 0
        %v4957 = vsel %vm439, %v4940, 0
        %v4960 = vsel %vm439, %v4941, 0
        %v4963 = vsel %vm439, %v4942, 0
        %v4966 = vsel %vm439, %v4943, 0
        %v4969 = vsel %vm439, %v4944, 0
        %4971 = vmatprep.subr.mxu0 0.0
        %4972 = vmatpush1.msra.mxu0 %v4945
        %4973 = vmatprep.subr.mxu0 0.0
        %4974 = vmatpush1.msra.mxu0 %v4946
        %4975 = vmatprep.subr.mxu0 0.0
        %4976 = vmatpush1.msra.mxu0 0.0
        %4977 = vmatprep.subr.mxu0 0.0
        %4978 = vmatpush1.msra.mxu0 0.0
        %4979 = vmatprep.subr.mxu0 0.0
        %4980 = vmatpush1.msra.mxu0 0.0
        %4981 = vmatprep.subr.mxu0 0.0
        %4982 = vmatpush1.msra.mxu0 0.0
        %4983 = vmatprep.subr.mxu0 0.0
        %4984 = vmatpush1.msra.mxu0 0.0
        %4985 = vmatprep.subr.mxu0 0.0
        %4986 = vmatpush1.msra.mxu0 0.0
        %4987 = vmatprep.subr.mxu0 0.0
        %4988 = vmatpush1.msra.mxu0 0.0
        %4989 = vmatprep.subr.mxu0 0.0
        %4990 = vmatpush1.msra.mxu0 0.0
        %4991 = vmatprep.subr.mxu0 0.0
        %4992 = vmatpush1.msra.mxu0 0.0
        %4993 = vmatprep.subr.mxu0 0.0
        %4994 = vmatpush1.msra.mxu0 0.0
        %4995 = vmatprep.subr.mxu0 0.0
        %4996 = vmatpush1.msra.mxu0 0.0
        %4997 = vmatprep.subr.mxu0 0.0
        %4998 = vmatpush1.msra.mxu0 0.0
        %4999 = vmatprep.subr.mxu0 0.0
        %5000 = vmatpush1.msra.mxu0 0.0
        %5001 = vmatprep.subr.mxu0 0.0
        %5002 = vmatpush1.msra.mxu0 0.0
        %5003 = vmatprep.subr.mxu0 0.0
        %5004 = vmatpush1.msra.mxu0 0.0
        %5005 = vmatprep.subr.mxu0 0.0
        %5006 = vmatpush1.msra.mxu0 0.0
        %5007 = vmatprep.subr.mxu0 0.0
        %5008 = vmatpush1.msra.mxu0 0.0
        %5009 = vmatprep.subr.mxu0 0.0
        %5010 = vmatpush1.msra.mxu0 0.0
        %5011 = vmatprep.subr.mxu0 0.0
        %5012 = vmatpush1.msra.mxu0 0.0
        %5013 = vmatprep.subr.mxu0 0.0
        %5014 = vmatpush1.msra.mxu0 0.0
        %5015 = vmatprep.subr.mxu0 0.0
        %5016 = vmatpush1.msra.mxu0 0.0
        %5017 = vmatprep.subr.mxu0 0.0
        %5018 = vmatpush1.msra.mxu0 0.0
        %5019 = vmatprep.subr.mxu0 0.0
        %5020 = vmatpush1.msra.mxu0 0.0
        %5021 = vmatprep.subr.mxu0 0.0
        %5022 = vmatpush1.msra.mxu0 0.0
        %5023 = vmatprep.subr.mxu0 0.0
        %5024 = vmatpush1.msra.mxu0 0.0
        %5025 = vmatprep.subr.mxu0 0.0
        %5026 = vmatpush1.msra.mxu0 0.0
        %5027 = vmatprep.subr.mxu0 0.0
        %5028 = vmatpush1.msra.mxu0 0.0
        %5029 = vmatprep.subr.mxu0 0.0
        %5030 = vmatpush1.msra.mxu0 0.0
        %5031 = vmatprep.subr.mxu0 0.0
        %5032 = vmatpush1.msra.mxu0 0.0
        %5033 = vmatprep.subr.mxu0 0.0
        %5034 = vmatpush1.msra.mxu0 0.0
        %5035 = vmatprep.mubr.f32.mxu0 0.0
        %5036 = vmatmul.mubr.f32.gmra.mrb[0].mxu0 %v4948
        %v5037 = vpop.f32.mrb[0].mxu0
        %v5038 = vadd.f32 0.0, %v5037
        %v5039 = vpop.f32.mrb[0].mxu0
        %5040 = vmatprep.mubr.f32.mxu0 0.0
        %5041 = vmatmul.mubr.f32.gmra.mrb[0].mxu0 %v4951
        %v5042 = vpop.f32.mrb[0].mxu0
        %v5043 = vadd.f32 0.0, %v5042
        %v5044 = vpop.f32.mrb[0].mxu0
        %5045 = vmatprep.mubr.f32.mxu0 0.0
        %5046 = vmatmul.mubr.f32.gmra.mrb[0].mxu0 %v4954
        %v5047 = vpop.f32.mrb[0].mxu0
        %v5048 = vadd.f32 0.0, %v5047
        %v5049 = vpop.f32.mrb[0].mxu0
        %5050 = vmatprep.mubr.f32.mxu0 0.0
        %5051 = vmatmul.mubr.f32.gmra.mrb[0].mxu0 %v4957
        %v5052 = vpop.f32.mrb[0].mxu0
        %v5053 = vadd.f32 0.0, %v5052
        %v5054 = vpop.f32.mrb[0].mxu0
        %5055 = vmatprep.mubr.f32.mxu0 0.0
        %5056 = vmatmul.mubr.f32.gmra.mrb[0].mxu0 %v4960
        %v5057 = vpop.f32.mrb[0].mxu0
        %v5058 = vadd.f32 0.0, %v5057
        %v5059 = vpop.f32.mrb[0].mxu0
        %5060 = vmatprep.mubr.f32.mxu0 0.0
        %5061 = vmatmul.mubr.f32.gmra.mrb[0].mxu0 %v4963
        %v5062 = vpop.f32.mrb[0].mxu0
        %v5063 = vadd.f32 0.0, %v5062
        %v5064 = vpop.f32.mrb[0].mxu0
        %5065 = vmatprep.mubr.f32.mxu0 0.0
        %5066 = vmatmul.mubr.f32.gmra.mrb[0].mxu0 %v4966
        %v5067 = vpop.f32.mrb[0].mxu0
        %v5068 = vadd.f32 0.0, %v5067
        %v5069 = vpop.f32.mrb[0].mxu0
        %5070 = vmatprep.mubr.f32.mxu0 0.0
        %5071 = vmatmul.mubr.f32.gmra.mrb[0].mxu0 %v4969
        %v5072 = vpop.f32.mrb[0].mxu0
        %v5073 = vadd.f32 0.0, %v5072
        %v5074 = vpop.f32.mrb[0].mxu0
        %5075 = vdwg.mxu0
        %v5076 = vadd.f32 %v4872, %v5038
        %v5077 = vadd.f32 %v4873, %v5043
        %v5078 = vadd.f32 %v4874, %v5048
        %v5079 = vadd.f32 %v4875, %v5053
        %v5080 = vadd.f32 %v4876, %v5058
        %v5081 = vadd.f32 %v4877, %v5063
        %v5082 = vadd.f32 %v4878, %v5068
        %v5083 = vadd.f32 %v4879, %v5073
        %v5084 = vld [vmem:[#allocation2 + $0x28] sm:$0xff]
        %v5085 = vld [vmem:[#allocation2 + $0x30] sm:$0xff]
        %v5086 = vld [vmem:[#allocation2 + $0x38] sm:$0xff]
        %v5087 = vld [vmem:[#allocation2 + $0x40] sm:$0xff]
        %v5088 = vld [vmem:[#allocation2 + $0x48] sm:$0xff]
        %v5089 = vld [vmem:[#allocation2 + $0x50] sm:$0xff]
        %v5090 = vld [vmem:[#allocation2 + $0x58] sm:$0xff]
        %v5091 = vld [vmem:[#allocation2 + $0x60] sm:$0xff]
        %s5092 = scalar_lea.vmem %s5, 1408
        %v5093 = vld [vmem:[%s5092] sm:$0xff]
        %v5094 = vld [vmem:[%s5092 + $0x8] sm:$0xff]
        %v5095 = vld [vmem:[%s5092 + $0x10] sm:$0xff]
        %v5096 = vld [vmem:[%s5092 + $0x18] sm:$0xff]
        %v5097 = vld [vmem:[%s5092 + $0x20] sm:$0xff]
        %v5098 = vld [vmem:[%s5092 + $0x28] sm:$0xff]
        %v5099 = vld [vmem:[%s5092 + $0x30] sm:$0xff]
        %v5100 = vld [vmem:[%s5092 + $0x38] sm:$0xff]
        %5102 = vset.pattern.permute.xlu0 0
        %5103 = vperm.xlu0 %5102, %v5093
        %v5104 = vpop.permute.xlu0 %5103
        %5107 = vset.pattern.permute.xlu0 0
        %5108 = vperm.xlu0 %5107, %v5094
        %v5109 = vpop.permute.xlu0 %5108
        %5112 = vset.pattern.permute.xlu0 0
        %5113 = vperm.xlu0 %5112, %v5095
        %v5114 = vpop.permute.xlu0 %5113
        %5117 = vset.pattern.permute.xlu0 0
        %5118 = vperm.xlu0 %5117, %v5096
        %v5119 = vpop.permute.xlu0 %5118
        %5122 = vset.pattern.permute.xlu0 0
        %5123 = vperm.xlu0 %5122, %v5097
        %v5124 = vpop.permute.xlu0 %5123
        %5127 = vset.pattern.permute.xlu0 0
        %5128 = vperm.xlu0 %5127, %v5098
        %v5129 = vpop.permute.xlu0 %5128
        %5132 = vset.pattern.permute.xlu0 0
        %5133 = vperm.xlu0 %5132, %v5099
        %v5134 = vpop.permute.xlu0 %5133
        %5137 = vset.pattern.permute.xlu0 0
        %5138 = vperm.xlu0 %5137, %v5100
        %v5139 = vpop.permute.xlu0 %5138
        %v5141 = vmul.f32 %v5084, %v5104
        %v5142 = vmul.f32 %v5085, %v5109
        %v5143 = vmul.f32 %v5086, %v5114
        %v5144 = vmul.f32 %v5087, %v5119
        %v5145 = vmul.f32 %v5088, %v5124
        %v5146 = vmul.f32 %v5089, %v5129
        %v5147 = vmul.f32 %v5090, %v5134
        %v5148 = vmul.f32 %v5091, %v5139
        %v5149 = vld [vmem:[%s3 + $0x160] sm:$0xff]
        %v5150 = vld [vmem:[%s3 + $0x168] sm:$0xff]
        %v5152 = vsel %vm439, %v5141, 0
        %v5155 = vsel %vm439, %v5142, 0
        %v5158 = vsel %vm439, %v5143, 0
        %v5161 = vsel %vm439, %v5144, 0
        %v5164 = vsel %vm439, %v5145, 0
        %v5167 = vsel %vm439, %v5146, 0
        %v5170 = vsel %vm439, %v5147, 0
        %v5173 = vsel %vm439, %v5148, 0
        %5175 = vmatprep.subr.mxu0 0.0
        %5176 = vmatpush1.msra.mxu0 %v5149
        %5177 = vmatprep.subr.mxu0 0.0
        %5178 = vmatpush1.msra.mxu0 %v5150
        %5179 = vmatprep.subr.mxu0 0.0
        %5180 = vmatpush1.msra.mxu0 0.0
        %5181 = vmatprep.subr.mxu0 0.0
        %5182 = vmatpush1.msra.mxu0 0.0
        %5183 = vmatprep.subr.mxu0 0.0
        %5184 = vmatpush1.msra.mxu0 0.0
        %5185 = vmatprep.subr.mxu0 0.0
        %5186 = vmatpush1.msra.mxu0 0.0
        %5187 = vmatprep.subr.mxu0 0.0
        %5188 = vmatpush1.msra.mxu0 0.0
        %5189 = vmatprep.subr.mxu0 0.0
        %5190 = vmatpush1.msra.mxu0 0.0
        %5191 = vmatprep.subr.mxu0 0.0
        %5192 = vmatpush1.msra.mxu0 0.0
        %5193 = vmatprep.subr.mxu0 0.0
        %5194 = vmatpush1.msra.mxu0 0.0
        %5195 = vmatprep.subr.mxu0 0.0
        %5196 = vmatpush1.msra.mxu0 0.0
        %5197 = vmatprep.subr.mxu0 0.0
        %5198 = vmatpush1.msra.mxu0 0.0
        %5199 = vmatprep.subr.mxu0 0.0
        %5200 = vmatpush1.msra.mxu0 0.0
        %5201 = vmatprep.subr.mxu0 0.0
        %5202 = vmatpush1.msra.mxu0 0.0
        %5203 = vmatprep.subr.mxu0 0.0
        %5204 = vmatpush1.msra.mxu0 0.0
        %5205 = vmatprep.subr.mxu0 0.0
        %5206 = vmatpush1.msra.mxu0 0.0
        %5207 = vmatprep.subr.mxu0 0.0
        %5208 = vmatpush1.msra.mxu0 0.0
        %5209 = vmatprep.subr.mxu0 0.0
        %5210 = vmatpush1.msra.mxu0 0.0
        %5211 = vmatprep.subr.mxu0 0.0
        %5212 = vmatpush1.msra.mxu0 0.0
        %5213 = vmatprep.subr.mxu0 0.0
        %5214 = vmatpush1.msra.mxu0 0.0
        %5215 = vmatprep.subr.mxu0 0.0
        %5216 = vmatpush1.msra.mxu0 0.0
        %5217 = vmatprep.subr.mxu0 0.0
        %5218 = vmatpush1.msra.mxu0 0.0
        %5219 = vmatprep.subr.mxu0 0.0
        %5220 = vmatpush1.msra.mxu0 0.0
        %5221 = vmatprep.subr.mxu0 0.0
        %5222 = vmatpush1.msra.mxu0 0.0
        %5223 = vmatprep.subr.mxu0 0.0
        %5224 = vmatpush1.msra.mxu0 0.0
        %5225 = vmatprep.subr.mxu0 0.0
        %5226 = vmatpush1.msra.mxu0 0.0
        %5227 = vmatprep.subr.mxu0 0.0
        %5228 = vmatpush1.msra.mxu0 0.0
        %5229 = vmatprep.subr.mxu0 0.0
        %5230 = vmatpush1.msra.mxu0 0.0
        %5231 = vmatprep.subr.mxu0 0.0
        %5232 = vmatpush1.msra.mxu0 0.0
        %5233 = vmatprep.subr.mxu0 0.0
        %5234 = vmatpush1.msra.mxu0 0.0
        %5235 = vmatprep.subr.mxu0 0.0
        %5236 = vmatpush1.msra.mxu0 0.0
        %5237 = vmatprep.subr.mxu0 0.0
        %5238 = vmatpush1.msra.mxu0 0.0
        %5239 = vmatprep.mubr.f32.mxu0 0.0
        %5240 = vmatmul.mubr.f32.gmra.mrb[0].mxu0 %v5152
        %v5241 = vpop.f32.mrb[0].mxu0
        %v5242 = vadd.f32 0.0, %v5241
        %v5243 = vpop.f32.mrb[0].mxu0
        %5244 = vmatprep.mubr.f32.mxu0 0.0
        %5245 = vmatmul.mubr.f32.gmra.mrb[0].mxu0 %v5155
        %v5246 = vpop.f32.mrb[0].mxu0
        %v5247 = vadd.f32 0.0, %v5246
        %v5248 = vpop.f32.mrb[0].mxu0
        %5249 = vmatprep.mubr.f32.mxu0 0.0
        %5250 = vmatmul.mubr.f32.gmra.mrb[0].mxu0 %v5158
        %v5251 = vpop.f32.mrb[0].mxu0
        %v5252 = vadd.f32 0.0, %v5251
        %v5253 = vpop.f32.mrb[0].mxu0
        %5254 = vmatprep.mubr.f32.mxu0 0.0
        %5255 = vmatmul.mubr.f32.gmra.mrb[0].mxu0 %v5161
        %v5256 = vpop.f32.mrb[0].mxu0
        %v5257 = vadd.f32 0.0, %v5256
        %v5258 = vpop.f32.mrb[0].mxu0
        %5259 = vmatprep.mubr.f32.mxu0 0.0
        %5260 = vmatmul.mubr.f32.gmra.mrb[0].mxu0 %v5164
        %v5261 = vpop.f32.mrb[0].mxu0
        %v5262 = vadd.f32 0.0, %v5261
        %v5263 = vpop.f32.mrb[0].mxu0
        %5264 = vmatprep.mubr.f32.mxu0 0.0
        %5265 = vmatmul.mubr.f32.gmra.mrb[0].mxu0 %v5167
        %v5266 = vpop.f32.mrb[0].mxu0
        %v5267 = vadd.f32 0.0, %v5266
        %v5268 = vpop.f32.mrb[0].mxu0
        %5269 = vmatprep.mubr.f32.mxu0 0.0
        %5270 = vmatmul.mubr.f32.gmra.mrb[0].mxu0 %v5170
        %v5271 = vpop.f32.mrb[0].mxu0
        %v5272 = vadd.f32 0.0, %v5271
        %v5273 = vpop.f32.mrb[0].mxu0
        %5274 = vmatprep.mubr.f32.mxu0 0.0
        %5275 = vmatmul.mubr.f32.gmra.mrb[0].mxu0 %v5173
        %v5276 = vpop.f32.mrb[0].mxu0
        %v5277 = vadd.f32 0.0, %v5276
        %v5278 = vpop.f32.mrb[0].mxu0
        %5279 = vdwg.mxu0
        %v5280 = vadd.f32 %v5076, %v5242
        %v5281 = vadd.f32 %v5077, %v5247
        %v5282 = vadd.f32 %v5078, %v5252
        %v5283 = vadd.f32 %v5079, %v5257
        %v5284 = vadd.f32 %v5080, %v5262
        %v5285 = vadd.f32 %v5081, %v5267
        %v5286 = vadd.f32 %v5082, %v5272
        %v5287 = vadd.f32 %v5083, %v5277
        %v5288 = vld [vmem:[#allocation2 + $0x29] sm:$0xff]
        %v5289 = vld [vmem:[#allocation2 + $0x31] sm:$0xff]
        %v5290 = vld [vmem:[#allocation2 + $0x39] sm:$0xff]
        %v5291 = vld [vmem:[#allocation2 + $0x41] sm:$0xff]
        %v5292 = vld [vmem:[#allocation2 + $0x49] sm:$0xff]
        %v5293 = vld [vmem:[#allocation2 + $0x51] sm:$0xff]
        %v5294 = vld [vmem:[#allocation2 + $0x59] sm:$0xff]
        %v5295 = vld [vmem:[#allocation2 + $0x61] sm:$0xff]
        %s5296 = scalar_lea.vmem %s5, 1472
        %v5297 = vld [vmem:[%s5296] sm:$0xff]
        %v5298 = vld [vmem:[%s5296 + $0x8] sm:$0xff]
        %v5299 = vld [vmem:[%s5296 + $0x10] sm:$0xff]
        %v5300 = vld [vmem:[%s5296 + $0x18] sm:$0xff]
        %v5301 = vld [vmem:[%s5296 + $0x20] sm:$0xff]
        %v5302 = vld [vmem:[%s5296 + $0x28] sm:$0xff]
        %v5303 = vld [vmem:[%s5296 + $0x30] sm:$0xff]
        %v5304 = vld [vmem:[%s5296 + $0x38] sm:$0xff]
        %5306 = vset.pattern.permute.xlu0 0
        %5307 = vperm.xlu0 %5306, %v5297
        %v5308 = vpop.permute.xlu0 %5307
        %5311 = vset.pattern.permute.xlu0 0
        %5312 = vperm.xlu0 %5311, %v5298
        %v5313 = vpop.permute.xlu0 %5312
        %5316 = vset.pattern.permute.xlu0 0
        %5317 = vperm.xlu0 %5316, %v5299
        %v5318 = vpop.permute.xlu0 %5317
        %5321 = vset.pattern.permute.xlu0 0
        %5322 = vperm.xlu0 %5321, %v5300
        %v5323 = vpop.permute.xlu0 %5322
        %5326 = vset.pattern.permute.xlu0 0
        %5327 = vperm.xlu0 %5326, %v5301
        %v5328 = vpop.permute.xlu0 %5327
        %5331 = vset.pattern.permute.xlu0 0
        %5332 = vperm.xlu0 %5331, %v5302
        %v5333 = vpop.permute.xlu0 %5332
        %5336 = vset.pattern.permute.xlu0 0
        %5337 = vperm.xlu0 %5336, %v5303
        %v5338 = vpop.permute.xlu0 %5337
        %5341 = vset.pattern.permute.xlu0 0
        %5342 = vperm.xlu0 %5341, %v5304
        %v5343 = vpop.permute.xlu0 %5342
        %v5345 = vmul.f32 %v5288, %v5308
        %v5346 = vmul.f32 %v5289, %v5313
        %v5347 = vmul.f32 %v5290, %v5318
        %v5348 = vmul.f32 %v5291, %v5323
        %v5349 = vmul.f32 %v5292, %v5328
        %v5350 = vmul.f32 %v5293, %v5333
        %v5351 = vmul.f32 %v5294, %v5338
        %v5352 = vmul.f32 %v5295, %v5343
        %v5353 = vld [vmem:[%s3 + $0x170] sm:$0xff]
        %v5354 = vld [vmem:[%s3 + $0x178] sm:$0xff]
        %v5356 = vsel %vm439, %v5345, 0
        %v5359 = vsel %vm439, %v5346, 0
        %v5362 = vsel %vm439, %v5347, 0
        %v5365 = vsel %vm439, %v5348, 0
        %v5368 = vsel %vm439, %v5349, 0
        %v5371 = vsel %vm439, %v5350, 0
        %v5374 = vsel %vm439, %v5351, 0
        %v5377 = vsel %vm439, %v5352, 0
        %5379 = vmatprep.subr.mxu0 0.0
        %5380 = vmatpush1.msra.mxu0 %v5353
        %5381 = vmatprep.subr.mxu0 0.0
        %5382 = vmatpush1.msra.mxu0 %v5354
        %5383 = vmatprep.subr.mxu0 0.0
        %5384 = vmatpush1.msra.mxu0 0.0
        %5385 = vmatprep.subr.mxu0 0.0
        %5386 = vmatpush1.msra.mxu0 0.0
        %5387 = vmatprep.subr.mxu0 0.0
        %5388 = vmatpush1.msra.mxu0 0.0
        %5389 = vmatprep.subr.mxu0 0.0
        %5390 = vmatpush1.msra.mxu0 0.0
        %5391 = vmatprep.subr.mxu0 0.0
        %5392 = vmatpush1.msra.mxu0 0.0
        %5393 = vmatprep.subr.mxu0 0.0
        %5394 = vmatpush1.msra.mxu0 0.0
        %5395 = vmatprep.subr.mxu0 0.0
        %5396 = vmatpush1.msra.mxu0 0.0
        %5397 = vmatprep.subr.mxu0 0.0
        %5398 = vmatpush1.msra.mxu0 0.0
        %5399 = vmatprep.subr.mxu0 0.0
        %5400 = vmatpush1.msra.mxu0 0.0
        %5401 = vmatprep.subr.mxu0 0.0
        %5402 = vmatpush1.msra.mxu0 0.0
        %5403 = vmatprep.subr.mxu0 0.0
        %5404 = vmatpush1.msra.mxu0 0.0
        %5405 = vmatprep.subr.mxu0 0.0
        %5406 = vmatpush1.msra.mxu0 0.0
        %5407 = vmatprep.subr.mxu0 0.0
        %5408 = vmatpush1.msra.mxu0 0.0
        %5409 = vmatprep.subr.mxu0 0.0
        %5410 = vmatpush1.msra.mxu0 0.0
        %5411 = vmatprep.subr.mxu0 0.0
        %5412 = vmatpush1.msra.mxu0 0.0
        %5413 = vmatprep.subr.mxu0 0.0
        %5414 = vmatpush1.msra.mxu0 0.0
        %5415 = vmatprep.subr.mxu0 0.0
        %5416 = vmatpush1.msra.mxu0 0.0
        %5417 = vmatprep.subr.mxu0 0.0
        %5418 = vmatpush1.msra.mxu0 0.0
        %5419 = vmatprep.subr.mxu0 0.0
        %5420 = vmatpush1.msra.mxu0 0.0
        %5421 = vmatprep.subr.mxu0 0.0
        %5422 = vmatpush1.msra.mxu0 0.0
        %5423 = vmatprep.subr.mxu0 0.0
        %5424 = vmatpush1.msra.mxu0 0.0
        %5425 = vmatprep.subr.mxu0 0.0
        %5426 = vmatpush1.msra.mxu0 0.0
        %5427 = vmatprep.subr.mxu0 0.0
        %5428 = vmatpush1.msra.mxu0 0.0
        %5429 = vmatprep.subr.mxu0 0.0
        %5430 = vmatpush1.msra.mxu0 0.0
        %5431 = vmatprep.subr.mxu0 0.0
        %5432 = vmatpush1.msra.mxu0 0.0
        %5433 = vmatprep.subr.mxu0 0.0
        %5434 = vmatpush1.msra.mxu0 0.0
        %5435 = vmatprep.subr.mxu0 0.0
        %5436 = vmatpush1.msra.mxu0 0.0
        %5437 = vmatprep.subr.mxu0 0.0
        %5438 = vmatpush1.msra.mxu0 0.0
        %5439 = vmatprep.subr.mxu0 0.0
        %5440 = vmatpush1.msra.mxu0 0.0
        %5441 = vmatprep.subr.mxu0 0.0
        %5442 = vmatpush1.msra.mxu0 0.0
        %5443 = vmatprep.mubr.f32.mxu0 0.0
        %5444 = vmatmul.mubr.f32.gmra.mrb[0].mxu0 %v5356
        %v5445 = vpop.f32.mrb[0].mxu0
        %v5446 = vadd.f32 0.0, %v5445
        %v5447 = vpop.f32.mrb[0].mxu0
        %5448 = vmatprep.mubr.f32.mxu0 0.0
        %5449 = vmatmul.mubr.f32.gmra.mrb[0].mxu0 %v5359
        %v5450 = vpop.f32.mrb[0].mxu0
        %v5451 = vadd.f32 0.0, %v5450
        %v5452 = vpop.f32.mrb[0].mxu0
        %5453 = vmatprep.mubr.f32.mxu0 0.0
        %5454 = vmatmul.mubr.f32.gmra.mrb[0].mxu0 %v5362
        %v5455 = vpop.f32.mrb[0].mxu0
        %v5456 = vadd.f32 0.0, %v5455
        %v5457 = vpop.f32.mrb[0].mxu0
        %5458 = vmatprep.mubr.f32.mxu0 0.0
        %5459 = vmatmul.mubr.f32.gmra.mrb[0].mxu0 %v5365
        %v5460 = vpop.f32.mrb[0].mxu0
        %v5461 = vadd.f32 0.0, %v5460
        %v5462 = vpop.f32.mrb[0].mxu0
        %5463 = vmatprep.mubr.f32.mxu0 0.0
        %5464 = vmatmul.mubr.f32.gmra.mrb[0].mxu0 %v5368
        %v5465 = vpop.f32.mrb[0].mxu0
        %v5466 = vadd.f32 0.0, %v5465
        %v5467 = vpop.f32.mrb[0].mxu0
        %5468 = vmatprep.mubr.f32.mxu0 0.0
        %5469 = vmatmul.mubr.f32.gmra.mrb[0].mxu0 %v5371
        %v5470 = vpop.f32.mrb[0].mxu0
        %v5471 = vadd.f32 0.0, %v5470
        %v5472 = vpop.f32.mrb[0].mxu0
        %5473 = vmatprep.mubr.f32.mxu0 0.0
        %5474 = vmatmul.mubr.f32.gmra.mrb[0].mxu0 %v5374
        %v5475 = vpop.f32.mrb[0].mxu0
        %v5476 = vadd.f32 0.0, %v5475
        %v5477 = vpop.f32.mrb[0].mxu0
        %5478 = vmatprep.mubr.f32.mxu0 0.0
        %5479 = vmatmul.mubr.f32.gmra.mrb[0].mxu0 %v5377
        %v5480 = vpop.f32.mrb[0].mxu0
        %v5481 = vadd.f32 0.0, %v5480
        %v5482 = vpop.f32.mrb[0].mxu0
        %5483 = vdwg.mxu0
        %v5484 = vadd.f32 %v5280, %v5446
        %v5485 = vadd.f32 %v5281, %v5451
        %v5486 = vadd.f32 %v5282, %v5456
        %v5487 = vadd.f32 %v5283, %v5461
        %v5488 = vadd.f32 %v5284, %v5466
        %v5489 = vadd.f32 %v5285, %v5471
        %v5490 = vadd.f32 %v5286, %v5476
        %v5491 = vadd.f32 %v5287, %v5481
        %v5492 = vld [vmem:[#allocation2 + $0x2b] sm:$0xff]
        %v5493 = vld [vmem:[#allocation2 + $0x33] sm:$0xff]
        %v5494 = vld [vmem:[#allocation2 + $0x3b] sm:$0xff]
        %v5495 = vld [vmem:[#allocation2 + $0x43] sm:$0xff]
        %v5496 = vld [vmem:[#allocation2 + $0x4b] sm:$0xff]
        %v5497 = vld [vmem:[#allocation2 + $0x53] sm:$0xff]
        %v5498 = vld [vmem:[#allocation2 + $0x5b] sm:$0xff]
        %v5499 = vld [vmem:[#allocation2 + $0x63] sm:$0xff]
        %s5500 = scalar_lea.vmem %s5, 1536
        %v5501 = vld [vmem:[%s5500] sm:$0xff]
        %v5502 = vld [vmem:[%s5500 + $0x8] sm:$0xff]
        %v5503 = vld [vmem:[%s5500 + $0x10] sm:$0xff]
        %v5504 = vld [vmem:[%s5500 + $0x18] sm:$0xff]
        %v5505 = vld [vmem:[%s5500 + $0x20] sm:$0xff]
        %v5506 = vld [vmem:[%s5500 + $0x28] sm:$0xff]
        %v5507 = vld [vmem:[%s5500 + $0x30] sm:$0xff]
        %v5508 = vld [vmem:[%s5500 + $0x38] sm:$0xff]
        %5510 = vset.pattern.permute.xlu0 0
        %5511 = vperm.xlu0 %5510, %v5501
        %v5512 = vpop.permute.xlu0 %5511
        %5515 = vset.pattern.permute.xlu0 0
        %5516 = vperm.xlu0 %5515, %v5502
        %v5517 = vpop.permute.xlu0 %5516
        %5520 = vset.pattern.permute.xlu0 0
        %5521 = vperm.xlu0 %5520, %v5503
        %v5522 = vpop.permute.xlu0 %5521
        %5525 = vset.pattern.permute.xlu0 0
        %5526 = vperm.xlu0 %5525, %v5504
        %v5527 = vpop.permute.xlu0 %5526
        %5530 = vset.pattern.permute.xlu0 0
        %5531 = vperm.xlu0 %5530, %v5505
        %v5532 = vpop.permute.xlu0 %5531
        %5535 = vset.pattern.permute.xlu0 0
        %5536 = vperm.xlu0 %5535, %v5506
        %v5537 = vpop.permute.xlu0 %5536
        %5540 = vset.pattern.permute.xlu0 0
        %5541 = vperm.xlu0 %5540, %v5507
        %v5542 = vpop.permute.xlu0 %5541
        %5545 = vset.pattern.permute.xlu0 0
        %5546 = vperm.xlu0 %5545, %v5508
        %v5547 = vpop.permute.xlu0 %5546
        %v5549 = vmul.f32 %v5492, %v5512
        %v5550 = vmul.f32 %v5493, %v5517
        %v5551 = vmul.f32 %v5494, %v5522
        %v5552 = vmul.f32 %v5495, %v5527
        %v5553 = vmul.f32 %v5496, %v5532
        %v5554 = vmul.f32 %v5497, %v5537
        %v5555 = vmul.f32 %v5498, %v5542
        %v5556 = vmul.f32 %v5499, %v5547
        %v5557 = vld [vmem:[%s3 + $0x180] sm:$0xff]
        %v5558 = vld [vmem:[%s3 + $0x188] sm:$0xff]
        %v5560 = vsel %vm439, %v5549, 0
        %v5563 = vsel %vm439, %v5550, 0
        %v5566 = vsel %vm439, %v5551, 0
        %v5569 = vsel %vm439, %v5552, 0
        %v5572 = vsel %vm439, %v5553, 0
        %v5575 = vsel %vm439, %v5554, 0
        %v5578 = vsel %vm439, %v5555, 0
        %v5581 = vsel %vm439, %v5556, 0
        %5583 = vmatprep.subr.mxu0 0.0
        %5584 = vmatpush1.msra.mxu0 %v5557
        %5585 = vmatprep.subr.mxu0 0.0
        %5586 = vmatpush1.msra.mxu0 %v5558
        %5587 = vmatprep.subr.mxu0 0.0
        %5588 = vmatpush1.msra.mxu0 0.0
        %5589 = vmatprep.subr.mxu0 0.0
        %5590 = vmatpush1.msra.mxu0 0.0
        %5591 = vmatprep.subr.mxu0 0.0
        %5592 = vmatpush1.msra.mxu0 0.0
        %5593 = vmatprep.subr.mxu0 0.0
        %5594 = vmatpush1.msra.mxu0 0.0
        %5595 = vmatprep.subr.mxu0 0.0
        %5596 = vmatpush1.msra.mxu0 0.0
        %5597 = vmatprep.subr.mxu0 0.0
        %5598 = vmatpush1.msra.mxu0 0.0
        %5599 = vmatprep.subr.mxu0 0.0
        %5600 = vmatpush1.msra.mxu0 0.0
        %5601 = vmatprep.subr.mxu0 0.0
        %5602 = vmatpush1.msra.mxu0 0.0
        %5603 = vmatprep.subr.mxu0 0.0
        %5604 = vmatpush1.msra.mxu0 0.0
        %5605 = vmatprep.subr.mxu0 0.0
        %5606 = vmatpush1.msra.mxu0 0.0
        %5607 = vmatprep.subr.mxu0 0.0
        %5608 = vmatpush1.msra.mxu0 0.0
        %5609 = vmatprep.subr.mxu0 0.0
        %5610 = vmatpush1.msra.mxu0 0.0
        %5611 = vmatprep.subr.mxu0 0.0
        %5612 = vmatpush1.msra.mxu0 0.0
        %5613 = vmatprep.subr.mxu0 0.0
        %5614 = vmatpush1.msra.mxu0 0.0
        %5615 = vmatprep.subr.mxu0 0.0
        %5616 = vmatpush1.msra.mxu0 0.0
        %5617 = vmatprep.subr.mxu0 0.0
        %5618 = vmatpush1.msra.mxu0 0.0
        %5619 = vmatprep.subr.mxu0 0.0
        %5620 = vmatpush1.msra.mxu0 0.0
        %5621 = vmatprep.subr.mxu0 0.0
        %5622 = vmatpush1.msra.mxu0 0.0
        %5623 = vmatprep.subr.mxu0 0.0
        %5624 = vmatpush1.msra.mxu0 0.0
        %5625 = vmatprep.subr.mxu0 0.0
        %5626 = vmatpush1.msra.mxu0 0.0
        %5627 = vmatprep.subr.mxu0 0.0
        %5628 = vmatpush1.msra.mxu0 0.0
        %5629 = vmatprep.subr.mxu0 0.0
        %5630 = vmatpush1.msra.mxu0 0.0
        %5631 = vmatprep.subr.mxu0 0.0
        %5632 = vmatpush1.msra.mxu0 0.0
        %5633 = vmatprep.subr.mxu0 0.0
        %5634 = vmatpush1.msra.mxu0 0.0
        %5635 = vmatprep.subr.mxu0 0.0
        %5636 = vmatpush1.msra.mxu0 0.0
        %5637 = vmatprep.subr.mxu0 0.0
        %5638 = vmatpush1.msra.mxu0 0.0
        %5639 = vmatprep.subr.mxu0 0.0
        %5640 = vmatpush1.msra.mxu0 0.0
        %5641 = vmatprep.subr.mxu0 0.0
        %5642 = vmatpush1.msra.mxu0 0.0
        %5643 = vmatprep.subr.mxu0 0.0
        %5644 = vmatpush1.msra.mxu0 0.0
        %5645 = vmatprep.subr.mxu0 0.0
        %5646 = vmatpush1.msra.mxu0 0.0
        %5647 = vmatprep.mubr.f32.mxu0 0.0
        %5648 = vmatmul.mubr.f32.gmra.mrb[0].mxu0 %v5560
        %v5649 = vpop.f32.mrb[0].mxu0
        %v5650 = vadd.f32 0.0, %v5649
        %v5651 = vpop.f32.mrb[0].mxu0
        %5652 = vmatprep.mubr.f32.mxu0 0.0
        %5653 = vmatmul.mubr.f32.gmra.mrb[0].mxu0 %v5563
        %v5654 = vpop.f32.mrb[0].mxu0
        %v5655 = vadd.f32 0.0, %v5654
        %v5656 = vpop.f32.mrb[0].mxu0
        %5657 = vmatprep.mubr.f32.mxu0 0.0
        %5658 = vmatmul.mubr.f32.gmra.mrb[0].mxu0 %v5566
        %v5659 = vpop.f32.mrb[0].mxu0
        %v5660 = vadd.f32 0.0, %v5659
        %v5661 = vpop.f32.mrb[0].mxu0
        %5662 = vmatprep.mubr.f32.mxu0 0.0
        %5663 = vmatmul.mubr.f32.gmra.mrb[0].mxu0 %v5569
        %v5664 = vpop.f32.mrb[0].mxu0
        %v5665 = vadd.f32 0.0, %v5664
        %v5666 = vpop.f32.mrb[0].mxu0
        %5667 = vmatprep.mubr.f32.mxu0 0.0
        %5668 = vmatmul.mubr.f32.gmra.mrb[0].mxu0 %v5572
        %v5669 = vpop.f32.mrb[0].mxu0
        %v5670 = vadd.f32 0.0, %v5669
        %v5671 = vpop.f32.mrb[0].mxu0
        %5672 = vmatprep.mubr.f32.mxu0 0.0
        %5673 = vmatmul.mubr.f32.gmra.mrb[0].mxu0 %v5575
        %v5674 = vpop.f32.mrb[0].mxu0
        %v5675 = vadd.f32 0.0, %v5674
        %v5676 = vpop.f32.mrb[0].mxu0
        %5677 = vmatprep.mubr.f32.mxu0 0.0
        %5678 = vmatmul.mubr.f32.gmra.mrb[0].mxu0 %v5578
        %v5679 = vpop.f32.mrb[0].mxu0
        %v5680 = vadd.f32 0.0, %v5679
        %v5681 = vpop.f32.mrb[0].mxu0
        %5682 = vmatprep.mubr.f32.mxu0 0.0
        %5683 = vmatmul.mubr.f32.gmra.mrb[0].mxu0 %v5581
        %v5684 = vpop.f32.mrb[0].mxu0
        %v5685 = vadd.f32 0.0, %v5684
        %v5686 = vpop.f32.mrb[0].mxu0
        %5687 = vdwg.mxu0
        %v5688 = vadd.f32 %v5484, %v5650
        %v5689 = vadd.f32 %v5485, %v5655
        %v5690 = vadd.f32 %v5486, %v5660
        %v5691 = vadd.f32 %v5487, %v5665
        %v5692 = vadd.f32 %v5488, %v5670
        %v5693 = vadd.f32 %v5489, %v5675
        %v5694 = vadd.f32 %v5490, %v5680
        %v5695 = vadd.f32 %v5491, %v5685
        %v5696 = vld [vmem:[#allocation2 + $0x2c] sm:$0xff]
        %v5697 = vld [vmem:[#allocation2 + $0x34] sm:$0xff]
        %v5698 = vld [vmem:[#allocation2 + $0x3c] sm:$0xff]
        %v5699 = vld [vmem:[#allocation2 + $0x44] sm:$0xff]
        %v5700 = vld [vmem:[#allocation2 + $0x4c] sm:$0xff]
        %v5701 = vld [vmem:[#allocation2 + $0x54] sm:$0xff]
        %v5702 = vld [vmem:[#allocation2 + $0x5c] sm:$0xff]
        %v5703 = vld [vmem:[#allocation2 + $0x64] sm:$0xff]
        %s5704 = scalar_lea.vmem %s5, 1600
        %v5705 = vld [vmem:[%s5704] sm:$0xff]
        %v5706 = vld [vmem:[%s5704 + $0x8] sm:$0xff]
        %v5707 = vld [vmem:[%s5704 + $0x10] sm:$0xff]
        %v5708 = vld [vmem:[%s5704 + $0x18] sm:$0xff]
        %v5709 = vld [vmem:[%s5704 + $0x20] sm:$0xff]
        %v5710 = vld [vmem:[%s5704 + $0x28] sm:$0xff]
        %v5711 = vld [vmem:[%s5704 + $0x30] sm:$0xff]
        %v5712 = vld [vmem:[%s5704 + $0x38] sm:$0xff]
        %5714 = vset.pattern.permute.xlu0 0
        %5715 = vperm.xlu0 %5714, %v5705
        %v5716 = vpop.permute.xlu0 %5715
        %5719 = vset.pattern.permute.xlu0 0
        %5720 = vperm.xlu0 %5719, %v5706
        %v5721 = vpop.permute.xlu0 %5720
        %5724 = vset.pattern.permute.xlu0 0
        %5725 = vperm.xlu0 %5724, %v5707
        %v5726 = vpop.permute.xlu0 %5725
        %5729 = vset.pattern.permute.xlu0 0
        %5730 = vperm.xlu0 %5729, %v5708
        %v5731 = vpop.permute.xlu0 %5730
        %5734 = vset.pattern.permute.xlu0 0
        %5735 = vperm.xlu0 %5734, %v5709
        %v5736 = vpop.permute.xlu0 %5735
        %5739 = vset.pattern.permute.xlu0 0
        %5740 = vperm.xlu0 %5739, %v5710
        %v5741 = vpop.permute.xlu0 %5740
        %5744 = vset.pattern.permute.xlu0 0
        %5745 = vperm.xlu0 %5744, %v5711
        %v5746 = vpop.permute.xlu0 %5745
        %5749 = vset.pattern.permute.xlu0 0
        %5750 = vperm.xlu0 %5749, %v5712
        %v5751 = vpop.permute.xlu0 %5750
        %v5753 = vmul.f32 %v5696, %v5716
        %v5754 = vmul.f32 %v5697, %v5721
        %v5755 = vmul.f32 %v5698, %v5726
        %v5756 = vmul.f32 %v5699, %v5731
        %v5757 = vmul.f32 %v5700, %v5736
        %v5758 = vmul.f32 %v5701, %v5741
        %v5759 = vmul.f32 %v5702, %v5746
        %v5760 = vmul.f32 %v5703, %v5751
        %v5761 = vld [vmem:[%s3 + $0x190] sm:$0xff]
        %v5762 = vld [vmem:[%s3 + $0x198] sm:$0xff]
        %v5764 = vsel %vm439, %v5753, 0
        %v5767 = vsel %vm439, %v5754, 0
        %v5770 = vsel %vm439, %v5755, 0
        %v5773 = vsel %vm439, %v5756, 0
        %v5776 = vsel %vm439, %v5757, 0
        %v5779 = vsel %vm439, %v5758, 0
        %v5782 = vsel %vm439, %v5759, 0
        %v5785 = vsel %vm439, %v5760, 0
        %5787 = vmatprep.subr.mxu0 0.0
        %5788 = vmatpush1.msra.mxu0 %v5761
        %5789 = vmatprep.subr.mxu0 0.0
        %5790 = vmatpush1.msra.mxu0 %v5762
        %5791 = vmatprep.subr.mxu0 0.0
        %5792 = vmatpush1.msra.mxu0 0.0
        %5793 = vmatprep.subr.mxu0 0.0
        %5794 = vmatpush1.msra.mxu0 0.0
        %5795 = vmatprep.subr.mxu0 0.0
        %5796 = vmatpush1.msra.mxu0 0.0
        %5797 = vmatprep.subr.mxu0 0.0
        %5798 = vmatpush1.msra.mxu0 0.0
        %5799 = vmatprep.subr.mxu0 0.0
        %5800 = vmatpush1.msra.mxu0 0.0
        %5801 = vmatprep.subr.mxu0 0.0
        %5802 = vmatpush1.msra.mxu0 0.0
        %5803 = vmatprep.subr.mxu0 0.0
        %5804 = vmatpush1.msra.mxu0 0.0
        %5805 = vmatprep.subr.mxu0 0.0
        %5806 = vmatpush1.msra.mxu0 0.0
        %5807 = vmatprep.subr.mxu0 0.0
        %5808 = vmatpush1.msra.mxu0 0.0
        %5809 = vmatprep.subr.mxu0 0.0
        %5810 = vmatpush1.msra.mxu0 0.0
        %5811 = vmatprep.subr.mxu0 0.0
        %5812 = vmatpush1.msra.mxu0 0.0
        %5813 = vmatprep.subr.mxu0 0.0
        %5814 = vmatpush1.msra.mxu0 0.0
        %5815 = vmatprep.subr.mxu0 0.0
        %5816 = vmatpush1.msra.mxu0 0.0
        %5817 = vmatprep.subr.mxu0 0.0
        %5818 = vmatpush1.msra.mxu0 0.0
        %5819 = vmatprep.subr.mxu0 0.0
        %5820 = vmatpush1.msra.mxu0 0.0
        %5821 = vmatprep.subr.mxu0 0.0
        %5822 = vmatpush1.msra.mxu0 0.0
        %5823 = vmatprep.subr.mxu0 0.0
        %5824 = vmatpush1.msra.mxu0 0.0
        %5825 = vmatprep.subr.mxu0 0.0
        %5826 = vmatpush1.msra.mxu0 0.0
        %5827 = vmatprep.subr.mxu0 0.0
        %5828 = vmatpush1.msra.mxu0 0.0
        %5829 = vmatprep.subr.mxu0 0.0
        %5830 = vmatpush1.msra.mxu0 0.0
        %5831 = vmatprep.subr.mxu0 0.0
        %5832 = vmatpush1.msra.mxu0 0.0
        %5833 = vmatprep.subr.mxu0 0.0
        %5834 = vmatpush1.msra.mxu0 0.0
        %5835 = vmatprep.subr.mxu0 0.0
        %5836 = vmatpush1.msra.mxu0 0.0
        %5837 = vmatprep.subr.mxu0 0.0
        %5838 = vmatpush1.msra.mxu0 0.0
        %5839 = vmatprep.subr.mxu0 0.0
        %5840 = vmatpush1.msra.mxu0 0.0
        %5841 = vmatprep.subr.mxu0 0.0
        %5842 = vmatpush1.msra.mxu0 0.0
        %5843 = vmatprep.subr.mxu0 0.0
        %5844 = vmatpush1.msra.mxu0 0.0
        %5845 = vmatprep.subr.mxu0 0.0
        %5846 = vmatpush1.msra.mxu0 0.0
        %5847 = vmatprep.subr.mxu0 0.0
        %5848 = vmatpush1.msra.mxu0 0.0
        %5849 = vmatprep.subr.mxu0 0.0
        %5850 = vmatpush1.msra.mxu0 0.0
        %5851 = vmatprep.mubr.f32.mxu0 0.0
        %5852 = vmatmul.mubr.f32.gmra.mrb[0].mxu0 %v5764
        %v5853 = vpop.f32.mrb[0].mxu0
        %v5854 = vadd.f32 0.0, %v5853
        %v5855 = vpop.f32.mrb[0].mxu0
        %5856 = vmatprep.mubr.f32.mxu0 0.0
        %5857 = vmatmul.mubr.f32.gmra.mrb[0].mxu0 %v5767
        %v5858 = vpop.f32.mrb[0].mxu0
        %v5859 = vadd.f32 0.0, %v5858
        %v5860 = vpop.f32.mrb[0].mxu0
        %5861 = vmatprep.mubr.f32.mxu0 0.0
        %5862 = vmatmul.mubr.f32.gmra.mrb[0].mxu0 %v5770
        %v5863 = vpop.f32.mrb[0].mxu0
        %v5864 = vadd.f32 0.0, %v5863
        %v5865 = vpop.f32.mrb[0].mxu0
        %5866 = vmatprep.mubr.f32.mxu0 0.0
        %5867 = vmatmul.mubr.f32.gmra.mrb[0].mxu0 %v5773
        %v5868 = vpop.f32.mrb[0].mxu0
        %v5869 = vadd.f32 0.0, %v5868
        %v5870 = vpop.f32.mrb[0].mxu0
        %5871 = vmatprep.mubr.f32.mxu0 0.0
        %5872 = vmatmul.mubr.f32.gmra.mrb[0].mxu0 %v5776
        %v5873 = vpop.f32.mrb[0].mxu0
        %v5874 = vadd.f32 0.0, %v5873
        %v5875 = vpop.f32.mrb[0].mxu0
        %5876 = vmatprep.mubr.f32.mxu0 0.0
        %5877 = vmatmul.mubr.f32.gmra.mrb[0].mxu0 %v5779
        %v5878 = vpop.f32.mrb[0].mxu0
        %v5879 = vadd.f32 0.0, %v5878
        %v5880 = vpop.f32.mrb[0].mxu0
        %5881 = vmatprep.mubr.f32.mxu0 0.0
        %5882 = vmatmul.mubr.f32.gmra.mrb[0].mxu0 %v5782
        %v5883 = vpop.f32.mrb[0].mxu0
        %v5884 = vadd.f32 0.0, %v5883
        %v5885 = vpop.f32.mrb[0].mxu0
        %5886 = vmatprep.mubr.f32.mxu0 0.0
        %5887 = vmatmul.mubr.f32.gmra.mrb[0].mxu0 %v5785
        %v5888 = vpop.f32.mrb[0].mxu0
        %v5889 = vadd.f32 0.0, %v5888
        %v5890 = vpop.f32.mrb[0].mxu0
        %5891 = vdwg.mxu0
        %v5892 = vadd.f32 %v5688, %v5854
        %v5893 = vadd.f32 %v5689, %v5859
        %v5894 = vadd.f32 %v5690, %v5864
        %v5895 = vadd.f32 %v5691, %v5869
        %v5896 = vadd.f32 %v5692, %v5874
        %v5897 = vadd.f32 %v5693, %v5879
        %v5898 = vadd.f32 %v5694, %v5884
        %v5899 = vadd.f32 %v5695, %v5889
        %v5900 = vld [vmem:[#allocation2 + $0x2d] sm:$0xff]
        %v5901 = vld [vmem:[#allocation2 + $0x35] sm:$0xff]
        %v5902 = vld [vmem:[#allocation2 + $0x3d] sm:$0xff]
        %v5903 = vld [vmem:[#allocation2 + $0x45] sm:$0xff]
        %v5904 = vld [vmem:[#allocation2 + $0x4d] sm:$0xff]
        %v5905 = vld [vmem:[#allocation2 + $0x55] sm:$0xff]
        %v5906 = vld [vmem:[#allocation2 + $0x5d] sm:$0xff]
        %v5907 = vld [vmem:[#allocation2 + $0x65] sm:$0xff]
        %s5908 = scalar_lea.vmem %s5, 1664
        %v5909 = vld [vmem:[%s5908] sm:$0xff]
        %v5910 = vld [vmem:[%s5908 + $0x8] sm:$0xff]
        %v5911 = vld [vmem:[%s5908 + $0x10] sm:$0xff]
        %v5912 = vld [vmem:[%s5908 + $0x18] sm:$0xff]
        %v5913 = vld [vmem:[%s5908 + $0x20] sm:$0xff]
        %v5914 = vld [vmem:[%s5908 + $0x28] sm:$0xff]
        %v5915 = vld [vmem:[%s5908 + $0x30] sm:$0xff]
        %v5916 = vld [vmem:[%s5908 + $0x38] sm:$0xff]
        %5918 = vset.pattern.permute.xlu0 0
        %5919 = vperm.xlu0 %5918, %v5909
        %v5920 = vpop.permute.xlu0 %5919
        %5923 = vset.pattern.permute.xlu0 0
        %5924 = vperm.xlu0 %5923, %v5910
        %v5925 = vpop.permute.xlu0 %5924
        %5928 = vset.pattern.permute.xlu0 0
        %5929 = vperm.xlu0 %5928, %v5911
        %v5930 = vpop.permute.xlu0 %5929
        %5933 = vset.pattern.permute.xlu0 0
        %5934 = vperm.xlu0 %5933, %v5912
        %v5935 = vpop.permute.xlu0 %5934
        %5938 = vset.pattern.permute.xlu0 0
        %5939 = vperm.xlu0 %5938, %v5913
        %v5940 = vpop.permute.xlu0 %5939
        %5943 = vset.pattern.permute.xlu0 0
        %5944 = vperm.xlu0 %5943, %v5914
        %v5945 = vpop.permute.xlu0 %5944
        %5948 = vset.pattern.permute.xlu0 0
        %5949 = vperm.xlu0 %5948, %v5915
        %v5950 = vpop.permute.xlu0 %5949
        %5953 = vset.pattern.permute.xlu0 0
        %5954 = vperm.xlu0 %5953, %v5916
        %v5955 = vpop.permute.xlu0 %5954
        %v5957 = vmul.f32 %v5900, %v5920
        %v5958 = vmul.f32 %v5901, %v5925
        %v5959 = vmul.f32 %v5902, %v5930
        %v5960 = vmul.f32 %v5903, %v5935
        %v5961 = vmul.f32 %v5904, %v5940
        %v5962 = vmul.f32 %v5905, %v5945
        %v5963 = vmul.f32 %v5906, %v5950
        %v5964 = vmul.f32 %v5907, %v5955
        %v5965 = vld [vmem:[%s3 + $0x1a0] sm:$0xff]
        %v5966 = vld [vmem:[%s3 + $0x1a8] sm:$0xff]
        %v5968 = vsel %vm439, %v5957, 0
        %v5971 = vsel %vm439, %v5958, 0
        %v5974 = vsel %vm439, %v5959, 0
        %v5977 = vsel %vm439, %v5960, 0
        %v5980 = vsel %vm439, %v5961, 0
        %v5983 = vsel %vm439, %v5962, 0
        %v5986 = vsel %vm439, %v5963, 0
        %v5989 = vsel %vm439, %v5964, 0
        %5991 = vmatprep.subr.mxu0 0.0
        %5992 = vmatpush1.msra.mxu0 %v5965
        %5993 = vmatprep.subr.mxu0 0.0
        %5994 = vmatpush1.msra.mxu0 %v5966
        %5995 = vmatprep.subr.mxu0 0.0
        %5996 = vmatpush1.msra.mxu0 0.0
        %5997 = vmatprep.subr.mxu0 0.0
        %5998 = vmatpush1.msra.mxu0 0.0
        %5999 = vmatprep.subr.mxu0 0.0
        %6000 = vmatpush1.msra.mxu0 0.0
        %6001 = vmatprep.subr.mxu0 0.0
        %6002 = vmatpush1.msra.mxu0 0.0
        %6003 = vmatprep.subr.mxu0 0.0
        %6004 = vmatpush1.msra.mxu0 0.0
        %6005 = vmatprep.subr.mxu0 0.0
        %6006 = vmatpush1.msra.mxu0 0.0
        %6007 = vmatprep.subr.mxu0 0.0
        %6008 = vmatpush1.msra.mxu0 0.0
        %6009 = vmatprep.subr.mxu0 0.0
        %6010 = vmatpush1.msra.mxu0 0.0
        %6011 = vmatprep.subr.mxu0 0.0
        %6012 = vmatpush1.msra.mxu0 0.0
        %6013 = vmatprep.subr.mxu0 0.0
        %6014 = vmatpush1.msra.mxu0 0.0
        %6015 = vmatprep.subr.mxu0 0.0
        %6016 = vmatpush1.msra.mxu0 0.0
        %6017 = vmatprep.subr.mxu0 0.0
        %6018 = vmatpush1.msra.mxu0 0.0
        %6019 = vmatprep.subr.mxu0 0.0
        %6020 = vmatpush1.msra.mxu0 0.0
        %6021 = vmatprep.subr.mxu0 0.0
        %6022 = vmatpush1.msra.mxu0 0.0
        %6023 = vmatprep.subr.mxu0 0.0
        %6024 = vmatpush1.msra.mxu0 0.0
        %6025 = vmatprep.subr.mxu0 0.0
        %6026 = vmatpush1.msra.mxu0 0.0
        %6027 = vmatprep.subr.mxu0 0.0
        %6028 = vmatpush1.msra.mxu0 0.0
        %6029 = vmatprep.subr.mxu0 0.0
        %6030 = vmatpush1.msra.mxu0 0.0
        %6031 = vmatprep.subr.mxu0 0.0
        %6032 = vmatpush1.msra.mxu0 0.0
        %6033 = vmatprep.subr.mxu0 0.0
        %6034 = vmatpush1.msra.mxu0 0.0
        %6035 = vmatprep.subr.mxu0 0.0
        %6036 = vmatpush1.msra.mxu0 0.0
        %6037 = vmatprep.subr.mxu0 0.0
        %6038 = vmatpush1.msra.mxu0 0.0
        %6039 = vmatprep.subr.mxu0 0.0
        %6040 = vmatpush1.msra.mxu0 0.0
        %6041 = vmatprep.subr.mxu0 0.0
        %6042 = vmatpush1.msra.mxu0 0.0
        %6043 = vmatprep.subr.mxu0 0.0
        %6044 = vmatpush1.msra.mxu0 0.0
        %6045 = vmatprep.subr.mxu0 0.0
        %6046 = vmatpush1.msra.mxu0 0.0
        %6047 = vmatprep.subr.mxu0 0.0
        %6048 = vmatpush1.msra.mxu0 0.0
        %6049 = vmatprep.subr.mxu0 0.0
        %6050 = vmatpush1.msra.mxu0 0.0
        %6051 = vmatprep.subr.mxu0 0.0
        %6052 = vmatpush1.msra.mxu0 0.0
        %6053 = vmatprep.subr.mxu0 0.0
        %6054 = vmatpush1.msra.mxu0 0.0
        %6055 = vmatprep.mubr.f32.mxu0 0.0
        %6056 = vmatmul.mubr.f32.gmra.mrb[0].mxu0 %v5968
        %v6057 = vpop.f32.mrb[0].mxu0
        %v6058 = vadd.f32 0.0, %v6057
        %v6059 = vpop.f32.mrb[0].mxu0
        %6060 = vmatprep.mubr.f32.mxu0 0.0
        %6061 = vmatmul.mubr.f32.gmra.mrb[0].mxu0 %v5971
        %v6062 = vpop.f32.mrb[0].mxu0
        %v6063 = vadd.f32 0.0, %v6062
        %v6064 = vpop.f32.mrb[0].mxu0
        %6065 = vmatprep.mubr.f32.mxu0 0.0
        %6066 = vmatmul.mubr.f32.gmra.mrb[0].mxu0 %v5974
        %v6067 = vpop.f32.mrb[0].mxu0
        %v6068 = vadd.f32 0.0, %v6067
        %v6069 = vpop.f32.mrb[0].mxu0
        %6070 = vmatprep.mubr.f32.mxu0 0.0
        %6071 = vmatmul.mubr.f32.gmra.mrb[0].mxu0 %v5977
        %v6072 = vpop.f32.mrb[0].mxu0
        %v6073 = vadd.f32 0.0, %v6072
        %v6074 = vpop.f32.mrb[0].mxu0
        %6075 = vmatprep.mubr.f32.mxu0 0.0
        %6076 = vmatmul.mubr.f32.gmra.mrb[0].mxu0 %v5980
        %v6077 = vpop.f32.mrb[0].mxu0
        %v6078 = vadd.f32 0.0, %v6077
        %v6079 = vpop.f32.mrb[0].mxu0
        %6080 = vmatprep.mubr.f32.mxu0 0.0
        %6081 = vmatmul.mubr.f32.gmra.mrb[0].mxu0 %v5983
        %v6082 = vpop.f32.mrb[0].mxu0
        %v6083 = vadd.f32 0.0, %v6082
        %v6084 = vpop.f32.mrb[0].mxu0
        %6085 = vmatprep.mubr.f32.mxu0 0.0
        %6086 = vmatmul.mubr.f32.gmra.mrb[0].mxu0 %v5986
        %v6087 = vpop.f32.mrb[0].mxu0
        %v6088 = vadd.f32 0.0, %v6087
        %v6089 = vpop.f32.mrb[0].mxu0
        %6090 = vmatprep.mubr.f32.mxu0 0.0
        %6091 = vmatmul.mubr.f32.gmra.mrb[0].mxu0 %v5989
        %v6092 = vpop.f32.mrb[0].mxu0
        %v6093 = vadd.f32 0.0, %v6092
        %v6094 = vpop.f32.mrb[0].mxu0
        %6095 = vdwg.mxu0
        %v6096 = vadd.f32 %v5892, %v6058
        %v6097 = vadd.f32 %v5893, %v6063
        %v6098 = vadd.f32 %v5894, %v6068
        %v6099 = vadd.f32 %v5895, %v6073
        %v6100 = vadd.f32 %v5896, %v6078
        %v6101 = vadd.f32 %v5897, %v6083
        %v6102 = vadd.f32 %v5898, %v6088
        %v6103 = vadd.f32 %v5899, %v6093
        %v6104 = vmul.f32 %v6096, 0.5
        %v6105 = vmul.f32 %v6097, 0.5
        %v6106 = vmul.f32 %v6098, 0.5
        %v6107 = vmul.f32 %v6099, 0.5
        %v6108 = vmul.f32 %v6100, 0.5
        %v6109 = vmul.f32 %v6101, 0.5
        %v6110 = vmul.f32 %v6102, 0.5
        %v6111 = vmul.f32 %v6103, 0.5
        %v6112 = vmul.f32 %v6096, 0.70710677
        %v6113 = vmul.f32 %v6097, 0.70710677
        %v6114 = vmul.f32 %v6098, 0.70710677
        %v6115 = vmul.f32 %v6099, 0.70710677
        %v6116 = vmul.f32 %v6100, 0.70710677
        %v6117 = vmul.f32 %v6101, 0.70710677
        %v6118 = vmul.f32 %v6102, 0.70710677
        %v6119 = vmul.f32 %v6103, 0.70710677
        %v6120 = verf.f32.pop %v6112
        %v6121 = verf.f32.pop %v6113
        %v6122 = verf.f32.pop %v6114
        %v6123 = verf.f32.pop %v6115
        %v6124 = verf.f32.pop %v6116
        %v6125 = verf.f32.pop %v6117
        %v6126 = verf.f32.pop %v6118
        %v6127 = verf.f32.pop %v6119
        %v6128 = vadd.f32 %v6120, 1.0
        %v6129 = vadd.f32 %v6121, 1.0
        %v6130 = vadd.f32 %v6122, 1.0
        %v6131 = vadd.f32 %v6123, 1.0
        %v6132 = vadd.f32 %v6124, 1.0
        %v6133 = vadd.f32 %v6125, 1.0
        %v6134 = vadd.f32 %v6126, 1.0
        %v6135 = vadd.f32 %v6127, 1.0
        %v6136 = vmul.f32 %v6104, %v6128
        %v6137 = vmul.f32 %v6105, %v6129
        %v6138 = vmul.f32 %v6106, %v6130
        %v6139 = vmul.f32 %v6107, %v6131
        %v6140 = vmul.f32 %v6108, %v6132
        %v6141 = vmul.f32 %v6109, %v6133
        %v6142 = vmul.f32 %v6110, %v6134
        %v6143 = vmul.f32 %v6111, %v6135
        %v6144 = vlaneseq
        %v6145 = vand.u32 %v6144, 127
        %vm6146 = vcmp.lt.s32.totalorder %v6145, 32
        %v6147 = vld [vmem:[%s4 + $0x1] sm:$0x1]
        %v6148 = vld [vmem:[%s4 + $0x2] sm:$0x1]
        %v6149 = vsel %vm6146, %v6136, 0.0
        %v6150 = vsel %vm6146, %v6137, 0.0
        %v6151 = vsel %vm6146, %v6138, 0.0
        %v6152 = vsel %vm6146, %v6139, 0.0
        %v6153 = vsel %vm6146, %v6140, 0.0
        %v6154 = vsel %vm6146, %v6141, 0.0
        %v6155 = vsel %vm6146, %v6142, 0.0
        %v6156 = vsel %vm6146, %v6143, 0.0
        %6157 = vadd.xlane.f32.xlu0 %v6149
        %v6158 = vpop.xlane.xlu0 %6157
        %6159 = vadd.xlane.f32.xlu0 %v6150
        %v6160 = vpop.xlane.xlu0 %6159
        %6161 = vadd.xlane.f32.xlu0 %v6151
        %v6162 = vpop.xlane.xlu0 %6161
        %6163 = vadd.xlane.f32.xlu0 %v6152
        %v6164 = vpop.xlane.xlu0 %6163
        %6165 = vadd.xlane.f32.xlu0 %v6153
        %v6166 = vpop.xlane.xlu0 %6165
        %6167 = vadd.xlane.f32.xlu0 %v6154
        %v6168 = vpop.xlane.xlu0 %6167
        %6169 = vadd.xlane.f32.xlu0 %v6155
        %v6170 = vpop.xlane.xlu0 %6169
        %6171 = vadd.xlane.f32.xlu0 %v6156
        %v6172 = vpop.xlane.xlu0 %6171
        %v6173 = vmul.f32 %v6158, 0.03125
        %v6174 = vmul.f32 %v6160, 0.03125
        %v6175 = vmul.f32 %v6162, 0.03125
        %v6176 = vmul.f32 %v6164, 0.03125
        %v6177 = vmul.f32 %v6166, 0.03125
        %v6178 = vmul.f32 %v6168, 0.03125
        %v6179 = vmul.f32 %v6170, 0.03125
        %v6180 = vmul.f32 %v6172, 0.03125
        %v6181 = vsub.f32 %v6136, %v6173
        %v6182 = vsub.f32 %v6137, %v6174
        %v6183 = vsub.f32 %v6138, %v6175
        %v6184 = vsub.f32 %v6139, %v6176
        %v6185 = vsub.f32 %v6140, %v6177
        %v6186 = vsub.f32 %v6141, %v6178
        %v6187 = vsub.f32 %v6142, %v6179
        %v6188 = vsub.f32 %v6143, %v6180
        %v6189 = vsel %vm6146, %v6181, 0.0
        %v6190 = vsel %vm6146, %v6182, 0.0
        %v6191 = vsel %vm6146, %v6183, 0.0
        %v6192 = vsel %vm6146, %v6184, 0.0
        %v6193 = vsel %vm6146, %v6185, 0.0
        %v6194 = vsel %vm6146, %v6186, 0.0
        %v6195 = vsel %vm6146, %v6187, 0.0
        %v6196 = vsel %vm6146, %v6188, 0.0
        %v6197 = vmul.f32 %v6189, %v6189
        %v6198 = vmul.f32 %v6190, %v6190
        %v6199 = vmul.f32 %v6191, %v6191
        %v6200 = vmul.f32 %v6192, %v6192
        %v6201 = vmul.f32 %v6193, %v6193
        %v6202 = vmul.f32 %v6194, %v6194
        %v6203 = vmul.f32 %v6195, %v6195
        %v6204 = vmul.f32 %v6196, %v6196
        %6205 = vadd.xlane.f32.xlu0 %v6197
        %v6206 = vpop.xlane.xlu0 %6205
        %6207 = vadd.xlane.f32.xlu0 %v6198
        %v6208 = vpop.xlane.xlu0 %6207
        %6209 = vadd.xlane.f32.xlu0 %v6199
        %v6210 = vpop.xlane.xlu0 %6209
        %6211 = vadd.xlane.f32.xlu0 %v6200
        %v6212 = vpop.xlane.xlu0 %6211
        %6213 = vadd.xlane.f32.xlu0 %v6201
        %v6214 = vpop.xlane.xlu0 %6213
        %6215 = vadd.xlane.f32.xlu0 %v6202
        %v6216 = vpop.xlane.xlu0 %6215
        %6217 = vadd.xlane.f32.xlu0 %v6203
        %v6218 = vpop.xlane.xlu0 %6217
        %6219 = vadd.xlane.f32.xlu0 %v6204
        %v6220 = vpop.xlane.xlu0 %6219
        %v6221 = vmul.f32 %v6206, 0.03125
        %v6222 = vmul.f32 %v6208, 0.03125
        %v6223 = vmul.f32 %v6210, 0.03125
        %v6224 = vmul.f32 %v6212, 0.03125
        %v6225 = vmul.f32 %v6214, 0.03125
        %v6226 = vmul.f32 %v6216, 0.03125
        %v6227 = vmul.f32 %v6218, 0.03125
        %v6228 = vmul.f32 %v6220, 0.03125
        %v6229 = vadd.f32 %v6221, 1e-05
        %v6230 = vadd.f32 %v6222, 1e-05
        %v6231 = vadd.f32 %v6223, 1e-05
        %v6232 = vadd.f32 %v6224, 1e-05
        %v6233 = vadd.f32 %v6225, 1e-05
        %v6234 = vadd.f32 %v6226, 1e-05
        %v6235 = vadd.f32 %v6227, 1e-05
        %v6236 = vadd.f32 %v6228, 1e-05
        %v6237 = vrsqrt.pop %v6229
        %v6238 = vrsqrt.pop %v6230
        %v6239 = vrsqrt.pop %v6231
        %v6240 = vrsqrt.pop %v6232
        %v6241 = vrsqrt.pop %v6233
        %v6242 = vrsqrt.pop %v6234
        %v6243 = vrsqrt.pop %v6235
        %v6244 = vrsqrt.pop %v6236
        %v6245 = vmul.f32 %v6189, %v6237
        %v6246 = vmul.f32 %v6190, %v6238
        %v6247 = vmul.f32 %v6191, %v6239
        %v6248 = vmul.f32 %v6192, %v6240
        %v6249 = vmul.f32 %v6193, %v6241
        %v6250 = vmul.f32 %v6194, %v6242
        %v6251 = vmul.f32 %v6195, %v6243
        %v6252 = vmul.f32 %v6196, %v6244
        %v6253 = vlaneseq
        %v6254 = vshrl.u32 %v6253, 7
        %v6255 = vsub.s32 0, %v6254
        %v6256 = vrot.slane %v6147, %v6255
        %v6257 = vmul.f32 %v6245, %v6256
        %v6258 = vmul.f32 %v6246, %v6256
        %v6259 = vmul.f32 %v6247, %v6256
        %v6260 = vmul.f32 %v6248, %v6256
        %v6261 = vmul.f32 %v6249, %v6256
        %v6262 = vmul.f32 %v6250, %v6256
        %v6263 = vmul.f32 %v6251, %v6256
        %v6264 = vmul.f32 %v6252, %v6256
        %v6265 = vlaneseq
        %v6266 = vshrl.u32 %v6265, 7
        %v6267 = vsub.s32 0, %v6266
        %v6268 = vrot.slane %v6148, %v6267
        %v6269 = vadd.f32 %v6257, %v6268
        %v6270 = vadd.f32 %v6258, %v6268
        %v6271 = vadd.f32 %v6259, %v6268
        %v6272 = vadd.f32 %v6260, %v6268
        %v6273 = vadd.f32 %v6261, %v6268
        %v6274 = vadd.f32 %v6262, %v6268
        %v6275 = vadd.f32 %v6263, %v6268
        %v6276 = vadd.f32 %v6264, %v6268
        %6277 = vst [vmem:[%s244] sm:$0xff] %v6269
        %6278 = vst [vmem:[%s244 + $0x8] sm:$0xff] %v6270
        %6279 = vst [vmem:[%s244 + $0x10] sm:$0xff] %v6271
        %6280 = vst [vmem:[%s244 + $0x18] sm:$0xff] %v6272
        %6281 = vst [vmem:[%s244 + $0x20] sm:$0xff] %v6273
        %6282 = vst [vmem:[%s244 + $0x28] sm:$0xff] %v6274
        %6283 = vst [vmem:[%s244 + $0x30] sm:$0xff] %v6275
        %6284 = vst [vmem:[%s244 + $0x38] sm:$0xff] %v6276
        %s6285 = sand.u32 %s159, 1
        %s6286 = scalar_lea.sflag [#allocation4], %s6285
        %s6287 = sand.u32 %s159, 1
        %s6288 = smul.addr %s6287, 64
        %s6289 = scalar_lea.vmem [#allocation3], %s6288
        // Predicated region
        $region45: #{tpu_custom_call.1} parent=43 // pred_check
          %p6290 = pneg %p169
        $region46: #{tpu_custom_call.1} parent=43 // pred_check_branch
          %6292 = sbr.rel (%p6290) target = $region48
        $region47: #{tpu_custom_call.1} parent=43 // pred_region
          %s6294 = ssub.s32 1024, 1024
          %6295 = vsyncadd %s6286, %s6294
          %s6296 = smul.addr %s20, 8
          %s6297 = smul.addr %s6296, 128
          %s6298 = scalar_lea.hbm %s6, %s6297
          %s6299 = sshll.u32 %s6289, 4
          %s6300 = int_to_ptr.vmem [resolvable:$true] %s6299
          %6305 = dma.vmem_to_hbm [thread:$0]  %s6300, 1024, %s6298, %s6286, 128, 128, 8
        $region48: #{tpu_custom_call.1} parent=43 // pred_fallthru
          _
      $region44: #{tpu_custom_call.1} parent=5 // pred_fallthru
        _
      %p6306 = scmp.le.s32.totalorder 2, %s15
      // Predicated region
      $region49: #{tpu_custom_call.1} parent=5 // pred_check
        %p6307 = pneg %p6306
      $region50: #{tpu_custom_call.1} parent=5 // pred_check_branch
        %6309 = sbr.rel (%p6307) target = $region52
      $region51: #{tpu_custom_call.1} parent=5 // pred_region
        %s6310 = ssub.s32 %s15, 2
        // Predicated region
        $region53: #{tpu_custom_call.1} parent=51 // pred_check
          %p6311 = pneg %p175
        $region54: #{tpu_custom_call.1} parent=51 // pred_check_branch
          %6313 = sbr.rel (%p6311) target = $region56
        $region55: #{tpu_custom_call.1} parent=51 // pred_region
          %s6314 = sand.u32 %s160, 1
          %s6315 = scalar_lea.sflag [#allocation4], %s6314
          %s6316 = sand.u32 %s160, 1
          %s6317 = smul.addr %s6316, 64
          %s6318 = scalar_lea.vmem [#allocation3], %s6317
          %6319 = dma.done %s6315, 1024
        $region56: #{tpu_custom_call.1} parent=51 // pred_fallthru
          _
      $region52: #{tpu_custom_call.1} parent=5 // pred_fallthru
        _
    $region6: #{tpu_custom_call.1} parent=1 // loop_footer
      %s19 = sadd.s32 1, %s15
    $region7: #{tpu_custom_call.1} parent=1 // loop_footer_branch
      %14 = sbr.rel target = $region3
    $region8: #{tpu_custom_call.1} parent=1 // loop_exit
      _
    %6320 = vsyncpa [#allocation4], 1
    %s6321 = scalar_lea.sflag [#allocation4], 1
    %6322 = vsyncpa %s6321, 1

</llo_original>
